<compile_context>
chip_gen: v7x
topology: tpu7x:2x2x1
jax: 0.10.0
libtpu: 0.0.40
codegen_flags: <defaults>
</compile_context>

<pallas_src>
import functools
import math

import jax
import jax.numpy as jnp
from jax import lax
from jax.experimental import pallas as pl
from jax.experimental.pallas import tpu as pltpu

# -------------------- model hyper-parameters (PyTorch defaults) ------------
D_MODEL = 64
NHEAD = 4
NUM_LAYERS = 2
DIM_FEEDFORWARD = 2048   # nn.TransformerEncoderLayer default
LN_EPS = 1e-5
PER_LAYER = 16           # number of per-layer parameter tensors in the flat arg list


# ============================== fused Pallas kernel =========================

def _add_layernorm(x, r, gamma, beta, eps=LN_EPS):
    """LayerNorm(x + r) over the last axis (post-norm residual)."""
    h = x + r
    mu = jnp.mean(h, axis=-1, keepdims=True)
    var = jnp.mean(jnp.square(h - mu), axis=-1, keepdims=True)
    return (h - mu) * lax.rsqrt(var + eps) * gamma + beta


def _fused_forward_kernel(*refs, S, B, d_model, nhead, num_layers):
    # refs = (x, emb_w, emb_b, fc_w, fc_b, <16 params per layer> * num_layers, out)
    x_ref, emb_w_ref, emb_b_ref, fc_w_ref, fc_b_ref = refs[:5]
    o_ref = refs[-1]
    layer_refs = refs[5:-1]

    hd = d_model // nhead
    scale = 1.0 / math.sqrt(hd)

    # ---------------- embedding:  (B*S, in_dim) @ (in_dim, D) ----------------
    h = jnp.dot(x_ref[...], emb_w_ref[...],
                preferred_element_type=jnp.float32) + emb_b_ref[...]

    # ---------------- transformer encoder layers -----------------------------
    for li in range(num_layers):
        (wq_ref, wk_ref, wv_ref, bq_ref, bk_ref, bv_ref,
         wo_ref, bo_ref, w1_ref, b1_ref, w2_ref, b2_ref,
         g1_ref, be1_ref, g2_ref, be2_ref) = \
            layer_refs[li * PER_LAYER:(li + 1) * PER_LAYER]

        # ---- self-attention (per-head projections; scale folded into q) ----
        q_heads, k_heads, v_heads = [], [], []
        for hh in range(nhead):
            q_heads.append(
                (jnp.dot(h, wq_ref[hh], preferred_element_type=jnp.float32)
                 + bq_ref[hh]) * scale)
            k_heads.append(
                jnp.dot(h, wk_ref[hh], preferred_element_type=jnp.float32)
                + bk_ref[hh])
            v_heads.append(
                jnp.dot(h, wv_ref[hh], preferred_element_type=jnp.float32)
                + bv_ref[hh])

        # rows are batch-major: rows [b*S, (b+1)*S) belong to batch element b
        proj_rows = []
        for b in range(B):
            r0 = b * S
            acc = jnp.zeros((S, d_model), jnp.float32)
            for hh in range(nhead):
                qb = q_heads[hh][r0:r0 + S, :]          # (S, hd), sublane-aligned
                kb = k_heads[hh][r0:r0 + S, :]
                vb = v_heads[hh][r0:r0 + S, :]
                # scores = q @ k^T without materializing a transpose
                sc = lax.dot_general(qb, kb, (((1,), (1,)), ((), ())),
                                     preferred_element_type=jnp.float32)   # (S, S)
                sc = sc - jnp.max(sc, axis=-1, keepdims=True)
                p = jnp.exp(sc)
                p = p * pl.reciprocal(jnp.sum(p, axis=-1, keepdims=True),
                                      approx=True)
                o_bh = jnp.dot(p, vb, preferred_element_type=jnp.float32)  # (S, hd)
                # out-projection accumulated per head: no head concatenation
                acc = acc + jnp.dot(o_bh, wo_ref[hh],
                                    preferred_element_type=jnp.float32)
            proj_rows.append(acc + bo_ref[...])
        attn_out = jnp.concatenate(proj_rows, axis=0)                      # (B*S, D)

        # norm1(x + self_attn(x))   (dropout == identity)
        h = _add_layernorm(h, attn_out, g1_ref[...], be1_ref[...])

        # ---- feed-forward (bf16 weights, f32 MXU accumulation) ----
        ff = jnp.dot(h.astype(jnp.bfloat16), w1_ref[...],
                     preferred_element_type=jnp.float32) + b1_ref[...]
        ff = jnp.maximum(ff, 0.0)
        ff = jnp.dot(ff.astype(jnp.bfloat16), w2_ref[...],
                     preferred_element_type=jnp.float32) + b2_ref[...]

        # norm2(x + ff(x))
        h = _add_layernorm(h, ff, g2_ref[...], be2_ref[...])

    # ---------------- mean over dim=1 (the B axis) ---------------------------
    pooled = h[0:S, :]
    for b in range(1, B):
        pooled = pooled + h[b * S:(b + 1) * S, :]
    pooled = pooled * (1.0 / B)                                            # (S, D)

    # ---------------- output head --------------------------------------------
    o_ref[...] = jnp.dot(pooled, fc_w_ref[...],
                         preferred_element_type=jnp.float32) + fc_b_ref[...]


# ============================ model wrapper =================================

_LAYER_KEYS = ("wq", "wk", "wv", "bq", "bk", "bv",
               "wo", "bo", "w1", "b1", "w2", "b2",
               "ln1_g", "ln1_b", "ln2_g", "ln2_b")


def transformer_regressor_forward(x, params, *, nhead=NHEAD):
    S, B, input_dim = x.shape
    d_model = params["emb_w"].shape[1]
    output_dim = params["fc_w"].shape[1]
    num_layers = len(params["layers"])

    # Batch-major flatten (row index = b*S + s). One tiny XLA transpose on the
    # input; everything downstream stays inside the single fused kernel.
    x_flat = x.transpose(1, 0, 2).reshape(B * S, input_dim)

    flat_inputs = [x_flat, params["emb_w"], params["emb_b"],
                   params["fc_w"], params["fc_b"]]
    for lp in params["layers"]:
        flat_inputs += [lp[k] for k in _LAYER_KEYS]

    kernel = functools.partial(_fused_forward_kernel,
                               S=S, B=B, d_model=d_model,
                               nhead=nhead, num_layers=num_layers)

    return pl.pallas_call(
        kernel,
        out_shape=jax.ShapeDtypeStruct((S, output_dim), jnp.float32),
        # no grid: whole arrays (activations + ~1.2 MiB of weights) live in VMEM
        compiler_params=pltpu.CompilerParams(vmem_limit_bytes=32 * 1024 * 1024),
    )(*flat_inputs)


# ============================ parameter init ================================

def _lin_init(key, fan_in, fan_out):
    # deterministic, PyTorch-Linear-like uniform(-1/sqrt(fan_in), 1/sqrt(fan_in)),
    # stored in JAX layout (in_features, out_features)
    k1, k2 = jax.random.split(key)
    bound = 1.0 / math.sqrt(fan_in)
    w = jax.random.uniform(k1, (fan_in, fan_out), jnp.float32, -bound, bound)
    b = jax.random.uniform(k2, (fan_out,), jnp.float32, -bound, bound)
    return w, b


def init_params(key, input_dim, output_dim, d_model=D_MODEL, nhead=NHEAD,
                num_layers=NUM_LAYERS, dff=DIM_FEEDFORWARD):
    hd = d_model // nhead
    keys = jax.random.split(key, 2 + num_layers)
    emb_w, emb_b = _lin_init(keys[0], input_dim, d_model)
    fc_w, fc_b = _lin_init(keys[1], d_model, output_dim)

    def split_heads_cols(w):  # (D, D) -> (H, D, hd):  [h] = w[:, h*hd:(h+1)*hd]
        return w.reshape(d_model, nhead, hd).transpose(1, 0, 2)

    layers = []
    for li in range(num_layers):
        lk = jax.random.split(keys[2 + li], 4)
        in_w, in_b = _lin_init(lk[0], d_model, 3 * d_model)   # fused QKV (D, 3D)
        out_w, out_b = _lin_init(lk[1], d_model, d_model)     # (D, D)
        w1, b1 = _lin_init(lk[2], d_model, dff)
        w2, b2 = _lin_init(lk[3], dff, d_model)

        layers.append(dict(
            wq=split_heads_cols(in_w[:, 0:d_model]),
            wk=split_heads_cols(in_w[:, d_model:2 * d_model]),
            wv=split_heads_cols(in_w[:, 2 * d_model:3 * d_model]),
            bq=in_b[0:d_model].reshape(nhead, 1, hd),
            bk=in_b[d_model:2 * d_model].reshape(nhead, 1, hd),
            bv=in_b[2 * d_model:3 * d_model].reshape(nhead, 1, hd),
            wo=out_w.reshape(nhead, hd, d_model),     # [h] = out_w[h*hd:(h+1)*hd, :]
            bo=out_b.reshape(1, d_model),
            w1=w1.astype(jnp.bfloat16), b1=b1.reshape(1, dff),
            w2=w2.astype(jnp.bfloat16), b2=b2.reshape(1, d_model),
            ln1_g=jnp.ones((1, d_model), jnp.float32),
            ln1_b=jnp.zeros((1, d_model), jnp.float32),
            ln2_g=jnp.ones((1, d_model), jnp.float32),
            ln2_b=jnp.zeros((1, d_model), jnp.float32),
        ))
    return dict(emb_w=emb_w, emb_b=emb_b.reshape(1, d_model),
                fc_w=fc_w, fc_b=fc_b.reshape(1, output_dim), layers=layers)


# =================================== main ===================================

if __name__ == "__main__":
    key = jax.random.PRNGKey(0)
    kx, kp = jax.random.split(key)

    S, B = 8, 2                 # seq (attended axis), independent axis
    input_dim, output_dim = 32, 4

    x = jax.random.normal(kx, (S, B, input_dim), jnp.float32)
    params = init_params(kp, input_dim, output_dim)

    fwd = jax.jit(functools.partial(transformer_regressor_forward, nhead=NHEAD))
    out = fwd(x, params)
    out = jax.block_until_ready(out)

    assert out.shape == (S, output_dim), out.shape
    assert bool(jnp.all(jnp.isfinite(out)))
    print("KERNEL_OK")
</pallas_src>

<mosaic_0001>
module attributes {stable_mosaic.version = 11 : i64} {
  func.func @_fused_forward_kernel(%arg0: memref<16x32xf32, #tpu.memory_space<vmem>>, %arg1: memref<32x64xf32, #tpu.memory_space<vmem>>, %arg2: memref<1x64xf32, #tpu.memory_space<vmem>>, %arg3: memref<64x4xf32, #tpu.memory_space<vmem>>, %arg4: memref<1x4xf32, #tpu.memory_space<vmem>>, %arg5: memref<4x64x16xf32, #tpu.memory_space<vmem>>, %arg6: memref<4x64x16xf32, #tpu.memory_space<vmem>>, %arg7: memref<4x64x16xf32, #tpu.memory_space<vmem>>, %arg8: memref<4x1x16xf32, #tpu.memory_space<vmem>>, %arg9: memref<4x1x16xf32, #tpu.memory_space<vmem>>, %arg10: memref<4x1x16xf32, #tpu.memory_space<vmem>>, %arg11: memref<4x16x64xf32, #tpu.memory_space<vmem>>, %arg12: memref<1x64xf32, #tpu.memory_space<vmem>>, %arg13: memref<64x2048xbf16, #tpu.memory_space<vmem>>, %arg14: memref<1x2048xf32, #tpu.memory_space<vmem>>, %arg15: memref<2048x64xbf16, #tpu.memory_space<vmem>>, %arg16: memref<1x64xf32, #tpu.memory_space<vmem>>, %arg17: memref<1x64xf32, #tpu.memory_space<vmem>>, %arg18: memref<1x64xf32, #tpu.memory_space<vmem>>, %arg19: memref<1x64xf32, #tpu.memory_space<vmem>>, %arg20: memref<1x64xf32, #tpu.memory_space<vmem>>, %arg21: memref<4x64x16xf32, #tpu.memory_space<vmem>>, %arg22: memref<4x64x16xf32, #tpu.memory_space<vmem>>, %arg23: memref<4x64x16xf32, #tpu.memory_space<vmem>>, %arg24: memref<4x1x16xf32, #tpu.memory_space<vmem>>, %arg25: memref<4x1x16xf32, #tpu.memory_space<vmem>>, %arg26: memref<4x1x16xf32, #tpu.memory_space<vmem>>, %arg27: memref<4x16x64xf32, #tpu.memory_space<vmem>>, %arg28: memref<1x64xf32, #tpu.memory_space<vmem>>, %arg29: memref<64x2048xbf16, #tpu.memory_space<vmem>>, %arg30: memref<1x2048xf32, #tpu.memory_space<vmem>>, %arg31: memref<2048x64xbf16, #tpu.memory_space<vmem>>, %arg32: memref<1x64xf32, #tpu.memory_space<vmem>>, %arg33: memref<1x64xf32, #tpu.memory_space<vmem>>, %arg34: memref<1x64xf32, #tpu.memory_space<vmem>>, %arg35: memref<1x64xf32, #tpu.memory_space<vmem>>, %arg36: memref<1x64xf32, #tpu.memory_space<vmem>>, %arg37: memref<8x4xf32, #tpu.memory_space<vmem>>) attributes {dimension_semantics = [], scalar_prefetch = 0 : i64, scratch_operands = 0 : i64, tpu.core_type = #tpu.core_type<tc>} {
    %c0 = arith.constant 0 : index
    %c0_0 = arith.constant 0 : index
    %0 = vector.load %arg0[%c0, %c0_0] : memref<16x32xf32, #tpu.memory_space<vmem>>, vector<16x32xf32>
    %c0_1 = arith.constant 0 : index
    %c0_2 = arith.constant 0 : index
    %1 = vector.load %arg1[%c0_1, %c0_2] : memref<32x64xf32, #tpu.memory_space<vmem>>, vector<32x64xf32>
    %cst = arith.constant dense<0.000000e+00> : vector<16x64xf32>
    %2 = tpu.matmul %0, %1, %cst {dimension_numbers = #tpu.dot_dimension_numbers<[1], [0], [0], [1], [0, 0, 1, 1], [], []>} : vector<16x32xf32>, vector<32x64xf32>, vector<16x64xf32> -> vector<16x64xf32>
    %c0_3 = arith.constant 0 : index
    %c0_4 = arith.constant 0 : index
    %3 = vector.load %arg2[%c0_3, %c0_4] : memref<1x64xf32, #tpu.memory_space<vmem>>, vector<1x64xf32>
    %4 = vector.broadcast %3 : vector<1x64xf32> to vector<16x64xf32>
    %5 = arith.addf %2, %4 : vector<16x64xf32>
    %c0_5 = arith.constant 0 : index
    %c0_6 = arith.constant 0 : index
    %c0_7 = arith.constant 0 : index
    %6 = vector.load %arg5[%c0_5, %c0_6, %c0_7] : memref<4x64x16xf32, #tpu.memory_space<vmem>>, vector<1x64x16xf32>
    %7 = vector.shape_cast %6 : vector<1x64x16xf32> to vector<64x16xf32>
    %cst_8 = arith.constant dense<0.000000e+00> : vector<16x16xf32>
    %8 = tpu.matmul %5, %7, %cst_8 {dimension_numbers = #tpu.dot_dimension_numbers<[1], [0], [0], [1], [0, 0, 1, 1], [], []>} : vector<16x64xf32>, vector<64x16xf32>, vector<16x16xf32> -> vector<16x16xf32>
    %c0_9 = arith.constant 0 : index
    %c0_10 = arith.constant 0 : index
    %c0_11 = arith.constant 0 : index
    %9 = vector.load %arg8[%c0_9, %c0_10, %c0_11] : memref<4x1x16xf32, #tpu.memory_space<vmem>>, vector<1x1x16xf32>
    %10 = vector.shape_cast %9 : vector<1x1x16xf32> to vector<1x16xf32>
    %11 = vector.broadcast %10 : vector<1x16xf32> to vector<16x16xf32>
    %12 = arith.addf %8, %11 : vector<16x16xf32>
    %cst_12 = arith.constant 2.500000e-01 : f32
    %13 = vector.broadcast %cst_12 : f32 to vector<16x16xf32>
    %14 = arith.mulf %12, %13 : vector<16x16xf32>
    %c0_13 = arith.constant 0 : index
    %c0_14 = arith.constant 0 : index
    %c0_15 = arith.constant 0 : index
    %15 = vector.load %arg6[%c0_13, %c0_14, %c0_15] : memref<4x64x16xf32, #tpu.memory_space<vmem>>, vector<1x64x16xf32>
    %16 = vector.shape_cast %15 : vector<1x64x16xf32> to vector<64x16xf32>
    %cst_16 = arith.constant dense<0.000000e+00> : vector<16x16xf32>
    %17 = tpu.matmul %5, %16, %cst_16 {dimension_numbers = #tpu.dot_dimension_numbers<[1], [0], [0], [1], [0, 0, 1, 1], [], []>} : vector<16x64xf32>, vector<64x16xf32>, vector<16x16xf32> -> vector<16x16xf32>
    %c0_17 = arith.constant 0 : index
    %c0_18 = arith.constant 0 : index
    %c0_19 = arith.constant 0 : index
    %18 = vector.load %arg9[%c0_17, %c0_18, %c0_19] : memref<4x1x16xf32, #tpu.memory_space<vmem>>, vector<1x1x16xf32>
    %19 = vector.shape_cast %18 : vector<1x1x16xf32> to vector<1x16xf32>
    %20 = vector.broadcast %19 : vector<1x16xf32> to vector<16x16xf32>
    %21 = arith.addf %17, %20 : vector<16x16xf32>
    %c0_20 = arith.constant 0 : index
    %c0_21 = arith.constant 0 : index
    %c0_22 = arith.constant 0 : index
    %22 = vector.load %arg7[%c0_20, %c0_21, %c0_22] : memref<4x64x16xf32, #tpu.memory_space<vmem>>, vector<1x64x16xf32>
    %23 = vector.shape_cast %22 : vector<1x64x16xf32> to vector<64x16xf32>
    %cst_23 = arith.constant dense<0.000000e+00> : vector<16x16xf32>
    %24 = tpu.matmul %5, %23, %cst_23 {dimension_numbers = #tpu.dot_dimension_numbers<[1], [0], [0], [1], [0, 0, 1, 1], [], []>} : vector<16x64xf32>, vector<64x16xf32>, vector<16x16xf32> -> vector<16x16xf32>
    %c0_24 = arith.constant 0 : index
    %c0_25 = arith.constant 0 : index
    %c0_26 = arith.constant 0 : index
    %25 = vector.load %arg10[%c0_24, %c0_25, %c0_26] : memref<4x1x16xf32, #tpu.memory_space<vmem>>, vector<1x1x16xf32>
    %26 = vector.shape_cast %25 : vector<1x1x16xf32> to vector<1x16xf32>
    %27 = vector.broadcast %26 : vector<1x16xf32> to vector<16x16xf32>
    %28 = arith.addf %24, %27 : vector<16x16xf32>
    %c1 = arith.constant 1 : index
    %c0_27 = arith.constant 0 : index
    %c0_28 = arith.constant 0 : index
    %29 = vector.load %arg5[%c1, %c0_27, %c0_28] : memref<4x64x16xf32, #tpu.memory_space<vmem>>, vector<1x64x16xf32>
    %30 = vector.shape_cast %29 : vector<1x64x16xf32> to vector<64x16xf32>
    %cst_29 = arith.constant dense<0.000000e+00> : vector<16x16xf32>
    %31 = tpu.matmul %5, %30, %cst_29 {dimension_numbers = #tpu.dot_dimension_numbers<[1], [0], [0], [1], [0, 0, 1, 1], [], []>} : vector<16x64xf32>, vector<64x16xf32>, vector<16x16xf32> -> vector<16x16xf32>
    %c1_30 = arith.constant 1 : index
    %c0_31 = arith.constant 0 : index
    %c0_32 = arith.constant 0 : index
    %32 = vector.load %arg8[%c1_30, %c0_31, %c0_32] : memref<4x1x16xf32, #tpu.memory_space<vmem>>, vector<1x1x16xf32>
    %33 = vector.shape_cast %32 : vector<1x1x16xf32> to vector<1x16xf32>
    %34 = vector.broadcast %33 : vector<1x16xf32> to vector<16x16xf32>
    %35 = arith.addf %31, %34 : vector<16x16xf32>
    %cst_33 = arith.constant 2.500000e-01 : f32
    %36 = vector.broadcast %cst_33 : f32 to vector<16x16xf32>
    %37 = arith.mulf %35, %36 : vector<16x16xf32>
    %c1_34 = arith.constant 1 : index
    %c0_35 = arith.constant 0 : index
    %c0_36 = arith.constant 0 : index
    %38 = vector.load %arg6[%c1_34, %c0_35, %c0_36] : memref<4x64x16xf32, #tpu.memory_space<vmem>>, vector<1x64x16xf32>
    %39 = vector.shape_cast %38 : vector<1x64x16xf32> to vector<64x16xf32>
    %cst_37 = arith.constant dense<0.000000e+00> : vector<16x16xf32>
    %40 = tpu.matmul %5, %39, %cst_37 {dimension_numbers = #tpu.dot_dimension_numbers<[1], [0], [0], [1], [0, 0, 1, 1], [], []>} : vector<16x64xf32>, vector<64x16xf32>, vector<16x16xf32> -> vector<16x16xf32>
    %c1_38 = arith.constant 1 : index
    %c0_39 = arith.constant 0 : index
    %c0_40 = arith.constant 0 : index
    %41 = vector.load %arg9[%c1_38, %c0_39, %c0_40] : memref<4x1x16xf32, #tpu.memory_space<vmem>>, vector<1x1x16xf32>
    %42 = vector.shape_cast %41 : vector<1x1x16xf32> to vector<1x16xf32>
    %43 = vector.broadcast %42 : vector<1x16xf32> to vector<16x16xf32>
    %44 = arith.addf %40, %43 : vector<16x16xf32>
    %c1_41 = arith.constant 1 : index
    %c0_42 = arith.constant 0 : index
    %c0_43 = arith.constant 0 : index
    %45 = vector.load %arg7[%c1_41, %c0_42, %c0_43] : memref<4x64x16xf32, #tpu.memory_space<vmem>>, vector<1x64x16xf32>
    %46 = vector.shape_cast %45 : vector<1x64x16xf32> to vector<64x16xf32>
    %cst_44 = arith.constant dense<0.000000e+00> : vector<16x16xf32>
    %47 = tpu.matmul %5, %46, %cst_44 {dimension_numbers = #tpu.dot_dimension_numbers<[1], [0], [0], [1], [0, 0, 1, 1], [], []>} : vector<16x64xf32>, vector<64x16xf32>, vector<16x16xf32> -> vector<16x16xf32>
    %c1_45 = arith.constant 1 : index
    %c0_46 = arith.constant 0 : index
    %c0_47 = arith.constant 0 : index
    %48 = vector.load %arg10[%c1_45, %c0_46, %c0_47] : memref<4x1x16xf32, #tpu.memory_space<vmem>>, vector<1x1x16xf32>
    %49 = vector.shape_cast %48 : vector<1x1x16xf32> to vector<1x16xf32>
    %50 = vector.broadcast %49 : vector<1x16xf32> to vector<16x16xf32>
    %51 = arith.addf %47, %50 : vector<16x16xf32>
    %c2 = arith.constant 2 : index
    %c0_48 = arith.constant 0 : index
    %c0_49 = arith.constant 0 : index
    %52 = vector.load %arg5[%c2, %c0_48, %c0_49] : memref<4x64x16xf32, #tpu.memory_space<vmem>>, vector<1x64x16xf32>
    %53 = vector.shape_cast %52 : vector<1x64x16xf32> to vector<64x16xf32>
    %cst_50 = arith.constant dense<0.000000e+00> : vector<16x16xf32>
    %54 = tpu.matmul %5, %53, %cst_50 {dimension_numbers = #tpu.dot_dimension_numbers<[1], [0], [0], [1], [0, 0, 1, 1], [], []>} : vector<16x64xf32>, vector<64x16xf32>, vector<16x16xf32> -> vector<16x16xf32>
    %c2_51 = arith.constant 2 : index
    %c0_52 = arith.constant 0 : index
    %c0_53 = arith.constant 0 : index
    %55 = vector.load %arg8[%c2_51, %c0_52, %c0_53] : memref<4x1x16xf32, #tpu.memory_space<vmem>>, vector<1x1x16xf32>
    %56 = vector.shape_cast %55 : vector<1x1x16xf32> to vector<1x16xf32>
    %57 = vector.broadcast %56 : vector<1x16xf32> to vector<16x16xf32>
    %58 = arith.addf %54, %57 : vector<16x16xf32>
    %cst_54 = arith.constant 2.500000e-01 : f32
    %59 = vector.broadcast %cst_54 : f32 to vector<16x16xf32>
    %60 = arith.mulf %58, %59 : vector<16x16xf32>
    %c2_55 = arith.constant 2 : index
    %c0_56 = arith.constant 0 : index
    %c0_57 = arith.constant 0 : index
    %61 = vector.load %arg6[%c2_55, %c0_56, %c0_57] : memref<4x64x16xf32, #tpu.memory_space<vmem>>, vector<1x64x16xf32>
    %62 = vector.shape_cast %61 : vector<1x64x16xf32> to vector<64x16xf32>
    %cst_58 = arith.constant dense<0.000000e+00> : vector<16x16xf32>
    %63 = tpu.matmul %5, %62, %cst_58 {dimension_numbers = #tpu.dot_dimension_numbers<[1], [0], [0], [1], [0, 0, 1, 1], [], []>} : vector<16x64xf32>, vector<64x16xf32>, vector<16x16xf32> -> vector<16x16xf32>
    %c2_59 = arith.constant 2 : index
    %c0_60 = arith.constant 0 : index
    %c0_61 = arith.constant 0 : index
    %64 = vector.load %arg9[%c2_59, %c0_60, %c0_61] : memref<4x1x16xf32, #tpu.memory_space<vmem>>, vector<1x1x16xf32>
    %65 = vector.shape_cast %64 : vector<1x1x16xf32> to vector<1x16xf32>
    %66 = vector.broadcast %65 : vector<1x16xf32> to vector<16x16xf32>
    %67 = arith.addf %63, %66 : vector<16x16xf32>
    %c2_62 = arith.constant 2 : index
    %c0_63 = arith.constant 0 : index
    %c0_64 = arith.constant 0 : index
    %68 = vector.load %arg7[%c2_62, %c0_63, %c0_64] : memref<4x64x16xf32, #tpu.memory_space<vmem>>, vector<1x64x16xf32>
    %69 = vector.shape_cast %68 : vector<1x64x16xf32> to vector<64x16xf32>
    %cst_65 = arith.constant dense<0.000000e+00> : vector<16x16xf32>
    %70 = tpu.matmul %5, %69, %cst_65 {dimension_numbers = #tpu.dot_dimension_numbers<[1], [0], [0], [1], [0, 0, 1, 1], [], []>} : vector<16x64xf32>, vector<64x16xf32>, vector<16x16xf32> -> vector<16x16xf32>
    %c2_66 = arith.constant 2 : index
    %c0_67 = arith.constant 0 : index
    %c0_68 = arith.constant 0 : index
    %71 = vector.load %arg10[%c2_66, %c0_67, %c0_68] : memref<4x1x16xf32, #tpu.memory_space<vmem>>, vector<1x1x16xf32>
    %72 = vector.shape_cast %71 : vector<1x1x16xf32> to vector<1x16xf32>
    %73 = vector.broadcast %72 : vector<1x16xf32> to vector<16x16xf32>
    %74 = arith.addf %70, %73 : vector<16x16xf32>
    %c3 = arith.constant 3 : index
    %c0_69 = arith.constant 0 : index
    %c0_70 = arith.constant 0 : index
    %75 = vector.load %arg5[%c3, %c0_69, %c0_70] : memref<4x64x16xf32, #tpu.memory_space<vmem>>, vector<1x64x16xf32>
    %76 = vector.shape_cast %75 : vector<1x64x16xf32> to vector<64x16xf32>
    %cst_71 = arith.constant dense<0.000000e+00> : vector<16x16xf32>
    %77 = tpu.matmul %5, %76, %cst_71 {dimension_numbers = #tpu.dot_dimension_numbers<[1], [0], [0], [1], [0, 0, 1, 1], [], []>} : vector<16x64xf32>, vector<64x16xf32>, vector<16x16xf32> -> vector<16x16xf32>
    %c3_72 = arith.constant 3 : index
    %c0_73 = arith.constant 0 : index
    %c0_74 = arith.constant 0 : index
    %78 = vector.load %arg8[%c3_72, %c0_73, %c0_74] : memref<4x1x16xf32, #tpu.memory_space<vmem>>, vector<1x1x16xf32>
    %79 = vector.shape_cast %78 : vector<1x1x16xf32> to vector<1x16xf32>
    %80 = vector.broadcast %79 : vector<1x16xf32> to vector<16x16xf32>
    %81 = arith.addf %77, %80 : vector<16x16xf32>
    %cst_75 = arith.constant 2.500000e-01 : f32
    %82 = vector.broadcast %cst_75 : f32 to vector<16x16xf32>
    %83 = arith.mulf %81, %82 : vector<16x16xf32>
    %c3_76 = arith.constant 3 : index
    %c0_77 = arith.constant 0 : index
    %c0_78 = arith.constant 0 : index
    %84 = vector.load %arg6[%c3_76, %c0_77, %c0_78] : memref<4x64x16xf32, #tpu.memory_space<vmem>>, vector<1x64x16xf32>
    %85 = vector.shape_cast %84 : vector<1x64x16xf32> to vector<64x16xf32>
    %cst_79 = arith.constant dense<0.000000e+00> : vector<16x16xf32>
    %86 = tpu.matmul %5, %85, %cst_79 {dimension_numbers = #tpu.dot_dimension_numbers<[1], [0], [0], [1], [0, 0, 1, 1], [], []>} : vector<16x64xf32>, vector<64x16xf32>, vector<16x16xf32> -> vector<16x16xf32>
    %c3_80 = arith.constant 3 : index
    %c0_81 = arith.constant 0 : index
    %c0_82 = arith.constant 0 : index
    %87 = vector.load %arg9[%c3_80, %c0_81, %c0_82] : memref<4x1x16xf32, #tpu.memory_space<vmem>>, vector<1x1x16xf32>
    %88 = vector.shape_cast %87 : vector<1x1x16xf32> to vector<1x16xf32>
    %89 = vector.broadcast %88 : vector<1x16xf32> to vector<16x16xf32>
    %90 = arith.addf %86, %89 : vector<16x16xf32>
    %c3_83 = arith.constant 3 : index
    %c0_84 = arith.constant 0 : index
    %c0_85 = arith.constant 0 : index
    %91 = vector.load %arg7[%c3_83, %c0_84, %c0_85] : memref<4x64x16xf32, #tpu.memory_space<vmem>>, vector<1x64x16xf32>
    %92 = vector.shape_cast %91 : vector<1x64x16xf32> to vector<64x16xf32>
    %cst_86 = arith.constant dense<0.000000e+00> : vector<16x16xf32>
    %93 = tpu.matmul %5, %92, %cst_86 {dimension_numbers = #tpu.dot_dimension_numbers<[1], [0], [0], [1], [0, 0, 1, 1], [], []>} : vector<16x64xf32>, vector<64x16xf32>, vector<16x16xf32> -> vector<16x16xf32>
    %c3_87 = arith.constant 3 : index
    %c0_88 = arith.constant 0 : index
    %c0_89 = arith.constant 0 : index
    %94 = vector.load %arg10[%c3_87, %c0_88, %c0_89] : memref<4x1x16xf32, #tpu.memory_space<vmem>>, vector<1x1x16xf32>
    %95 = vector.shape_cast %94 : vector<1x1x16xf32> to vector<1x16xf32>
    %96 = vector.broadcast %95 : vector<1x16xf32> to vector<16x16xf32>
    %97 = arith.addf %93, %96 : vector<16x16xf32>
    %cst_90 = arith.constant 0.000000e+00 : f32
    %98 = vector.broadcast %cst_90 : f32 to vector<8x64xf32>
    %99 = vector.extract_strided_slice %14 {offsets = [0, 0], sizes = [8, 16], strides = [1, 1]} : vector<16x16xf32> to vector<8x16xf32>
    %100 = vector.extract_strided_slice %21 {offsets = [0, 0], sizes = [8, 16], strides = [1, 1]} : vector<16x16xf32> to vector<8x16xf32>
    %101 = vector.extract_strided_slice %28 {offsets = [0, 0], sizes = [8, 16], strides = [1, 1]} : vector<16x16xf32> to vector<8x16xf32>
    %cst_91 = arith.constant dense<0.000000e+00> : vector<8x8xf32>
    %102 = tpu.matmul %99, %100, %cst_91 {dimension_numbers = #tpu.dot_dimension_numbers<[1], [1], [0], [0], [0, 0, 1, 0], [], []>} : vector<8x16xf32>, vector<8x16xf32>, vector<8x8xf32> -> vector<8x8xf32>
    %cst_92 = arith.constant dense<0xFF800000> : vector<8xf32>
    %103 = vector.multi_reduction <maximumf>, %102, %cst_92 [1] : vector<8x8xf32> to vector<8xf32>
    %104 = vector.shape_cast %103 : vector<8xf32> to vector<8x1xf32>
    %105 = vector.broadcast %104 : vector<8x1xf32> to vector<8x8xf32>
    %106 = arith.subf %102, %105 : vector<8x8xf32>
    %107 = math.exp %106 : vector<8x8xf32>
    %cst_93 = arith.constant dense<0.000000e+00> : vector<8xf32>
    %108 = vector.multi_reduction <add>, %107, %cst_93 [1] : vector<8x8xf32> to vector<8xf32>
    %109 = vector.shape_cast %108 : vector<8xf32> to vector<8x1xf32>
    %110 = tpu.reciprocal %109 {approx = true} : vector<8x1xf32> -> vector<8x1xf32>
    %111 = vector.broadcast %110 : vector<8x1xf32> to vector<8x8xf32>
    %112 = arith.mulf %107, %111 : vector<8x8xf32>
    %cst_94 = arith.constant dense<0.000000e+00> : vector<8x16xf32>
    %113 = tpu.matmul %112, %101, %cst_94 {dimension_numbers = #tpu.dot_dimension_numbers<[1], [0], [0], [1], [0, 0, 1, 1], [], []>} : vector<8x8xf32>, vector<8x16xf32>, vector<8x16xf32> -> vector<8x16xf32>
    %c0_95 = arith.constant 0 : index
    %c0_96 = arith.constant 0 : index
    %c0_97 = arith.constant 0 : index
    %114 = vector.load %arg11[%c0_95, %c0_96, %c0_97] : memref<4x16x64xf32, #tpu.memory_space<vmem>>, vector<1x16x64xf32>
    %115 = vector.shape_cast %114 : vector<1x16x64xf32> to vector<16x64xf32>
    %cst_98 = arith.constant dense<0.000000e+00> : vector<8x64xf32>
    %116 = tpu.matmul %113, %115, %cst_98 {dimension_numbers = #tpu.dot_dimension_numbers<[1], [0], [0], [1], [0, 0, 1, 1], [], []>} : vector<8x16xf32>, vector<16x64xf32>, vector<8x64xf32> -> vector<8x64xf32>
    %117 = arith.addf %98, %116 : vector<8x64xf32>
    %118 = vector.extract_strided_slice %37 {offsets = [0, 0], sizes = [8, 16], strides = [1, 1]} : vector<16x16xf32> to vector<8x16xf32>
    %119 = vector.extract_strided_slice %44 {offsets = [0, 0], sizes = [8, 16], strides = [1, 1]} : vector<16x16xf32> to vector<8x16xf32>
    %120 = vector.extract_strided_slice %51 {offsets = [0, 0], sizes = [8, 16], strides = [1, 1]} : vector<16x16xf32> to vector<8x16xf32>
    %cst_99 = arith.constant dense<0.000000e+00> : vector<8x8xf32>
    %121 = tpu.matmul %118, %119, %cst_99 {dimension_numbers = #tpu.dot_dimension_numbers<[1], [1], [0], [0], [0, 0, 1, 0], [], []>} : vector<8x16xf32>, vector<8x16xf32>, vector<8x8xf32> -> vector<8x8xf32>
    %cst_100 = arith.constant dense<0xFF800000> : vector<8xf32>
    %122 = vector.multi_reduction <maximumf>, %121, %cst_100 [1] : vector<8x8xf32> to vector<8xf32>
    %123 = vector.shape_cast %122 : vector<8xf32> to vector<8x1xf32>
    %124 = vector.broadcast %123 : vector<8x1xf32> to vector<8x8xf32>
    %125 = arith.subf %121, %124 : vector<8x8xf32>
    %126 = math.exp %125 : vector<8x8xf32>
    %cst_101 = arith.constant dense<0.000000e+00> : vector<8xf32>
    %127 = vector.multi_reduction <add>, %126, %cst_101 [1] : vector<8x8xf32> to vector<8xf32>
    %128 = vector.shape_cast %127 : vector<8xf32> to vector<8x1xf32>
    %129 = tpu.reciprocal %128 {approx = true} : vector<8x1xf32> -> vector<8x1xf32>
    %130 = vector.broadcast %129 : vector<8x1xf32> to vector<8x8xf32>
    %131 = arith.mulf %126, %130 : vector<8x8xf32>
    %cst_102 = arith.constant dense<0.000000e+00> : vector<8x16xf32>
    %132 = tpu.matmul %131, %120, %cst_102 {dimension_numbers = #tpu.dot_dimension_numbers<[1], [0], [0], [1], [0, 0, 1, 1], [], []>} : vector<8x8xf32>, vector<8x16xf32>, vector<8x16xf32> -> vector<8x16xf32>
    %c1_103 = arith.constant 1 : index
    %c0_104 = arith.constant 0 : index
    %c0_105 = arith.constant 0 : index
    %133 = vector.load %arg11[%c1_103, %c0_104, %c0_105] : memref<4x16x64xf32, #tpu.memory_space<vmem>>, vector<1x16x64xf32>
    %134 = vector.shape_cast %133 : vector<1x16x64xf32> to vector<16x64xf32>
    %cst_106 = arith.constant dense<0.000000e+00> : vector<8x64xf32>
    %135 = tpu.matmul %132, %134, %cst_106 {dimension_numbers = #tpu.dot_dimension_numbers<[1], [0], [0], [1], [0, 0, 1, 1], [], []>} : vector<8x16xf32>, vector<16x64xf32>, vector<8x64xf32> -> vector<8x64xf32>
    %136 = arith.addf %117, %135 : vector<8x64xf32>
    %137 = vector.extract_strided_slice %60 {offsets = [0, 0], sizes = [8, 16], strides = [1, 1]} : vector<16x16xf32> to vector<8x16xf32>
    %138 = vector.extract_strided_slice %67 {offsets = [0, 0], sizes = [8, 16], strides = [1, 1]} : vector<16x16xf32> to vector<8x16xf32>
    %139 = vector.extract_strided_slice %74 {offsets = [0, 0], sizes = [8, 16], strides = [1, 1]} : vector<16x16xf32> to vector<8x16xf32>
    %cst_107 = arith.constant dense<0.000000e+00> : vector<8x8xf32>
    %140 = tpu.matmul %137, %138, %cst_107 {dimension_numbers = #tpu.dot_dimension_numbers<[1], [1], [0], [0], [0, 0, 1, 0], [], []>} : vector<8x16xf32>, vector<8x16xf32>, vector<8x8xf32> -> vector<8x8xf32>
    %cst_108 = arith.constant dense<0xFF800000> : vector<8xf32>
    %141 = vector.multi_reduction <maximumf>, %140, %cst_108 [1] : vector<8x8xf32> to vector<8xf32>
    %142 = vector.shape_cast %141 : vector<8xf32> to vector<8x1xf32>
    %143 = vector.broadcast %142 : vector<8x1xf32> to vector<8x8xf32>
    %144 = arith.subf %140, %143 : vector<8x8xf32>
    %145 = math.exp %144 : vector<8x8xf32>
    %cst_109 = arith.constant dense<0.000000e+00> : vector<8xf32>
    %146 = vector.multi_reduction <add>, %145, %cst_109 [1] : vector<8x8xf32> to vector<8xf32>
    %147 = vector.shape_cast %146 : vector<8xf32> to vector<8x1xf32>
    %148 = tpu.reciprocal %147 {approx = true} : vector<8x1xf32> -> vector<8x1xf32>
    %149 = vector.broadcast %148 : vector<8x1xf32> to vector<8x8xf32>
    %150 = arith.mulf %145, %149 : vector<8x8xf32>
    %cst_110 = arith.constant dense<0.000000e+00> : vector<8x16xf32>
    %151 = tpu.matmul %150, %139, %cst_110 {dimension_numbers = #tpu.dot_dimension_numbers<[1], [0], [0], [1], [0, 0, 1, 1], [], []>} : vector<8x8xf32>, vector<8x16xf32>, vector<8x16xf32> -> vector<8x16xf32>
    %c2_111 = arith.constant 2 : index
    %c0_112 = arith.constant 0 : index
    %c0_113 = arith.constant 0 : index
    %152 = vector.load %arg11[%c2_111, %c0_112, %c0_113] : memref<4x16x64xf32, #tpu.memory_space<vmem>>, vector<1x16x64xf32>
    %153 = vector.shape_cast %152 : vector<1x16x64xf32> to vector<16x64xf32>
    %cst_114 = arith.constant dense<0.000000e+00> : vector<8x64xf32>
    %154 = tpu.matmul %151, %153, %cst_114 {dimension_numbers = #tpu.dot_dimension_numbers<[1], [0], [0], [1], [0, 0, 1, 1], [], []>} : vector<8x16xf32>, vector<16x64xf32>, vector<8x64xf32> -> vector<8x64xf32>
    %155 = arith.addf %136, %154 : vector<8x64xf32>
    %156 = vector.extract_strided_slice %83 {offsets = [0, 0], sizes = [8, 16], strides = [1, 1]} : vector<16x16xf32> to vector<8x16xf32>
    %157 = vector.extract_strided_slice %90 {offsets = [0, 0], sizes = [8, 16], strides = [1, 1]} : vector<16x16xf32> to vector<8x16xf32>
    %158 = vector.extract_strided_slice %97 {offsets = [0, 0], sizes = [8, 16], strides = [1, 1]} : vector<16x16xf32> to vector<8x16xf32>
    %cst_115 = arith.constant dense<0.000000e+00> : vector<8x8xf32>
    %159 = tpu.matmul %156, %157, %cst_115 {dimension_numbers = #tpu.dot_dimension_numbers<[1], [1], [0], [0], [0, 0, 1, 0], [], []>} : vector<8x16xf32>, vector<8x16xf32>, vector<8x8xf32> -> vector<8x8xf32>
    %cst_116 = arith.constant dense<0xFF800000> : vector<8xf32>
    %160 = vector.multi_reduction <maximumf>, %159, %cst_116 [1] : vector<8x8xf32> to vector<8xf32>
    %161 = vector.shape_cast %160 : vector<8xf32> to vector<8x1xf32>
    %162 = vector.broadcast %161 : vector<8x1xf32> to vector<8x8xf32>
    %163 = arith.subf %159, %162 : vector<8x8xf32>
    %164 = math.exp %163 : vector<8x8xf32>
    %cst_117 = arith.constant dense<0.000000e+00> : vector<8xf32>
    %165 = vector.multi_reduction <add>, %164, %cst_117 [1] : vector<8x8xf32> to vector<8xf32>
    %166 = vector.shape_cast %165 : vector<8xf32> to vector<8x1xf32>
    %167 = tpu.reciprocal %166 {approx = true} : vector<8x1xf32> -> vector<8x1xf32>
    %168 = vector.broadcast %167 : vector<8x1xf32> to vector<8x8xf32>
    %169 = arith.mulf %164, %168 : vector<8x8xf32>
    %cst_118 = arith.constant dense<0.000000e+00> : vector<8x16xf32>
    %170 = tpu.matmul %169, %158, %cst_118 {dimension_numbers = #tpu.dot_dimension_numbers<[1], [0], [0], [1], [0, 0, 1, 1], [], []>} : vector<8x8xf32>, vector<8x16xf32>, vector<8x16xf32> -> vector<8x16xf32>
    %c3_119 = arith.constant 3 : index
    %c0_120 = arith.constant 0 : index
    %c0_121 = arith.constant 0 : index
    %171 = vector.load %arg11[%c3_119, %c0_120, %c0_121] : memref<4x16x64xf32, #tpu.memory_space<vmem>>, vector<1x16x64xf32>
    %172 = vector.shape_cast %171 : vector<1x16x64xf32> to vector<16x64xf32>
    %cst_122 = arith.constant dense<0.000000e+00> : vector<8x64xf32>
    %173 = tpu.matmul %170, %172, %cst_122 {dimension_numbers = #tpu.dot_dimension_numbers<[1], [0], [0], [1], [0, 0, 1, 1], [], []>} : vector<8x16xf32>, vector<16x64xf32>, vector<8x64xf32> -> vector<8x64xf32>
    %174 = arith.addf %155, %173 : vector<8x64xf32>
    %c0_123 = arith.constant 0 : index
    %c0_124 = arith.constant 0 : index
    %175 = vector.load %arg12[%c0_123, %c0_124] : memref<1x64xf32, #tpu.memory_space<vmem>>, vector<1x64xf32>
    %176 = vector.broadcast %175 : vector<1x64xf32> to vector<8x64xf32>
    %177 = arith.addf %174, %176 : vector<8x64xf32>
    %cst_125 = arith.constant 0.000000e+00 : f32
    %178 = vector.broadcast %cst_125 : f32 to vector<8x64xf32>
    %179 = vector.extract_strided_slice %14 {offsets = [8, 0], sizes = [8, 16], strides = [1, 1]} : vector<16x16xf32> to vector<8x16xf32>
    %180 = vector.extract_strided_slice %21 {offsets = [8, 0], sizes = [8, 16], strides = [1, 1]} : vector<16x16xf32> to vector<8x16xf32>
    %181 = vector.extract_strided_slice %28 {offsets = [8, 0], sizes = [8, 16], strides = [1, 1]} : vector<16x16xf32> to vector<8x16xf32>
    %cst_126 = arith.constant dense<0.000000e+00> : vector<8x8xf32>
    %182 = tpu.matmul %179, %180, %cst_126 {dimension_numbers = #tpu.dot_dimension_numbers<[1], [1], [0], [0], [0, 0, 1, 0], [], []>} : vector<8x16xf32>, vector<8x16xf32>, vector<8x8xf32> -> vector<8x8xf32>
    %cst_127 = arith.constant dense<0xFF800000> : vector<8xf32>
    %183 = vector.multi_reduction <maximumf>, %182, %cst_127 [1] : vector<8x8xf32> to vector<8xf32>
    %184 = vector.shape_cast %183 : vector<8xf32> to vector<8x1xf32>
    %185 = vector.broadcast %184 : vector<8x1xf32> to vector<8x8xf32>
    %186 = arith.subf %182, %185 : vector<8x8xf32>
    %187 = math.exp %186 : vector<8x8xf32>
    %cst_128 = arith.constant dense<0.000000e+00> : vector<8xf32>
    %188 = vector.multi_reduction <add>, %187, %cst_128 [1] : vector<8x8xf32> to vector<8xf32>
    %189 = vector.shape_cast %188 : vector<8xf32> to vector<8x1xf32>
    %190 = tpu.reciprocal %189 {approx = true} : vector<8x1xf32> -> vector<8x1xf32>
    %191 = vector.broadcast %190 : vector<8x1xf32> to vector<8x8xf32>
    %192 = arith.mulf %187, %191 : vector<8x8xf32>
    %cst_129 = arith.constant dense<0.000000e+00> : vector<8x16xf32>
    %193 = tpu.matmul %192, %181, %cst_129 {dimension_numbers = #tpu.dot_dimension_numbers<[1], [0], [0], [1], [0, 0, 1, 1], [], []>} : vector<8x8xf32>, vector<8x16xf32>, vector<8x16xf32> -> vector<8x16xf32>
    %c0_130 = arith.constant 0 : index
    %c0_131 = arith.constant 0 : index
    %c0_132 = arith.constant 0 : index
    %194 = vector.load %arg11[%c0_130, %c0_131, %c0_132] : memref<4x16x64xf32, #tpu.memory_space<vmem>>, vector<1x16x64xf32>
    %195 = vector.shape_cast %194 : vector<1x16x64xf32> to vector<16x64xf32>
    %cst_133 = arith.constant dense<0.000000e+00> : vector<8x64xf32>
    %196 = tpu.matmul %193, %195, %cst_133 {dimension_numbers = #tpu.dot_dimension_numbers<[1], [0], [0], [1], [0, 0, 1, 1], [], []>} : vector<8x16xf32>, vector<16x64xf32>, vector<8x64xf32> -> vector<8x64xf32>
    %197 = arith.addf %178, %196 : vector<8x64xf32>
    %198 = vector.extract_strided_slice %37 {offsets = [8, 0], sizes = [8, 16], strides = [1, 1]} : vector<16x16xf32> to vector<8x16xf32>
    %199 = vector.extract_strided_slice %44 {offsets = [8, 0], sizes = [8, 16], strides = [1, 1]} : vector<16x16xf32> to vector<8x16xf32>
    %200 = vector.extract_strided_slice %51 {offsets = [8, 0], sizes = [8, 16], strides = [1, 1]} : vector<16x16xf32> to vector<8x16xf32>
    %cst_134 = arith.constant dense<0.000000e+00> : vector<8x8xf32>
    %201 = tpu.matmul %198, %199, %cst_134 {dimension_numbers = #tpu.dot_dimension_numbers<[1], [1], [0], [0], [0, 0, 1, 0], [], []>} : vector<8x16xf32>, vector<8x16xf32>, vector<8x8xf32> -> vector<8x8xf32>
    %cst_135 = arith.constant dense<0xFF800000> : vector<8xf32>
    %202 = vector.multi_reduction <maximumf>, %201, %cst_135 [1] : vector<8x8xf32> to vector<8xf32>
    %203 = vector.shape_cast %202 : vector<8xf32> to vector<8x1xf32>
    %204 = vector.broadcast %203 : vector<8x1xf32> to vector<8x8xf32>
    %205 = arith.subf %201, %204 : vector<8x8xf32>
    %206 = math.exp %205 : vector<8x8xf32>
    %cst_136 = arith.constant dense<0.000000e+00> : vector<8xf32>
    %207 = vector.multi_reduction <add>, %206, %cst_136 [1] : vector<8x8xf32> to vector<8xf32>
    %208 = vector.shape_cast %207 : vector<8xf32> to vector<8x1xf32>
    %209 = tpu.reciprocal %208 {approx = true} : vector<8x1xf32> -> vector<8x1xf32>
    %210 = vector.broadcast %209 : vector<8x1xf32> to vector<8x8xf32>
    %211 = arith.mulf %206, %210 : vector<8x8xf32>
    %cst_137 = arith.constant dense<0.000000e+00> : vector<8x16xf32>
    %212 = tpu.matmul %211, %200, %cst_137 {dimension_numbers = #tpu.dot_dimension_numbers<[1], [0], [0], [1], [0, 0, 1, 1], [], []>} : vector<8x8xf32>, vector<8x16xf32>, vector<8x16xf32> -> vector<8x16xf32>
    %c1_138 = arith.constant 1 : index
    %c0_139 = arith.constant 0 : index
    %c0_140 = arith.constant 0 : index
    %213 = vector.load %arg11[%c1_138, %c0_139, %c0_140] : memref<4x16x64xf32, #tpu.memory_space<vmem>>, vector<1x16x64xf32>
    %214 = vector.shape_cast %213 : vector<1x16x64xf32> to vector<16x64xf32>
    %cst_141 = arith.constant dense<0.000000e+00> : vector<8x64xf32>
    %215 = tpu.matmul %212, %214, %cst_141 {dimension_numbers = #tpu.dot_dimension_numbers<[1], [0], [0], [1], [0, 0, 1, 1], [], []>} : vector<8x16xf32>, vector<16x64xf32>, vector<8x64xf32> -> vector<8x64xf32>
    %216 = arith.addf %197, %215 : vector<8x64xf32>
    %217 = vector.extract_strided_slice %60 {offsets = [8, 0], sizes = [8, 16], strides = [1, 1]} : vector<16x16xf32> to vector<8x16xf32>
    %218 = vector.extract_strided_slice %67 {offsets = [8, 0], sizes = [8, 16], strides = [1, 1]} : vector<16x16xf32> to vector<8x16xf32>
    %219 = vector.extract_strided_slice %74 {offsets = [8, 0], sizes = [8, 16], strides = [1, 1]} : vector<16x16xf32> to vector<8x16xf32>
    %cst_142 = arith.constant dense<0.000000e+00> : vector<8x8xf32>
    %220 = tpu.matmul %217, %218, %cst_142 {dimension_numbers = #tpu.dot_dimension_numbers<[1], [1], [0], [0], [0, 0, 1, 0], [], []>} : vector<8x16xf32>, vector<8x16xf32>, vector<8x8xf32> -> vector<8x8xf32>
    %cst_143 = arith.constant dense<0xFF800000> : vector<8xf32>
    %221 = vector.multi_reduction <maximumf>, %220, %cst_143 [1] : vector<8x8xf32> to vector<8xf32>
    %222 = vector.shape_cast %221 : vector<8xf32> to vector<8x1xf32>
    %223 = vector.broadcast %222 : vector<8x1xf32> to vector<8x8xf32>
    %224 = arith.subf %220, %223 : vector<8x8xf32>
    %225 = math.exp %224 : vector<8x8xf32>
    %cst_144 = arith.constant dense<0.000000e+00> : vector<8xf32>
    %226 = vector.multi_reduction <add>, %225, %cst_144 [1] : vector<8x8xf32> to vector<8xf32>
    %227 = vector.shape_cast %226 : vector<8xf32> to vector<8x1xf32>
    %228 = tpu.reciprocal %227 {approx = true} : vector<8x1xf32> -> vector<8x1xf32>
    %229 = vector.broadcast %228 : vector<8x1xf32> to vector<8x8xf32>
    %230 = arith.mulf %225, %229 : vector<8x8xf32>
    %cst_145 = arith.constant dense<0.000000e+00> : vector<8x16xf32>
    %231 = tpu.matmul %230, %219, %cst_145 {dimension_numbers = #tpu.dot_dimension_numbers<[1], [0], [0], [1], [0, 0, 1, 1], [], []>} : vector<8x8xf32>, vector<8x16xf32>, vector<8x16xf32> -> vector<8x16xf32>
    %c2_146 = arith.constant 2 : index
    %c0_147 = arith.constant 0 : index
    %c0_148 = arith.constant 0 : index
    %232 = vector.load %arg11[%c2_146, %c0_147, %c0_148] : memref<4x16x64xf32, #tpu.memory_space<vmem>>, vector<1x16x64xf32>
    %233 = vector.shape_cast %232 : vector<1x16x64xf32> to vector<16x64xf32>
    %cst_149 = arith.constant dense<0.000000e+00> : vector<8x64xf32>
    %234 = tpu.matmul %231, %233, %cst_149 {dimension_numbers = #tpu.dot_dimension_numbers<[1], [0], [0], [1], [0, 0, 1, 1], [], []>} : vector<8x16xf32>, vector<16x64xf32>, vector<8x64xf32> -> vector<8x64xf32>
    %235 = arith.addf %216, %234 : vector<8x64xf32>
    %236 = vector.extract_strided_slice %83 {offsets = [8, 0], sizes = [8, 16], strides = [1, 1]} : vector<16x16xf32> to vector<8x16xf32>
    %237 = vector.extract_strided_slice %90 {offsets = [8, 0], sizes = [8, 16], strides = [1, 1]} : vector<16x16xf32> to vector<8x16xf32>
    %238 = vector.extract_strided_slice %97 {offsets = [8, 0], sizes = [8, 16], strides = [1, 1]} : vector<16x16xf32> to vector<8x16xf32>
    %cst_150 = arith.constant dense<0.000000e+00> : vector<8x8xf32>
    %239 = tpu.matmul %236, %237, %cst_150 {dimension_numbers = #tpu.dot_dimension_numbers<[1], [1], [0], [0], [0, 0, 1, 0], [], []>} : vector<8x16xf32>, vector<8x16xf32>, vector<8x8xf32> -> vector<8x8xf32>
    %cst_151 = arith.constant dense<0xFF800000> : vector<8xf32>
    %240 = vector.multi_reduction <maximumf>, %239, %cst_151 [1] : vector<8x8xf32> to vector<8xf32>
    %241 = vector.shape_cast %240 : vector<8xf32> to vector<8x1xf32>
    %242 = vector.broadcast %241 : vector<8x1xf32> to vector<8x8xf32>
    %243 = arith.subf %239, %242 : vector<8x8xf32>
    %244 = math.exp %243 : vector<8x8xf32>
    %cst_152 = arith.constant dense<0.000000e+00> : vector<8xf32>
    %245 = vector.multi_reduction <add>, %244, %cst_152 [1] : vector<8x8xf32> to vector<8xf32>
    %246 = vector.shape_cast %245 : vector<8xf32> to vector<8x1xf32>
    %247 = tpu.reciprocal %246 {approx = true} : vector<8x1xf32> -> vector<8x1xf32>
    %248 = vector.broadcast %247 : vector<8x1xf32> to vector<8x8xf32>
    %249 = arith.mulf %244, %248 : vector<8x8xf32>
    %cst_153 = arith.constant dense<0.000000e+00> : vector<8x16xf32>
    %250 = tpu.matmul %249, %238, %cst_153 {dimension_numbers = #tpu.dot_dimension_numbers<[1], [0], [0], [1], [0, 0, 1, 1], [], []>} : vector<8x8xf32>, vector<8x16xf32>, vector<8x16xf32> -> vector<8x16xf32>
    %c3_154 = arith.constant 3 : index
    %c0_155 = arith.constant 0 : index
    %c0_156 = arith.constant 0 : index
    %251 = vector.load %arg11[%c3_154, %c0_155, %c0_156] : memref<4x16x64xf32, #tpu.memory_space<vmem>>, vector<1x16x64xf32>
    %252 = vector.shape_cast %251 : vector<1x16x64xf32> to vector<16x64xf32>
    %cst_157 = arith.constant dense<0.000000e+00> : vector<8x64xf32>
    %253 = tpu.matmul %250, %252, %cst_157 {dimension_numbers = #tpu.dot_dimension_numbers<[1], [0], [0], [1], [0, 0, 1, 1], [], []>} : vector<8x16xf32>, vector<16x64xf32>, vector<8x64xf32> -> vector<8x64xf32>
    %254 = arith.addf %235, %253 : vector<8x64xf32>
    %c0_158 = arith.constant 0 : index
    %c0_159 = arith.constant 0 : index
    %255 = vector.load %arg12[%c0_158, %c0_159] : memref<1x64xf32, #tpu.memory_space<vmem>>, vector<1x64xf32>
    %256 = vector.broadcast %255 : vector<1x64xf32> to vector<8x64xf32>
    %257 = arith.addf %254, %256 : vector<8x64xf32>
    %258 = tpu.concatenate %177, %257 in 0 : vector<8x64xf32>, vector<8x64xf32> -> vector<16x64xf32>
    %c0_160 = arith.constant 0 : index
    %c0_161 = arith.constant 0 : index
    %259 = vector.load %arg17[%c0_160, %c0_161] : memref<1x64xf32, #tpu.memory_space<vmem>>, vector<1x64xf32>
    %c0_162 = arith.constant 0 : index
    %c0_163 = arith.constant 0 : index
    %260 = vector.load %arg18[%c0_162, %c0_163] : memref<1x64xf32, #tpu.memory_space<vmem>>, vector<1x64xf32>
    %261 = arith.addf %5, %258 : vector<16x64xf32>
    %cst_164 = arith.constant dense<0.000000e+00> : vector<16xf32>
    %262 = vector.multi_reduction <add>, %261, %cst_164 [1] : vector<16x64xf32> to vector<16xf32>
    %263 = vector.shape_cast %262 : vector<16xf32> to vector<16x1xf32>
    %cst_165 = arith.constant 6.400000e+01 : f32
    %264 = vector.broadcast %cst_165 : f32 to vector<16x1xf32>
    %265 = arith.divf %263, %264 : vector<16x1xf32>
    %266 = vector.broadcast %265 : vector<16x1xf32> to vector<16x64xf32>
    %267 = arith.subf %261, %266 : vector<16x64xf32>
    %268 = arith.mulf %267, %267 : vector<16x64xf32>
    %cst_166 = arith.constant dense<0.000000e+00> : vector<16xf32>
    %269 = vector.multi_reduction <add>, %268, %cst_166 [1] : vector<16x64xf32> to vector<16xf32>
    %270 = vector.shape_cast %269 : vector<16xf32> to vector<16x1xf32>
    %cst_167 = arith.constant 6.400000e+01 : f32
    %271 = vector.broadcast %cst_167 : f32 to vector<16x1xf32>
    %272 = arith.divf %270, %271 : vector<16x1xf32>
    %273 = vector.broadcast %265 : vector<16x1xf32> to vector<16x64xf32>
    %274 = arith.subf %261, %273 : vector<16x64xf32>
    %cst_168 = arith.constant 9.99999974E-6 : f32
    %275 = vector.broadcast %cst_168 : f32 to vector<16x1xf32>
    %276 = arith.addf %272, %275 : vector<16x1xf32>
    %277 = math.rsqrt %276 : vector<16x1xf32>
    %278 = vector.broadcast %277 : vector<16x1xf32> to vector<16x64xf32>
    %279 = arith.mulf %274, %278 : vector<16x64xf32>
    %280 = vector.broadcast %259 : vector<1x64xf32> to vector<16x64xf32>
    %281 = arith.mulf %279, %280 : vector<16x64xf32>
    %282 = vector.broadcast %260 : vector<1x64xf32> to vector<16x64xf32>
    %283 = arith.addf %281, %282 : vector<16x64xf32>
    %284 = arith.truncf %283 : vector<16x64xf32> to vector<16x64xbf16>
    %c0_169 = arith.constant 0 : index
    %c0_170 = arith.constant 0 : index
    %285 = vector.load %arg13[%c0_169, %c0_170] : memref<64x2048xbf16, #tpu.memory_space<vmem>>, vector<64x2048xbf16>
    %cst_171 = arith.constant dense<0.000000e+00> : vector<16x2048xf32>
    %286 = tpu.matmul %284, %285, %cst_171 {dimension_numbers = #tpu.dot_dimension_numbers<[1], [0], [0], [1], [0, 0, 1, 1], [], []>} : vector<16x64xbf16>, vector<64x2048xbf16>, vector<16x2048xf32> -> vector<16x2048xf32>
    %c0_172 = arith.constant 0 : index
    %c0_173 = arith.constant 0 : index
    %287 = vector.load %arg14[%c0_172, %c0_173] : memref<1x2048xf32, #tpu.memory_space<vmem>>, vector<1x2048xf32>
    %288 = vector.broadcast %287 : vector<1x2048xf32> to vector<16x2048xf32>
    %289 = arith.addf %286, %288 : vector<16x2048xf32>
    %cst_174 = arith.constant 0.000000e+00 : f32
    %290 = vector.broadcast %cst_174 : f32 to vector<16x2048xf32>
    %291 = arith.maximumf %289, %290 : vector<16x2048xf32>
    %292 = arith.truncf %291 : vector<16x2048xf32> to vector<16x2048xbf16>
    %c0_175 = arith.constant 0 : index
    %c0_176 = arith.constant 0 : index
    %293 = vector.load %arg15[%c0_175, %c0_176] : memref<2048x64xbf16, #tpu.memory_space<vmem>>, vector<2048x64xbf16>
    %cst_177 = arith.constant dense<0.000000e+00> : vector<16x64xf32>
    %294 = tpu.matmul %292, %293, %cst_177 {dimension_numbers = #tpu.dot_dimension_numbers<[1], [0], [0], [1], [0, 0, 1, 1], [], []>} : vector<16x2048xbf16>, vector<2048x64xbf16>, vector<16x64xf32> -> vector<16x64xf32>
    %c0_178 = arith.constant 0 : index
    %c0_179 = arith.constant 0 : index
    %295 = vector.load %arg16[%c0_178, %c0_179] : memref<1x64xf32, #tpu.memory_space<vmem>>, vector<1x64xf32>
    %296 = vector.broadcast %295 : vector<1x64xf32> to vector<16x64xf32>
    %297 = arith.addf %294, %296 : vector<16x64xf32>
    %c0_180 = arith.constant 0 : index
    %c0_181 = arith.constant 0 : index
    %298 = vector.load %arg19[%c0_180, %c0_181] : memref<1x64xf32, #tpu.memory_space<vmem>>, vector<1x64xf32>
    %c0_182 = arith.constant 0 : index
    %c0_183 = arith.constant 0 : index
    %299 = vector.load %arg20[%c0_182, %c0_183] : memref<1x64xf32, #tpu.memory_space<vmem>>, vector<1x64xf32>
    %300 = arith.addf %283, %297 : vector<16x64xf32>
    %cst_184 = arith.constant dense<0.000000e+00> : vector<16xf32>
    %301 = vector.multi_reduction <add>, %300, %cst_184 [1] : vector<16x64xf32> to vector<16xf32>
    %302 = vector.shape_cast %301 : vector<16xf32> to vector<16x1xf32>
    %cst_185 = arith.constant 6.400000e+01 : f32
    %303 = vector.broadcast %cst_185 : f32 to vector<16x1xf32>
    %304 = arith.divf %302, %303 : vector<16x1xf32>
    %305 = vector.broadcast %304 : vector<16x1xf32> to vector<16x64xf32>
    %306 = arith.subf %300, %305 : vector<16x64xf32>
    %307 = arith.mulf %306, %306 : vector<16x64xf32>
    %cst_186 = arith.constant dense<0.000000e+00> : vector<16xf32>
    %308 = vector.multi_reduction <add>, %307, %cst_186 [1] : vector<16x64xf32> to vector<16xf32>
    %309 = vector.shape_cast %308 : vector<16xf32> to vector<16x1xf32>
    %cst_187 = arith.constant 6.400000e+01 : f32
    %310 = vector.broadcast %cst_187 : f32 to vector<16x1xf32>
    %311 = arith.divf %309, %310 : vector<16x1xf32>
    %312 = vector.broadcast %304 : vector<16x1xf32> to vector<16x64xf32>
    %313 = arith.subf %300, %312 : vector<16x64xf32>
    %cst_188 = arith.constant 9.99999974E-6 : f32
    %314 = vector.broadcast %cst_188 : f32 to vector<16x1xf32>
    %315 = arith.addf %311, %314 : vector<16x1xf32>
    %316 = math.rsqrt %315 : vector<16x1xf32>
    %317 = vector.broadcast %316 : vector<16x1xf32> to vector<16x64xf32>
    %318 = arith.mulf %313, %317 : vector<16x64xf32>
    %319 = vector.broadcast %298 : vector<1x64xf32> to vector<16x64xf32>
    %320 = arith.mulf %318, %319 : vector<16x64xf32>
    %321 = vector.broadcast %299 : vector<1x64xf32> to vector<16x64xf32>
    %322 = arith.addf %320, %321 : vector<16x64xf32>
    %c0_189 = arith.constant 0 : index
    %c0_190 = arith.constant 0 : index
    %c0_191 = arith.constant 0 : index
    %323 = vector.load %arg21[%c0_189, %c0_190, %c0_191] : memref<4x64x16xf32, #tpu.memory_space<vmem>>, vector<1x64x16xf32>
    %324 = vector.shape_cast %323 : vector<1x64x16xf32> to vector<64x16xf32>
    %cst_192 = arith.constant dense<0.000000e+00> : vector<16x16xf32>
    %325 = tpu.matmul %322, %324, %cst_192 {dimension_numbers = #tpu.dot_dimension_numbers<[1], [0], [0], [1], [0, 0, 1, 1], [], []>} : vector<16x64xf32>, vector<64x16xf32>, vector<16x16xf32> -> vector<16x16xf32>
    %c0_193 = arith.constant 0 : index
    %c0_194 = arith.constant 0 : index
    %c0_195 = arith.constant 0 : index
    %326 = vector.load %arg24[%c0_193, %c0_194, %c0_195] : memref<4x1x16xf32, #tpu.memory_space<vmem>>, vector<1x1x16xf32>
    %327 = vector.shape_cast %326 : vector<1x1x16xf32> to vector<1x16xf32>
    %328 = vector.broadcast %327 : vector<1x16xf32> to vector<16x16xf32>
    %329 = arith.addf %325, %328 : vector<16x16xf32>
    %cst_196 = arith.constant 2.500000e-01 : f32
    %330 = vector.broadcast %cst_196 : f32 to vector<16x16xf32>
    %331 = arith.mulf %329, %330 : vector<16x16xf32>
    %c0_197 = arith.constant 0 : index
    %c0_198 = arith.constant 0 : index
    %c0_199 = arith.constant 0 : index
    %332 = vector.load %arg22[%c0_197, %c0_198, %c0_199] : memref<4x64x16xf32, #tpu.memory_space<vmem>>, vector<1x64x16xf32>
    %333 = vector.shape_cast %332 : vector<1x64x16xf32> to vector<64x16xf32>
    %cst_200 = arith.constant dense<0.000000e+00> : vector<16x16xf32>
    %334 = tpu.matmul %322, %333, %cst_200 {dimension_numbers = #tpu.dot_dimension_numbers<[1], [0], [0], [1], [0, 0, 1, 1], [], []>} : vector<16x64xf32>, vector<64x16xf32>, vector<16x16xf32> -> vector<16x16xf32>
    %c0_201 = arith.constant 0 : index
    %c0_202 = arith.constant 0 : index
    %c0_203 = arith.constant 0 : index
    %335 = vector.load %arg25[%c0_201, %c0_202, %c0_203] : memref<4x1x16xf32, #tpu.memory_space<vmem>>, vector<1x1x16xf32>
    %336 = vector.shape_cast %335 : vector<1x1x16xf32> to vector<1x16xf32>
    %337 = vector.broadcast %336 : vector<1x16xf32> to vector<16x16xf32>
    %338 = arith.addf %334, %337 : vector<16x16xf32>
    %c0_204 = arith.constant 0 : index
    %c0_205 = arith.constant 0 : index
    %c0_206 = arith.constant 0 : index
    %339 = vector.load %arg23[%c0_204, %c0_205, %c0_206] : memref<4x64x16xf32, #tpu.memory_space<vmem>>, vector<1x64x16xf32>
    %340 = vector.shape_cast %339 : vector<1x64x16xf32> to vector<64x16xf32>
    %cst_207 = arith.constant dense<0.000000e+00> : vector<16x16xf32>
    %341 = tpu.matmul %322, %340, %cst_207 {dimension_numbers = #tpu.dot_dimension_numbers<[1], [0], [0], [1], [0, 0, 1, 1], [], []>} : vector<16x64xf32>, vector<64x16xf32>, vector<16x16xf32> -> vector<16x16xf32>
    %c0_208 = arith.constant 0 : index
    %c0_209 = arith.constant 0 : index
    %c0_210 = arith.constant 0 : index
    %342 = vector.load %arg26[%c0_208, %c0_209, %c0_210] : memref<4x1x16xf32, #tpu.memory_space<vmem>>, vector<1x1x16xf32>
    %343 = vector.shape_cast %342 : vector<1x1x16xf32> to vector<1x16xf32>
    %344 = vector.broadcast %343 : vector<1x16xf32> to vector<16x16xf32>
    %345 = arith.addf %341, %344 : vector<16x16xf32>
    %c1_211 = arith.constant 1 : index
    %c0_212 = arith.constant 0 : index
    %c0_213 = arith.constant 0 : index
    %346 = vector.load %arg21[%c1_211, %c0_212, %c0_213] : memref<4x64x16xf32, #tpu.memory_space<vmem>>, vector<1x64x16xf32>
    %347 = vector.shape_cast %346 : vector<1x64x16xf32> to vector<64x16xf32>
    %cst_214 = arith.constant dense<0.000000e+00> : vector<16x16xf32>
    %348 = tpu.matmul %322, %347, %cst_214 {dimension_numbers = #tpu.dot_dimension_numbers<[1], [0], [0], [1], [0, 0, 1, 1], [], []>} : vector<16x64xf32>, vector<64x16xf32>, vector<16x16xf32> -> vector<16x16xf32>
    %c1_215 = arith.constant 1 : index
    %c0_216 = arith.constant 0 : index
    %c0_217 = arith.constant 0 : index
    %349 = vector.load %arg24[%c1_215, %c0_216, %c0_217] : memref<4x1x16xf32, #tpu.memory_space<vmem>>, vector<1x1x16xf32>
    %350 = vector.shape_cast %349 : vector<1x1x16xf32> to vector<1x16xf32>
    %351 = vector.broadcast %350 : vector<1x16xf32> to vector<16x16xf32>
    %352 = arith.addf %348, %351 : vector<16x16xf32>
    %cst_218 = arith.constant 2.500000e-01 : f32
    %353 = vector.broadcast %cst_218 : f32 to vector<16x16xf32>
    %354 = arith.mulf %352, %353 : vector<16x16xf32>
    %c1_219 = arith.constant 1 : index
    %c0_220 = arith.constant 0 : index
    %c0_221 = arith.constant 0 : index
    %355 = vector.load %arg22[%c1_219, %c0_220, %c0_221] : memref<4x64x16xf32, #tpu.memory_space<vmem>>, vector<1x64x16xf32>
    %356 = vector.shape_cast %355 : vector<1x64x16xf32> to vector<64x16xf32>
    %cst_222 = arith.constant dense<0.000000e+00> : vector<16x16xf32>
    %357 = tpu.matmul %322, %356, %cst_222 {dimension_numbers = #tpu.dot_dimension_numbers<[1], [0], [0], [1], [0, 0, 1, 1], [], []>} : vector<16x64xf32>, vector<64x16xf32>, vector<16x16xf32> -> vector<16x16xf32>
    %c1_223 = arith.constant 1 : index
    %c0_224 = arith.constant 0 : index
    %c0_225 = arith.constant 0 : index
    %358 = vector.load %arg25[%c1_223, %c0_224, %c0_225] : memref<4x1x16xf32, #tpu.memory_space<vmem>>, vector<1x1x16xf32>
    %359 = vector.shape_cast %358 : vector<1x1x16xf32> to vector<1x16xf32>
    %360 = vector.broadcast %359 : vector<1x16xf32> to vector<16x16xf32>
    %361 = arith.addf %357, %360 : vector<16x16xf32>
    %c1_226 = arith.constant 1 : index
    %c0_227 = arith.constant 0 : index
    %c0_228 = arith.constant 0 : index
    %362 = vector.load %arg23[%c1_226, %c0_227, %c0_228] : memref<4x64x16xf32, #tpu.memory_space<vmem>>, vector<1x64x16xf32>
    %363 = vector.shape_cast %362 : vector<1x64x16xf32> to vector<64x16xf32>
    %cst_229 = arith.constant dense<0.000000e+00> : vector<16x16xf32>
    %364 = tpu.matmul %322, %363, %cst_229 {dimension_numbers = #tpu.dot_dimension_numbers<[1], [0], [0], [1], [0, 0, 1, 1], [], []>} : vector<16x64xf32>, vector<64x16xf32>, vector<16x16xf32> -> vector<16x16xf32>
    %c1_230 = arith.constant 1 : index
    %c0_231 = arith.constant 0 : index
    %c0_232 = arith.constant 0 : index
    %365 = vector.load %arg26[%c1_230, %c0_231, %c0_232] : memref<4x1x16xf32, #tpu.memory_space<vmem>>, vector<1x1x16xf32>
    %366 = vector.shape_cast %365 : vector<1x1x16xf32> to vector<1x16xf32>
    %367 = vector.broadcast %366 : vector<1x16xf32> to vector<16x16xf32>
    %368 = arith.addf %364, %367 : vector<16x16xf32>
    %c2_233 = arith.constant 2 : index
    %c0_234 = arith.constant 0 : index
    %c0_235 = arith.constant 0 : index
    %369 = vector.load %arg21[%c2_233, %c0_234, %c0_235] : memref<4x64x16xf32, #tpu.memory_space<vmem>>, vector<1x64x16xf32>
    %370 = vector.shape_cast %369 : vector<1x64x16xf32> to vector<64x16xf32>
    %cst_236 = arith.constant dense<0.000000e+00> : vector<16x16xf32>
    %371 = tpu.matmul %322, %370, %cst_236 {dimension_numbers = #tpu.dot_dimension_numbers<[1], [0], [0], [1], [0, 0, 1, 1], [], []>} : vector<16x64xf32>, vector<64x16xf32>, vector<16x16xf32> -> vector<16x16xf32>
    %c2_237 = arith.constant 2 : index
    %c0_238 = arith.constant 0 : index
    %c0_239 = arith.constant 0 : index
    %372 = vector.load %arg24[%c2_237, %c0_238, %c0_239] : memref<4x1x16xf32, #tpu.memory_space<vmem>>, vector<1x1x16xf32>
    %373 = vector.shape_cast %372 : vector<1x1x16xf32> to vector<1x16xf32>
    %374 = vector.broadcast %373 : vector<1x16xf32> to vector<16x16xf32>
    %375 = arith.addf %371, %374 : vector<16x16xf32>
    %cst_240 = arith.constant 2.500000e-01 : f32
    %376 = vector.broadcast %cst_240 : f32 to vector<16x16xf32>
    %377 = arith.mulf %375, %376 : vector<16x16xf32>
    %c2_241 = arith.constant 2 : index
    %c0_242 = arith.constant 0 : index
    %c0_243 = arith.constant 0 : index
    %378 = vector.load %arg22[%c2_241, %c0_242, %c0_243] : memref<4x64x16xf32, #tpu.memory_space<vmem>>, vector<1x64x16xf32>
    %379 = vector.shape_cast %378 : vector<1x64x16xf32> to vector<64x16xf32>
    %cst_244 = arith.constant dense<0.000000e+00> : vector<16x16xf32>
    %380 = tpu.matmul %322, %379, %cst_244 {dimension_numbers = #tpu.dot_dimension_numbers<[1], [0], [0], [1], [0, 0, 1, 1], [], []>} : vector<16x64xf32>, vector<64x16xf32>, vector<16x16xf32> -> vector<16x16xf32>
    %c2_245 = arith.constant 2 : index
    %c0_246 = arith.constant 0 : index
    %c0_247 = arith.constant 0 : index
    %381 = vector.load %arg25[%c2_245, %c0_246, %c0_247] : memref<4x1x16xf32, #tpu.memory_space<vmem>>, vector<1x1x16xf32>
    %382 = vector.shape_cast %381 : vector<1x1x16xf32> to vector<1x16xf32>
    %383 = vector.broadcast %382 : vector<1x16xf32> to vector<16x16xf32>
    %384 = arith.addf %380, %383 : vector<16x16xf32>
    %c2_248 = arith.constant 2 : index
    %c0_249 = arith.constant 0 : index
    %c0_250 = arith.constant 0 : index
    %385 = vector.load %arg23[%c2_248, %c0_249, %c0_250] : memref<4x64x16xf32, #tpu.memory_space<vmem>>, vector<1x64x16xf32>
    %386 = vector.shape_cast %385 : vector<1x64x16xf32> to vector<64x16xf32>
    %cst_251 = arith.constant dense<0.000000e+00> : vector<16x16xf32>
    %387 = tpu.matmul %322, %386, %cst_251 {dimension_numbers = #tpu.dot_dimension_numbers<[1], [0], [0], [1], [0, 0, 1, 1], [], []>} : vector<16x64xf32>, vector<64x16xf32>, vector<16x16xf32> -> vector<16x16xf32>
    %c2_252 = arith.constant 2 : index
    %c0_253 = arith.constant 0 : index
    %c0_254 = arith.constant 0 : index
    %388 = vector.load %arg26[%c2_252, %c0_253, %c0_254] : memref<4x1x16xf32, #tpu.memory_space<vmem>>, vector<1x1x16xf32>
    %389 = vector.shape_cast %388 : vector<1x1x16xf32> to vector<1x16xf32>
    %390 = vector.broadcast %389 : vector<1x16xf32> to vector<16x16xf32>
    %391 = arith.addf %387, %390 : vector<16x16xf32>
    %c3_255 = arith.constant 3 : index
    %c0_256 = arith.constant 0 : index
    %c0_257 = arith.constant 0 : index
    %392 = vector.load %arg21[%c3_255, %c0_256, %c0_257] : memref<4x64x16xf32, #tpu.memory_space<vmem>>, vector<1x64x16xf32>
    %393 = vector.shape_cast %392 : vector<1x64x16xf32> to vector<64x16xf32>
    %cst_258 = arith.constant dense<0.000000e+00> : vector<16x16xf32>
    %394 = tpu.matmul %322, %393, %cst_258 {dimension_numbers = #tpu.dot_dimension_numbers<[1], [0], [0], [1], [0, 0, 1, 1], [], []>} : vector<16x64xf32>, vector<64x16xf32>, vector<16x16xf32> -> vector<16x16xf32>
    %c3_259 = arith.constant 3 : index
    %c0_260 = arith.constant 0 : index
    %c0_261 = arith.constant 0 : index
    %395 = vector.load %arg24[%c3_259, %c0_260, %c0_261] : memref<4x1x16xf32, #tpu.memory_space<vmem>>, vector<1x1x16xf32>
    %396 = vector.shape_cast %395 : vector<1x1x16xf32> to vector<1x16xf32>
    %397 = vector.broadcast %396 : vector<1x16xf32> to vector<16x16xf32>
    %398 = arith.addf %394, %397 : vector<16x16xf32>
    %cst_262 = arith.constant 2.500000e-01 : f32
    %399 = vector.broadcast %cst_262 : f32 to vector<16x16xf32>
    %400 = arith.mulf %398, %399 : vector<16x16xf32>
    %c3_263 = arith.constant 3 : index
    %c0_264 = arith.constant 0 : index
    %c0_265 = arith.constant 0 : index
    %401 = vector.load %arg22[%c3_263, %c0_264, %c0_265] : memref<4x64x16xf32, #tpu.memory_space<vmem>>, vector<1x64x16xf32>
    %402 = vector.shape_cast %401 : vector<1x64x16xf32> to vector<64x16xf32>
    %cst_266 = arith.constant dense<0.000000e+00> : vector<16x16xf32>
    %403 = tpu.matmul %322, %402, %cst_266 {dimension_numbers = #tpu.dot_dimension_numbers<[1], [0], [0], [1], [0, 0, 1, 1], [], []>} : vector<16x64xf32>, vector<64x16xf32>, vector<16x16xf32> -> vector<16x16xf32>
    %c3_267 = arith.constant 3 : index
    %c0_268 = arith.constant 0 : index
    %c0_269 = arith.constant 0 : index
    %404 = vector.load %arg25[%c3_267, %c0_268, %c0_269] : memref<4x1x16xf32, #tpu.memory_space<vmem>>, vector<1x1x16xf32>
    %405 = vector.shape_cast %404 : vector<1x1x16xf32> to vector<1x16xf32>
    %406 = vector.broadcast %405 : vector<1x16xf32> to vector<16x16xf32>
    %407 = arith.addf %403, %406 : vector<16x16xf32>
    %c3_270 = arith.constant 3 : index
    %c0_271 = arith.constant 0 : index
    %c0_272 = arith.constant 0 : index
    %408 = vector.load %arg23[%c3_270, %c0_271, %c0_272] : memref<4x64x16xf32, #tpu.memory_space<vmem>>, vector<1x64x16xf32>
    %409 = vector.shape_cast %408 : vector<1x64x16xf32> to vector<64x16xf32>
    %cst_273 = arith.constant dense<0.000000e+00> : vector<16x16xf32>
    %410 = tpu.matmul %322, %409, %cst_273 {dimension_numbers = #tpu.dot_dimension_numbers<[1], [0], [0], [1], [0, 0, 1, 1], [], []>} : vector<16x64xf32>, vector<64x16xf32>, vector<16x16xf32> -> vector<16x16xf32>
    %c3_274 = arith.constant 3 : index
    %c0_275 = arith.constant 0 : index
    %c0_276 = arith.constant 0 : index
    %411 = vector.load %arg26[%c3_274, %c0_275, %c0_276] : memref<4x1x16xf32, #tpu.memory_space<vmem>>, vector<1x1x16xf32>
    %412 = vector.shape_cast %411 : vector<1x1x16xf32> to vector<1x16xf32>
    %413 = vector.broadcast %412 : vector<1x16xf32> to vector<16x16xf32>
    %414 = arith.addf %410, %413 : vector<16x16xf32>
    %cst_277 = arith.constant 0.000000e+00 : f32
    %415 = vector.broadcast %cst_277 : f32 to vector<8x64xf32>
    %416 = vector.extract_strided_slice %331 {offsets = [0, 0], sizes = [8, 16], strides = [1, 1]} : vector<16x16xf32> to vector<8x16xf32>
    %417 = vector.extract_strided_slice %338 {offsets = [0, 0], sizes = [8, 16], strides = [1, 1]} : vector<16x16xf32> to vector<8x16xf32>
    %418 = vector.extract_strided_slice %345 {offsets = [0, 0], sizes = [8, 16], strides = [1, 1]} : vector<16x16xf32> to vector<8x16xf32>
    %cst_278 = arith.constant dense<0.000000e+00> : vector<8x8xf32>
    %419 = tpu.matmul %416, %417, %cst_278 {dimension_numbers = #tpu.dot_dimension_numbers<[1], [1], [0], [0], [0, 0, 1, 0], [], []>} : vector<8x16xf32>, vector<8x16xf32>, vector<8x8xf32> -> vector<8x8xf32>
    %cst_279 = arith.constant dense<0xFF800000> : vector<8xf32>
    %420 = vector.multi_reduction <maximumf>, %419, %cst_279 [1] : vector<8x8xf32> to vector<8xf32>
    %421 = vector.shape_cast %420 : vector<8xf32> to vector<8x1xf32>
    %422 = vector.broadcast %421 : vector<8x1xf32> to vector<8x8xf32>
    %423 = arith.subf %419, %422 : vector<8x8xf32>
    %424 = math.exp %423 : vector<8x8xf32>
    %cst_280 = arith.constant dense<0.000000e+00> : vector<8xf32>
    %425 = vector.multi_reduction <add>, %424, %cst_280 [1] : vector<8x8xf32> to vector<8xf32>
    %426 = vector.shape_cast %425 : vector<8xf32> to vector<8x1xf32>
    %427 = tpu.reciprocal %426 {approx = true} : vector<8x1xf32> -> vector<8x1xf32>
    %428 = vector.broadcast %427 : vector<8x1xf32> to vector<8x8xf32>
    %429 = arith.mulf %424, %428 : vector<8x8xf32>
    %cst_281 = arith.constant dense<0.000000e+00> : vector<8x16xf32>
    %430 = tpu.matmul %429, %418, %cst_281 {dimension_numbers = #tpu.dot_dimension_numbers<[1], [0], [0], [1], [0, 0, 1, 1], [], []>} : vector<8x8xf32>, vector<8x16xf32>, vector<8x16xf32> -> vector<8x16xf32>
    %c0_282 = arith.constant 0 : index
    %c0_283 = arith.constant 0 : index
    %c0_284 = arith.constant 0 : index
    %431 = vector.load %arg27[%c0_282, %c0_283, %c0_284] : memref<4x16x64xf32, #tpu.memory_space<vmem>>, vector<1x16x64xf32>
    %432 = vector.shape_cast %431 : vector<1x16x64xf32> to vector<16x64xf32>
    %cst_285 = arith.constant dense<0.000000e+00> : vector<8x64xf32>
    %433 = tpu.matmul %430, %432, %cst_285 {dimension_numbers = #tpu.dot_dimension_numbers<[1], [0], [0], [1], [0, 0, 1, 1], [], []>} : vector<8x16xf32>, vector<16x64xf32>, vector<8x64xf32> -> vector<8x64xf32>
    %434 = arith.addf %415, %433 : vector<8x64xf32>
    %435 = vector.extract_strided_slice %354 {offsets = [0, 0], sizes = [8, 16], strides = [1, 1]} : vector<16x16xf32> to vector<8x16xf32>
    %436 = vector.extract_strided_slice %361 {offsets = [0, 0], sizes = [8, 16], strides = [1, 1]} : vector<16x16xf32> to vector<8x16xf32>
    %437 = vector.extract_strided_slice %368 {offsets = [0, 0], sizes = [8, 16], strides = [1, 1]} : vector<16x16xf32> to vector<8x16xf32>
    %cst_286 = arith.constant dense<0.000000e+00> : vector<8x8xf32>
    %438 = tpu.matmul %435, %436, %cst_286 {dimension_numbers = #tpu.dot_dimension_numbers<[1], [1], [0], [0], [0, 0, 1, 0], [], []>} : vector<8x16xf32>, vector<8x16xf32>, vector<8x8xf32> -> vector<8x8xf32>
    %cst_287 = arith.constant dense<0xFF800000> : vector<8xf32>
    %439 = vector.multi_reduction <maximumf>, %438, %cst_287 [1] : vector<8x8xf32> to vector<8xf32>
    %440 = vector.shape_cast %439 : vector<8xf32> to vector<8x1xf32>
    %441 = vector.broadcast %440 : vector<8x1xf32> to vector<8x8xf32>
    %442 = arith.subf %438, %441 : vector<8x8xf32>
    %443 = math.exp %442 : vector<8x8xf32>
    %cst_288 = arith.constant dense<0.000000e+00> : vector<8xf32>
    %444 = vector.multi_reduction <add>, %443, %cst_288 [1] : vector<8x8xf32> to vector<8xf32>
    %445 = vector.shape_cast %444 : vector<8xf32> to vector<8x1xf32>
    %446 = tpu.reciprocal %445 {approx = true} : vector<8x1xf32> -> vector<8x1xf32>
    %447 = vector.broadcast %446 : vector<8x1xf32> to vector<8x8xf32>
    %448 = arith.mulf %443, %447 : vector<8x8xf32>
    %cst_289 = arith.constant dense<0.000000e+00> : vector<8x16xf32>
    %449 = tpu.matmul %448, %437, %cst_289 {dimension_numbers = #tpu.dot_dimension_numbers<[1], [0], [0], [1], [0, 0, 1, 1], [], []>} : vector<8x8xf32>, vector<8x16xf32>, vector<8x16xf32> -> vector<8x16xf32>
    %c1_290 = arith.constant 1 : index
    %c0_291 = arith.constant 0 : index
    %c0_292 = arith.constant 0 : index
    %450 = vector.load %arg27[%c1_290, %c0_291, %c0_292] : memref<4x16x64xf32, #tpu.memory_space<vmem>>, vector<1x16x64xf32>
    %451 = vector.shape_cast %450 : vector<1x16x64xf32> to vector<16x64xf32>
    %cst_293 = arith.constant dense<0.000000e+00> : vector<8x64xf32>
    %452 = tpu.matmul %449, %451, %cst_293 {dimension_numbers = #tpu.dot_dimension_numbers<[1], [0], [0], [1], [0, 0, 1, 1], [], []>} : vector<8x16xf32>, vector<16x64xf32>, vector<8x64xf32> -> vector<8x64xf32>
    %453 = arith.addf %434, %452 : vector<8x64xf32>
    %454 = vector.extract_strided_slice %377 {offsets = [0, 0], sizes = [8, 16], strides = [1, 1]} : vector<16x16xf32> to vector<8x16xf32>
    %455 = vector.extract_strided_slice %384 {offsets = [0, 0], sizes = [8, 16], strides = [1, 1]} : vector<16x16xf32> to vector<8x16xf32>
    %456 = vector.extract_strided_slice %391 {offsets = [0, 0], sizes = [8, 16], strides = [1, 1]} : vector<16x16xf32> to vector<8x16xf32>
    %cst_294 = arith.constant dense<0.000000e+00> : vector<8x8xf32>
    %457 = tpu.matmul %454, %455, %cst_294 {dimension_numbers = #tpu.dot_dimension_numbers<[1], [1], [0], [0], [0, 0, 1, 0], [], []>} : vector<8x16xf32>, vector<8x16xf32>, vector<8x8xf32> -> vector<8x8xf32>
    %cst_295 = arith.constant dense<0xFF800000> : vector<8xf32>
    %458 = vector.multi_reduction <maximumf>, %457, %cst_295 [1] : vector<8x8xf32> to vector<8xf32>
    %459 = vector.shape_cast %458 : vector<8xf32> to vector<8x1xf32>
    %460 = vector.broadcast %459 : vector<8x1xf32> to vector<8x8xf32>
    %461 = arith.subf %457, %460 : vector<8x8xf32>
    %462 = math.exp %461 : vector<8x8xf32>
    %cst_296 = arith.constant dense<0.000000e+00> : vector<8xf32>
    %463 = vector.multi_reduction <add>, %462, %cst_296 [1] : vector<8x8xf32> to vector<8xf32>
    %464 = vector.shape_cast %463 : vector<8xf32> to vector<8x1xf32>
    %465 = tpu.reciprocal %464 {approx = true} : vector<8x1xf32> -> vector<8x1xf32>
    %466 = vector.broadcast %465 : vector<8x1xf32> to vector<8x8xf32>
    %467 = arith.mulf %462, %466 : vector<8x8xf32>
    %cst_297 = arith.constant dense<0.000000e+00> : vector<8x16xf32>
    %468 = tpu.matmul %467, %456, %cst_297 {dimension_numbers = #tpu.dot_dimension_numbers<[1], [0], [0], [1], [0, 0, 1, 1], [], []>} : vector<8x8xf32>, vector<8x16xf32>, vector<8x16xf32> -> vector<8x16xf32>
    %c2_298 = arith.constant 2 : index
    %c0_299 = arith.constant 0 : index
    %c0_300 = arith.constant 0 : index
    %469 = vector.load %arg27[%c2_298, %c0_299, %c0_300] : memref<4x16x64xf32, #tpu.memory_space<vmem>>, vector<1x16x64xf32>
    %470 = vector.shape_cast %469 : vector<1x16x64xf32> to vector<16x64xf32>
    %cst_301 = arith.constant dense<0.000000e+00> : vector<8x64xf32>
    %471 = tpu.matmul %468, %470, %cst_301 {dimension_numbers = #tpu.dot_dimension_numbers<[1], [0], [0], [1], [0, 0, 1, 1], [], []>} : vector<8x16xf32>, vector<16x64xf32>, vector<8x64xf32> -> vector<8x64xf32>
    %472 = arith.addf %453, %471 : vector<8x64xf32>
    %473 = vector.extract_strided_slice %400 {offsets = [0, 0], sizes = [8, 16], strides = [1, 1]} : vector<16x16xf32> to vector<8x16xf32>
    %474 = vector.extract_strided_slice %407 {offsets = [0, 0], sizes = [8, 16], strides = [1, 1]} : vector<16x16xf32> to vector<8x16xf32>
    %475 = vector.extract_strided_slice %414 {offsets = [0, 0], sizes = [8, 16], strides = [1, 1]} : vector<16x16xf32> to vector<8x16xf32>
    %cst_302 = arith.constant dense<0.000000e+00> : vector<8x8xf32>
    %476 = tpu.matmul %473, %474, %cst_302 {dimension_numbers = #tpu.dot_dimension_numbers<[1], [1], [0], [0], [0, 0, 1, 0], [], []>} : vector<8x16xf32>, vector<8x16xf32>, vector<8x8xf32> -> vector<8x8xf32>
    %cst_303 = arith.constant dense<0xFF800000> : vector<8xf32>
    %477 = vector.multi_reduction <maximumf>, %476, %cst_303 [1] : vector<8x8xf32> to vector<8xf32>
    %478 = vector.shape_cast %477 : vector<8xf32> to vector<8x1xf32>
    %479 = vector.broadcast %478 : vector<8x1xf32> to vector<8x8xf32>
    %480 = arith.subf %476, %479 : vector<8x8xf32>
    %481 = math.exp %480 : vector<8x8xf32>
    %cst_304 = arith.constant dense<0.000000e+00> : vector<8xf32>
    %482 = vector.multi_reduction <add>, %481, %cst_304 [1] : vector<8x8xf32> to vector<8xf32>
    %483 = vector.shape_cast %482 : vector<8xf32> to vector<8x1xf32>
    %484 = tpu.reciprocal %483 {approx = true} : vector<8x1xf32> -> vector<8x1xf32>
    %485 = vector.broadcast %484 : vector<8x1xf32> to vector<8x8xf32>
    %486 = arith.mulf %481, %485 : vector<8x8xf32>
    %cst_305 = arith.constant dense<0.000000e+00> : vector<8x16xf32>
    %487 = tpu.matmul %486, %475, %cst_305 {dimension_numbers = #tpu.dot_dimension_numbers<[1], [0], [0], [1], [0, 0, 1, 1], [], []>} : vector<8x8xf32>, vector<8x16xf32>, vector<8x16xf32> -> vector<8x16xf32>
    %c3_306 = arith.constant 3 : index
    %c0_307 = arith.constant 0 : index
    %c0_308 = arith.constant 0 : index
    %488 = vector.load %arg27[%c3_306, %c0_307, %c0_308] : memref<4x16x64xf32, #tpu.memory_space<vmem>>, vector<1x16x64xf32>
    %489 = vector.shape_cast %488 : vector<1x16x64xf32> to vector<16x64xf32>
    %cst_309 = arith.constant dense<0.000000e+00> : vector<8x64xf32>
    %490 = tpu.matmul %487, %489, %cst_309 {dimension_numbers = #tpu.dot_dimension_numbers<[1], [0], [0], [1], [0, 0, 1, 1], [], []>} : vector<8x16xf32>, vector<16x64xf32>, vector<8x64xf32> -> vector<8x64xf32>
    %491 = arith.addf %472, %490 : vector<8x64xf32>
    %c0_310 = arith.constant 0 : index
    %c0_311 = arith.constant 0 : index
    %492 = vector.load %arg28[%c0_310, %c0_311] : memref<1x64xf32, #tpu.memory_space<vmem>>, vector<1x64xf32>
    %493 = vector.broadcast %492 : vector<1x64xf32> to vector<8x64xf32>
    %494 = arith.addf %491, %493 : vector<8x64xf32>
    %cst_312 = arith.constant 0.000000e+00 : f32
    %495 = vector.broadcast %cst_312 : f32 to vector<8x64xf32>
    %496 = vector.extract_strided_slice %331 {offsets = [8, 0], sizes = [8, 16], strides = [1, 1]} : vector<16x16xf32> to vector<8x16xf32>
    %497 = vector.extract_strided_slice %338 {offsets = [8, 0], sizes = [8, 16], strides = [1, 1]} : vector<16x16xf32> to vector<8x16xf32>
    %498 = vector.extract_strided_slice %345 {offsets = [8, 0], sizes = [8, 16], strides = [1, 1]} : vector<16x16xf32> to vector<8x16xf32>
    %cst_313 = arith.constant dense<0.000000e+00> : vector<8x8xf32>
    %499 = tpu.matmul %496, %497, %cst_313 {dimension_numbers = #tpu.dot_dimension_numbers<[1], [1], [0], [0], [0, 0, 1, 0], [], []>} : vector<8x16xf32>, vector<8x16xf32>, vector<8x8xf32> -> vector<8x8xf32>
    %cst_314 = arith.constant dense<0xFF800000> : vector<8xf32>
    %500 = vector.multi_reduction <maximumf>, %499, %cst_314 [1] : vector<8x8xf32> to vector<8xf32>
    %501 = vector.shape_cast %500 : vector<8xf32> to vector<8x1xf32>
    %502 = vector.broadcast %501 : vector<8x1xf32> to vector<8x8xf32>
    %503 = arith.subf %499, %502 : vector<8x8xf32>
    %504 = math.exp %503 : vector<8x8xf32>
    %cst_315 = arith.constant dense<0.000000e+00> : vector<8xf32>
    %505 = vector.multi_reduction <add>, %504, %cst_315 [1] : vector<8x8xf32> to vector<8xf32>
    %506 = vector.shape_cast %505 : vector<8xf32> to vector<8x1xf32>
    %507 = tpu.reciprocal %506 {approx = true} : vector<8x1xf32> -> vector<8x1xf32>
    %508 = vector.broadcast %507 : vector<8x1xf32> to vector<8x8xf32>
    %509 = arith.mulf %504, %508 : vector<8x8xf32>
    %cst_316 = arith.constant dense<0.000000e+00> : vector<8x16xf32>
    %510 = tpu.matmul %509, %498, %cst_316 {dimension_numbers = #tpu.dot_dimension_numbers<[1], [0], [0], [1], [0, 0, 1, 1], [], []>} : vector<8x8xf32>, vector<8x16xf32>, vector<8x16xf32> -> vector<8x16xf32>
    %c0_317 = arith.constant 0 : index
    %c0_318 = arith.constant 0 : index
    %c0_319 = arith.constant 0 : index
    %511 = vector.load %arg27[%c0_317, %c0_318, %c0_319] : memref<4x16x64xf32, #tpu.memory_space<vmem>>, vector<1x16x64xf32>
    %512 = vector.shape_cast %511 : vector<1x16x64xf32> to vector<16x64xf32>
    %cst_320 = arith.constant dense<0.000000e+00> : vector<8x64xf32>
    %513 = tpu.matmul %510, %512, %cst_320 {dimension_numbers = #tpu.dot_dimension_numbers<[1], [0], [0], [1], [0, 0, 1, 1], [], []>} : vector<8x16xf32>, vector<16x64xf32>, vector<8x64xf32> -> vector<8x64xf32>
    %514 = arith.addf %495, %513 : vector<8x64xf32>
    %515 = vector.extract_strided_slice %354 {offsets = [8, 0], sizes = [8, 16], strides = [1, 1]} : vector<16x16xf32> to vector<8x16xf32>
    %516 = vector.extract_strided_slice %361 {offsets = [8, 0], sizes = [8, 16], strides = [1, 1]} : vector<16x16xf32> to vector<8x16xf32>
    %517 = vector.extract_strided_slice %368 {offsets = [8, 0], sizes = [8, 16], strides = [1, 1]} : vector<16x16xf32> to vector<8x16xf32>
    %cst_321 = arith.constant dense<0.000000e+00> : vector<8x8xf32>
    %518 = tpu.matmul %515, %516, %cst_321 {dimension_numbers = #tpu.dot_dimension_numbers<[1], [1], [0], [0], [0, 0, 1, 0], [], []>} : vector<8x16xf32>, vector<8x16xf32>, vector<8x8xf32> -> vector<8x8xf32>
    %cst_322 = arith.constant dense<0xFF800000> : vector<8xf32>
    %519 = vector.multi_reduction <maximumf>, %518, %cst_322 [1] : vector<8x8xf32> to vector<8xf32>
    %520 = vector.shape_cast %519 : vector<8xf32> to vector<8x1xf32>
    %521 = vector.broadcast %520 : vector<8x1xf32> to vector<8x8xf32>
    %522 = arith.subf %518, %521 : vector<8x8xf32>
    %523 = math.exp %522 : vector<8x8xf32>
    %cst_323 = arith.constant dense<0.000000e+00> : vector<8xf32>
    %524 = vector.multi_reduction <add>, %523, %cst_323 [1] : vector<8x8xf32> to vector<8xf32>
    %525 = vector.shape_cast %524 : vector<8xf32> to vector<8x1xf32>
    %526 = tpu.reciprocal %525 {approx = true} : vector<8x1xf32> -> vector<8x1xf32>
    %527 = vector.broadcast %526 : vector<8x1xf32> to vector<8x8xf32>
    %528 = arith.mulf %523, %527 : vector<8x8xf32>
    %cst_324 = arith.constant dense<0.000000e+00> : vector<8x16xf32>
    %529 = tpu.matmul %528, %517, %cst_324 {dimension_numbers = #tpu.dot_dimension_numbers<[1], [0], [0], [1], [0, 0, 1, 1], [], []>} : vector<8x8xf32>, vector<8x16xf32>, vector<8x16xf32> -> vector<8x16xf32>
    %c1_325 = arith.constant 1 : index
    %c0_326 = arith.constant 0 : index
    %c0_327 = arith.constant 0 : index
    %530 = vector.load %arg27[%c1_325, %c0_326, %c0_327] : memref<4x16x64xf32, #tpu.memory_space<vmem>>, vector<1x16x64xf32>
    %531 = vector.shape_cast %530 : vector<1x16x64xf32> to vector<16x64xf32>
    %cst_328 = arith.constant dense<0.000000e+00> : vector<8x64xf32>
    %532 = tpu.matmul %529, %531, %cst_328 {dimension_numbers = #tpu.dot_dimension_numbers<[1], [0], [0], [1], [0, 0, 1, 1], [], []>} : vector<8x16xf32>, vector<16x64xf32>, vector<8x64xf32> -> vector<8x64xf32>
    %533 = arith.addf %514, %532 : vector<8x64xf32>
    %534 = vector.extract_strided_slice %377 {offsets = [8, 0], sizes = [8, 16], strides = [1, 1]} : vector<16x16xf32> to vector<8x16xf32>
    %535 = vector.extract_strided_slice %384 {offsets = [8, 0], sizes = [8, 16], strides = [1, 1]} : vector<16x16xf32> to vector<8x16xf32>
    %536 = vector.extract_strided_slice %391 {offsets = [8, 0], sizes = [8, 16], strides = [1, 1]} : vector<16x16xf32> to vector<8x16xf32>
    %cst_329 = arith.constant dense<0.000000e+00> : vector<8x8xf32>
    %537 = tpu.matmul %534, %535, %cst_329 {dimension_numbers = #tpu.dot_dimension_numbers<[1], [1], [0], [0], [0, 0, 1, 0], [], []>} : vector<8x16xf32>, vector<8x16xf32>, vector<8x8xf32> -> vector<8x8xf32>
    %cst_330 = arith.constant dense<0xFF800000> : vector<8xf32>
    %538 = vector.multi_reduction <maximumf>, %537, %cst_330 [1] : vector<8x8xf32> to vector<8xf32>
    %539 = vector.shape_cast %538 : vector<8xf32> to vector<8x1xf32>
    %540 = vector.broadcast %539 : vector<8x1xf32> to vector<8x8xf32>
    %541 = arith.subf %537, %540 : vector<8x8xf32>
    %542 = math.exp %541 : vector<8x8xf32>
    %cst_331 = arith.constant dense<0.000000e+00> : vector<8xf32>
    %543 = vector.multi_reduction <add>, %542, %cst_331 [1] : vector<8x8xf32> to vector<8xf32>
    %544 = vector.shape_cast %543 : vector<8xf32> to vector<8x1xf32>
    %545 = tpu.reciprocal %544 {approx = true} : vector<8x1xf32> -> vector<8x1xf32>
    %546 = vector.broadcast %545 : vector<8x1xf32> to vector<8x8xf32>
    %547 = arith.mulf %542, %546 : vector<8x8xf32>
    %cst_332 = arith.constant dense<0.000000e+00> : vector<8x16xf32>
    %548 = tpu.matmul %547, %536, %cst_332 {dimension_numbers = #tpu.dot_dimension_numbers<[1], [0], [0], [1], [0, 0, 1, 1], [], []>} : vector<8x8xf32>, vector<8x16xf32>, vector<8x16xf32> -> vector<8x16xf32>
    %c2_333 = arith.constant 2 : index
    %c0_334 = arith.constant 0 : index
    %c0_335 = arith.constant 0 : index
    %549 = vector.load %arg27[%c2_333, %c0_334, %c0_335] : memref<4x16x64xf32, #tpu.memory_space<vmem>>, vector<1x16x64xf32>
    %550 = vector.shape_cast %549 : vector<1x16x64xf32> to vector<16x64xf32>
    %cst_336 = arith.constant dense<0.000000e+00> : vector<8x64xf32>
    %551 = tpu.matmul %548, %550, %cst_336 {dimension_numbers = #tpu.dot_dimension_numbers<[1], [0], [0], [1], [0, 0, 1, 1], [], []>} : vector<8x16xf32>, vector<16x64xf32>, vector<8x64xf32> -> vector<8x64xf32>
    %552 = arith.addf %533, %551 : vector<8x64xf32>
    %553 = vector.extract_strided_slice %400 {offsets = [8, 0], sizes = [8, 16], strides = [1, 1]} : vector<16x16xf32> to vector<8x16xf32>
    %554 = vector.extract_strided_slice %407 {offsets = [8, 0], sizes = [8, 16], strides = [1, 1]} : vector<16x16xf32> to vector<8x16xf32>
    %555 = vector.extract_strided_slice %414 {offsets = [8, 0], sizes = [8, 16], strides = [1, 1]} : vector<16x16xf32> to vector<8x16xf32>
    %cst_337 = arith.constant dense<0.000000e+00> : vector<8x8xf32>
    %556 = tpu.matmul %553, %554, %cst_337 {dimension_numbers = #tpu.dot_dimension_numbers<[1], [1], [0], [0], [0, 0, 1, 0], [], []>} : vector<8x16xf32>, vector<8x16xf32>, vector<8x8xf32> -> vector<8x8xf32>
    %cst_338 = arith.constant dense<0xFF800000> : vector<8xf32>
    %557 = vector.multi_reduction <maximumf>, %556, %cst_338 [1] : vector<8x8xf32> to vector<8xf32>
    %558 = vector.shape_cast %557 : vector<8xf32> to vector<8x1xf32>
    %559 = vector.broadcast %558 : vector<8x1xf32> to vector<8x8xf32>
    %560 = arith.subf %556, %559 : vector<8x8xf32>
    %561 = math.exp %560 : vector<8x8xf32>
    %cst_339 = arith.constant dense<0.000000e+00> : vector<8xf32>
    %562 = vector.multi_reduction <add>, %561, %cst_339 [1] : vector<8x8xf32> to vector<8xf32>
    %563 = vector.shape_cast %562 : vector<8xf32> to vector<8x1xf32>
    %564 = tpu.reciprocal %563 {approx = true} : vector<8x1xf32> -> vector<8x1xf32>
    %565 = vector.broadcast %564 : vector<8x1xf32> to vector<8x8xf32>
    %566 = arith.mulf %561, %565 : vector<8x8xf32>
    %cst_340 = arith.constant dense<0.000000e+00> : vector<8x16xf32>
    %567 = tpu.matmul %566, %555, %cst_340 {dimension_numbers = #tpu.dot_dimension_numbers<[1], [0], [0], [1], [0, 0, 1, 1], [], []>} : vector<8x8xf32>, vector<8x16xf32>, vector<8x16xf32> -> vector<8x16xf32>
    %c3_341 = arith.constant 3 : index
    %c0_342 = arith.constant 0 : index
    %c0_343 = arith.constant 0 : index
    %568 = vector.load %arg27[%c3_341, %c0_342, %c0_343] : memref<4x16x64xf32, #tpu.memory_space<vmem>>, vector<1x16x64xf32>
    %569 = vector.shape_cast %568 : vector<1x16x64xf32> to vector<16x64xf32>
    %cst_344 = arith.constant dense<0.000000e+00> : vector<8x64xf32>
    %570 = tpu.matmul %567, %569, %cst_344 {dimension_numbers = #tpu.dot_dimension_numbers<[1], [0], [0], [1], [0, 0, 1, 1], [], []>} : vector<8x16xf32>, vector<16x64xf32>, vector<8x64xf32> -> vector<8x64xf32>
    %571 = arith.addf %552, %570 : vector<8x64xf32>
    %c0_345 = arith.constant 0 : index
    %c0_346 = arith.constant 0 : index
    %572 = vector.load %arg28[%c0_345, %c0_346] : memref<1x64xf32, #tpu.memory_space<vmem>>, vector<1x64xf32>
    %573 = vector.broadcast %572 : vector<1x64xf32> to vector<8x64xf32>
    %574 = arith.addf %571, %573 : vector<8x64xf32>
    %575 = tpu.concatenate %494, %574 in 0 : vector<8x64xf32>, vector<8x64xf32> -> vector<16x64xf32>
    %c0_347 = arith.constant 0 : index
    %c0_348 = arith.constant 0 : index
    %576 = vector.load %arg33[%c0_347, %c0_348] : memref<1x64xf32, #tpu.memory_space<vmem>>, vector<1x64xf32>
    %c0_349 = arith.constant 0 : index
    %c0_350 = arith.constant 0 : index
    %577 = vector.load %arg34[%c0_349, %c0_350] : memref<1x64xf32, #tpu.memory_space<vmem>>, vector<1x64xf32>
    %578 = arith.addf %322, %575 : vector<16x64xf32>
    %cst_351 = arith.constant dense<0.000000e+00> : vector<16xf32>
    %579 = vector.multi_reduction <add>, %578, %cst_351 [1] : vector<16x64xf32> to vector<16xf32>
    %580 = vector.shape_cast %579 : vector<16xf32> to vector<16x1xf32>
    %cst_352 = arith.constant 6.400000e+01 : f32
    %581 = vector.broadcast %cst_352 : f32 to vector<16x1xf32>
    %582 = arith.divf %580, %581 : vector<16x1xf32>
    %583 = vector.broadcast %582 : vector<16x1xf32> to vector<16x64xf32>
    %584 = arith.subf %578, %583 : vector<16x64xf32>
    %585 = arith.mulf %584, %584 : vector<16x64xf32>
    %cst_353 = arith.constant dense<0.000000e+00> : vector<16xf32>
    %586 = vector.multi_reduction <add>, %585, %cst_353 [1] : vector<16x64xf32> to vector<16xf32>
    %587 = vector.shape_cast %586 : vector<16xf32> to vector<16x1xf32>
    %cst_354 = arith.constant 6.400000e+01 : f32
    %588 = vector.broadcast %cst_354 : f32 to vector<16x1xf32>
    %589 = arith.divf %587, %588 : vector<16x1xf32>
    %590 = vector.broadcast %582 : vector<16x1xf32> to vector<16x64xf32>
    %591 = arith.subf %578, %590 : vector<16x64xf32>
    %cst_355 = arith.constant 9.99999974E-6 : f32
    %592 = vector.broadcast %cst_355 : f32 to vector<16x1xf32>
    %593 = arith.addf %589, %592 : vector<16x1xf32>
    %594 = math.rsqrt %593 : vector<16x1xf32>
    %595 = vector.broadcast %594 : vector<16x1xf32> to vector<16x64xf32>
    %596 = arith.mulf %591, %595 : vector<16x64xf32>
    %597 = vector.broadcast %576 : vector<1x64xf32> to vector<16x64xf32>
    %598 = arith.mulf %596, %597 : vector<16x64xf32>
    %599 = vector.broadcast %577 : vector<1x64xf32> to vector<16x64xf32>
    %600 = arith.addf %598, %599 : vector<16x64xf32>
    %601 = arith.truncf %600 : vector<16x64xf32> to vector<16x64xbf16>
    %c0_356 = arith.constant 0 : index
    %c0_357 = arith.constant 0 : index
    %602 = vector.load %arg29[%c0_356, %c0_357] : memref<64x2048xbf16, #tpu.memory_space<vmem>>, vector<64x2048xbf16>
    %cst_358 = arith.constant dense<0.000000e+00> : vector<16x2048xf32>
    %603 = tpu.matmul %601, %602, %cst_358 {dimension_numbers = #tpu.dot_dimension_numbers<[1], [0], [0], [1], [0, 0, 1, 1], [], []>} : vector<16x64xbf16>, vector<64x2048xbf16>, vector<16x2048xf32> -> vector<16x2048xf32>
    %c0_359 = arith.constant 0 : index
    %c0_360 = arith.constant 0 : index
    %604 = vector.load %arg30[%c0_359, %c0_360] : memref<1x2048xf32, #tpu.memory_space<vmem>>, vector<1x2048xf32>
    %605 = vector.broadcast %604 : vector<1x2048xf32> to vector<16x2048xf32>
    %606 = arith.addf %603, %605 : vector<16x2048xf32>
    %cst_361 = arith.constant 0.000000e+00 : f32
    %607 = vector.broadcast %cst_361 : f32 to vector<16x2048xf32>
    %608 = arith.maximumf %606, %607 : vector<16x2048xf32>
    %609 = arith.truncf %608 : vector<16x2048xf32> to vector<16x2048xbf16>
    %c0_362 = arith.constant 0 : index
    %c0_363 = arith.constant 0 : index
    %610 = vector.load %arg31[%c0_362, %c0_363] : memref<2048x64xbf16, #tpu.memory_space<vmem>>, vector<2048x64xbf16>
    %cst_364 = arith.constant dense<0.000000e+00> : vector<16x64xf32>
    %611 = tpu.matmul %609, %610, %cst_364 {dimension_numbers = #tpu.dot_dimension_numbers<[1], [0], [0], [1], [0, 0, 1, 1], [], []>} : vector<16x2048xbf16>, vector<2048x64xbf16>, vector<16x64xf32> -> vector<16x64xf32>
    %c0_365 = arith.constant 0 : index
    %c0_366 = arith.constant 0 : index
    %612 = vector.load %arg32[%c0_365, %c0_366] : memref<1x64xf32, #tpu.memory_space<vmem>>, vector<1x64xf32>
    %613 = vector.broadcast %612 : vector<1x64xf32> to vector<16x64xf32>
    %614 = arith.addf %611, %613 : vector<16x64xf32>
    %c0_367 = arith.constant 0 : index
    %c0_368 = arith.constant 0 : index
    %615 = vector.load %arg35[%c0_367, %c0_368] : memref<1x64xf32, #tpu.memory_space<vmem>>, vector<1x64xf32>
    %c0_369 = arith.constant 0 : index
    %c0_370 = arith.constant 0 : index
    %616 = vector.load %arg36[%c0_369, %c0_370] : memref<1x64xf32, #tpu.memory_space<vmem>>, vector<1x64xf32>
    %617 = arith.addf %600, %614 : vector<16x64xf32>
    %cst_371 = arith.constant dense<0.000000e+00> : vector<16xf32>
    %618 = vector.multi_reduction <add>, %617, %cst_371 [1] : vector<16x64xf32> to vector<16xf32>
    %619 = vector.shape_cast %618 : vector<16xf32> to vector<16x1xf32>
    %cst_372 = arith.constant 6.400000e+01 : f32
    %620 = vector.broadcast %cst_372 : f32 to vector<16x1xf32>
    %621 = arith.divf %619, %620 : vector<16x1xf32>
    %622 = vector.broadcast %621 : vector<16x1xf32> to vector<16x64xf32>
    %623 = arith.subf %617, %622 : vector<16x64xf32>
    %624 = arith.mulf %623, %623 : vector<16x64xf32>
    %cst_373 = arith.constant dense<0.000000e+00> : vector<16xf32>
    %625 = vector.multi_reduction <add>, %624, %cst_373 [1] : vector<16x64xf32> to vector<16xf32>
    %626 = vector.shape_cast %625 : vector<16xf32> to vector<16x1xf32>
    %cst_374 = arith.constant 6.400000e+01 : f32
    %627 = vector.broadcast %cst_374 : f32 to vector<16x1xf32>
    %628 = arith.divf %626, %627 : vector<16x1xf32>
    %629 = vector.broadcast %621 : vector<16x1xf32> to vector<16x64xf32>
    %630 = arith.subf %617, %629 : vector<16x64xf32>
    %cst_375 = arith.constant 9.99999974E-6 : f32
    %631 = vector.broadcast %cst_375 : f32 to vector<16x1xf32>
    %632 = arith.addf %628, %631 : vector<16x1xf32>
    %633 = math.rsqrt %632 : vector<16x1xf32>
    %634 = vector.broadcast %633 : vector<16x1xf32> to vector<16x64xf32>
    %635 = arith.mulf %630, %634 : vector<16x64xf32>
    %636 = vector.broadcast %615 : vector<1x64xf32> to vector<16x64xf32>
    %637 = arith.mulf %635, %636 : vector<16x64xf32>
    %638 = vector.broadcast %616 : vector<1x64xf32> to vector<16x64xf32>
    %639 = arith.addf %637, %638 : vector<16x64xf32>
    %640 = vector.extract_strided_slice %639 {offsets = [0, 0], sizes = [8, 64], strides = [1, 1]} : vector<16x64xf32> to vector<8x64xf32>
    %641 = vector.extract_strided_slice %639 {offsets = [8, 0], sizes = [8, 64], strides = [1, 1]} : vector<16x64xf32> to vector<8x64xf32>
    %642 = arith.addf %640, %641 : vector<8x64xf32>
    %cst_376 = arith.constant 5.000000e-01 : f32
    %643 = vector.broadcast %cst_376 : f32 to vector<8x64xf32>
    %644 = arith.mulf %642, %643 : vector<8x64xf32>
    %c0_377 = arith.constant 0 : index
    %c0_378 = arith.constant 0 : index
    %645 = vector.load %arg3[%c0_377, %c0_378] : memref<64x4xf32, #tpu.memory_space<vmem>>, vector<64x4xf32>
    %cst_379 = arith.constant dense<0.000000e+00> : vector<8x4xf32>
    %646 = tpu.matmul %644, %645, %cst_379 {dimension_numbers = #tpu.dot_dimension_numbers<[1], [0], [0], [1], [0, 0, 1, 1], [], []>} : vector<8x64xf32>, vector<64x4xf32>, vector<8x4xf32> -> vector<8x4xf32>
    %c0_380 = arith.constant 0 : index
    %c0_381 = arith.constant 0 : index
    %647 = vector.load %arg4[%c0_380, %c0_381] : memref<1x4xf32, #tpu.memory_space<vmem>>, vector<1x4xf32>
    %648 = vector.broadcast %647 : vector<1x4xf32> to vector<8x4xf32>
    %649 = arith.addf %646, %648 : vector<8x4xf32>
    %c0_382 = arith.constant 0 : index
    %c0_383 = arith.constant 0 : index
    %650 = vector.load %arg37[%c0_382, %c0_383] : memref<8x4xf32, #tpu.memory_space<vmem>>, vector<8x4xf32>
    tpu.vector_store %arg37[%c0_382, %c0_383], %649 {strides = array<i32>} : memref<8x4xf32, #tpu.memory_space<vmem>>, vector<8x4xf32>,
    return
  }
}

</mosaic_0001>

<llo_original>
// kernel: transformer_regressor_forward.1
$region0: #{transformer_regressor_forward.1}
  #allocation0 [shape = 'u32[]', space=smem, size = 0x4, offset = 0x4, fixed_abs, tag = 'smem constant byte address 0x4 - core index']
  #allocation1 [shape = 'u32[144,128]{1,0:T(1,128)}', space=vmem, size = 0x12000, scoped, tag = 'internal scratch']
  %s0 = inlined_call_operand.smem [shape: u32[38], index: -1, kind: input, shape index: {}]
  %s1 = sld [smem:[%s0]]
  %s2 = scalar_lea.smem %s0, 1
  %s3 = sld [smem:[%s2]]
  %s4 = scalar_lea.smem %s0, 2
  %s5 = sld [smem:[%s4]]
  %s6 = scalar_lea.smem %s0, 3
  %s7 = sld [smem:[%s6]]
  %s8 = scalar_lea.smem %s0, 4
  %s9 = sld [smem:[%s8]]
  %s10 = scalar_lea.smem %s0, 5
  %s11 = sld [smem:[%s10]]
  %s12 = scalar_lea.smem %s0, 6
  %s13 = sld [smem:[%s12]]
  %s14 = scalar_lea.smem %s0, 7
  %s15 = sld [smem:[%s14]]
  %s16 = scalar_lea.smem %s0, 8
  %s17 = sld [smem:[%s16]]
  %s18 = scalar_lea.smem %s0, 9
  %s19 = sld [smem:[%s18]]
  %s20 = scalar_lea.smem %s0, 10
  %s21 = sld [smem:[%s20]]
  %s22 = scalar_lea.smem %s0, 11
  %s23 = sld [smem:[%s22]]
  %s24 = scalar_lea.smem %s0, 12
  %s25 = sld [smem:[%s24]]
  %s26 = scalar_lea.smem %s0, 13
  %s27 = sld [smem:[%s26]]
  %s28 = scalar_lea.smem %s0, 14
  %s29 = sld [smem:[%s28]]
  %s30 = scalar_lea.smem %s0, 15
  %s31 = sld [smem:[%s30]]
  %s32 = scalar_lea.smem %s0, 16
  %s33 = sld [smem:[%s32]]
  %s34 = scalar_lea.smem %s0, 17
  %s35 = sld [smem:[%s34]]
  %s36 = scalar_lea.smem %s0, 18
  %s37 = sld [smem:[%s36]]
  %s38 = scalar_lea.smem %s0, 19
  %s39 = sld [smem:[%s38]]
  %s40 = scalar_lea.smem %s0, 20
  %s41 = sld [smem:[%s40]]
  %s42 = scalar_lea.smem %s0, 21
  %s43 = sld [smem:[%s42]]
  %s44 = scalar_lea.smem %s0, 22
  %s45 = sld [smem:[%s44]]
  %s46 = scalar_lea.smem %s0, 23
  %s47 = sld [smem:[%s46]]
  %s48 = scalar_lea.smem %s0, 24
  %s49 = sld [smem:[%s48]]
  %s50 = scalar_lea.smem %s0, 25
  %s51 = sld [smem:[%s50]]
  %s52 = scalar_lea.smem %s0, 26
  %s53 = sld [smem:[%s52]]
  %s54 = scalar_lea.smem %s0, 27
  %s55 = sld [smem:[%s54]]
  %s56 = scalar_lea.smem %s0, 28
  %s57 = sld [smem:[%s56]]
  %s58 = scalar_lea.smem %s0, 29
  %s59 = sld [smem:[%s58]]
  %s60 = scalar_lea.smem %s0, 30
  %s61 = sld [smem:[%s60]]
  %s62 = scalar_lea.smem %s0, 31
  %s63 = sld [smem:[%s62]]
  %s64 = scalar_lea.smem %s0, 32
  %s65 = sld [smem:[%s64]]
  %s66 = scalar_lea.smem %s0, 33
  %s67 = sld [smem:[%s66]]
  %s68 = scalar_lea.smem %s0, 34
  %s69 = sld [smem:[%s68]]
  %s70 = scalar_lea.smem %s0, 35
  %s71 = sld [smem:[%s70]]
  %s72 = scalar_lea.smem %s0, 36
  %s73 = sld [smem:[%s72]]
  %s74 = scalar_lea.smem %s0, 37
  %s75 = sld [smem:[%s74]]
  %s76 = sld [smem:[#allocation0]]
  $region158: #{transformer_regressor_forward.1} parent=0
    _
  %s78 = ssub.s32 1, %s76
  %s79 = scalar_select 0, %s78, %s76
  // Predicated region
  $region2: #{transformer_regressor_forward.1} parent=0 // pred_check
    _
  $region3: #{transformer_regressor_forward.1} parent=0 // pred_check_branch
    %81 = sbr.rel (0) target = $region5
  $region4: #{transformer_regressor_forward.1} parent=0 // pred_region
    _
  $region5: #{transformer_regressor_forward.1} parent=0 // pred_fallthru
    _
  // Predicated region
  $region6: #{transformer_regressor_forward.1} parent=0 // pred_check
    _
  $region7: #{transformer_regressor_forward.1} parent=0 // pred_check_branch
    %83 = sbr.rel (0) target = $region9
  $region8: #{transformer_regressor_forward.1} parent=0 // pred_region
    _
  $region9: #{transformer_regressor_forward.1} parent=0 // pred_fallthru
    _
  // Predicated region
  $region10: #{transformer_regressor_forward.1} parent=0 // pred_check
    _
  $region11: #{transformer_regressor_forward.1} parent=0 // pred_check_branch
    %85 = sbr.rel (0) target = $region13
  $region12: #{transformer_regressor_forward.1} parent=0 // pred_region
    _
  $region13: #{transformer_regressor_forward.1} parent=0 // pred_fallthru
    _
  // Predicated region
  $region14: #{transformer_regressor_forward.1} parent=0 // pred_check
    _
  $region15: #{transformer_regressor_forward.1} parent=0 // pred_check_branch
    %87 = sbr.rel (0) target = $region17
  $region16: #{transformer_regressor_forward.1} parent=0 // pred_region
    _
  $region17: #{transformer_regressor_forward.1} parent=0 // pred_fallthru
    _
  // Predicated region
  $region18: #{transformer_regressor_forward.1} parent=0 // pred_check
    _
  $region19: #{transformer_regressor_forward.1} parent=0 // pred_check_branch
    %89 = sbr.rel (0) target = $region21
  $region20: #{transformer_regressor_forward.1} parent=0 // pred_region
    _
  $region21: #{transformer_regressor_forward.1} parent=0 // pred_fallthru
    _
  // Predicated region
  $region22: #{transformer_regressor_forward.1} parent=0 // pred_check
    _
  $region23: #{transformer_regressor_forward.1} parent=0 // pred_check_branch
    %91 = sbr.rel (0) target = $region25
  $region24: #{transformer_regressor_forward.1} parent=0 // pred_region
    _
  $region25: #{transformer_regressor_forward.1} parent=0 // pred_fallthru
    _
  // Predicated region
  $region26: #{transformer_regressor_forward.1} parent=0 // pred_check
    _
  $region27: #{transformer_regressor_forward.1} parent=0 // pred_check_branch
    %93 = sbr.rel (0) target = $region29
  $region28: #{transformer_regressor_forward.1} parent=0 // pred_region
    _
  $region29: #{transformer_regressor_forward.1} parent=0 // pred_fallthru
    _
  // Predicated region
  $region30: #{transformer_regressor_forward.1} parent=0 // pred_check
    _
  $region31: #{transformer_regressor_forward.1} parent=0 // pred_check_branch
    %95 = sbr.rel (0) target = $region33
  $region32: #{transformer_regressor_forward.1} parent=0 // pred_region
    _
  $region33: #{transformer_regressor_forward.1} parent=0 // pred_fallthru
    _
  // Predicated region
  $region34: #{transformer_regressor_forward.1} parent=0 // pred_check
    _
  $region35: #{transformer_regressor_forward.1} parent=0 // pred_check_branch
    %97 = sbr.rel (0) target = $region37
  $region36: #{transformer_regressor_forward.1} parent=0 // pred_region
    _
  $region37: #{transformer_regressor_forward.1} parent=0 // pred_fallthru
    _
  // Predicated region
  $region38: #{transformer_regressor_forward.1} parent=0 // pred_check
    _
  $region39: #{transformer_regressor_forward.1} parent=0 // pred_check_branch
    %99 = sbr.rel (0) target = $region41
  $region40: #{transformer_regressor_forward.1} parent=0 // pred_region
    _
  $region41: #{transformer_regressor_forward.1} parent=0 // pred_fallthru
    _
  // Predicated region
  $region42: #{transformer_regressor_forward.1} parent=0 // pred_check
    _
  $region43: #{transformer_regressor_forward.1} parent=0 // pred_check_branch
    %101 = sbr.rel (0) target = $region45
  $region44: #{transformer_regressor_forward.1} parent=0 // pred_region
    _
  $region45: #{transformer_regressor_forward.1} parent=0 // pred_fallthru
    _
  // Predicated region
  $region46: #{transformer_regressor_forward.1} parent=0 // pred_check
    _
  $region47: #{transformer_regressor_forward.1} parent=0 // pred_check_branch
    %103 = sbr.rel (0) target = $region49
  $region48: #{transformer_regressor_forward.1} parent=0 // pred_region
    _
  $region49: #{transformer_regressor_forward.1} parent=0 // pred_fallthru
    _
  // Predicated region
  $region50: #{transformer_regressor_forward.1} parent=0 // pred_check
    _
  $region51: #{transformer_regressor_forward.1} parent=0 // pred_check_branch
    %105 = sbr.rel (0) target = $region53
  $region52: #{transformer_regressor_forward.1} parent=0 // pred_region
    _
  $region53: #{transformer_regressor_forward.1} parent=0 // pred_fallthru
    _
  // Predicated region
  $region54: #{transformer_regressor_forward.1} parent=0 // pred_check
    _
  $region55: #{transformer_regressor_forward.1} parent=0 // pred_check_branch
    %107 = sbr.rel (0) target = $region57
  $region56: #{transformer_regressor_forward.1} parent=0 // pred_region
    _
  $region57: #{transformer_regressor_forward.1} parent=0 // pred_fallthru
    _
  // Predicated region
  $region58: #{transformer_regressor_forward.1} parent=0 // pred_check
    _
  $region59: #{transformer_regressor_forward.1} parent=0 // pred_check_branch
    %109 = sbr.rel (0) target = $region61
  $region60: #{transformer_regressor_forward.1} parent=0 // pred_region
    _
  $region61: #{transformer_regressor_forward.1} parent=0 // pred_fallthru
    _
  // Predicated region
  $region62: #{transformer_regressor_forward.1} parent=0 // pred_check
    _
  $region63: #{transformer_regressor_forward.1} parent=0 // pred_check_branch
    %111 = sbr.rel (0) target = $region65
  $region64: #{transformer_regressor_forward.1} parent=0 // pred_region
    _
  $region65: #{transformer_regressor_forward.1} parent=0 // pred_fallthru
    _
  // Predicated region
  $region66: #{transformer_regressor_forward.1} parent=0 // pred_check
    _
  $region67: #{transformer_regressor_forward.1} parent=0 // pred_check_branch
    %113 = sbr.rel (0) target = $region69
  $region68: #{transformer_regressor_forward.1} parent=0 // pred_region
    _
  $region69: #{transformer_regressor_forward.1} parent=0 // pred_fallthru
    _
  // Predicated region
  $region70: #{transformer_regressor_forward.1} parent=0 // pred_check
    _
  $region71: #{transformer_regressor_forward.1} parent=0 // pred_check_branch
    %115 = sbr.rel (0) target = $region73
  $region72: #{transformer_regressor_forward.1} parent=0 // pred_region
    _
  $region73: #{transformer_regressor_forward.1} parent=0 // pred_fallthru
    _
  // Predicated region
  $region74: #{transformer_regressor_forward.1} parent=0 // pred_check
    _
  $region75: #{transformer_regressor_forward.1} parent=0 // pred_check_branch
    %117 = sbr.rel (0) target = $region77
  $region76: #{transformer_regressor_forward.1} parent=0 // pred_region
    _
  $region77: #{transformer_regressor_forward.1} parent=0 // pred_fallthru
    _
  // Predicated region
  $region78: #{transformer_regressor_forward.1} parent=0 // pred_check
    _
  $region79: #{transformer_regressor_forward.1} parent=0 // pred_check_branch
    %119 = sbr.rel (0) target = $region81
  $region80: #{transformer_regressor_forward.1} parent=0 // pred_region
    _
  $region81: #{transformer_regressor_forward.1} parent=0 // pred_fallthru
    _
  // Predicated region
  $region82: #{transformer_regressor_forward.1} parent=0 // pred_check
    _
  $region83: #{transformer_regressor_forward.1} parent=0 // pred_check_branch
    %121 = sbr.rel (0) target = $region85
  $region84: #{transformer_regressor_forward.1} parent=0 // pred_region
    _
  $region85: #{transformer_regressor_forward.1} parent=0 // pred_fallthru
    _
  // Predicated region
  $region86: #{transformer_regressor_forward.1} parent=0 // pred_check
    _
  $region87: #{transformer_regressor_forward.1} parent=0 // pred_check_branch
    %123 = sbr.rel (0) target = $region89
  $region88: #{transformer_regressor_forward.1} parent=0 // pred_region
    _
  $region89: #{transformer_regressor_forward.1} parent=0 // pred_fallthru
    _
  // Predicated region
  $region90: #{transformer_regressor_forward.1} parent=0 // pred_check
    _
  $region91: #{transformer_regressor_forward.1} parent=0 // pred_check_branch
    %125 = sbr.rel (0) target = $region93
  $region92: #{transformer_regressor_forward.1} parent=0 // pred_region
    _
  $region93: #{transformer_regressor_forward.1} parent=0 // pred_fallthru
    _
  // Predicated region
  $region94: #{transformer_regressor_forward.1} parent=0 // pred_check
    _
  $region95: #{transformer_regressor_forward.1} parent=0 // pred_check_branch
    %127 = sbr.rel (0) target = $region97
  $region96: #{transformer_regressor_forward.1} parent=0 // pred_region
    _
  $region97: #{transformer_regressor_forward.1} parent=0 // pred_fallthru
    _
  // Predicated region
  $region98: #{transformer_regressor_forward.1} parent=0 // pred_check
    _
  $region99: #{transformer_regressor_forward.1} parent=0 // pred_check_branch
    %129 = sbr.rel (0) target = $region101
  $region100: #{transformer_regressor_forward.1} parent=0 // pred_region
    _
  $region101: #{transformer_regressor_forward.1} parent=0 // pred_fallthru
    _
  // Predicated region
  $region102: #{transformer_regressor_forward.1} parent=0 // pred_check
    _
  $region103: #{transformer_regressor_forward.1} parent=0 // pred_check_branch
    %131 = sbr.rel (0) target = $region105
  $region104: #{transformer_regressor_forward.1} parent=0 // pred_region
    _
  $region105: #{transformer_regressor_forward.1} parent=0 // pred_fallthru
    _
  // Predicated region
  $region106: #{transformer_regressor_forward.1} parent=0 // pred_check
    _
  $region107: #{transformer_regressor_forward.1} parent=0 // pred_check_branch
    %133 = sbr.rel (0) target = $region109
  $region108: #{transformer_regressor_forward.1} parent=0 // pred_region
    _
  $region109: #{transformer_regressor_forward.1} parent=0 // pred_fallthru
    _
  // Predicated region
  $region110: #{transformer_regressor_forward.1} parent=0 // pred_check
    _
  $region111: #{transformer_regressor_forward.1} parent=0 // pred_check_branch
    %135 = sbr.rel (0) target = $region113
  $region112: #{transformer_regressor_forward.1} parent=0 // pred_region
    _
  $region113: #{transformer_regressor_forward.1} parent=0 // pred_fallthru
    _
  // Predicated region
  $region114: #{transformer_regressor_forward.1} parent=0 // pred_check
    _
  $region115: #{transformer_regressor_forward.1} parent=0 // pred_check_branch
    %137 = sbr.rel (0) target = $region117
  $region116: #{transformer_regressor_forward.1} parent=0 // pred_region
    _
  $region117: #{transformer_regressor_forward.1} parent=0 // pred_fallthru
    _
  // Predicated region
  $region118: #{transformer_regressor_forward.1} parent=0 // pred_check
    _
  $region119: #{transformer_regressor_forward.1} parent=0 // pred_check_branch
    %139 = sbr.rel (0) target = $region121
  $region120: #{transformer_regressor_forward.1} parent=0 // pred_region
    _
  $region121: #{transformer_regressor_forward.1} parent=0 // pred_fallthru
    _
  // Predicated region
  $region122: #{transformer_regressor_forward.1} parent=0 // pred_check
    _
  $region123: #{transformer_regressor_forward.1} parent=0 // pred_check_branch
    %141 = sbr.rel (0) target = $region125
  $region124: #{transformer_regressor_forward.1} parent=0 // pred_region
    _
  $region125: #{transformer_regressor_forward.1} parent=0 // pred_fallthru
    _
  // Predicated region
  $region126: #{transformer_regressor_forward.1} parent=0 // pred_check
    _
  $region127: #{transformer_regressor_forward.1} parent=0 // pred_check_branch
    %143 = sbr.rel (0) target = $region129
  $region128: #{transformer_regressor_forward.1} parent=0 // pred_region
    _
  $region129: #{transformer_regressor_forward.1} parent=0 // pred_fallthru
    _
  // Predicated region
  $region130: #{transformer_regressor_forward.1} parent=0 // pred_check
    _
  $region131: #{transformer_regressor_forward.1} parent=0 // pred_check_branch
    %145 = sbr.rel (0) target = $region133
  $region132: #{transformer_regressor_forward.1} parent=0 // pred_region
    _
  $region133: #{transformer_regressor_forward.1} parent=0 // pred_fallthru
    _
  // Predicated region
  $region134: #{transformer_regressor_forward.1} parent=0 // pred_check
    _
  $region135: #{transformer_regressor_forward.1} parent=0 // pred_check_branch
    %147 = sbr.rel (0) target = $region137
  $region136: #{transformer_regressor_forward.1} parent=0 // pred_region
    _
  $region137: #{transformer_regressor_forward.1} parent=0 // pred_fallthru
    _
  // Predicated region
  $region138: #{transformer_regressor_forward.1} parent=0 // pred_check
    _
  $region139: #{transformer_regressor_forward.1} parent=0 // pred_check_branch
    %149 = sbr.rel (0) target = $region141
  $region140: #{transformer_regressor_forward.1} parent=0 // pred_region
    _
  $region141: #{transformer_regressor_forward.1} parent=0 // pred_fallthru
    _
  // Predicated region
  $region142: #{transformer_regressor_forward.1} parent=0 // pred_check
    _
  $region143: #{transformer_regressor_forward.1} parent=0 // pred_check_branch
    %151 = sbr.rel (0) target = $region145
  $region144: #{transformer_regressor_forward.1} parent=0 // pred_region
    _
  $region145: #{transformer_regressor_forward.1} parent=0 // pred_fallthru
    _
  // Predicated region
  $region146: #{transformer_regressor_forward.1} parent=0 // pred_check
    _
  $region147: #{transformer_regressor_forward.1} parent=0 // pred_check_branch
    %153 = sbr.rel (0) target = $region149
  $region148: #{transformer_regressor_forward.1} parent=0 // pred_region
    _
  $region149: #{transformer_regressor_forward.1} parent=0 // pred_fallthru
    _
  %v155 = vld [vmem:[%s1] sm:$0xff]
  %v156 = vld [vmem:[%s1 + $0x8] sm:$0xff]
  %v157 = vld [vmem:[%s3] sm:$0xff]
  %v158 = vld [vmem:[%s3 + $0x8] sm:$0xff]
  %v159 = vld [vmem:[%s3 + $0x10] sm:$0xff]
  %v160 = vld [vmem:[%s3 + $0x18] sm:$0xff]
  %v161 = vld [vmem:[%s5] sm:$0x1]
  %v163 = vlaneseq
  %v164 = vshrl.u32 %v163, 7
  %v165 = vsub.s32 0, %v164
  %v166 = vrot.slane %v161, %v165
  %vm168 = vcmask 261120
  %v170 = vsel %vm168, %v155, 0
  %v173 = vsel %vm168, %v156, 0
  %175 = vmatprep.subr.mxu0 0.0
  %176 = vmatpush1.msra.mxu0 %v157
  %177 = vmatprep.subr.mxu0 0.0
  %178 = vmatpush1.msra.mxu0 %v158
  %179 = vmatprep.subr.mxu0 0.0
  %180 = vmatpush1.msra.mxu0 %v159
  %181 = vmatprep.subr.mxu0 0.0
  %182 = vmatpush1.msra.mxu0 %v160
  %183 = vmatprep.subr.mxu0 0.0
  %184 = vmatpush1.msra.mxu0 0.0
  %185 = vmatprep.subr.mxu0 0.0
  %186 = vmatpush1.msra.mxu0 0.0
  %187 = vmatprep.subr.mxu0 0.0
  %188 = vmatpush1.msra.mxu0 0.0
  %189 = vmatprep.subr.mxu0 0.0
  %190 = vmatpush1.msra.mxu0 0.0
  %191 = vmatprep.subr.mxu0 0.0
  %192 = vmatpush1.msra.mxu0 0.0
  %193 = vmatprep.subr.mxu0 0.0
  %194 = vmatpush1.msra.mxu0 0.0
  %195 = vmatprep.subr.mxu0 0.0
  %196 = vmatpush1.msra.mxu0 0.0
  %197 = vmatprep.subr.mxu0 0.0
  %198 = vmatpush1.msra.mxu0 0.0
  %199 = vmatprep.subr.mxu0 0.0
  %200 = vmatpush1.msra.mxu0 0.0
  %201 = vmatprep.subr.mxu0 0.0
  %202 = vmatpush1.msra.mxu0 0.0
  %203 = vmatprep.subr.mxu0 0.0
  %204 = vmatpush1.msra.mxu0 0.0
  %205 = vmatprep.subr.mxu0 0.0
  %206 = vmatpush1.msra.mxu0 0.0
  %207 = vmatprep.subr.mxu0 0.0
  %208 = vmatpush1.msra.mxu0 0.0
  %209 = vmatprep.subr.mxu0 0.0
  %210 = vmatpush1.msra.mxu0 0.0
  %211 = vmatprep.subr.mxu0 0.0
  %212 = vmatpush1.msra.mxu0 0.0
  %213 = vmatprep.subr.mxu0 0.0
  %214 = vmatpush1.msra.mxu0 0.0
  %215 = vmatprep.subr.mxu0 0.0
  %216 = vmatpush1.msra.mxu0 0.0
  %217 = vmatprep.subr.mxu0 0.0
  %218 = vmatpush1.msra.mxu0 0.0
  %219 = vmatprep.subr.mxu0 0.0
  %220 = vmatpush1.msra.mxu0 0.0
  %221 = vmatprep.subr.mxu0 0.0
  %222 = vmatpush1.msra.mxu0 0.0
  %223 = vmatprep.subr.mxu0 0.0
  %224 = vmatpush1.msra.mxu0 0.0
  %225 = vmatprep.subr.mxu0 0.0
  %226 = vmatpush1.msra.mxu0 0.0
  %227 = vmatprep.subr.mxu0 0.0
  %228 = vmatpush1.msra.mxu0 0.0
  %229 = vmatprep.subr.mxu0 0.0
  %230 = vmatpush1.msra.mxu0 0.0
  %231 = vmatprep.subr.mxu0 0.0
  %232 = vmatpush1.msra.mxu0 0.0
  %233 = vmatprep.subr.mxu0 0.0
  %234 = vmatpush1.msra.mxu0 0.0
  %235 = vmatprep.subr.mxu0 0.0
  %236 = vmatpush1.msra.mxu0 0.0
  %237 = vmatprep.subr.mxu0 0.0
  %238 = vmatpush1.msra.mxu0 0.0
  %239 = vmatprep.mubr.f32.mxu0 0.0
  %240 = vmatmul.mubr.f32.gmra.mrb[0].mxu0 %v170
  %v241 = vpop.f32.mrb[0].mxu0
  %v242 = vadd.f32 %v166, %v241
  %v243 = vpop.f32.mrb[0].mxu0
  %244 = vmatprep.mubr.f32.mxu0 0.0
  %245 = vmatmul.mubr.f32.gmra.mrb[0].mxu0 %v173
  %v246 = vpop.f32.mrb[0].mxu0
  %v247 = vadd.f32 %v166, %v246
  %v248 = vpop.f32.mrb[0].mxu0
  %249 = vdwg.mxu0
  %v250 = vld [vmem:[%s11] sm:$0xff]
  %v251 = vld [vmem:[%s11 + $0x8] sm:$0xff]
  %v252 = vld [vmem:[%s11 + $0x10] sm:$0xff]
  %v253 = vld [vmem:[%s11 + $0x18] sm:$0xff]
  %v254 = vld [vmem:[%s11 + $0x20] sm:$0xff]
  %v255 = vld [vmem:[%s11 + $0x28] sm:$0xff]
  %v256 = vld [vmem:[%s11 + $0x30] sm:$0xff]
  %v257 = vld [vmem:[%s11 + $0x38] sm:$0xff]
  %v258 = vld [vmem:[%s17] sm:$0x1]
  %v260 = vlaneseq
  %v261 = vshrl.u32 %v260, 7
  %v262 = vsub.s32 0, %v261
  %v263 = vrot.slane %v258, %v262
  %vm265 = vcmask 523264
  %v267 = vsel %vm265, %v242, 0
  %v270 = vsel %vm265, %v247, 0
  %272 = vmatprep.subr.mxu0 0.0
  %273 = vmatpush1.msra.mxu0 %v250
  %274 = vmatprep.subr.mxu0 0.0
  %275 = vmatpush1.msra.mxu0 %v251
  %276 = vmatprep.subr.mxu0 0.0
  %277 = vmatpush1.msra.mxu0 %v252
  %278 = vmatprep.subr.mxu0 0.0
  %279 = vmatpush1.msra.mxu0 %v253
  %280 = vmatprep.subr.mxu0 0.0
  %281 = vmatpush1.msra.mxu0 %v254
  %282 = vmatprep.subr.mxu0 0.0
  %283 = vmatpush1.msra.mxu0 %v255
  %284 = vmatprep.subr.mxu0 0.0
  %285 = vmatpush1.msra.mxu0 %v256
  %286 = vmatprep.subr.mxu0 0.0
  %287 = vmatpush1.msra.mxu0 %v257
  %288 = vmatprep.subr.mxu0 0.0
  %289 = vmatpush1.msra.mxu0 0.0
  %290 = vmatprep.subr.mxu0 0.0
  %291 = vmatpush1.msra.mxu0 0.0
  %292 = vmatprep.subr.mxu0 0.0
  %293 = vmatpush1.msra.mxu0 0.0
  %294 = vmatprep.subr.mxu0 0.0
  %295 = vmatpush1.msra.mxu0 0.0
  %296 = vmatprep.subr.mxu0 0.0
  %297 = vmatpush1.msra.mxu0 0.0
  %298 = vmatprep.subr.mxu0 0.0
  %299 = vmatpush1.msra.mxu0 0.0
  %300 = vmatprep.subr.mxu0 0.0
  %301 = vmatpush1.msra.mxu0 0.0
  %302 = vmatprep.subr.mxu0 0.0
  %303 = vmatpush1.msra.mxu0 0.0
  %304 = vmatprep.subr.mxu0 0.0
  %305 = vmatpush1.msra.mxu0 0.0
  %306 = vmatprep.subr.mxu0 0.0
  %307 = vmatpush1.msra.mxu0 0.0
  %308 = vmatprep.subr.mxu0 0.0
  %309 = vmatpush1.msra.mxu0 0.0
  %310 = vmatprep.subr.mxu0 0.0
  %311 = vmatpush1.msra.mxu0 0.0
  %312 = vmatprep.subr.mxu0 0.0
  %313 = vmatpush1.msra.mxu0 0.0
  %314 = vmatprep.subr.mxu0 0.0
  %315 = vmatpush1.msra.mxu0 0.0
  %316 = vmatprep.subr.mxu0 0.0
  %317 = vmatpush1.msra.mxu0 0.0
  %318 = vmatprep.subr.mxu0 0.0
  %319 = vmatpush1.msra.mxu0 0.0
  %320 = vmatprep.subr.mxu0 0.0
  %321 = vmatpush1.msra.mxu0 0.0
  %322 = vmatprep.subr.mxu0 0.0
  %323 = vmatpush1.msra.mxu0 0.0
  %324 = vmatprep.subr.mxu0 0.0
  %325 = vmatpush1.msra.mxu0 0.0
  %326 = vmatprep.subr.mxu0 0.0
  %327 = vmatpush1.msra.mxu0 0.0
  %328 = vmatprep.subr.mxu0 0.0
  %329 = vmatpush1.msra.mxu0 0.0
  %330 = vmatprep.subr.mxu0 0.0
  %331 = vmatpush1.msra.mxu0 0.0
  %332 = vmatprep.subr.mxu0 0.0
  %333 = vmatpush1.msra.mxu0 0.0
  %334 = vmatprep.subr.mxu0 0.0
  %335 = vmatpush1.msra.mxu0 0.0
  %336 = vmatprep.mubr.f32.mxu0 0.0
  %337 = vmatmul.mubr.f32.gmra.mrb[0].mxu0 %v267
  %v338 = vpop.f32.mrb[0].mxu0
  %v339 = vadd.f32 %v263, %v338
  %v340 = vpop.f32.mrb[0].mxu0
  %341 = vmatprep.mubr.f32.mxu0 0.0
  %342 = vmatmul.mubr.f32.gmra.mrb[0].mxu0 %v270
  %v343 = vpop.f32.mrb[0].mxu0
  %v344 = vadd.f32 %v263, %v343
  %v345 = vpop.f32.mrb[0].mxu0
  %346 = vdwg.mxu0
  %v347 = vmul.f32 %v339, 0.25
  %v348 = vmul.f32 %v344, 0.25
  %v349 = vld [vmem:[%s13] sm:$0xff]
  %v350 = vld [vmem:[%s13 + $0x8] sm:$0xff]
  %v351 = vld [vmem:[%s13 + $0x10] sm:$0xff]
  %v352 = vld [vmem:[%s13 + $0x18] sm:$0xff]
  %v353 = vld [vmem:[%s13 + $0x20] sm:$0xff]
  %v354 = vld [vmem:[%s13 + $0x28] sm:$0xff]
  %v355 = vld [vmem:[%s13 + $0x30] sm:$0xff]
  %v356 = vld [vmem:[%s13 + $0x38] sm:$0xff]
  %v357 = vld [vmem:[%s19] sm:$0x1]
  %v359 = vlaneseq
  %v360 = vshrl.u32 %v359, 7
  %v361 = vsub.s32 0, %v360
  %v362 = vrot.slane %v357, %v361
  %364 = vmatprep.subr.mxu0 0.0
  %365 = vmatpush1.msra.mxu0 %v349
  %366 = vmatprep.subr.mxu0 0.0
  %367 = vmatpush1.msra.mxu0 %v350
  %368 = vmatprep.subr.mxu0 0.0
  %369 = vmatpush1.msra.mxu0 %v351
  %370 = vmatprep.subr.mxu0 0.0
  %371 = vmatpush1.msra.mxu0 %v352
  %372 = vmatprep.subr.mxu0 0.0
  %373 = vmatpush1.msra.mxu0 %v353
  %374 = vmatprep.subr.mxu0 0.0
  %375 = vmatpush1.msra.mxu0 %v354
  %376 = vmatprep.subr.mxu0 0.0
  %377 = vmatpush1.msra.mxu0 %v355
  %378 = vmatprep.subr.mxu0 0.0
  %379 = vmatpush1.msra.mxu0 %v356
  %380 = vmatprep.subr.mxu0 0.0
  %381 = vmatpush1.msra.mxu0 0.0
  %382 = vmatprep.subr.mxu0 0.0
  %383 = vmatpush1.msra.mxu0 0.0
  %384 = vmatprep.subr.mxu0 0.0
  %385 = vmatpush1.msra.mxu0 0.0
  %386 = vmatprep.subr.mxu0 0.0
  %387 = vmatpush1.msra.mxu0 0.0
  %388 = vmatprep.subr.mxu0 0.0
  %389 = vmatpush1.msra.mxu0 0.0
  %390 = vmatprep.subr.mxu0 0.0
  %391 = vmatpush1.msra.mxu0 0.0
  %392 = vmatprep.subr.mxu0 0.0
  %393 = vmatpush1.msra.mxu0 0.0
  %394 = vmatprep.subr.mxu0 0.0
  %395 = vmatpush1.msra.mxu0 0.0
  %396 = vmatprep.subr.mxu0 0.0
  %397 = vmatpush1.msra.mxu0 0.0
  %398 = vmatprep.subr.mxu0 0.0
  %399 = vmatpush1.msra.mxu0 0.0
  %400 = vmatprep.subr.mxu0 0.0
  %401 = vmatpush1.msra.mxu0 0.0
  %402 = vmatprep.subr.mxu0 0.0
  %403 = vmatpush1.msra.mxu0 0.0
  %404 = vmatprep.subr.mxu0 0.0
  %405 = vmatpush1.msra.mxu0 0.0
  %406 = vmatprep.subr.mxu0 0.0
  %407 = vmatpush1.msra.mxu0 0.0
  %408 = vmatprep.subr.mxu0 0.0
  %409 = vmatpush1.msra.mxu0 0.0
  %410 = vmatprep.subr.mxu0 0.0
  %411 = vmatpush1.msra.mxu0 0.0
  %412 = vmatprep.subr.mxu0 0.0
  %413 = vmatpush1.msra.mxu0 0.0
  %414 = vmatprep.subr.mxu0 0.0
  %415 = vmatpush1.msra.mxu0 0.0
  %416 = vmatprep.subr.mxu0 0.0
  %417 = vmatpush1.msra.mxu0 0.0
  %418 = vmatprep.subr.mxu0 0.0
  %419 = vmatpush1.msra.mxu0 0.0
  %420 = vmatprep.subr.mxu0 0.0
  %421 = vmatpush1.msra.mxu0 0.0
  %422 = vmatprep.subr.mxu0 0.0
  %423 = vmatpush1.msra.mxu0 0.0
  %424 = vmatprep.subr.mxu0 0.0
  %425 = vmatpush1.msra.mxu0 0.0
  %426 = vmatprep.subr.mxu0 0.0
  %427 = vmatpush1.msra.mxu0 0.0
  %428 = vmatprep.mubr.f32.mxu0 0.0
  %429 = vmatmul.mubr.f32.gmra.mrb[0].mxu0 %v267
  %v430 = vpop.f32.mrb[0].mxu0
  %v431 = vadd.f32 %v362, %v430
  %v432 = vpop.f32.mrb[0].mxu0
  %433 = vmatprep.mubr.f32.mxu0 0.0
  %434 = vmatmul.mubr.f32.gmra.mrb[0].mxu0 %v270
  %v435 = vpop.f32.mrb[0].mxu0
  %v436 = vadd.f32 %v362, %v435
  %v437 = vpop.f32.mrb[0].mxu0
  %438 = vdwg.mxu0
  %v439 = vld [vmem:[%s15] sm:$0xff]
  %v440 = vld [vmem:[%s15 + $0x8] sm:$0xff]
  %v441 = vld [vmem:[%s15 + $0x10] sm:$0xff]
  %v442 = vld [vmem:[%s15 + $0x18] sm:$0xff]
  %v443 = vld [vmem:[%s15 + $0x20] sm:$0xff]
  %v444 = vld [vmem:[%s15 + $0x28] sm:$0xff]
  %v445 = vld [vmem:[%s15 + $0x30] sm:$0xff]
  %v446 = vld [vmem:[%s15 + $0x38] sm:$0xff]
  %v447 = vld [vmem:[%s21] sm:$0x1]
  %v449 = vlaneseq
  %v450 = vshrl.u32 %v449, 7
  %v451 = vsub.s32 0, %v450
  %v452 = vrot.slane %v447, %v451
  %454 = vmatprep.subr.mxu0 0.0
  %455 = vmatpush1.msra.mxu0 %v439
  %456 = vmatprep.subr.mxu0 0.0
  %457 = vmatpush1.msra.mxu0 %v440
  %458 = vmatprep.subr.mxu0 0.0
  %459 = vmatpush1.msra.mxu0 %v441
  %460 = vmatprep.subr.mxu0 0.0
  %461 = vmatpush1.msra.mxu0 %v442
  %462 = vmatprep.subr.mxu0 0.0
  %463 = vmatpush1.msra.mxu0 %v443
  %464 = vmatprep.subr.mxu0 0.0
  %465 = vmatpush1.msra.mxu0 %v444
  %466 = vmatprep.subr.mxu0 0.0
  %467 = vmatpush1.msra.mxu0 %v445
  %468 = vmatprep.subr.mxu0 0.0
  %469 = vmatpush1.msra.mxu0 %v446
  %470 = vmatprep.subr.mxu0 0.0
  %471 = vmatpush1.msra.mxu0 0.0
  %472 = vmatprep.subr.mxu0 0.0
  %473 = vmatpush1.msra.mxu0 0.0
  %474 = vmatprep.subr.mxu0 0.0
  %475 = vmatpush1.msra.mxu0 0.0
  %476 = vmatprep.subr.mxu0 0.0
  %477 = vmatpush1.msra.mxu0 0.0
  %478 = vmatprep.subr.mxu0 0.0
  %479 = vmatpush1.msra.mxu0 0.0
  %480 = vmatprep.subr.mxu0 0.0
  %481 = vmatpush1.msra.mxu0 0.0
  %482 = vmatprep.subr.mxu0 0.0
  %483 = vmatpush1.msra.mxu0 0.0
  %484 = vmatprep.subr.mxu0 0.0
  %485 = vmatpush1.msra.mxu0 0.0
  %486 = vmatprep.subr.mxu0 0.0
  %487 = vmatpush1.msra.mxu0 0.0
  %488 = vmatprep.subr.mxu0 0.0
  %489 = vmatpush1.msra.mxu0 0.0
  %490 = vmatprep.subr.mxu0 0.0
  %491 = vmatpush1.msra.mxu0 0.0
  %492 = vmatprep.subr.mxu0 0.0
  %493 = vmatpush1.msra.mxu0 0.0
  %494 = vmatprep.subr.mxu0 0.0
  %495 = vmatpush1.msra.mxu0 0.0
  %496 = vmatprep.subr.mxu0 0.0
  %497 = vmatpush1.msra.mxu0 0.0
  %498 = vmatprep.subr.mxu0 0.0
  %499 = vmatpush1.msra.mxu0 0.0
  %500 = vmatprep.subr.mxu0 0.0
  %501 = vmatpush1.msra.mxu0 0.0
  %502 = vmatprep.subr.mxu0 0.0
  %503 = vmatpush1.msra.mxu0 0.0
  %504 = vmatprep.subr.mxu0 0.0
  %505 = vmatpush1.msra.mxu0 0.0
  %506 = vmatprep.subr.mxu0 0.0
  %507 = vmatpush1.msra.mxu0 0.0
  %508 = vmatprep.subr.mxu0 0.0
  %509 = vmatpush1.msra.mxu0 0.0
  %510 = vmatprep.subr.mxu0 0.0
  %511 = vmatpush1.msra.mxu0 0.0
  %512 = vmatprep.subr.mxu0 0.0
  %513 = vmatpush1.msra.mxu0 0.0
  %514 = vmatprep.subr.mxu0 0.0
  %515 = vmatpush1.msra.mxu0 0.0
  %516 = vmatprep.subr.mxu0 0.0
  %517 = vmatpush1.msra.mxu0 0.0
  %518 = vmatprep.mubr.f32.mxu0 0.0
  %519 = vmatmul.mubr.f32.gmra.mrb[0].mxu0 %v267
  %v520 = vpop.f32.mrb[0].mxu0
  %v521 = vadd.f32 %v452, %v520
  %v522 = vpop.f32.mrb[0].mxu0
  %523 = vmatprep.mubr.f32.mxu0 0.0
  %524 = vmatmul.mubr.f32.gmra.mrb[0].mxu0 %v270
  %v525 = vpop.f32.mrb[0].mxu0
  %v526 = vadd.f32 %v452, %v525
  %v527 = vpop.f32.mrb[0].mxu0
  %528 = vdwg.mxu0
  %s529 = scalar_lea.vmem %s11, 64
  %v530 = vld [vmem:[%s529] sm:$0xff]
  %v531 = vld [vmem:[%s529 + $0x8] sm:$0xff]
  %v532 = vld [vmem:[%s529 + $0x10] sm:$0xff]
  %v533 = vld [vmem:[%s529 + $0x18] sm:$0xff]
  %v534 = vld [vmem:[%s529 + $0x20] sm:$0xff]
  %v535 = vld [vmem:[%s529 + $0x28] sm:$0xff]
  %v536 = vld [vmem:[%s529 + $0x30] sm:$0xff]
  %v537 = vld [vmem:[%s529 + $0x38] sm:$0xff]
  %s538 = scalar_lea.vmem %s17, 1
  %v539 = vld [vmem:[%s538] sm:$0x1]
  %v541 = vlaneseq
  %v542 = vshrl.u32 %v541, 7
  %v543 = vsub.s32 0, %v542
  %v544 = vrot.slane %v539, %v543
  %546 = vmatprep.subr.mxu0 0.0
  %547 = vmatpush1.msra.mxu0 %v530
  %548 = vmatprep.subr.mxu0 0.0
  %549 = vmatpush1.msra.mxu0 %v531
  %550 = vmatprep.subr.mxu0 0.0
  %551 = vmatpush1.msra.mxu0 %v532
  %552 = vmatprep.subr.mxu0 0.0
  %553 = vmatpush1.msra.mxu0 %v533
  %554 = vmatprep.subr.mxu0 0.0
  %555 = vmatpush1.msra.mxu0 %v534
  %556 = vmatprep.subr.mxu0 0.0
  %557 = vmatpush1.msra.mxu0 %v535
  %558 = vmatprep.subr.mxu0 0.0
  %559 = vmatpush1.msra.mxu0 %v536
  %560 = vmatprep.subr.mxu0 0.0
  %561 = vmatpush1.msra.mxu0 %v537
  %562 = vmatprep.subr.mxu0 0.0
  %563 = vmatpush1.msra.mxu0 0.0
  %564 = vmatprep.subr.mxu0 0.0
  %565 = vmatpush1.msra.mxu0 0.0
  %566 = vmatprep.subr.mxu0 0.0
  %567 = vmatpush1.msra.mxu0 0.0
  %568 = vmatprep.subr.mxu0 0.0
  %569 = vmatpush1.msra.mxu0 0.0
  %570 = vmatprep.subr.mxu0 0.0
  %571 = vmatpush1.msra.mxu0 0.0
  %572 = vmatprep.subr.mxu0 0.0
  %573 = vmatpush1.msra.mxu0 0.0
  %574 = vmatprep.subr.mxu0 0.0
  %575 = vmatpush1.msra.mxu0 0.0
  %576 = vmatprep.subr.mxu0 0.0
  %577 = vmatpush1.msra.mxu0 0.0
  %578 = vmatprep.subr.mxu0 0.0
  %579 = vmatpush1.msra.mxu0 0.0
  %580 = vmatprep.subr.mxu0 0.0
  %581 = vmatpush1.msra.mxu0 0.0
  %582 = vmatprep.subr.mxu0 0.0
  %583 = vmatpush1.msra.mxu0 0.0
  %584 = vmatprep.subr.mxu0 0.0
  %585 = vmatpush1.msra.mxu0 0.0
  %586 = vmatprep.subr.mxu0 0.0
  %587 = vmatpush1.msra.mxu0 0.0
  %588 = vmatprep.subr.mxu0 0.0
  %589 = vmatpush1.msra.mxu0 0.0
  %590 = vmatprep.subr.mxu0 0.0
  %591 = vmatpush1.msra.mxu0 0.0
  %592 = vmatprep.subr.mxu0 0.0
  %593 = vmatpush1.msra.mxu0 0.0
  %594 = vmatprep.subr.mxu0 0.0
  %595 = vmatpush1.msra.mxu0 0.0
  %596 = vmatprep.subr.mxu0 0.0
  %597 = vmatpush1.msra.mxu0 0.0
  %598 = vmatprep.subr.mxu0 0.0
  %599 = vmatpush1.msra.mxu0 0.0
  %600 = vmatprep.subr.mxu0 0.0
  %601 = vmatpush1.msra.mxu0 0.0
  %602 = vmatprep.subr.mxu0 0.0
  %603 = vmatpush1.msra.mxu0 0.0
  %604 = vmatprep.subr.mxu0 0.0
  %605 = vmatpush1.msra.mxu0 0.0
  %606 = vmatprep.subr.mxu0 0.0
  %607 = vmatpush1.msra.mxu0 0.0
  %608 = vmatprep.subr.mxu0 0.0
  %609 = vmatpush1.msra.mxu0 0.0
  %610 = vmatprep.mubr.f32.mxu0 0.0
  %611 = vmatmul.mubr.f32.gmra.mrb[0].mxu0 %v267
  %v612 = vpop.f32.mrb[0].mxu0
  %v613 = vadd.f32 %v544, %v612
  %v614 = vpop.f32.mrb[0].mxu0
  %615 = vmatprep.mubr.f32.mxu0 0.0
  %616 = vmatmul.mubr.f32.gmra.mrb[0].mxu0 %v270
  %v617 = vpop.f32.mrb[0].mxu0
  %v618 = vadd.f32 %v544, %v617
  %v619 = vpop.f32.mrb[0].mxu0
  %620 = vdwg.mxu0
  %v621 = vmul.f32 %v613, 0.25
  %v622 = vmul.f32 %v618, 0.25
  %s623 = scalar_lea.vmem %s13, 64
  %v624 = vld [vmem:[%s623] sm:$0xff]
  %v625 = vld [vmem:[%s623 + $0x8] sm:$0xff]
  %v626 = vld [vmem:[%s623 + $0x10] sm:$0xff]
  %v627 = vld [vmem:[%s623 + $0x18] sm:$0xff]
  %v628 = vld [vmem:[%s623 + $0x20] sm:$0xff]
  %v629 = vld [vmem:[%s623 + $0x28] sm:$0xff]
  %v630 = vld [vmem:[%s623 + $0x30] sm:$0xff]
  %v631 = vld [vmem:[%s623 + $0x38] sm:$0xff]
  %s632 = scalar_lea.vmem %s19, 1
  %v633 = vld [vmem:[%s632] sm:$0x1]
  %v635 = vlaneseq
  %v636 = vshrl.u32 %v635, 7
  %v637 = vsub.s32 0, %v636
  %v638 = vrot.slane %v633, %v637
  %640 = vmatprep.subr.mxu0 0.0
  %641 = vmatpush1.msra.mxu0 %v624
  %642 = vmatprep.subr.mxu0 0.0
  %643 = vmatpush1.msra.mxu0 %v625
  %644 = vmatprep.subr.mxu0 0.0
  %645 = vmatpush1.msra.mxu0 %v626
  %646 = vmatprep.subr.mxu0 0.0
  %647 = vmatpush1.msra.mxu0 %v627
  %648 = vmatprep.subr.mxu0 0.0
  %649 = vmatpush1.msra.mxu0 %v628
  %650 = vmatprep.subr.mxu0 0.0
  %651 = vmatpush1.msra.mxu0 %v629
  %652 = vmatprep.subr.mxu0 0.0
  %653 = vmatpush1.msra.mxu0 %v630
  %654 = vmatprep.subr.mxu0 0.0
  %655 = vmatpush1.msra.mxu0 %v631
  %656 = vmatprep.subr.mxu0 0.0
  %657 = vmatpush1.msra.mxu0 0.0
  %658 = vmatprep.subr.mxu0 0.0
  %659 = vmatpush1.msra.mxu0 0.0
  %660 = vmatprep.subr.mxu0 0.0
  %661 = vmatpush1.msra.mxu0 0.0
  %662 = vmatprep.subr.mxu0 0.0
  %663 = vmatpush1.msra.mxu0 0.0
  %664 = vmatprep.subr.mxu0 0.0
  %665 = vmatpush1.msra.mxu0 0.0
  %666 = vmatprep.subr.mxu0 0.0
  %667 = vmatpush1.msra.mxu0 0.0
  %668 = vmatprep.subr.mxu0 0.0
  %669 = vmatpush1.msra.mxu0 0.0
  %670 = vmatprep.subr.mxu0 0.0
  %671 = vmatpush1.msra.mxu0 0.0
  %672 = vmatprep.subr.mxu0 0.0
  %673 = vmatpush1.msra.mxu0 0.0
  %674 = vmatprep.subr.mxu0 0.0
  %675 = vmatpush1.msra.mxu0 0.0
  %676 = vmatprep.subr.mxu0 0.0
  %677 = vmatpush1.msra.mxu0 0.0
  %678 = vmatprep.subr.mxu0 0.0
  %679 = vmatpush1.msra.mxu0 0.0
  %680 = vmatprep.subr.mxu0 0.0
  %681 = vmatpush1.msra.mxu0 0.0
  %682 = vmatprep.subr.mxu0 0.0
  %683 = vmatpush1.msra.mxu0 0.0
  %684 = vmatprep.subr.mxu0 0.0
  %685 = vmatpush1.msra.mxu0 0.0
  %686 = vmatprep.subr.mxu0 0.0
  %687 = vmatpush1.msra.mxu0 0.0
  %688 = vmatprep.subr.mxu0 0.0
  %689 = vmatpush1.msra.mxu0 0.0
  %690 = vmatprep.subr.mxu0 0.0
  %691 = vmatpush1.msra.mxu0 0.0
  %692 = vmatprep.subr.mxu0 0.0
  %693 = vmatpush1.msra.mxu0 0.0
  %694 = vmatprep.subr.mxu0 0.0
  %695 = vmatpush1.msra.mxu0 0.0
  %696 = vmatprep.subr.mxu0 0.0
  %697 = vmatpush1.msra.mxu0 0.0
  %698 = vmatprep.subr.mxu0 0.0
  %699 = vmatpush1.msra.mxu0 0.0
  %700 = vmatprep.subr.mxu0 0.0
  %701 = vmatpush1.msra.mxu0 0.0
  %702 = vmatprep.subr.mxu0 0.0
  %703 = vmatpush1.msra.mxu0 0.0
  %704 = vmatprep.mubr.f32.mxu0 0.0
  %705 = vmatmul.mubr.f32.gmra.mrb[0].mxu0 %v267
  %v706 = vpop.f32.mrb[0].mxu0
  %v707 = vadd.f32 %v638, %v706
  %v708 = vpop.f32.mrb[0].mxu0
  %709 = vmatprep.mubr.f32.mxu0 0.0
  %710 = vmatmul.mubr.f32.gmra.mrb[0].mxu0 %v270
  %v711 = vpop.f32.mrb[0].mxu0
  %v712 = vadd.f32 %v638, %v711
  %v713 = vpop.f32.mrb[0].mxu0
  %714 = vdwg.mxu0
  %s715 = scalar_lea.vmem %s15, 64
  %v716 = vld [vmem:[%s715] sm:$0xff]
  %v717 = vld [vmem:[%s715 + $0x8] sm:$0xff]
  %v718 = vld [vmem:[%s715 + $0x10] sm:$0xff]
  %v719 = vld [vmem:[%s715 + $0x18] sm:$0xff]
  %v720 = vld [vmem:[%s715 + $0x20] sm:$0xff]
  %v721 = vld [vmem:[%s715 + $0x28] sm:$0xff]
  %v722 = vld [vmem:[%s715 + $0x30] sm:$0xff]
  %v723 = vld [vmem:[%s715 + $0x38] sm:$0xff]
  %s724 = scalar_lea.vmem %s21, 1
  %v725 = vld [vmem:[%s724] sm:$0x1]
  %v727 = vlaneseq
  %v728 = vshrl.u32 %v727, 7
  %v729 = vsub.s32 0, %v728
  %v730 = vrot.slane %v725, %v729
  %732 = vmatprep.subr.mxu0 0.0
  %733 = vmatpush1.msra.mxu0 %v716
  %734 = vmatprep.subr.mxu0 0.0
  %735 = vmatpush1.msra.mxu0 %v717
  %736 = vmatprep.subr.mxu0 0.0
  %737 = vmatpush1.msra.mxu0 %v718
  %738 = vmatprep.subr.mxu0 0.0
  %739 = vmatpush1.msra.mxu0 %v719
  %740 = vmatprep.subr.mxu0 0.0
  %741 = vmatpush1.msra.mxu0 %v720
  %742 = vmatprep.subr.mxu0 0.0
  %743 = vmatpush1.msra.mxu0 %v721
  %744 = vmatprep.subr.mxu0 0.0
  %745 = vmatpush1.msra.mxu0 %v722
  %746 = vmatprep.subr.mxu0 0.0
  %747 = vmatpush1.msra.mxu0 %v723
  %748 = vmatprep.subr.mxu0 0.0
  %749 = vmatpush1.msra.mxu0 0.0
  %750 = vmatprep.subr.mxu0 0.0
  %751 = vmatpush1.msra.mxu0 0.0
  %752 = vmatprep.subr.mxu0 0.0
  %753 = vmatpush1.msra.mxu0 0.0
  %754 = vmatprep.subr.mxu0 0.0
  %755 = vmatpush1.msra.mxu0 0.0
  %756 = vmatprep.subr.mxu0 0.0
  %757 = vmatpush1.msra.mxu0 0.0
  %758 = vmatprep.subr.mxu0 0.0
  %759 = vmatpush1.msra.mxu0 0.0
  %760 = vmatprep.subr.mxu0 0.0
  %761 = vmatpush1.msra.mxu0 0.0
  %762 = vmatprep.subr.mxu0 0.0
  %763 = vmatpush1.msra.mxu0 0.0
  %764 = vmatprep.subr.mxu0 0.0
  %765 = vmatpush1.msra.mxu0 0.0
  %766 = vmatprep.subr.mxu0 0.0
  %767 = vmatpush1.msra.mxu0 0.0
  %768 = vmatprep.subr.mxu0 0.0
  %769 = vmatpush1.msra.mxu0 0.0
  %770 = vmatprep.subr.mxu0 0.0
  %771 = vmatpush1.msra.mxu0 0.0
  %772 = vmatprep.subr.mxu0 0.0
  %773 = vmatpush1.msra.mxu0 0.0
  %774 = vmatprep.subr.mxu0 0.0
  %775 = vmatpush1.msra.mxu0 0.0
  %776 = vmatprep.subr.mxu0 0.0
  %777 = vmatpush1.msra.mxu0 0.0
  %778 = vmatprep.subr.mxu0 0.0
  %779 = vmatpush1.msra.mxu0 0.0
  %780 = vmatprep.subr.mxu0 0.0
  %781 = vmatpush1.msra.mxu0 0.0
  %782 = vmatprep.subr.mxu0 0.0
  %783 = vmatpush1.msra.mxu0 0.0
  %784 = vmatprep.subr.mxu0 0.0
  %785 = vmatpush1.msra.mxu0 0.0
  %786 = vmatprep.subr.mxu0 0.0
  %787 = vmatpush1.msra.mxu0 0.0
  %788 = vmatprep.subr.mxu0 0.0
  %789 = vmatpush1.msra.mxu0 0.0
  %790 = vmatprep.subr.mxu0 0.0
  %791 = vmatpush1.msra.mxu0 0.0
  %792 = vmatprep.subr.mxu0 0.0
  %793 = vmatpush1.msra.mxu0 0.0
  %794 = vmatprep.subr.mxu0 0.0
  %795 = vmatpush1.msra.mxu0 0.0
  %796 = vmatprep.mubr.f32.mxu0 0.0
  %797 = vmatmul.mubr.f32.gmra.mrb[0].mxu0 %v267
  %v798 = vpop.f32.mrb[0].mxu0
  %v799 = vadd.f32 %v730, %v798
  %v800 = vpop.f32.mrb[0].mxu0
  %801 = vmatprep.mubr.f32.mxu0 0.0
  %802 = vmatmul.mubr.f32.gmra.mrb[0].mxu0 %v270
  %v803 = vpop.f32.mrb[0].mxu0
  %v804 = vadd.f32 %v730, %v803
  %v805 = vpop.f32.mrb[0].mxu0
  %806 = vdwg.mxu0
  %s807 = scalar_lea.vmem %s11, 128
  %v808 = vld [vmem:[%s807] sm:$0xff]
  %v809 = vld [vmem:[%s807 + $0x8] sm:$0xff]
  %v810 = vld [vmem:[%s807 + $0x10] sm:$0xff]
  %v811 = vld [vmem:[%s807 + $0x18] sm:$0xff]
  %v812 = vld [vmem:[%s807 + $0x20] sm:$0xff]
  %v813 = vld [vmem:[%s807 + $0x28] sm:$0xff]
  %v814 = vld [vmem:[%s807 + $0x30] sm:$0xff]
  %v815 = vld [vmem:[%s807 + $0x38] sm:$0xff]
  %s816 = scalar_lea.vmem %s17, 2
  %v817 = vld [vmem:[%s816] sm:$0x1]
  %v819 = vlaneseq
  %v820 = vshrl.u32 %v819, 7
  %v821 = vsub.s32 0, %v820
  %v822 = vrot.slane %v817, %v821
  %824 = vmatprep.subr.mxu0 0.0
  %825 = vmatpush1.msra.mxu0 %v808
  %826 = vmatprep.subr.mxu0 0.0
  %827 = vmatpush1.msra.mxu0 %v809
  %828 = vmatprep.subr.mxu0 0.0
  %829 = vmatpush1.msra.mxu0 %v810
  %830 = vmatprep.subr.mxu0 0.0
  %831 = vmatpush1.msra.mxu0 %v811
  %832 = vmatprep.subr.mxu0 0.0
  %833 = vmatpush1.msra.mxu0 %v812
  %834 = vmatprep.subr.mxu0 0.0
  %835 = vmatpush1.msra.mxu0 %v813
  %836 = vmatprep.subr.mxu0 0.0
  %837 = vmatpush1.msra.mxu0 %v814
  %838 = vmatprep.subr.mxu0 0.0
  %839 = vmatpush1.msra.mxu0 %v815
  %840 = vmatprep.subr.mxu0 0.0
  %841 = vmatpush1.msra.mxu0 0.0
  %842 = vmatprep.subr.mxu0 0.0
  %843 = vmatpush1.msra.mxu0 0.0
  %844 = vmatprep.subr.mxu0 0.0
  %845 = vmatpush1.msra.mxu0 0.0
  %846 = vmatprep.subr.mxu0 0.0
  %847 = vmatpush1.msra.mxu0 0.0
  %848 = vmatprep.subr.mxu0 0.0
  %849 = vmatpush1.msra.mxu0 0.0
  %850 = vmatprep.subr.mxu0 0.0
  %851 = vmatpush1.msra.mxu0 0.0
  %852 = vmatprep.subr.mxu0 0.0
  %853 = vmatpush1.msra.mxu0 0.0
  %854 = vmatprep.subr.mxu0 0.0
  %855 = vmatpush1.msra.mxu0 0.0
  %856 = vmatprep.subr.mxu0 0.0
  %857 = vmatpush1.msra.mxu0 0.0
  %858 = vmatprep.subr.mxu0 0.0
  %859 = vmatpush1.msra.mxu0 0.0
  %860 = vmatprep.subr.mxu0 0.0
  %861 = vmatpush1.msra.mxu0 0.0
  %862 = vmatprep.subr.mxu0 0.0
  %863 = vmatpush1.msra.mxu0 0.0
  %864 = vmatprep.subr.mxu0 0.0
  %865 = vmatpush1.msra.mxu0 0.0
  %866 = vmatprep.subr.mxu0 0.0
  %867 = vmatpush1.msra.mxu0 0.0
  %868 = vmatprep.subr.mxu0 0.0
  %869 = vmatpush1.msra.mxu0 0.0
  %870 = vmatprep.subr.mxu0 0.0
  %871 = vmatpush1.msra.mxu0 0.0
  %872 = vmatprep.subr.mxu0 0.0
  %873 = vmatpush1.msra.mxu0 0.0
  %874 = vmatprep.subr.mxu0 0.0
  %875 = vmatpush1.msra.mxu0 0.0
  %876 = vmatprep.subr.mxu0 0.0
  %877 = vmatpush1.msra.mxu0 0.0
  %878 = vmatprep.subr.mxu0 0.0
  %879 = vmatpush1.msra.mxu0 0.0
  %880 = vmatprep.subr.mxu0 0.0
  %881 = vmatpush1.msra.mxu0 0.0
  %882 = vmatprep.subr.mxu0 0.0
  %883 = vmatpush1.msra.mxu0 0.0
  %884 = vmatprep.subr.mxu0 0.0
  %885 = vmatpush1.msra.mxu0 0.0
  %886 = vmatprep.subr.mxu0 0.0
  %887 = vmatpush1.msra.mxu0 0.0
  %888 = vmatprep.mubr.f32.mxu0 0.0
  %889 = vmatmul.mubr.f32.gmra.mrb[0].mxu0 %v267
  %v890 = vpop.f32.mrb[0].mxu0
  %v891 = vadd.f32 %v822, %v890
  %v892 = vpop.f32.mrb[0].mxu0
  %893 = vmatprep.mubr.f32.mxu0 0.0
  %894 = vmatmul.mubr.f32.gmra.mrb[0].mxu0 %v270
  %v895 = vpop.f32.mrb[0].mxu0
  %v896 = vadd.f32 %v822, %v895
  %v897 = vpop.f32.mrb[0].mxu0
  %898 = vdwg.mxu0
  %v899 = vmul.f32 %v891, 0.25
  %v900 = vmul.f32 %v896, 0.25
  %s901 = scalar_lea.vmem %s13, 128
  %v902 = vld [vmem:[%s901] sm:$0xff]
  %v903 = vld [vmem:[%s901 + $0x8] sm:$0xff]
  %v904 = vld [vmem:[%s901 + $0x10] sm:$0xff]
  %v905 = vld [vmem:[%s901 + $0x18] sm:$0xff]
  %v906 = vld [vmem:[%s901 + $0x20] sm:$0xff]
  %v907 = vld [vmem:[%s901 + $0x28] sm:$0xff]
  %v908 = vld [vmem:[%s901 + $0x30] sm:$0xff]
  %v909 = vld [vmem:[%s901 + $0x38] sm:$0xff]
  %s910 = scalar_lea.vmem %s19, 2
  %v911 = vld [vmem:[%s910] sm:$0x1]
  %v913 = vlaneseq
  %v914 = vshrl.u32 %v913, 7
  %v915 = vsub.s32 0, %v914
  %v916 = vrot.slane %v911, %v915
  %918 = vmatprep.subr.mxu0 0.0
  %919 = vmatpush1.msra.mxu0 %v902
  %920 = vmatprep.subr.mxu0 0.0
  %921 = vmatpush1.msra.mxu0 %v903
  %922 = vmatprep.subr.mxu0 0.0
  %923 = vmatpush1.msra.mxu0 %v904
  %924 = vmatprep.subr.mxu0 0.0
  %925 = vmatpush1.msra.mxu0 %v905
  %926 = vmatprep.subr.mxu0 0.0
  %927 = vmatpush1.msra.mxu0 %v906
  %928 = vmatprep.subr.mxu0 0.0
  %929 = vmatpush1.msra.mxu0 %v907
  %930 = vmatprep.subr.mxu0 0.0
  %931 = vmatpush1.msra.mxu0 %v908
  %932 = vmatprep.subr.mxu0 0.0
  %933 = vmatpush1.msra.mxu0 %v909
  %934 = vmatprep.subr.mxu0 0.0
  %935 = vmatpush1.msra.mxu0 0.0
  %936 = vmatprep.subr.mxu0 0.0
  %937 = vmatpush1.msra.mxu0 0.0
  %938 = vmatprep.subr.mxu0 0.0
  %939 = vmatpush1.msra.mxu0 0.0
  %940 = vmatprep.subr.mxu0 0.0
  %941 = vmatpush1.msra.mxu0 0.0
  %942 = vmatprep.subr.mxu0 0.0
  %943 = vmatpush1.msra.mxu0 0.0
  %944 = vmatprep.subr.mxu0 0.0
  %945 = vmatpush1.msra.mxu0 0.0
  %946 = vmatprep.subr.mxu0 0.0
  %947 = vmatpush1.msra.mxu0 0.0
  %948 = vmatprep.subr.mxu0 0.0
  %949 = vmatpush1.msra.mxu0 0.0
  %950 = vmatprep.subr.mxu0 0.0
  %951 = vmatpush1.msra.mxu0 0.0
  %952 = vmatprep.subr.mxu0 0.0
  %953 = vmatpush1.msra.mxu0 0.0
  %954 = vmatprep.subr.mxu0 0.0
  %955 = vmatpush1.msra.mxu0 0.0
  %956 = vmatprep.subr.mxu0 0.0
  %957 = vmatpush1.msra.mxu0 0.0
  %958 = vmatprep.subr.mxu0 0.0
  %959 = vmatpush1.msra.mxu0 0.0
  %960 = vmatprep.subr.mxu0 0.0
  %961 = vmatpush1.msra.mxu0 0.0
  %962 = vmatprep.subr.mxu0 0.0
  %963 = vmatpush1.msra.mxu0 0.0
  %964 = vmatprep.subr.mxu0 0.0
  %965 = vmatpush1.msra.mxu0 0.0
  %966 = vmatprep.subr.mxu0 0.0
  %967 = vmatpush1.msra.mxu0 0.0
  %968 = vmatprep.subr.mxu0 0.0
  %969 = vmatpush1.msra.mxu0 0.0
  %970 = vmatprep.subr.mxu0 0.0
  %971 = vmatpush1.msra.mxu0 0.0
  %972 = vmatprep.subr.mxu0 0.0
  %973 = vmatpush1.msra.mxu0 0.0
  %974 = vmatprep.subr.mxu0 0.0
  %975 = vmatpush1.msra.mxu0 0.0
  %976 = vmatprep.subr.mxu0 0.0
  %977 = vmatpush1.msra.mxu0 0.0
  %978 = vmatprep.subr.mxu0 0.0
  %979 = vmatpush1.msra.mxu0 0.0
  %980 = vmatprep.subr.mxu0 0.0
  %981 = vmatpush1.msra.mxu0 0.0
  %982 = vmatprep.mubr.f32.mxu0 0.0
  %983 = vmatmul.mubr.f32.gmra.mrb[0].mxu0 %v267
  %v984 = vpop.f32.mrb[0].mxu0
  %v985 = vadd.f32 %v916, %v984
  %v986 = vpop.f32.mrb[0].mxu0
  %987 = vmatprep.mubr.f32.mxu0 0.0
  %988 = vmatmul.mubr.f32.gmra.mrb[0].mxu0 %v270
  %v989 = vpop.f32.mrb[0].mxu0
  %v990 = vadd.f32 %v916, %v989
  %v991 = vpop.f32.mrb[0].mxu0
  %992 = vdwg.mxu0
  %s993 = scalar_lea.vmem %s15, 128
  %v994 = vld [vmem:[%s993] sm:$0xff]
  %v995 = vld [vmem:[%s993 + $0x8] sm:$0xff]
  %v996 = vld [vmem:[%s993 + $0x10] sm:$0xff]
  %v997 = vld [vmem:[%s993 + $0x18] sm:$0xff]
  %v998 = vld [vmem:[%s993 + $0x20] sm:$0xff]
  %v999 = vld [vmem:[%s993 + $0x28] sm:$0xff]
  %v1000 = vld [vmem:[%s993 + $0x30] sm:$0xff]
  %v1001 = vld [vmem:[%s993 + $0x38] sm:$0xff]
  %s1002 = scalar_lea.vmem %s21, 2
  %v1003 = vld [vmem:[%s1002] sm:$0x1]
  %v1005 = vlaneseq
  %v1006 = vshrl.u32 %v1005, 7
  %v1007 = vsub.s32 0, %v1006
  %v1008 = vrot.slane %v1003, %v1007
  %1010 = vmatprep.subr.mxu0 0.0
  %1011 = vmatpush1.msra.mxu0 %v994
  %1012 = vmatprep.subr.mxu0 0.0
  %1013 = vmatpush1.msra.mxu0 %v995
  %1014 = vmatprep.subr.mxu0 0.0
  %1015 = vmatpush1.msra.mxu0 %v996
  %1016 = vmatprep.subr.mxu0 0.0
  %1017 = vmatpush1.msra.mxu0 %v997
  %1018 = vmatprep.subr.mxu0 0.0
  %1019 = vmatpush1.msra.mxu0 %v998
  %1020 = vmatprep.subr.mxu0 0.0
  %1021 = vmatpush1.msra.mxu0 %v999
  %1022 = vmatprep.subr.mxu0 0.0
  %1023 = vmatpush1.msra.mxu0 %v1000
  %1024 = vmatprep.subr.mxu0 0.0
  %1025 = vmatpush1.msra.mxu0 %v1001
  %1026 = vmatprep.subr.mxu0 0.0
  %1027 = vmatpush1.msra.mxu0 0.0
  %1028 = vmatprep.subr.mxu0 0.0
  %1029 = vmatpush1.msra.mxu0 0.0
  %1030 = vmatprep.subr.mxu0 0.0
  %1031 = vmatpush1.msra.mxu0 0.0
  %1032 = vmatprep.subr.mxu0 0.0
  %1033 = vmatpush1.msra.mxu0 0.0
  %1034 = vmatprep.subr.mxu0 0.0
  %1035 = vmatpush1.msra.mxu0 0.0
  %1036 = vmatprep.subr.mxu0 0.0
  %1037 = vmatpush1.msra.mxu0 0.0
  %1038 = vmatprep.subr.mxu0 0.0
  %1039 = vmatpush1.msra.mxu0 0.0
  %1040 = vmatprep.subr.mxu0 0.0
  %1041 = vmatpush1.msra.mxu0 0.0
  %1042 = vmatprep.subr.mxu0 0.0
  %1043 = vmatpush1.msra.mxu0 0.0
  %1044 = vmatprep.subr.mxu0 0.0
  %1045 = vmatpush1.msra.mxu0 0.0
  %1046 = vmatprep.subr.mxu0 0.0
  %1047 = vmatpush1.msra.mxu0 0.0
  %1048 = vmatprep.subr.mxu0 0.0
  %1049 = vmatpush1.msra.mxu0 0.0
  %1050 = vmatprep.subr.mxu0 0.0
  %1051 = vmatpush1.msra.mxu0 0.0
  %1052 = vmatprep.subr.mxu0 0.0
  %1053 = vmatpush1.msra.mxu0 0.0
  %1054 = vmatprep.subr.mxu0 0.0
  %1055 = vmatpush1.msra.mxu0 0.0
  %1056 = vmatprep.subr.mxu0 0.0
  %1057 = vmatpush1.msra.mxu0 0.0
  %1058 = vmatprep.subr.mxu0 0.0
  %1059 = vmatpush1.msra.mxu0 0.0
  %1060 = vmatprep.subr.mxu0 0.0
  %1061 = vmatpush1.msra.mxu0 0.0
  %1062 = vmatprep.subr.mxu0 0.0
  %1063 = vmatpush1.msra.mxu0 0.0
  %1064 = vmatprep.subr.mxu0 0.0
  %1065 = vmatpush1.msra.mxu0 0.0
  %1066 = vmatprep.subr.mxu0 0.0
  %1067 = vmatpush1.msra.mxu0 0.0
  %1068 = vmatprep.subr.mxu0 0.0
  %1069 = vmatpush1.msra.mxu0 0.0
  %1070 = vmatprep.subr.mxu0 0.0
  %1071 = vmatpush1.msra.mxu0 0.0
  %1072 = vmatprep.subr.mxu0 0.0
  %1073 = vmatpush1.msra.mxu0 0.0
  %1074 = vmatprep.mubr.f32.mxu0 0.0
  %1075 = vmatmul.mubr.f32.gmra.mrb[0].mxu0 %v267
  %v1076 = vpop.f32.mrb[0].mxu0
  %v1077 = vadd.f32 %v1008, %v1076
  %v1078 = vpop.f32.mrb[0].mxu0
  %1079 = vmatprep.mubr.f32.mxu0 0.0
  %1080 = vmatmul.mubr.f32.gmra.mrb[0].mxu0 %v270
  %v1081 = vpop.f32.mrb[0].mxu0
  %v1082 = vadd.f32 %v1008, %v1081
  %v1083 = vpop.f32.mrb[0].mxu0
  %1084 = vdwg.mxu0
  %s1085 = scalar_lea.vmem %s11, 192
  %v1086 = vld [vmem:[%s1085] sm:$0xff]
  %v1087 = vld [vmem:[%s1085 + $0x8] sm:$0xff]
  %v1088 = vld [vmem:[%s1085 + $0x10] sm:$0xff]
  %v1089 = vld [vmem:[%s1085 + $0x18] sm:$0xff]
  %v1090 = vld [vmem:[%s1085 + $0x20] sm:$0xff]
  %v1091 = vld [vmem:[%s1085 + $0x28] sm:$0xff]
  %v1092 = vld [vmem:[%s1085 + $0x30] sm:$0xff]
  %v1093 = vld [vmem:[%s1085 + $0x38] sm:$0xff]
  %s1094 = scalar_lea.vmem %s17, 3
  %v1095 = vld [vmem:[%s1094] sm:$0x1]
  %v1097 = vlaneseq
  %v1098 = vshrl.u32 %v1097, 7
  %v1099 = vsub.s32 0, %v1098
  %v1100 = vrot.slane %v1095, %v1099
  %1102 = vmatprep.subr.mxu0 0.0
  %1103 = vmatpush1.msra.mxu0 %v1086
  %1104 = vmatprep.subr.mxu0 0.0
  %1105 = vmatpush1.msra.mxu0 %v1087
  %1106 = vmatprep.subr.mxu0 0.0
  %1107 = vmatpush1.msra.mxu0 %v1088
  %1108 = vmatprep.subr.mxu0 0.0
  %1109 = vmatpush1.msra.mxu0 %v1089
  %1110 = vmatprep.subr.mxu0 0.0
  %1111 = vmatpush1.msra.mxu0 %v1090
  %1112 = vmatprep.subr.mxu0 0.0
  %1113 = vmatpush1.msra.mxu0 %v1091
  %1114 = vmatprep.subr.mxu0 0.0
  %1115 = vmatpush1.msra.mxu0 %v1092
  %1116 = vmatprep.subr.mxu0 0.0
  %1117 = vmatpush1.msra.mxu0 %v1093
  %1118 = vmatprep.subr.mxu0 0.0
  %1119 = vmatpush1.msra.mxu0 0.0
  %1120 = vmatprep.subr.mxu0 0.0
  %1121 = vmatpush1.msra.mxu0 0.0
  %1122 = vmatprep.subr.mxu0 0.0
  %1123 = vmatpush1.msra.mxu0 0.0
  %1124 = vmatprep.subr.mxu0 0.0
  %1125 = vmatpush1.msra.mxu0 0.0
  %1126 = vmatprep.subr.mxu0 0.0
  %1127 = vmatpush1.msra.mxu0 0.0
  %1128 = vmatprep.subr.mxu0 0.0
  %1129 = vmatpush1.msra.mxu0 0.0
  %1130 = vmatprep.subr.mxu0 0.0
  %1131 = vmatpush1.msra.mxu0 0.0
  %1132 = vmatprep.subr.mxu0 0.0
  %1133 = vmatpush1.msra.mxu0 0.0
  %1134 = vmatprep.subr.mxu0 0.0
  %1135 = vmatpush1.msra.mxu0 0.0
  %1136 = vmatprep.subr.mxu0 0.0
  %1137 = vmatpush1.msra.mxu0 0.0
  %1138 = vmatprep.subr.mxu0 0.0
  %1139 = vmatpush1.msra.mxu0 0.0
  %1140 = vmatprep.subr.mxu0 0.0
  %1141 = vmatpush1.msra.mxu0 0.0
  %1142 = vmatprep.subr.mxu0 0.0
  %1143 = vmatpush1.msra.mxu0 0.0
  %1144 = vmatprep.subr.mxu0 0.0
  %1145 = vmatpush1.msra.mxu0 0.0
  %1146 = vmatprep.subr.mxu0 0.0
  %1147 = vmatpush1.msra.mxu0 0.0
  %1148 = vmatprep.subr.mxu0 0.0
  %1149 = vmatpush1.msra.mxu0 0.0
  %1150 = vmatprep.subr.mxu0 0.0
  %1151 = vmatpush1.msra.mxu0 0.0
  %1152 = vmatprep.subr.mxu0 0.0
  %1153 = vmatpush1.msra.mxu0 0.0
  %1154 = vmatprep.subr.mxu0 0.0
  %1155 = vmatpush1.msra.mxu0 0.0
  %1156 = vmatprep.subr.mxu0 0.0
  %1157 = vmatpush1.msra.mxu0 0.0
  %1158 = vmatprep.subr.mxu0 0.0
  %1159 = vmatpush1.msra.mxu0 0.0
  %1160 = vmatprep.subr.mxu0 0.0
  %1161 = vmatpush1.msra.mxu0 0.0
  %1162 = vmatprep.subr.mxu0 0.0
  %1163 = vmatpush1.msra.mxu0 0.0
  %1164 = vmatprep.subr.mxu0 0.0
  %1165 = vmatpush1.msra.mxu0 0.0
  %1166 = vmatprep.mubr.f32.mxu0 0.0
  %1167 = vmatmul.mubr.f32.gmra.mrb[0].mxu0 %v267
  %v1168 = vpop.f32.mrb[0].mxu0
  %v1169 = vadd.f32 %v1100, %v1168
  %v1170 = vpop.f32.mrb[0].mxu0
  %1171 = vmatprep.mubr.f32.mxu0 0.0
  %1172 = vmatmul.mubr.f32.gmra.mrb[0].mxu0 %v270
  %v1173 = vpop.f32.mrb[0].mxu0
  %v1174 = vadd.f32 %v1100, %v1173
  %v1175 = vpop.f32.mrb[0].mxu0
  %1176 = vdwg.mxu0
  %v1177 = vmul.f32 %v1169, 0.25
  %v1178 = vmul.f32 %v1174, 0.25
  %s1179 = scalar_lea.vmem %s13, 192
  %v1180 = vld [vmem:[%s1179] sm:$0xff]
  %v1181 = vld [vmem:[%s1179 + $0x8] sm:$0xff]
  %v1182 = vld [vmem:[%s1179 + $0x10] sm:$0xff]
  %v1183 = vld [vmem:[%s1179 + $0x18] sm:$0xff]
  %v1184 = vld [vmem:[%s1179 + $0x20] sm:$0xff]
  %v1185 = vld [vmem:[%s1179 + $0x28] sm:$0xff]
  %v1186 = vld [vmem:[%s1179 + $0x30] sm:$0xff]
  %v1187 = vld [vmem:[%s1179 + $0x38] sm:$0xff]
  %s1188 = scalar_lea.vmem %s19, 3
  %v1189 = vld [vmem:[%s1188] sm:$0x1]
  %v1191 = vlaneseq
  %v1192 = vshrl.u32 %v1191, 7
  %v1193 = vsub.s32 0, %v1192
  %v1194 = vrot.slane %v1189, %v1193
  %1196 = vmatprep.subr.mxu0 0.0
  %1197 = vmatpush1.msra.mxu0 %v1180
  %1198 = vmatprep.subr.mxu0 0.0
  %1199 = vmatpush1.msra.mxu0 %v1181
  %1200 = vmatprep.subr.mxu0 0.0
  %1201 = vmatpush1.msra.mxu0 %v1182
  %1202 = vmatprep.subr.mxu0 0.0
  %1203 = vmatpush1.msra.mxu0 %v1183
  %1204 = vmatprep.subr.mxu0 0.0
  %1205 = vmatpush1.msra.mxu0 %v1184
  %1206 = vmatprep.subr.mxu0 0.0
  %1207 = vmatpush1.msra.mxu0 %v1185
  %1208 = vmatprep.subr.mxu0 0.0
  %1209 = vmatpush1.msra.mxu0 %v1186
  %1210 = vmatprep.subr.mxu0 0.0
  %1211 = vmatpush1.msra.mxu0 %v1187
  %1212 = vmatprep.subr.mxu0 0.0
  %1213 = vmatpush1.msra.mxu0 0.0
  %1214 = vmatprep.subr.mxu0 0.0
  %1215 = vmatpush1.msra.mxu0 0.0
  %1216 = vmatprep.subr.mxu0 0.0
  %1217 = vmatpush1.msra.mxu0 0.0
  %1218 = vmatprep.subr.mxu0 0.0
  %1219 = vmatpush1.msra.mxu0 0.0
  %1220 = vmatprep.subr.mxu0 0.0
  %1221 = vmatpush1.msra.mxu0 0.0
  %1222 = vmatprep.subr.mxu0 0.0
  %1223 = vmatpush1.msra.mxu0 0.0
  %1224 = vmatprep.subr.mxu0 0.0
  %1225 = vmatpush1.msra.mxu0 0.0
  %1226 = vmatprep.subr.mxu0 0.0
  %1227 = vmatpush1.msra.mxu0 0.0
  %1228 = vmatprep.subr.mxu0 0.0
  %1229 = vmatpush1.msra.mxu0 0.0
  %1230 = vmatprep.subr.mxu0 0.0
  %1231 = vmatpush1.msra.mxu0 0.0
  %1232 = vmatprep.subr.mxu0 0.0
  %1233 = vmatpush1.msra.mxu0 0.0
  %1234 = vmatprep.subr.mxu0 0.0
  %1235 = vmatpush1.msra.mxu0 0.0
  %1236 = vmatprep.subr.mxu0 0.0
  %1237 = vmatpush1.msra.mxu0 0.0
  %1238 = vmatprep.subr.mxu0 0.0
  %1239 = vmatpush1.msra.mxu0 0.0
  %1240 = vmatprep.subr.mxu0 0.0
  %1241 = vmatpush1.msra.mxu0 0.0
  %1242 = vmatprep.subr.mxu0 0.0
  %1243 = vmatpush1.msra.mxu0 0.0
  %1244 = vmatprep.subr.mxu0 0.0
  %1245 = vmatpush1.msra.mxu0 0.0
  %1246 = vmatprep.subr.mxu0 0.0
  %1247 = vmatpush1.msra.mxu0 0.0
  %1248 = vmatprep.subr.mxu0 0.0
  %1249 = vmatpush1.msra.mxu0 0.0
  %1250 = vmatprep.subr.mxu0 0.0
  %1251 = vmatpush1.msra.mxu0 0.0
  %1252 = vmatprep.subr.mxu0 0.0
  %1253 = vmatpush1.msra.mxu0 0.0
  %1254 = vmatprep.subr.mxu0 0.0
  %1255 = vmatpush1.msra.mxu0 0.0
  %1256 = vmatprep.subr.mxu0 0.0
  %1257 = vmatpush1.msra.mxu0 0.0
  %1258 = vmatprep.subr.mxu0 0.0
  %1259 = vmatpush1.msra.mxu0 0.0
  %1260 = vmatprep.mubr.f32.mxu0 0.0
  %1261 = vmatmul.mubr.f32.gmra.mrb[0].mxu0 %v267
  %v1262 = vpop.f32.mrb[0].mxu0
  %v1263 = vadd.f32 %v1194, %v1262
  %v1264 = vpop.f32.mrb[0].mxu0
  %1265 = vmatprep.mubr.f32.mxu0 0.0
  %1266 = vmatmul.mubr.f32.gmra.mrb[0].mxu0 %v270
  %v1267 = vpop.f32.mrb[0].mxu0
  %v1268 = vadd.f32 %v1194, %v1267
  %v1269 = vpop.f32.mrb[0].mxu0
  %1270 = vdwg.mxu0
  %s1271 = scalar_lea.vmem %s15, 192
  %v1272 = vld [vmem:[%s1271] sm:$0xff]
  %v1273 = vld [vmem:[%s1271 + $0x8] sm:$0xff]
  %v1274 = vld [vmem:[%s1271 + $0x10] sm:$0xff]
  %v1275 = vld [vmem:[%s1271 + $0x18] sm:$0xff]
  %v1276 = vld [vmem:[%s1271 + $0x20] sm:$0xff]
  %v1277 = vld [vmem:[%s1271 + $0x28] sm:$0xff]
  %v1278 = vld [vmem:[%s1271 + $0x30] sm:$0xff]
  %v1279 = vld [vmem:[%s1271 + $0x38] sm:$0xff]
  %s1280 = scalar_lea.vmem %s21, 3
  %v1281 = vld [vmem:[%s1280] sm:$0x1]
  %v1283 = vlaneseq
  %v1284 = vshrl.u32 %v1283, 7
  %v1285 = vsub.s32 0, %v1284
  %v1286 = vrot.slane %v1281, %v1285
  %1288 = vmatprep.subr.mxu0 0.0
  %1289 = vmatpush1.msra.mxu0 %v1272
  %1290 = vmatprep.subr.mxu0 0.0
  %1291 = vmatpush1.msra.mxu0 %v1273
  %1292 = vmatprep.subr.mxu0 0.0
  %1293 = vmatpush1.msra.mxu0 %v1274
  %1294 = vmatprep.subr.mxu0 0.0
  %1295 = vmatpush1.msra.mxu0 %v1275
  %1296 = vmatprep.subr.mxu0 0.0
  %1297 = vmatpush1.msra.mxu0 %v1276
  %1298 = vmatprep.subr.mxu0 0.0
  %1299 = vmatpush1.msra.mxu0 %v1277
  %1300 = vmatprep.subr.mxu0 0.0
  %1301 = vmatpush1.msra.mxu0 %v1278
  %1302 = vmatprep.subr.mxu0 0.0
  %1303 = vmatpush1.msra.mxu0 %v1279
  %1304 = vmatprep.subr.mxu0 0.0
  %1305 = vmatpush1.msra.mxu0 0.0
  %1306 = vmatprep.subr.mxu0 0.0
  %1307 = vmatpush1.msra.mxu0 0.0
  %1308 = vmatprep.subr.mxu0 0.0
  %1309 = vmatpush1.msra.mxu0 0.0
  %1310 = vmatprep.subr.mxu0 0.0
  %1311 = vmatpush1.msra.mxu0 0.0
  %1312 = vmatprep.subr.mxu0 0.0
  %1313 = vmatpush1.msra.mxu0 0.0
  %1314 = vmatprep.subr.mxu0 0.0
  %1315 = vmatpush1.msra.mxu0 0.0
  %1316 = vmatprep.subr.mxu0 0.0
  %1317 = vmatpush1.msra.mxu0 0.0
  %1318 = vmatprep.subr.mxu0 0.0
  %1319 = vmatpush1.msra.mxu0 0.0
  %1320 = vmatprep.subr.mxu0 0.0
  %1321 = vmatpush1.msra.mxu0 0.0
  %1322 = vmatprep.subr.mxu0 0.0
  %1323 = vmatpush1.msra.mxu0 0.0
  %1324 = vmatprep.subr.mxu0 0.0
  %1325 = vmatpush1.msra.mxu0 0.0
  %1326 = vmatprep.subr.mxu0 0.0
  %1327 = vmatpush1.msra.mxu0 0.0
  %1328 = vmatprep.subr.mxu0 0.0
  %1329 = vmatpush1.msra.mxu0 0.0
  %1330 = vmatprep.subr.mxu0 0.0
  %1331 = vmatpush1.msra.mxu0 0.0
  %1332 = vmatprep.subr.mxu0 0.0
  %1333 = vmatpush1.msra.mxu0 0.0
  %1334 = vmatprep.subr.mxu0 0.0
  %1335 = vmatpush1.msra.mxu0 0.0
  %1336 = vmatprep.subr.mxu0 0.0
  %1337 = vmatpush1.msra.mxu0 0.0
  %1338 = vmatprep.subr.mxu0 0.0
  %1339 = vmatpush1.msra.mxu0 0.0
  %1340 = vmatprep.subr.mxu0 0.0
  %1341 = vmatpush1.msra.mxu0 0.0
  %1342 = vmatprep.subr.mxu0 0.0
  %1343 = vmatpush1.msra.mxu0 0.0
  %1344 = vmatprep.subr.mxu0 0.0
  %1345 = vmatpush1.msra.mxu0 0.0
  %1346 = vmatprep.subr.mxu0 0.0
  %1347 = vmatpush1.msra.mxu0 0.0
  %1348 = vmatprep.subr.mxu0 0.0
  %1349 = vmatpush1.msra.mxu0 0.0
  %1350 = vmatprep.subr.mxu0 0.0
  %1351 = vmatpush1.msra.mxu0 0.0
  %1352 = vmatprep.mubr.f32.mxu0 0.0
  %1353 = vmatmul.mubr.f32.gmra.mrb[0].mxu0 %v267
  %v1354 = vpop.f32.mrb[0].mxu0
  %v1355 = vadd.f32 %v1286, %v1354
  %v1356 = vpop.f32.mrb[0].mxu0
  %1357 = vmatprep.mubr.f32.mxu0 0.0
  %1358 = vmatmul.mubr.f32.gmra.mrb[0].mxu0 %v270
  %v1359 = vpop.f32.mrb[0].mxu0
  %v1360 = vadd.f32 %v1286, %v1359
  %v1361 = vpop.f32.mrb[0].mxu0
  %1362 = vdwg.mxu0
  %vm1363 = vcmask 130048
  %v1365 = vsel %vm1363, %v347, 0
  %v1368 = vsel %vm1363, %v431, 0
  %1370 = vmatprep.subr.mxu0 0.0
  %1371 = vmatpush1.xpose.msra.mxu0 %v1368
  %1372 = vmatprep.subr.mxu0 0.0
  %1373 = vmatpush1.xpose.msra.mxu0 0.0
  %1374 = vmatprep.subr.mxu0 0.0
  %1375 = vmatpush1.xpose.msra.mxu0 0.0
  %1376 = vmatprep.subr.mxu0 0.0
  %1377 = vmatpush1.xpose.msra.mxu0 0.0
  %1378 = vmatprep.subr.mxu0 0.0
  %1379 = vmatpush1.xpose.msra.mxu0 0.0
  %1380 = vmatprep.subr.mxu0 0.0
  %1381 = vmatpush1.xpose.msra.mxu0 0.0
  %1382 = vmatprep.subr.mxu0 0.0
  %1383 = vmatpush1.xpose.msra.mxu0 0.0
  %1384 = vmatprep.subr.mxu0 0.0
  %1385 = vmatpush1.xpose.msra.mxu0 0.0
  %1386 = vmatprep.subr.mxu0 0.0
  %1387 = vmatpush1.xpose.msra.mxu0 0.0
  %1388 = vmatprep.subr.mxu0 0.0
  %1389 = vmatpush1.xpose.msra.mxu0 0.0
  %1390 = vmatprep.subr.mxu0 0.0
  %1391 = vmatpush1.xpose.msra.mxu0 0.0
  %1392 = vmatprep.subr.mxu0 0.0
  %1393 = vmatpush1.xpose.msra.mxu0 0.0
  %1394 = vmatprep.subr.mxu0 0.0
  %1395 = vmatpush1.xpose.msra.mxu0 0.0
  %1396 = vmatprep.subr.mxu0 0.0
  %1397 = vmatpush1.xpose.msra.mxu0 0.0
  %1398 = vmatprep.subr.mxu0 0.0
  %1399 = vmatpush1.xpose.msra.mxu0 0.0
  %1400 = vmatprep.subr.mxu0 0.0
  %1401 = vmatpush1.xpose.msra.mxu0 0.0
  %1402 = vmatprep.subr.mxu0 0.0
  %1403 = vmatpush1.xpose.msra.mxu0 0.0
  %1404 = vmatprep.subr.mxu0 0.0
  %1405 = vmatpush1.xpose.msra.mxu0 0.0
  %1406 = vmatprep.subr.mxu0 0.0
  %1407 = vmatpush1.xpose.msra.mxu0 0.0
  %1408 = vmatprep.subr.mxu0 0.0
  %1409 = vmatpush1.xpose.msra.mxu0 0.0
  %1410 = vmatprep.subr.mxu0 0.0
  %1411 = vmatpush1.xpose.msra.mxu0 0.0
  %1412 = vmatprep.subr.mxu0 0.0
  %1413 = vmatpush1.xpose.msra.mxu0 0.0
  %1414 = vmatprep.subr.mxu0 0.0
  %1415 = vmatpush1.xpose.msra.mxu0 0.0
  %1416 = vmatprep.subr.mxu0 0.0
  %1417 = vmatpush1.xpose.msra.mxu0 0.0
  %1418 = vmatprep.subr.mxu0 0.0
  %1419 = vmatpush1.xpose.msra.mxu0 0.0
  %1420 = vmatprep.subr.mxu0 0.0
  %1421 = vmatpush1.xpose.msra.mxu0 0.0
  %1422 = vmatprep.subr.mxu0 0.0
  %1423 = vmatpush1.xpose.msra.mxu0 0.0
  %1424 = vmatprep.subr.mxu0 0.0
  %1425 = vmatpush1.xpose.msra.mxu0 0.0
  %1426 = vmatprep.subr.mxu0 0.0
  %1427 = vmatpush1.xpose.msra.mxu0 0.0
  %1428 = vmatprep.subr.mxu0 0.0
  %1429 = vmatpush1.xpose.msra.mxu0 0.0
  %1430 = vmatprep.subr.mxu0 0.0
  %1431 = vmatpush1.xpose.msra.mxu0 0.0
  %1432 = vmatprep.subr.mxu0 0.0
  %1433 = vmatpush1.xpose.msra.mxu0 0.0
  %1434 = vmatprep.mubr.f32.mxu0 0.0
  %1435 = vmatmul.mubr.f32.gmra.mrb[0].mxu0 %v1365
  %v1436 = vpop.f32.mrb[0].mxu0
  %v1437 = vadd.f32 0.0, %v1436
  %v1438 = vpop.f32.mrb[0].mxu0
  %1439 = vdwg.mxu0
  %vm1440 = vcmask 64512
  %v1441 = vsel %vm1440, %v1437, -inf
  %1442 = vmax.xlane.f32.xlu0 %v1441
  %v1443 = vpop.xlane.xlu0 %1442
  %v1444 = vsub.f32 %v1437, %v1443
  %v1445 = vmul.f32 %v1444, 1.442695
  %v1446 = vpow.pop %v1445
  %v1447 = vsel %vm1440, %v1446, 0.0
  %1448 = vadd.xlane.f32.xlu0 %v1447
  %v1449 = vpop.xlane.xlu0 %1448
  %v1450 = vrcp.pop %v1449
  %v1451 = vmul.f32 %v1446, %v1450
  %v1453 = vsel %vm1440, %v1451, 0
  %1455 = vmatprep.subr.mxu0 0.0
  %1456 = vmatpush1.msra.mxu0 %v521
  %1457 = vmatprep.subr.mxu0 0.0
  %1458 = vmatpush1.msra.mxu0 0.0
  %1459 = vmatprep.subr.mxu0 0.0
  %1460 = vmatpush1.msra.mxu0 0.0
  %1461 = vmatprep.subr.mxu0 0.0
  %1462 = vmatpush1.msra.mxu0 0.0
  %1463 = vmatprep.subr.mxu0 0.0
  %1464 = vmatpush1.msra.mxu0 0.0
  %1465 = vmatprep.subr.mxu0 0.0
  %1466 = vmatpush1.msra.mxu0 0.0
  %1467 = vmatprep.subr.mxu0 0.0
  %1468 = vmatpush1.msra.mxu0 0.0
  %1469 = vmatprep.subr.mxu0 0.0
  %1470 = vmatpush1.msra.mxu0 0.0
  %1471 = vmatprep.subr.mxu0 0.0
  %1472 = vmatpush1.msra.mxu0 0.0
  %1473 = vmatprep.subr.mxu0 0.0
  %1474 = vmatpush1.msra.mxu0 0.0
  %1475 = vmatprep.subr.mxu0 0.0
  %1476 = vmatpush1.msra.mxu0 0.0
  %1477 = vmatprep.subr.mxu0 0.0
  %1478 = vmatpush1.msra.mxu0 0.0
  %1479 = vmatprep.subr.mxu0 0.0
  %1480 = vmatpush1.msra.mxu0 0.0
  %1481 = vmatprep.subr.mxu0 0.0
  %1482 = vmatpush1.msra.mxu0 0.0
  %1483 = vmatprep.subr.mxu0 0.0
  %1484 = vmatpush1.msra.mxu0 0.0
  %1485 = vmatprep.subr.mxu0 0.0
  %1486 = vmatpush1.msra.mxu0 0.0
  %1487 = vmatprep.subr.mxu0 0.0
  %1488 = vmatpush1.msra.mxu0 0.0
  %1489 = vmatprep.subr.mxu0 0.0
  %1490 = vmatpush1.msra.mxu0 0.0
  %1491 = vmatprep.subr.mxu0 0.0
  %1492 = vmatpush1.msra.mxu0 0.0
  %1493 = vmatprep.subr.mxu0 0.0
  %1494 = vmatpush1.msra.mxu0 0.0
  %1495 = vmatprep.subr.mxu0 0.0
  %1496 = vmatpush1.msra.mxu0 0.0
  %1497 = vmatprep.subr.mxu0 0.0
  %1498 = vmatpush1.msra.mxu0 0.0
  %1499 = vmatprep.subr.mxu0 0.0
  %1500 = vmatpush1.msra.mxu0 0.0
  %1501 = vmatprep.subr.mxu0 0.0
  %1502 = vmatpush1.msra.mxu0 0.0
  %1503 = vmatprep.subr.mxu0 0.0
  %1504 = vmatpush1.msra.mxu0 0.0
  %1505 = vmatprep.subr.mxu0 0.0
  %1506 = vmatpush1.msra.mxu0 0.0
  %1507 = vmatprep.subr.mxu0 0.0
  %1508 = vmatpush1.msra.mxu0 0.0
  %1509 = vmatprep.subr.mxu0 0.0
  %1510 = vmatpush1.msra.mxu0 0.0
  %1511 = vmatprep.subr.mxu0 0.0
  %1512 = vmatpush1.msra.mxu0 0.0
  %1513 = vmatprep.subr.mxu0 0.0
  %1514 = vmatpush1.msra.mxu0 0.0
  %1515 = vmatprep.subr.mxu0 0.0
  %1516 = vmatpush1.msra.mxu0 0.0
  %1517 = vmatprep.subr.mxu0 0.0
  %1518 = vmatpush1.msra.mxu0 0.0
  %1519 = vmatprep.mubr.f32.mxu0 0.0
  %1520 = vmatmul.mubr.f32.gmra.mrb[0].mxu0 %v1453
  %v1521 = vpop.f32.mrb[0].mxu0
  %v1522 = vadd.f32 0.0, %v1521
  %v1523 = vpop.f32.mrb[0].mxu0
  %1524 = vdwg.mxu0
  %v1525 = vld [vmem:[%s23] sm:$0xff]
  %v1526 = vld [vmem:[%s23 + $0x8] sm:$0xff]
  %v1528 = vsel %vm1363, %v621, 0
  %v1531 = vsel %vm1363, %v707, 0
  %1533 = vmatprep.subr.mxu0 0.0
  %1534 = vmatpush1.xpose.msra.mxu0 %v1531
  %1535 = vmatprep.subr.mxu0 0.0
  %1536 = vmatpush1.xpose.msra.mxu0 0.0
  %1537 = vmatprep.subr.mxu0 0.0
  %1538 = vmatpush1.xpose.msra.mxu0 0.0
  %1539 = vmatprep.subr.mxu0 0.0
  %1540 = vmatpush1.xpose.msra.mxu0 0.0
  %1541 = vmatprep.subr.mxu0 0.0
  %1542 = vmatpush1.xpose.msra.mxu0 0.0
  %1543 = vmatprep.subr.mxu0 0.0
  %1544 = vmatpush1.xpose.msra.mxu0 0.0
  %1545 = vmatprep.subr.mxu0 0.0
  %1546 = vmatpush1.xpose.msra.mxu0 0.0
  %1547 = vmatprep.subr.mxu0 0.0
  %1548 = vmatpush1.xpose.msra.mxu0 0.0
  %1549 = vmatprep.subr.mxu0 0.0
  %1550 = vmatpush1.xpose.msra.mxu0 0.0
  %1551 = vmatprep.subr.mxu0 0.0
  %1552 = vmatpush1.xpose.msra.mxu0 0.0
  %1553 = vmatprep.subr.mxu0 0.0
  %1554 = vmatpush1.xpose.msra.mxu0 0.0
  %1555 = vmatprep.subr.mxu0 0.0
  %1556 = vmatpush1.xpose.msra.mxu0 0.0
  %1557 = vmatprep.subr.mxu0 0.0
  %1558 = vmatpush1.xpose.msra.mxu0 0.0
  %1559 = vmatprep.subr.mxu0 0.0
  %1560 = vmatpush1.xpose.msra.mxu0 0.0
  %1561 = vmatprep.subr.mxu0 0.0
  %1562 = vmatpush1.xpose.msra.mxu0 0.0
  %1563 = vmatprep.subr.mxu0 0.0
  %1564 = vmatpush1.xpose.msra.mxu0 0.0
  %1565 = vmatprep.subr.mxu0 0.0
  %1566 = vmatpush1.xpose.msra.mxu0 0.0
  %1567 = vmatprep.subr.mxu0 0.0
  %1568 = vmatpush1.xpose.msra.mxu0 0.0
  %1569 = vmatprep.subr.mxu0 0.0
  %1570 = vmatpush1.xpose.msra.mxu0 0.0
  %1571 = vmatprep.subr.mxu0 0.0
  %1572 = vmatpush1.xpose.msra.mxu0 0.0
  %1573 = vmatprep.subr.mxu0 0.0
  %1574 = vmatpush1.xpose.msra.mxu0 0.0
  %1575 = vmatprep.subr.mxu0 0.0
  %1576 = vmatpush1.xpose.msra.mxu0 0.0
  %1577 = vmatprep.subr.mxu0 0.0
  %1578 = vmatpush1.xpose.msra.mxu0 0.0
  %1579 = vmatprep.subr.mxu0 0.0
  %1580 = vmatpush1.xpose.msra.mxu0 0.0
  %1581 = vmatprep.subr.mxu0 0.0
  %1582 = vmatpush1.xpose.msra.mxu0 0.0
  %1583 = vmatprep.subr.mxu0 0.0
  %1584 = vmatpush1.xpose.msra.mxu0 0.0
  %1585 = vmatprep.subr.mxu0 0.0
  %1586 = vmatpush1.xpose.msra.mxu0 0.0
  %1587 = vmatprep.subr.mxu0 0.0
  %1588 = vmatpush1.xpose.msra.mxu0 0.0
  %1589 = vmatprep.subr.mxu0 0.0
  %1590 = vmatpush1.xpose.msra.mxu0 0.0
  %1591 = vmatprep.subr.mxu0 0.0
  %1592 = vmatpush1.xpose.msra.mxu0 0.0
  %1593 = vmatprep.subr.mxu0 0.0
  %1594 = vmatpush1.xpose.msra.mxu0 0.0
  %1595 = vmatprep.subr.mxu0 0.0
  %1596 = vmatpush1.xpose.msra.mxu0 0.0
  %1597 = vmatprep.mubr.f32.mxu0 0.0
  %1598 = vmatmul.mubr.f32.gmra.mrb[0].mxu0 %v1528
  %v1599 = vpop.f32.mrb[0].mxu0
  %v1600 = vadd.f32 0.0, %v1599
  %v1601 = vpop.f32.mrb[0].mxu0
  %1602 = vdwg.mxu0
  %v1603 = vsel %vm1440, %v1600, -inf
  %1604 = vmax.xlane.f32.xlu0 %v1603
  %v1605 = vpop.xlane.xlu0 %1604
  %v1606 = vsub.f32 %v1600, %v1605
  %v1607 = vmul.f32 %v1606, 1.442695
  %v1608 = vpow.pop %v1607
  %v1609 = vsel %vm1440, %v1608, 0.0
  %1610 = vadd.xlane.f32.xlu0 %v1609
  %v1611 = vpop.xlane.xlu0 %1610
  %v1612 = vrcp.pop %v1611
  %v1613 = vmul.f32 %v1608, %v1612
  %v1615 = vsel %vm1440, %v1613, 0
  %1617 = vmatprep.subr.mxu0 0.0
  %1618 = vmatpush1.msra.mxu0 %v799
  %1619 = vmatprep.subr.mxu0 0.0
  %1620 = vmatpush1.msra.mxu0 0.0
  %1621 = vmatprep.subr.mxu0 0.0
  %1622 = vmatpush1.msra.mxu0 0.0
  %1623 = vmatprep.subr.mxu0 0.0
  %1624 = vmatpush1.msra.mxu0 0.0
  %1625 = vmatprep.subr.mxu0 0.0
  %1626 = vmatpush1.msra.mxu0 0.0
  %1627 = vmatprep.subr.mxu0 0.0
  %1628 = vmatpush1.msra.mxu0 0.0
  %1629 = vmatprep.subr.mxu0 0.0
  %1630 = vmatpush1.msra.mxu0 0.0
  %1631 = vmatprep.subr.mxu0 0.0
  %1632 = vmatpush1.msra.mxu0 0.0
  %1633 = vmatprep.subr.mxu0 0.0
  %1634 = vmatpush1.msra.mxu0 0.0
  %1635 = vmatprep.subr.mxu0 0.0
  %1636 = vmatpush1.msra.mxu0 0.0
  %1637 = vmatprep.subr.mxu0 0.0
  %1638 = vmatpush1.msra.mxu0 0.0
  %1639 = vmatprep.subr.mxu0 0.0
  %1640 = vmatpush1.msra.mxu0 0.0
  %1641 = vmatprep.subr.mxu0 0.0
  %1642 = vmatpush1.msra.mxu0 0.0
  %1643 = vmatprep.subr.mxu0 0.0
  %1644 = vmatpush1.msra.mxu0 0.0
  %1645 = vmatprep.subr.mxu0 0.0
  %1646 = vmatpush1.msra.mxu0 0.0
  %1647 = vmatprep.subr.mxu0 0.0
  %1648 = vmatpush1.msra.mxu0 0.0
  %1649 = vmatprep.subr.mxu0 0.0
  %1650 = vmatpush1.msra.mxu0 0.0
  %1651 = vmatprep.subr.mxu0 0.0
  %1652 = vmatpush1.msra.mxu0 0.0
  %1653 = vmatprep.subr.mxu0 0.0
  %1654 = vmatpush1.msra.mxu0 0.0
  %1655 = vmatprep.subr.mxu0 0.0
  %1656 = vmatpush1.msra.mxu0 0.0
  %1657 = vmatprep.subr.mxu0 0.0
  %1658 = vmatpush1.msra.mxu0 0.0
  %1659 = vmatprep.subr.mxu0 0.0
  %1660 = vmatpush1.msra.mxu0 0.0
  %1661 = vmatprep.subr.mxu0 0.0
  %1662 = vmatpush1.msra.mxu0 0.0
  %1663 = vmatprep.subr.mxu0 0.0
  %1664 = vmatpush1.msra.mxu0 0.0
  %1665 = vmatprep.subr.mxu0 0.0
  %1666 = vmatpush1.msra.mxu0 0.0
  %1667 = vmatprep.subr.mxu0 0.0
  %1668 = vmatpush1.msra.mxu0 0.0
  %1669 = vmatprep.subr.mxu0 0.0
  %1670 = vmatpush1.msra.mxu0 0.0
  %1671 = vmatprep.subr.mxu0 0.0
  %1672 = vmatpush1.msra.mxu0 0.0
  %1673 = vmatprep.subr.mxu0 0.0
  %1674 = vmatpush1.msra.mxu0 0.0
  %1675 = vmatprep.subr.mxu0 0.0
  %1676 = vmatpush1.msra.mxu0 0.0
  %1677 = vmatprep.subr.mxu0 0.0
  %1678 = vmatpush1.msra.mxu0 0.0
  %1679 = vmatprep.subr.mxu0 0.0
  %1680 = vmatpush1.msra.mxu0 0.0
  %1681 = vmatprep.mubr.f32.mxu0 0.0
  %1682 = vmatmul.mubr.f32.gmra.mrb[0].mxu0 %v1615
  %v1683 = vpop.f32.mrb[0].mxu0
  %v1684 = vadd.f32 0.0, %v1683
  %v1685 = vpop.f32.mrb[0].mxu0
  %1686 = vdwg.mxu0
  %s1687 = scalar_lea.vmem %s23, 16
  %v1688 = vld [vmem:[%s1687] sm:$0xff]
  %v1689 = vld [vmem:[%s1687 + $0x8] sm:$0xff]
  %v1691 = vsel %vm1363, %v1684, 0
  %1693 = vmatprep.subr.mxu0 0.0
  %1694 = vmatpush1.msra.mxu0 %v1688
  %1695 = vmatprep.subr.mxu0 0.0
  %1696 = vmatpush1.msra.mxu0 %v1689
  %1697 = vmatprep.subr.mxu0 0.0
  %1698 = vmatpush1.msra.mxu0 0.0
  %1699 = vmatprep.subr.mxu0 0.0
  %1700 = vmatpush1.msra.mxu0 0.0
  %1701 = vmatprep.subr.mxu0 0.0
  %1702 = vmatpush1.msra.mxu0 0.0
  %1703 = vmatprep.subr.mxu0 0.0
  %1704 = vmatpush1.msra.mxu0 0.0
  %1705 = vmatprep.subr.mxu0 0.0
  %1706 = vmatpush1.msra.mxu0 0.0
  %1707 = vmatprep.subr.mxu0 0.0
  %1708 = vmatpush1.msra.mxu0 0.0
  %1709 = vmatprep.subr.mxu0 0.0
  %1710 = vmatpush1.msra.mxu0 0.0
  %1711 = vmatprep.subr.mxu0 0.0
  %1712 = vmatpush1.msra.mxu0 0.0
  %1713 = vmatprep.subr.mxu0 0.0
  %1714 = vmatpush1.msra.mxu0 0.0
  %1715 = vmatprep.subr.mxu0 0.0
  %1716 = vmatpush1.msra.mxu0 0.0
  %1717 = vmatprep.subr.mxu0 0.0
  %1718 = vmatpush1.msra.mxu0 0.0
  %1719 = vmatprep.subr.mxu0 0.0
  %1720 = vmatpush1.msra.mxu0 0.0
  %1721 = vmatprep.subr.mxu0 0.0
  %1722 = vmatpush1.msra.mxu0 0.0
  %1723 = vmatprep.subr.mxu0 0.0
  %1724 = vmatpush1.msra.mxu0 0.0
  %1725 = vmatprep.subr.mxu0 0.0
  %1726 = vmatpush1.msra.mxu0 0.0
  %1727 = vmatprep.subr.mxu0 0.0
  %1728 = vmatpush1.msra.mxu0 0.0
  %1729 = vmatprep.subr.mxu0 0.0
  %1730 = vmatpush1.msra.mxu0 0.0
  %1731 = vmatprep.subr.mxu0 0.0
  %1732 = vmatpush1.msra.mxu0 0.0
  %1733 = vmatprep.subr.mxu0 0.0
  %1734 = vmatpush1.msra.mxu0 0.0
  %1735 = vmatprep.subr.mxu0 0.0
  %1736 = vmatpush1.msra.mxu0 0.0
  %1737 = vmatprep.subr.mxu0 0.0
  %1738 = vmatpush1.msra.mxu0 0.0
  %1739 = vmatprep.subr.mxu0 0.0
  %1740 = vmatpush1.msra.mxu0 0.0
  %1741 = vmatprep.subr.mxu0 0.0
  %1742 = vmatpush1.msra.mxu0 0.0
  %1743 = vmatprep.subr.mxu0 0.0
  %1744 = vmatpush1.msra.mxu0 0.0
  %1745 = vmatprep.subr.mxu0 0.0
  %1746 = vmatpush1.msra.mxu0 0.0
  %1747 = vmatprep.subr.mxu0 0.0
  %1748 = vmatpush1.msra.mxu0 0.0
  %1749 = vmatprep.subr.mxu0 0.0
  %1750 = vmatpush1.msra.mxu0 0.0
  %1751 = vmatprep.subr.mxu0 0.0
  %1752 = vmatpush1.msra.mxu0 0.0
  %1753 = vmatprep.subr.mxu0 0.0
  %1754 = vmatpush1.msra.mxu0 0.0
  %1755 = vmatprep.subr.mxu0 0.0
  %1756 = vmatpush1.msra.mxu0 0.0
  %1757 = vmatprep.mubr.f32.mxu0 0.0
  %1758 = vmatmul.mubr.f32.gmra.mrb[0].mxu0 %v1691
  %v1759 = vpop.f32.mrb[0].mxu0
  %v1760 = vadd.f32 0.0, %v1759
  %v1761 = vpop.f32.mrb[0].mxu0
  %1762 = vdwg.mxu0
  %v1764 = vsel %vm1363, %v1522, 0
  %1766 = vmatprep.subr.mxu0 0.0
  %1767 = vmatpush1.msra.mxu0 %v1525
  %1768 = vmatprep.subr.mxu0 0.0
  %1769 = vmatpush1.msra.mxu0 %v1526
  %1770 = vmatprep.subr.mxu0 0.0
  %1771 = vmatpush1.msra.mxu0 0.0
  %1772 = vmatprep.subr.mxu0 0.0
  %1773 = vmatpush1.msra.mxu0 0.0
  %1774 = vmatprep.subr.mxu0 0.0
  %1775 = vmatpush1.msra.mxu0 0.0
  %1776 = vmatprep.subr.mxu0 0.0
  %1777 = vmatpush1.msra.mxu0 0.0
  %1778 = vmatprep.subr.mxu0 0.0
  %1779 = vmatpush1.msra.mxu0 0.0
  %1780 = vmatprep.subr.mxu0 0.0
  %1781 = vmatpush1.msra.mxu0 0.0
  %1782 = vmatprep.subr.mxu0 0.0
  %1783 = vmatpush1.msra.mxu0 0.0
  %1784 = vmatprep.subr.mxu0 0.0
  %1785 = vmatpush1.msra.mxu0 0.0
  %1786 = vmatprep.subr.mxu0 0.0
  %1787 = vmatpush1.msra.mxu0 0.0
  %1788 = vmatprep.subr.mxu0 0.0
  %1789 = vmatpush1.msra.mxu0 0.0
  %1790 = vmatprep.subr.mxu0 0.0
  %1791 = vmatpush1.msra.mxu0 0.0
  %1792 = vmatprep.subr.mxu0 0.0
  %1793 = vmatpush1.msra.mxu0 0.0
  %1794 = vmatprep.subr.mxu0 0.0
  %1795 = vmatpush1.msra.mxu0 0.0
  %1796 = vmatprep.subr.mxu0 0.0
  %1797 = vmatpush1.msra.mxu0 0.0
  %1798 = vmatprep.subr.mxu0 0.0
  %1799 = vmatpush1.msra.mxu0 0.0
  %1800 = vmatprep.subr.mxu0 0.0
  %1801 = vmatpush1.msra.mxu0 0.0
  %1802 = vmatprep.subr.mxu0 0.0
  %1803 = vmatpush1.msra.mxu0 0.0
  %1804 = vmatprep.subr.mxu0 0.0
  %1805 = vmatpush1.msra.mxu0 0.0
  %1806 = vmatprep.subr.mxu0 0.0
  %1807 = vmatpush1.msra.mxu0 0.0
  %1808 = vmatprep.subr.mxu0 0.0
  %1809 = vmatpush1.msra.mxu0 0.0
  %1810 = vmatprep.subr.mxu0 0.0
  %1811 = vmatpush1.msra.mxu0 0.0
  %1812 = vmatprep.subr.mxu0 0.0
  %1813 = vmatpush1.msra.mxu0 0.0
  %1814 = vmatprep.subr.mxu0 0.0
  %1815 = vmatpush1.msra.mxu0 0.0
  %1816 = vmatprep.subr.mxu0 0.0
  %1817 = vmatpush1.msra.mxu0 0.0
  %1818 = vmatprep.subr.mxu0 0.0
  %1819 = vmatpush1.msra.mxu0 0.0
  %1820 = vmatprep.subr.mxu0 0.0
  %1821 = vmatpush1.msra.mxu0 0.0
  %1822 = vmatprep.subr.mxu0 0.0
  %1823 = vmatpush1.msra.mxu0 0.0
  %1824 = vmatprep.subr.mxu0 0.0
  %1825 = vmatpush1.msra.mxu0 0.0
  %1826 = vmatprep.subr.mxu0 0.0
  %1827 = vmatpush1.msra.mxu0 0.0
  %1828 = vmatprep.subr.mxu0 0.0
  %1829 = vmatpush1.msra.mxu0 0.0
  %1830 = vmatprep.mubr.f32.mxu0 0.0
  %1831 = vmatmul.mubr.f32.gmra.mrb[0].mxu0 %v1764
  %v1832 = vpop.f32.mrb[0].mxu0
  %v1833 = vadd.f32 %v1760, %v1832
  %v1834 = vpop.f32.mrb[0].mxu0
  %1835 = vdwg.mxu0
  %v1837 = vsel %vm1363, %v899, 0
  %v1840 = vsel %vm1363, %v985, 0
  %1842 = vmatprep.subr.mxu0 0.0
  %1843 = vmatpush1.xpose.msra.mxu0 %v1840
  %1844 = vmatprep.subr.mxu0 0.0
  %1845 = vmatpush1.xpose.msra.mxu0 0.0
  %1846 = vmatprep.subr.mxu0 0.0
  %1847 = vmatpush1.xpose.msra.mxu0 0.0
  %1848 = vmatprep.subr.mxu0 0.0
  %1849 = vmatpush1.xpose.msra.mxu0 0.0
  %1850 = vmatprep.subr.mxu0 0.0
  %1851 = vmatpush1.xpose.msra.mxu0 0.0
  %1852 = vmatprep.subr.mxu0 0.0
  %1853 = vmatpush1.xpose.msra.mxu0 0.0
  %1854 = vmatprep.subr.mxu0 0.0
  %1855 = vmatpush1.xpose.msra.mxu0 0.0
  %1856 = vmatprep.subr.mxu0 0.0
  %1857 = vmatpush1.xpose.msra.mxu0 0.0
  %1858 = vmatprep.subr.mxu0 0.0
  %1859 = vmatpush1.xpose.msra.mxu0 0.0
  %1860 = vmatprep.subr.mxu0 0.0
  %1861 = vmatpush1.xpose.msra.mxu0 0.0
  %1862 = vmatprep.subr.mxu0 0.0
  %1863 = vmatpush1.xpose.msra.mxu0 0.0
  %1864 = vmatprep.subr.mxu0 0.0
  %1865 = vmatpush1.xpose.msra.mxu0 0.0
  %1866 = vmatprep.subr.mxu0 0.0
  %1867 = vmatpush1.xpose.msra.mxu0 0.0
  %1868 = vmatprep.subr.mxu0 0.0
  %1869 = vmatpush1.xpose.msra.mxu0 0.0
  %1870 = vmatprep.subr.mxu0 0.0
  %1871 = vmatpush1.xpose.msra.mxu0 0.0
  %1872 = vmatprep.subr.mxu0 0.0
  %1873 = vmatpush1.xpose.msra.mxu0 0.0
  %1874 = vmatprep.subr.mxu0 0.0
  %1875 = vmatpush1.xpose.msra.mxu0 0.0
  %1876 = vmatprep.subr.mxu0 0.0
  %1877 = vmatpush1.xpose.msra.mxu0 0.0
  %1878 = vmatprep.subr.mxu0 0.0
  %1879 = vmatpush1.xpose.msra.mxu0 0.0
  %1880 = vmatprep.subr.mxu0 0.0
  %1881 = vmatpush1.xpose.msra.mxu0 0.0
  %1882 = vmatprep.subr.mxu0 0.0
  %1883 = vmatpush1.xpose.msra.mxu0 0.0
  %1884 = vmatprep.subr.mxu0 0.0
  %1885 = vmatpush1.xpose.msra.mxu0 0.0
  %1886 = vmatprep.subr.mxu0 0.0
  %1887 = vmatpush1.xpose.msra.mxu0 0.0
  %1888 = vmatprep.subr.mxu0 0.0
  %1889 = vmatpush1.xpose.msra.mxu0 0.0
  %1890 = vmatprep.subr.mxu0 0.0
  %1891 = vmatpush1.xpose.msra.mxu0 0.0
  %1892 = vmatprep.subr.mxu0 0.0
  %1893 = vmatpush1.xpose.msra.mxu0 0.0
  %1894 = vmatprep.subr.mxu0 0.0
  %1895 = vmatpush1.xpose.msra.mxu0 0.0
  %1896 = vmatprep.subr.mxu0 0.0
  %1897 = vmatpush1.xpose.msra.mxu0 0.0
  %1898 = vmatprep.subr.mxu0 0.0
  %1899 = vmatpush1.xpose.msra.mxu0 0.0
  %1900 = vmatprep.subr.mxu0 0.0
  %1901 = vmatpush1.xpose.msra.mxu0 0.0
  %1902 = vmatprep.subr.mxu0 0.0
  %1903 = vmatpush1.xpose.msra.mxu0 0.0
  %1904 = vmatprep.subr.mxu0 0.0
  %1905 = vmatpush1.xpose.msra.mxu0 0.0
  %1906 = vmatprep.mubr.f32.mxu0 0.0
  %1907 = vmatmul.mubr.f32.gmra.mrb[0].mxu0 %v1837
  %v1908 = vpop.f32.mrb[0].mxu0
  %v1909 = vadd.f32 0.0, %v1908
  %v1910 = vpop.f32.mrb[0].mxu0
  %1911 = vdwg.mxu0
  %v1912 = vsel %vm1440, %v1909, -inf
  %1913 = vmax.xlane.f32.xlu0 %v1912
  %v1914 = vpop.xlane.xlu0 %1913
  %v1915 = vsub.f32 %v1909, %v1914
  %v1916 = vmul.f32 %v1915, 1.442695
  %v1917 = vpow.pop %v1916
  %v1918 = vsel %vm1440, %v1917, 0.0
  %1919 = vadd.xlane.f32.xlu0 %v1918
  %v1920 = vpop.xlane.xlu0 %1919
  %v1921 = vrcp.pop %v1920
  %v1922 = vmul.f32 %v1917, %v1921
  %v1924 = vsel %vm1440, %v1922, 0
  %1926 = vmatprep.subr.mxu0 0.0
  %1927 = vmatpush1.msra.mxu0 %v1077
  %1928 = vmatprep.subr.mxu0 0.0
  %1929 = vmatpush1.msra.mxu0 0.0
  %1930 = vmatprep.subr.mxu0 0.0
  %1931 = vmatpush1.msra.mxu0 0.0
  %1932 = vmatprep.subr.mxu0 0.0
  %1933 = vmatpush1.msra.mxu0 0.0
  %1934 = vmatprep.subr.mxu0 0.0
  %1935 = vmatpush1.msra.mxu0 0.0
  %1936 = vmatprep.subr.mxu0 0.0
  %1937 = vmatpush1.msra.mxu0 0.0
  %1938 = vmatprep.subr.mxu0 0.0
  %1939 = vmatpush1.msra.mxu0 0.0
  %1940 = vmatprep.subr.mxu0 0.0
  %1941 = vmatpush1.msra.mxu0 0.0
  %1942 = vmatprep.subr.mxu0 0.0
  %1943 = vmatpush1.msra.mxu0 0.0
  %1944 = vmatprep.subr.mxu0 0.0
  %1945 = vmatpush1.msra.mxu0 0.0
  %1946 = vmatprep.subr.mxu0 0.0
  %1947 = vmatpush1.msra.mxu0 0.0
  %1948 = vmatprep.subr.mxu0 0.0
  %1949 = vmatpush1.msra.mxu0 0.0
  %1950 = vmatprep.subr.mxu0 0.0
  %1951 = vmatpush1.msra.mxu0 0.0
  %1952 = vmatprep.subr.mxu0 0.0
  %1953 = vmatpush1.msra.mxu0 0.0
  %1954 = vmatprep.subr.mxu0 0.0
  %1955 = vmatpush1.msra.mxu0 0.0
  %1956 = vmatprep.subr.mxu0 0.0
  %1957 = vmatpush1.msra.mxu0 0.0
  %1958 = vmatprep.subr.mxu0 0.0
  %1959 = vmatpush1.msra.mxu0 0.0
  %1960 = vmatprep.subr.mxu0 0.0
  %1961 = vmatpush1.msra.mxu0 0.0
  %1962 = vmatprep.subr.mxu0 0.0
  %1963 = vmatpush1.msra.mxu0 0.0
  %1964 = vmatprep.subr.mxu0 0.0
  %1965 = vmatpush1.msra.mxu0 0.0
  %1966 = vmatprep.subr.mxu0 0.0
  %1967 = vmatpush1.msra.mxu0 0.0
  %1968 = vmatprep.subr.mxu0 0.0
  %1969 = vmatpush1.msra.mxu0 0.0
  %1970 = vmatprep.subr.mxu0 0.0
  %1971 = vmatpush1.msra.mxu0 0.0
  %1972 = vmatprep.subr.mxu0 0.0
  %1973 = vmatpush1.msra.mxu0 0.0
  %1974 = vmatprep.subr.mxu0 0.0
  %1975 = vmatpush1.msra.mxu0 0.0
  %1976 = vmatprep.subr.mxu0 0.0
  %1977 = vmatpush1.msra.mxu0 0.0
  %1978 = vmatprep.subr.mxu0 0.0
  %1979 = vmatpush1.msra.mxu0 0.0
  %1980 = vmatprep.subr.mxu0 0.0
  %1981 = vmatpush1.msra.mxu0 0.0
  %1982 = vmatprep.subr.mxu0 0.0
  %1983 = vmatpush1.msra.mxu0 0.0
  %1984 = vmatprep.subr.mxu0 0.0
  %1985 = vmatpush1.msra.mxu0 0.0
  %1986 = vmatprep.subr.mxu0 0.0
  %1987 = vmatpush1.msra.mxu0 0.0
  %1988 = vmatprep.subr.mxu0 0.0
  %1989 = vmatpush1.msra.mxu0 0.0
  %1990 = vmatprep.mubr.f32.mxu0 0.0
  %1991 = vmatmul.mubr.f32.gmra.mrb[0].mxu0 %v1924
  %v1992 = vpop.f32.mrb[0].mxu0
  %v1993 = vadd.f32 0.0, %v1992
  %v1994 = vpop.f32.mrb[0].mxu0
  %1995 = vdwg.mxu0
  %s1996 = scalar_lea.vmem %s23, 32
  %v1997 = vld [vmem:[%s1996] sm:$0xff]
  %v1998 = vld [vmem:[%s1996 + $0x8] sm:$0xff]
  %v2000 = vsel %vm1363, %v1993, 0
  %2002 = vmatprep.subr.mxu0 0.0
  %2003 = vmatpush1.msra.mxu0 %v1997
  %2004 = vmatprep.subr.mxu0 0.0
  %2005 = vmatpush1.msra.mxu0 %v1998
  %2006 = vmatprep.subr.mxu0 0.0
  %2007 = vmatpush1.msra.mxu0 0.0
  %2008 = vmatprep.subr.mxu0 0.0
  %2009 = vmatpush1.msra.mxu0 0.0
  %2010 = vmatprep.subr.mxu0 0.0
  %2011 = vmatpush1.msra.mxu0 0.0
  %2012 = vmatprep.subr.mxu0 0.0
  %2013 = vmatpush1.msra.mxu0 0.0
  %2014 = vmatprep.subr.mxu0 0.0
  %2015 = vmatpush1.msra.mxu0 0.0
  %2016 = vmatprep.subr.mxu0 0.0
  %2017 = vmatpush1.msra.mxu0 0.0
  %2018 = vmatprep.subr.mxu0 0.0
  %2019 = vmatpush1.msra.mxu0 0.0
  %2020 = vmatprep.subr.mxu0 0.0
  %2021 = vmatpush1.msra.mxu0 0.0
  %2022 = vmatprep.subr.mxu0 0.0
  %2023 = vmatpush1.msra.mxu0 0.0
  %2024 = vmatprep.subr.mxu0 0.0
  %2025 = vmatpush1.msra.mxu0 0.0
  %2026 = vmatprep.subr.mxu0 0.0
  %2027 = vmatpush1.msra.mxu0 0.0
  %2028 = vmatprep.subr.mxu0 0.0
  %2029 = vmatpush1.msra.mxu0 0.0
  %2030 = vmatprep.subr.mxu0 0.0
  %2031 = vmatpush1.msra.mxu0 0.0
  %2032 = vmatprep.subr.mxu0 0.0
  %2033 = vmatpush1.msra.mxu0 0.0
  %2034 = vmatprep.subr.mxu0 0.0
  %2035 = vmatpush1.msra.mxu0 0.0
  %2036 = vmatprep.subr.mxu0 0.0
  %2037 = vmatpush1.msra.mxu0 0.0
  %2038 = vmatprep.subr.mxu0 0.0
  %2039 = vmatpush1.msra.mxu0 0.0
  %2040 = vmatprep.subr.mxu0 0.0
  %2041 = vmatpush1.msra.mxu0 0.0
  %2042 = vmatprep.subr.mxu0 0.0
  %2043 = vmatpush1.msra.mxu0 0.0
  %2044 = vmatprep.subr.mxu0 0.0
  %2045 = vmatpush1.msra.mxu0 0.0
  %2046 = vmatprep.subr.mxu0 0.0
  %2047 = vmatpush1.msra.mxu0 0.0
  %2048 = vmatprep.subr.mxu0 0.0
  %2049 = vmatpush1.msra.mxu0 0.0
  %2050 = vmatprep.subr.mxu0 0.0
  %2051 = vmatpush1.msra.mxu0 0.0
  %2052 = vmatprep.subr.mxu0 0.0
  %2053 = vmatpush1.msra.mxu0 0.0
  %2054 = vmatprep.subr.mxu0 0.0
  %2055 = vmatpush1.msra.mxu0 0.0
  %2056 = vmatprep.subr.mxu0 0.0
  %2057 = vmatpush1.msra.mxu0 0.0
  %2058 = vmatprep.subr.mxu0 0.0
  %2059 = vmatpush1.msra.mxu0 0.0
  %2060 = vmatprep.subr.mxu0 0.0
  %2061 = vmatpush1.msra.mxu0 0.0
  %2062 = vmatprep.subr.mxu0 0.0
  %2063 = vmatpush1.msra.mxu0 0.0
  %2064 = vmatprep.subr.mxu0 0.0
  %2065 = vmatpush1.msra.mxu0 0.0
  %2066 = vmatprep.mubr.f32.mxu0 0.0
  %2067 = vmatmul.mubr.f32.gmra.mrb[0].mxu0 %v2000
  %v2068 = vpop.f32.mrb[0].mxu0
  %v2069 = vadd.f32 0.0, %v2068
  %v2070 = vpop.f32.mrb[0].mxu0
  %2071 = vdwg.mxu0
  %v2072 = vadd.f32 %v1833, %v2069
  %v2074 = vsel %vm1363, %v1177, 0
  %v2077 = vsel %vm1363, %v1263, 0
  %2079 = vmatprep.subr.mxu0 0.0
  %2080 = vmatpush1.xpose.msra.mxu0 %v2077
  %2081 = vmatprep.subr.mxu0 0.0
  %2082 = vmatpush1.xpose.msra.mxu0 0.0
  %2083 = vmatprep.subr.mxu0 0.0
  %2084 = vmatpush1.xpose.msra.mxu0 0.0
  %2085 = vmatprep.subr.mxu0 0.0
  %2086 = vmatpush1.xpose.msra.mxu0 0.0
  %2087 = vmatprep.subr.mxu0 0.0
  %2088 = vmatpush1.xpose.msra.mxu0 0.0
  %2089 = vmatprep.subr.mxu0 0.0
  %2090 = vmatpush1.xpose.msra.mxu0 0.0
  %2091 = vmatprep.subr.mxu0 0.0
  %2092 = vmatpush1.xpose.msra.mxu0 0.0
  %2093 = vmatprep.subr.mxu0 0.0
  %2094 = vmatpush1.xpose.msra.mxu0 0.0
  %2095 = vmatprep.subr.mxu0 0.0
  %2096 = vmatpush1.xpose.msra.mxu0 0.0
  %2097 = vmatprep.subr.mxu0 0.0
  %2098 = vmatpush1.xpose.msra.mxu0 0.0
  %2099 = vmatprep.subr.mxu0 0.0
  %2100 = vmatpush1.xpose.msra.mxu0 0.0
  %2101 = vmatprep.subr.mxu0 0.0
  %2102 = vmatpush1.xpose.msra.mxu0 0.0
  %2103 = vmatprep.subr.mxu0 0.0
  %2104 = vmatpush1.xpose.msra.mxu0 0.0
  %2105 = vmatprep.subr.mxu0 0.0
  %2106 = vmatpush1.xpose.msra.mxu0 0.0
  %2107 = vmatprep.subr.mxu0 0.0
  %2108 = vmatpush1.xpose.msra.mxu0 0.0
  %2109 = vmatprep.subr.mxu0 0.0
  %2110 = vmatpush1.xpose.msra.mxu0 0.0
  %2111 = vmatprep.subr.mxu0 0.0
  %2112 = vmatpush1.xpose.msra.mxu0 0.0
  %2113 = vmatprep.subr.mxu0 0.0
  %2114 = vmatpush1.xpose.msra.mxu0 0.0
  %2115 = vmatprep.subr.mxu0 0.0
  %2116 = vmatpush1.xpose.msra.mxu0 0.0
  %2117 = vmatprep.subr.mxu0 0.0
  %2118 = vmatpush1.xpose.msra.mxu0 0.0
  %2119 = vmatprep.subr.mxu0 0.0
  %2120 = vmatpush1.xpose.msra.mxu0 0.0
  %2121 = vmatprep.subr.mxu0 0.0
  %2122 = vmatpush1.xpose.msra.mxu0 0.0
  %2123 = vmatprep.subr.mxu0 0.0
  %2124 = vmatpush1.xpose.msra.mxu0 0.0
  %2125 = vmatprep.subr.mxu0 0.0
  %2126 = vmatpush1.xpose.msra.mxu0 0.0
  %2127 = vmatprep.subr.mxu0 0.0
  %2128 = vmatpush1.xpose.msra.mxu0 0.0
  %2129 = vmatprep.subr.mxu0 0.0
  %2130 = vmatpush1.xpose.msra.mxu0 0.0
  %2131 = vmatprep.subr.mxu0 0.0
  %2132 = vmatpush1.xpose.msra.mxu0 0.0
  %2133 = vmatprep.subr.mxu0 0.0
  %2134 = vmatpush1.xpose.msra.mxu0 0.0
  %2135 = vmatprep.subr.mxu0 0.0
  %2136 = vmatpush1.xpose.msra.mxu0 0.0
  %2137 = vmatprep.subr.mxu0 0.0
  %2138 = vmatpush1.xpose.msra.mxu0 0.0
  %2139 = vmatprep.subr.mxu0 0.0
  %2140 = vmatpush1.xpose.msra.mxu0 0.0
  %2141 = vmatprep.subr.mxu0 0.0
  %2142 = vmatpush1.xpose.msra.mxu0 0.0
  %2143 = vmatprep.mubr.f32.mxu0 0.0
  %2144 = vmatmul.mubr.f32.gmra.mrb[0].mxu0 %v2074
  %v2145 = vpop.f32.mrb[0].mxu0
  %v2146 = vadd.f32 0.0, %v2145
  %v2147 = vpop.f32.mrb[0].mxu0
  %2148 = vdwg.mxu0
  %v2149 = vsel %vm1440, %v2146, -inf
  %2150 = vmax.xlane.f32.xlu0 %v2149
  %v2151 = vpop.xlane.xlu0 %2150
  %v2152 = vsub.f32 %v2146, %v2151
  %v2153 = vmul.f32 %v2152, 1.442695
  %v2154 = vpow.pop %v2153
  %v2155 = vsel %vm1440, %v2154, 0.0
  %2156 = vadd.xlane.f32.xlu0 %v2155
  %v2157 = vpop.xlane.xlu0 %2156
  %v2158 = vrcp.pop %v2157
  %v2159 = vmul.f32 %v2154, %v2158
  %v2161 = vsel %vm1440, %v2159, 0
  %2163 = vmatprep.subr.mxu0 0.0
  %2164 = vmatpush1.msra.mxu0 %v1355
  %2165 = vmatprep.subr.mxu0 0.0
  %2166 = vmatpush1.msra.mxu0 0.0
  %2167 = vmatprep.subr.mxu0 0.0
  %2168 = vmatpush1.msra.mxu0 0.0
  %2169 = vmatprep.subr.mxu0 0.0
  %2170 = vmatpush1.msra.mxu0 0.0
  %2171 = vmatprep.subr.mxu0 0.0
  %2172 = vmatpush1.msra.mxu0 0.0
  %2173 = vmatprep.subr.mxu0 0.0
  %2174 = vmatpush1.msra.mxu0 0.0
  %2175 = vmatprep.subr.mxu0 0.0
  %2176 = vmatpush1.msra.mxu0 0.0
  %2177 = vmatprep.subr.mxu0 0.0
  %2178 = vmatpush1.msra.mxu0 0.0
  %2179 = vmatprep.subr.mxu0 0.0
  %2180 = vmatpush1.msra.mxu0 0.0
  %2181 = vmatprep.subr.mxu0 0.0
  %2182 = vmatpush1.msra.mxu0 0.0
  %2183 = vmatprep.subr.mxu0 0.0
  %2184 = vmatpush1.msra.mxu0 0.0
  %2185 = vmatprep.subr.mxu0 0.0
  %2186 = vmatpush1.msra.mxu0 0.0
  %2187 = vmatprep.subr.mxu0 0.0
  %2188 = vmatpush1.msra.mxu0 0.0
  %2189 = vmatprep.subr.mxu0 0.0
  %2190 = vmatpush1.msra.mxu0 0.0
  %2191 = vmatprep.subr.mxu0 0.0
  %2192 = vmatpush1.msra.mxu0 0.0
  %2193 = vmatprep.subr.mxu0 0.0
  %2194 = vmatpush1.msra.mxu0 0.0
  %2195 = vmatprep.subr.mxu0 0.0
  %2196 = vmatpush1.msra.mxu0 0.0
  %2197 = vmatprep.subr.mxu0 0.0
  %2198 = vmatpush1.msra.mxu0 0.0
  %2199 = vmatprep.subr.mxu0 0.0
  %2200 = vmatpush1.msra.mxu0 0.0
  %2201 = vmatprep.subr.mxu0 0.0
  %2202 = vmatpush1.msra.mxu0 0.0
  %2203 = vmatprep.subr.mxu0 0.0
  %2204 = vmatpush1.msra.mxu0 0.0
  %2205 = vmatprep.subr.mxu0 0.0
  %2206 = vmatpush1.msra.mxu0 0.0
  %2207 = vmatprep.subr.mxu0 0.0
  %2208 = vmatpush1.msra.mxu0 0.0
  %2209 = vmatprep.subr.mxu0 0.0
  %2210 = vmatpush1.msra.mxu0 0.0
  %2211 = vmatprep.subr.mxu0 0.0
  %2212 = vmatpush1.msra.mxu0 0.0
  %2213 = vmatprep.subr.mxu0 0.0
  %2214 = vmatpush1.msra.mxu0 0.0
  %2215 = vmatprep.subr.mxu0 0.0
  %2216 = vmatpush1.msra.mxu0 0.0
  %2217 = vmatprep.subr.mxu0 0.0
  %2218 = vmatpush1.msra.mxu0 0.0
  %2219 = vmatprep.subr.mxu0 0.0
  %2220 = vmatpush1.msra.mxu0 0.0
  %2221 = vmatprep.subr.mxu0 0.0
  %2222 = vmatpush1.msra.mxu0 0.0
  %2223 = vmatprep.subr.mxu0 0.0
  %2224 = vmatpush1.msra.mxu0 0.0
  %2225 = vmatprep.subr.mxu0 0.0
  %2226 = vmatpush1.msra.mxu0 0.0
  %2227 = vmatprep.mubr.f32.mxu0 0.0
  %2228 = vmatmul.mubr.f32.gmra.mrb[0].mxu0 %v2161
  %v2229 = vpop.f32.mrb[0].mxu0
  %v2230 = vadd.f32 0.0, %v2229
  %v2231 = vpop.f32.mrb[0].mxu0
  %2232 = vdwg.mxu0
  %s2233 = scalar_lea.vmem %s23, 48
  %v2234 = vld [vmem:[%s2233] sm:$0xff]
  %v2235 = vld [vmem:[%s2233 + $0x8] sm:$0xff]
  %v2237 = vsel %vm1363, %v2230, 0
  %2239 = vmatprep.subr.mxu0 0.0
  %2240 = vmatpush1.msra.mxu0 %v2234
  %2241 = vmatprep.subr.mxu0 0.0
  %2242 = vmatpush1.msra.mxu0 %v2235
  %2243 = vmatprep.subr.mxu0 0.0
  %2244 = vmatpush1.msra.mxu0 0.0
  %2245 = vmatprep.subr.mxu0 0.0
  %2246 = vmatpush1.msra.mxu0 0.0
  %2247 = vmatprep.subr.mxu0 0.0
  %2248 = vmatpush1.msra.mxu0 0.0
  %2249 = vmatprep.subr.mxu0 0.0
  %2250 = vmatpush1.msra.mxu0 0.0
  %2251 = vmatprep.subr.mxu0 0.0
  %2252 = vmatpush1.msra.mxu0 0.0
  %2253 = vmatprep.subr.mxu0 0.0
  %2254 = vmatpush1.msra.mxu0 0.0
  %2255 = vmatprep.subr.mxu0 0.0
  %2256 = vmatpush1.msra.mxu0 0.0
  %2257 = vmatprep.subr.mxu0 0.0
  %2258 = vmatpush1.msra.mxu0 0.0
  %2259 = vmatprep.subr.mxu0 0.0
  %2260 = vmatpush1.msra.mxu0 0.0
  %2261 = vmatprep.subr.mxu0 0.0
  %2262 = vmatpush1.msra.mxu0 0.0
  %2263 = vmatprep.subr.mxu0 0.0
  %2264 = vmatpush1.msra.mxu0 0.0
  %2265 = vmatprep.subr.mxu0 0.0
  %2266 = vmatpush1.msra.mxu0 0.0
  %2267 = vmatprep.subr.mxu0 0.0
  %2268 = vmatpush1.msra.mxu0 0.0
  %2269 = vmatprep.subr.mxu0 0.0
  %2270 = vmatpush1.msra.mxu0 0.0
  %2271 = vmatprep.subr.mxu0 0.0
  %2272 = vmatpush1.msra.mxu0 0.0
  %2273 = vmatprep.subr.mxu0 0.0
  %2274 = vmatpush1.msra.mxu0 0.0
  %2275 = vmatprep.subr.mxu0 0.0
  %2276 = vmatpush1.msra.mxu0 0.0
  %2277 = vmatprep.subr.mxu0 0.0
  %2278 = vmatpush1.msra.mxu0 0.0
  %2279 = vmatprep.subr.mxu0 0.0
  %2280 = vmatpush1.msra.mxu0 0.0
  %2281 = vmatprep.subr.mxu0 0.0
  %2282 = vmatpush1.msra.mxu0 0.0
  %2283 = vmatprep.subr.mxu0 0.0
  %2284 = vmatpush1.msra.mxu0 0.0
  %2285 = vmatprep.subr.mxu0 0.0
  %2286 = vmatpush1.msra.mxu0 0.0
  %2287 = vmatprep.subr.mxu0 0.0
  %2288 = vmatpush1.msra.mxu0 0.0
  %2289 = vmatprep.subr.mxu0 0.0
  %2290 = vmatpush1.msra.mxu0 0.0
  %2291 = vmatprep.subr.mxu0 0.0
  %2292 = vmatpush1.msra.mxu0 0.0
  %2293 = vmatprep.subr.mxu0 0.0
  %2294 = vmatpush1.msra.mxu0 0.0
  %2295 = vmatprep.subr.mxu0 0.0
  %2296 = vmatpush1.msra.mxu0 0.0
  %2297 = vmatprep.subr.mxu0 0.0
  %2298 = vmatpush1.msra.mxu0 0.0
  %2299 = vmatprep.subr.mxu0 0.0
  %2300 = vmatpush1.msra.mxu0 0.0
  %2301 = vmatprep.subr.mxu0 0.0
  %2302 = vmatpush1.msra.mxu0 0.0
  %2303 = vmatprep.mubr.f32.mxu0 0.0
  %2304 = vmatmul.mubr.f32.gmra.mrb[0].mxu0 %v2237
  %v2305 = vpop.f32.mrb[0].mxu0
  %v2306 = vadd.f32 0.0, %v2305
  %v2307 = vpop.f32.mrb[0].mxu0
  %2308 = vdwg.mxu0
  %v2309 = vadd.f32 %v2072, %v2306
  %v2310 = vld [vmem:[%s25] sm:$0x1]
  %v2312 = vlaneseq
  %v2313 = vshrl.u32 %v2312, 7
  %v2314 = vsub.s32 0, %v2313
  %v2315 = vrot.slane %v2310, %v2314
  %v2317 = vadd.f32 %v2309, %v2315
  %v2319 = vsel %vm1363, %v348, 0
  %v2322 = vsel %vm1363, %v436, 0
  %2324 = vmatprep.subr.mxu0 0.0
  %2325 = vmatpush1.xpose.msra.mxu0 %v2322
  %2326 = vmatprep.subr.mxu0 0.0
  %2327 = vmatpush1.xpose.msra.mxu0 0.0
  %2328 = vmatprep.subr.mxu0 0.0
  %2329 = vmatpush1.xpose.msra.mxu0 0.0
  %2330 = vmatprep.subr.mxu0 0.0
  %2331 = vmatpush1.xpose.msra.mxu0 0.0
  %2332 = vmatprep.subr.mxu0 0.0
  %2333 = vmatpush1.xpose.msra.mxu0 0.0
  %2334 = vmatprep.subr.mxu0 0.0
  %2335 = vmatpush1.xpose.msra.mxu0 0.0
  %2336 = vmatprep.subr.mxu0 0.0
  %2337 = vmatpush1.xpose.msra.mxu0 0.0
  %2338 = vmatprep.subr.mxu0 0.0
  %2339 = vmatpush1.xpose.msra.mxu0 0.0
  %2340 = vmatprep.subr.mxu0 0.0
  %2341 = vmatpush1.xpose.msra.mxu0 0.0
  %2342 = vmatprep.subr.mxu0 0.0
  %2343 = vmatpush1.xpose.msra.mxu0 0.0
  %2344 = vmatprep.subr.mxu0 0.0
  %2345 = vmatpush1.xpose.msra.mxu0 0.0
  %2346 = vmatprep.subr.mxu0 0.0
  %2347 = vmatpush1.xpose.msra.mxu0 0.0
  %2348 = vmatprep.subr.mxu0 0.0
  %2349 = vmatpush1.xpose.msra.mxu0 0.0
  %2350 = vmatprep.subr.mxu0 0.0
  %2351 = vmatpush1.xpose.msra.mxu0 0.0
  %2352 = vmatprep.subr.mxu0 0.0
  %2353 = vmatpush1.xpose.msra.mxu0 0.0
  %2354 = vmatprep.subr.mxu0 0.0
  %2355 = vmatpush1.xpose.msra.mxu0 0.0
  %2356 = vmatprep.subr.mxu0 0.0
  %2357 = vmatpush1.xpose.msra.mxu0 0.0
  %2358 = vmatprep.subr.mxu0 0.0
  %2359 = vmatpush1.xpose.msra.mxu0 0.0
  %2360 = vmatprep.subr.mxu0 0.0
  %2361 = vmatpush1.xpose.msra.mxu0 0.0
  %2362 = vmatprep.subr.mxu0 0.0
  %2363 = vmatpush1.xpose.msra.mxu0 0.0
  %2364 = vmatprep.subr.mxu0 0.0
  %2365 = vmatpush1.xpose.msra.mxu0 0.0
  %2366 = vmatprep.subr.mxu0 0.0
  %2367 = vmatpush1.xpose.msra.mxu0 0.0
  %2368 = vmatprep.subr.mxu0 0.0
  %2369 = vmatpush1.xpose.msra.mxu0 0.0
  %2370 = vmatprep.subr.mxu0 0.0
  %2371 = vmatpush1.xpose.msra.mxu0 0.0
  %2372 = vmatprep.subr.mxu0 0.0
  %2373 = vmatpush1.xpose.msra.mxu0 0.0
  %2374 = vmatprep.subr.mxu0 0.0
  %2375 = vmatpush1.xpose.msra.mxu0 0.0
  %2376 = vmatprep.subr.mxu0 0.0
  %2377 = vmatpush1.xpose.msra.mxu0 0.0
  %2378 = vmatprep.subr.mxu0 0.0
  %2379 = vmatpush1.xpose.msra.mxu0 0.0
  %2380 = vmatprep.subr.mxu0 0.0
  %2381 = vmatpush1.xpose.msra.mxu0 0.0
  %2382 = vmatprep.subr.mxu0 0.0
  %2383 = vmatpush1.xpose.msra.mxu0 0.0
  %2384 = vmatprep.subr.mxu0 0.0
  %2385 = vmatpush1.xpose.msra.mxu0 0.0
  %2386 = vmatprep.subr.mxu0 0.0
  %2387 = vmatpush1.xpose.msra.mxu0 0.0
  %2388 = vmatprep.mubr.f32.mxu0 0.0
  %2389 = vmatmul.mubr.f32.gmra.mrb[0].mxu0 %v2319
  %v2390 = vpop.f32.mrb[0].mxu0
  %v2391 = vadd.f32 0.0, %v2390
  %v2392 = vpop.f32.mrb[0].mxu0
  %2393 = vdwg.mxu0
  %v2394 = vsel %vm1440, %v2391, -inf
  %2395 = vmax.xlane.f32.xlu0 %v2394
  %v2396 = vpop.xlane.xlu0 %2395
  %v2397 = vsub.f32 %v2391, %v2396
  %v2398 = vmul.f32 %v2397, 1.442695
  %v2399 = vpow.pop %v2398
  %v2400 = vsel %vm1440, %v2399, 0.0
  %2401 = vadd.xlane.f32.xlu0 %v2400
  %v2402 = vpop.xlane.xlu0 %2401
  %v2403 = vrcp.pop %v2402
  %v2404 = vmul.f32 %v2399, %v2403
  %v2406 = vsel %vm1440, %v2404, 0
  %2408 = vmatprep.subr.mxu0 0.0
  %2409 = vmatpush1.msra.mxu0 %v526
  %2410 = vmatprep.subr.mxu0 0.0
  %2411 = vmatpush1.msra.mxu0 0.0
  %2412 = vmatprep.subr.mxu0 0.0
  %2413 = vmatpush1.msra.mxu0 0.0
  %2414 = vmatprep.subr.mxu0 0.0
  %2415 = vmatpush1.msra.mxu0 0.0
  %2416 = vmatprep.subr.mxu0 0.0
  %2417 = vmatpush1.msra.mxu0 0.0
  %2418 = vmatprep.subr.mxu0 0.0
  %2419 = vmatpush1.msra.mxu0 0.0
  %2420 = vmatprep.subr.mxu0 0.0
  %2421 = vmatpush1.msra.mxu0 0.0
  %2422 = vmatprep.subr.mxu0 0.0
  %2423 = vmatpush1.msra.mxu0 0.0
  %2424 = vmatprep.subr.mxu0 0.0
  %2425 = vmatpush1.msra.mxu0 0.0
  %2426 = vmatprep.subr.mxu0 0.0
  %2427 = vmatpush1.msra.mxu0 0.0
  %2428 = vmatprep.subr.mxu0 0.0
  %2429 = vmatpush1.msra.mxu0 0.0
  %2430 = vmatprep.subr.mxu0 0.0
  %2431 = vmatpush1.msra.mxu0 0.0
  %2432 = vmatprep.subr.mxu0 0.0
  %2433 = vmatpush1.msra.mxu0 0.0
  %2434 = vmatprep.subr.mxu0 0.0
  %2435 = vmatpush1.msra.mxu0 0.0
  %2436 = vmatprep.subr.mxu0 0.0
  %2437 = vmatpush1.msra.mxu0 0.0
  %2438 = vmatprep.subr.mxu0 0.0
  %2439 = vmatpush1.msra.mxu0 0.0
  %2440 = vmatprep.subr.mxu0 0.0
  %2441 = vmatpush1.msra.mxu0 0.0
  %2442 = vmatprep.subr.mxu0 0.0
  %2443 = vmatpush1.msra.mxu0 0.0
  %2444 = vmatprep.subr.mxu0 0.0
  %2445 = vmatpush1.msra.mxu0 0.0
  %2446 = vmatprep.subr.mxu0 0.0
  %2447 = vmatpush1.msra.mxu0 0.0
  %2448 = vmatprep.subr.mxu0 0.0
  %2449 = vmatpush1.msra.mxu0 0.0
  %2450 = vmatprep.subr.mxu0 0.0
  %2451 = vmatpush1.msra.mxu0 0.0
  %2452 = vmatprep.subr.mxu0 0.0
  %2453 = vmatpush1.msra.mxu0 0.0
  %2454 = vmatprep.subr.mxu0 0.0
  %2455 = vmatpush1.msra.mxu0 0.0
  %2456 = vmatprep.subr.mxu0 0.0
  %2457 = vmatpush1.msra.mxu0 0.0
  %2458 = vmatprep.subr.mxu0 0.0
  %2459 = vmatpush1.msra.mxu0 0.0
  %2460 = vmatprep.subr.mxu0 0.0
  %2461 = vmatpush1.msra.mxu0 0.0
  %2462 = vmatprep.subr.mxu0 0.0
  %2463 = vmatpush1.msra.mxu0 0.0
  %2464 = vmatprep.subr.mxu0 0.0
  %2465 = vmatpush1.msra.mxu0 0.0
  %2466 = vmatprep.subr.mxu0 0.0
  %2467 = vmatpush1.msra.mxu0 0.0
  %2468 = vmatprep.subr.mxu0 0.0
  %2469 = vmatpush1.msra.mxu0 0.0
  %2470 = vmatprep.subr.mxu0 0.0
  %2471 = vmatpush1.msra.mxu0 0.0
  %2472 = vmatprep.mubr.f32.mxu0 0.0
  %2473 = vmatmul.mubr.f32.gmra.mrb[0].mxu0 %v2406
  %v2474 = vpop.f32.mrb[0].mxu0
  %v2475 = vadd.f32 0.0, %v2474
  %v2476 = vpop.f32.mrb[0].mxu0
  %2477 = vdwg.mxu0
  %v2479 = vsel %vm1363, %v622, 0
  %v2482 = vsel %vm1363, %v712, 0
  %2484 = vmatprep.subr.mxu0 0.0
  %2485 = vmatpush1.xpose.msra.mxu0 %v2482
  %2486 = vmatprep.subr.mxu0 0.0
  %2487 = vmatpush1.xpose.msra.mxu0 0.0
  %2488 = vmatprep.subr.mxu0 0.0
  %2489 = vmatpush1.xpose.msra.mxu0 0.0
  %2490 = vmatprep.subr.mxu0 0.0
  %2491 = vmatpush1.xpose.msra.mxu0 0.0
  %2492 = vmatprep.subr.mxu0 0.0
  %2493 = vmatpush1.xpose.msra.mxu0 0.0
  %2494 = vmatprep.subr.mxu0 0.0
  %2495 = vmatpush1.xpose.msra.mxu0 0.0
  %2496 = vmatprep.subr.mxu0 0.0
  %2497 = vmatpush1.xpose.msra.mxu0 0.0
  %2498 = vmatprep.subr.mxu0 0.0
  %2499 = vmatpush1.xpose.msra.mxu0 0.0
  %2500 = vmatprep.subr.mxu0 0.0
  %2501 = vmatpush1.xpose.msra.mxu0 0.0
  %2502 = vmatprep.subr.mxu0 0.0
  %2503 = vmatpush1.xpose.msra.mxu0 0.0
  %2504 = vmatprep.subr.mxu0 0.0
  %2505 = vmatpush1.xpose.msra.mxu0 0.0
  %2506 = vmatprep.subr.mxu0 0.0
  %2507 = vmatpush1.xpose.msra.mxu0 0.0
  %2508 = vmatprep.subr.mxu0 0.0
  %2509 = vmatpush1.xpose.msra.mxu0 0.0
  %2510 = vmatprep.subr.mxu0 0.0
  %2511 = vmatpush1.xpose.msra.mxu0 0.0
  %2512 = vmatprep.subr.mxu0 0.0
  %2513 = vmatpush1.xpose.msra.mxu0 0.0
  %2514 = vmatprep.subr.mxu0 0.0
  %2515 = vmatpush1.xpose.msra.mxu0 0.0
  %2516 = vmatprep.subr.mxu0 0.0
  %2517 = vmatpush1.xpose.msra.mxu0 0.0
  %2518 = vmatprep.subr.mxu0 0.0
  %2519 = vmatpush1.xpose.msra.mxu0 0.0
  %2520 = vmatprep.subr.mxu0 0.0
  %2521 = vmatpush1.xpose.msra.mxu0 0.0
  %2522 = vmatprep.subr.mxu0 0.0
  %2523 = vmatpush1.xpose.msra.mxu0 0.0
  %2524 = vmatprep.subr.mxu0 0.0
  %2525 = vmatpush1.xpose.msra.mxu0 0.0
  %2526 = vmatprep.subr.mxu0 0.0
  %2527 = vmatpush1.xpose.msra.mxu0 0.0
  %2528 = vmatprep.subr.mxu0 0.0
  %2529 = vmatpush1.xpose.msra.mxu0 0.0
  %2530 = vmatprep.subr.mxu0 0.0
  %2531 = vmatpush1.xpose.msra.mxu0 0.0
  %2532 = vmatprep.subr.mxu0 0.0
  %2533 = vmatpush1.xpose.msra.mxu0 0.0
  %2534 = vmatprep.subr.mxu0 0.0
  %2535 = vmatpush1.xpose.msra.mxu0 0.0
  %2536 = vmatprep.subr.mxu0 0.0
  %2537 = vmatpush1.xpose.msra.mxu0 0.0
  %2538 = vmatprep.subr.mxu0 0.0
  %2539 = vmatpush1.xpose.msra.mxu0 0.0
  %2540 = vmatprep.subr.mxu0 0.0
  %2541 = vmatpush1.xpose.msra.mxu0 0.0
  %2542 = vmatprep.subr.mxu0 0.0
  %2543 = vmatpush1.xpose.msra.mxu0 0.0
  %2544 = vmatprep.subr.mxu0 0.0
  %2545 = vmatpush1.xpose.msra.mxu0 0.0
  %2546 = vmatprep.subr.mxu0 0.0
  %2547 = vmatpush1.xpose.msra.mxu0 0.0
  %2548 = vmatprep.mubr.f32.mxu0 0.0
  %2549 = vmatmul.mubr.f32.gmra.mrb[0].mxu0 %v2479
  %v2550 = vpop.f32.mrb[0].mxu0
  %v2551 = vadd.f32 0.0, %v2550
  %v2552 = vpop.f32.mrb[0].mxu0
  %2553 = vdwg.mxu0
  %v2554 = vsel %vm1440, %v2551, -inf
  %2555 = vmax.xlane.f32.xlu0 %v2554
  %v2556 = vpop.xlane.xlu0 %2555
  %v2557 = vsub.f32 %v2551, %v2556
  %v2558 = vmul.f32 %v2557, 1.442695
  %v2559 = vpow.pop %v2558
  %v2560 = vsel %vm1440, %v2559, 0.0
  %2561 = vadd.xlane.f32.xlu0 %v2560
  %v2562 = vpop.xlane.xlu0 %2561
  %v2563 = vrcp.pop %v2562
  %v2564 = vmul.f32 %v2559, %v2563
  %v2566 = vsel %vm1440, %v2564, 0
  %2568 = vmatprep.subr.mxu0 0.0
  %2569 = vmatpush1.msra.mxu0 %v804
  %2570 = vmatprep.subr.mxu0 0.0
  %2571 = vmatpush1.msra.mxu0 0.0
  %2572 = vmatprep.subr.mxu0 0.0
  %2573 = vmatpush1.msra.mxu0 0.0
  %2574 = vmatprep.subr.mxu0 0.0
  %2575 = vmatpush1.msra.mxu0 0.0
  %2576 = vmatprep.subr.mxu0 0.0
  %2577 = vmatpush1.msra.mxu0 0.0
  %2578 = vmatprep.subr.mxu0 0.0
  %2579 = vmatpush1.msra.mxu0 0.0
  %2580 = vmatprep.subr.mxu0 0.0
  %2581 = vmatpush1.msra.mxu0 0.0
  %2582 = vmatprep.subr.mxu0 0.0
  %2583 = vmatpush1.msra.mxu0 0.0
  %2584 = vmatprep.subr.mxu0 0.0
  %2585 = vmatpush1.msra.mxu0 0.0
  %2586 = vmatprep.subr.mxu0 0.0
  %2587 = vmatpush1.msra.mxu0 0.0
  %2588 = vmatprep.subr.mxu0 0.0
  %2589 = vmatpush1.msra.mxu0 0.0
  %2590 = vmatprep.subr.mxu0 0.0
  %2591 = vmatpush1.msra.mxu0 0.0
  %2592 = vmatprep.subr.mxu0 0.0
  %2593 = vmatpush1.msra.mxu0 0.0
  %2594 = vmatprep.subr.mxu0 0.0
  %2595 = vmatpush1.msra.mxu0 0.0
  %2596 = vmatprep.subr.mxu0 0.0
  %2597 = vmatpush1.msra.mxu0 0.0
  %2598 = vmatprep.subr.mxu0 0.0
  %2599 = vmatpush1.msra.mxu0 0.0
  %2600 = vmatprep.subr.mxu0 0.0
  %2601 = vmatpush1.msra.mxu0 0.0
  %2602 = vmatprep.subr.mxu0 0.0
  %2603 = vmatpush1.msra.mxu0 0.0
  %2604 = vmatprep.subr.mxu0 0.0
  %2605 = vmatpush1.msra.mxu0 0.0
  %2606 = vmatprep.subr.mxu0 0.0
  %2607 = vmatpush1.msra.mxu0 0.0
  %2608 = vmatprep.subr.mxu0 0.0
  %2609 = vmatpush1.msra.mxu0 0.0
  %2610 = vmatprep.subr.mxu0 0.0
  %2611 = vmatpush1.msra.mxu0 0.0
  %2612 = vmatprep.subr.mxu0 0.0
  %2613 = vmatpush1.msra.mxu0 0.0
  %2614 = vmatprep.subr.mxu0 0.0
  %2615 = vmatpush1.msra.mxu0 0.0
  %2616 = vmatprep.subr.mxu0 0.0
  %2617 = vmatpush1.msra.mxu0 0.0
  %2618 = vmatprep.subr.mxu0 0.0
  %2619 = vmatpush1.msra.mxu0 0.0
  %2620 = vmatprep.subr.mxu0 0.0
  %2621 = vmatpush1.msra.mxu0 0.0
  %2622 = vmatprep.subr.mxu0 0.0
  %2623 = vmatpush1.msra.mxu0 0.0
  %2624 = vmatprep.subr.mxu0 0.0
  %2625 = vmatpush1.msra.mxu0 0.0
  %2626 = vmatprep.subr.mxu0 0.0
  %2627 = vmatpush1.msra.mxu0 0.0
  %2628 = vmatprep.subr.mxu0 0.0
  %2629 = vmatpush1.msra.mxu0 0.0
  %2630 = vmatprep.subr.mxu0 0.0
  %2631 = vmatpush1.msra.mxu0 0.0
  %2632 = vmatprep.mubr.f32.mxu0 0.0
  %2633 = vmatmul.mubr.f32.gmra.mrb[0].mxu0 %v2566
  %v2634 = vpop.f32.mrb[0].mxu0
  %v2635 = vadd.f32 0.0, %v2634
  %v2636 = vpop.f32.mrb[0].mxu0
  %2637 = vdwg.mxu0
  %v2639 = vsel %vm1363, %v2635, 0
  %2641 = vmatprep.subr.mxu0 0.0
  %2642 = vmatpush1.msra.mxu0 %v1688
  %2643 = vmatprep.subr.mxu0 0.0
  %2644 = vmatpush1.msra.mxu0 %v1689
  %2645 = vmatprep.subr.mxu0 0.0
  %2646 = vmatpush1.msra.mxu0 0.0
  %2647 = vmatprep.subr.mxu0 0.0
  %2648 = vmatpush1.msra.mxu0 0.0
  %2649 = vmatprep.subr.mxu0 0.0
  %2650 = vmatpush1.msra.mxu0 0.0
  %2651 = vmatprep.subr.mxu0 0.0
  %2652 = vmatpush1.msra.mxu0 0.0
  %2653 = vmatprep.subr.mxu0 0.0
  %2654 = vmatpush1.msra.mxu0 0.0
  %2655 = vmatprep.subr.mxu0 0.0
  %2656 = vmatpush1.msra.mxu0 0.0
  %2657 = vmatprep.subr.mxu0 0.0
  %2658 = vmatpush1.msra.mxu0 0.0
  %2659 = vmatprep.subr.mxu0 0.0
  %2660 = vmatpush1.msra.mxu0 0.0
  %2661 = vmatprep.subr.mxu0 0.0
  %2662 = vmatpush1.msra.mxu0 0.0
  %2663 = vmatprep.subr.mxu0 0.0
  %2664 = vmatpush1.msra.mxu0 0.0
  %2665 = vmatprep.subr.mxu0 0.0
  %2666 = vmatpush1.msra.mxu0 0.0
  %2667 = vmatprep.subr.mxu0 0.0
  %2668 = vmatpush1.msra.mxu0 0.0
  %2669 = vmatprep.subr.mxu0 0.0
  %2670 = vmatpush1.msra.mxu0 0.0
  %2671 = vmatprep.subr.mxu0 0.0
  %2672 = vmatpush1.msra.mxu0 0.0
  %2673 = vmatprep.subr.mxu0 0.0
  %2674 = vmatpush1.msra.mxu0 0.0
  %2675 = vmatprep.subr.mxu0 0.0
  %2676 = vmatpush1.msra.mxu0 0.0
  %2677 = vmatprep.subr.mxu0 0.0
  %2678 = vmatpush1.msra.mxu0 0.0
  %2679 = vmatprep.subr.mxu0 0.0
  %2680 = vmatpush1.msra.mxu0 0.0
  %2681 = vmatprep.subr.mxu0 0.0
  %2682 = vmatpush1.msra.mxu0 0.0
  %2683 = vmatprep.subr.mxu0 0.0
  %2684 = vmatpush1.msra.mxu0 0.0
  %2685 = vmatprep.subr.mxu0 0.0
  %2686 = vmatpush1.msra.mxu0 0.0
  %2687 = vmatprep.subr.mxu0 0.0
  %2688 = vmatpush1.msra.mxu0 0.0
  %2689 = vmatprep.subr.mxu0 0.0
  %2690 = vmatpush1.msra.mxu0 0.0
  %2691 = vmatprep.subr.mxu0 0.0
  %2692 = vmatpush1.msra.mxu0 0.0
  %2693 = vmatprep.subr.mxu0 0.0
  %2694 = vmatpush1.msra.mxu0 0.0
  %2695 = vmatprep.subr.mxu0 0.0
  %2696 = vmatpush1.msra.mxu0 0.0
  %2697 = vmatprep.subr.mxu0 0.0
  %2698 = vmatpush1.msra.mxu0 0.0
  %2699 = vmatprep.subr.mxu0 0.0
  %2700 = vmatpush1.msra.mxu0 0.0
  %2701 = vmatprep.subr.mxu0 0.0
  %2702 = vmatpush1.msra.mxu0 0.0
  %2703 = vmatprep.subr.mxu0 0.0
  %2704 = vmatpush1.msra.mxu0 0.0
  %2705 = vmatprep.mubr.f32.mxu0 0.0
  %2706 = vmatmul.mubr.f32.gmra.mrb[0].mxu0 %v2639
  %v2707 = vpop.f32.mrb[0].mxu0
  %v2708 = vadd.f32 0.0, %v2707
  %v2709 = vpop.f32.mrb[0].mxu0
  %2710 = vdwg.mxu0
  %v2712 = vsel %vm1363, %v2475, 0
  %2714 = vmatprep.subr.mxu0 0.0
  %2715 = vmatpush1.msra.mxu0 %v1525
  %2716 = vmatprep.subr.mxu0 0.0
  %2717 = vmatpush1.msra.mxu0 %v1526
  %2718 = vmatprep.subr.mxu0 0.0
  %2719 = vmatpush1.msra.mxu0 0.0
  %2720 = vmatprep.subr.mxu0 0.0
  %2721 = vmatpush1.msra.mxu0 0.0
  %2722 = vmatprep.subr.mxu0 0.0
  %2723 = vmatpush1.msra.mxu0 0.0
  %2724 = vmatprep.subr.mxu0 0.0
  %2725 = vmatpush1.msra.mxu0 0.0
  %2726 = vmatprep.subr.mxu0 0.0
  %2727 = vmatpush1.msra.mxu0 0.0
  %2728 = vmatprep.subr.mxu0 0.0
  %2729 = vmatpush1.msra.mxu0 0.0
  %2730 = vmatprep.subr.mxu0 0.0
  %2731 = vmatpush1.msra.mxu0 0.0
  %2732 = vmatprep.subr.mxu0 0.0
  %2733 = vmatpush1.msra.mxu0 0.0
  %2734 = vmatprep.subr.mxu0 0.0
  %2735 = vmatpush1.msra.mxu0 0.0
  %2736 = vmatprep.subr.mxu0 0.0
  %2737 = vmatpush1.msra.mxu0 0.0
  %2738 = vmatprep.subr.mxu0 0.0
  %2739 = vmatpush1.msra.mxu0 0.0
  %2740 = vmatprep.subr.mxu0 0.0
  %2741 = vmatpush1.msra.mxu0 0.0
  %2742 = vmatprep.subr.mxu0 0.0
  %2743 = vmatpush1.msra.mxu0 0.0
  %2744 = vmatprep.subr.mxu0 0.0
  %2745 = vmatpush1.msra.mxu0 0.0
  %2746 = vmatprep.subr.mxu0 0.0
  %2747 = vmatpush1.msra.mxu0 0.0
  %2748 = vmatprep.subr.mxu0 0.0
  %2749 = vmatpush1.msra.mxu0 0.0
  %2750 = vmatprep.subr.mxu0 0.0
  %2751 = vmatpush1.msra.mxu0 0.0
  %2752 = vmatprep.subr.mxu0 0.0
  %2753 = vmatpush1.msra.mxu0 0.0
  %2754 = vmatprep.subr.mxu0 0.0
  %2755 = vmatpush1.msra.mxu0 0.0
  %2756 = vmatprep.subr.mxu0 0.0
  %2757 = vmatpush1.msra.mxu0 0.0
  %2758 = vmatprep.subr.mxu0 0.0
  %2759 = vmatpush1.msra.mxu0 0.0
  %2760 = vmatprep.subr.mxu0 0.0
  %2761 = vmatpush1.msra.mxu0 0.0
  %2762 = vmatprep.subr.mxu0 0.0
  %2763 = vmatpush1.msra.mxu0 0.0
  %2764 = vmatprep.subr.mxu0 0.0
  %2765 = vmatpush1.msra.mxu0 0.0
  %2766 = vmatprep.subr.mxu0 0.0
  %2767 = vmatpush1.msra.mxu0 0.0
  %2768 = vmatprep.subr.mxu0 0.0
  %2769 = vmatpush1.msra.mxu0 0.0
  %2770 = vmatprep.subr.mxu0 0.0
  %2771 = vmatpush1.msra.mxu0 0.0
  %2772 = vmatprep.subr.mxu0 0.0
  %2773 = vmatpush1.msra.mxu0 0.0
  %2774 = vmatprep.subr.mxu0 0.0
  %2775 = vmatpush1.msra.mxu0 0.0
  %2776 = vmatprep.subr.mxu0 0.0
  %2777 = vmatpush1.msra.mxu0 0.0
  %2778 = vmatprep.mubr.f32.mxu0 0.0
  %2779 = vmatmul.mubr.f32.gmra.mrb[0].mxu0 %v2712
  %v2780 = vpop.f32.mrb[0].mxu0
  %v2781 = vadd.f32 %v2708, %v2780
  %v2782 = vpop.f32.mrb[0].mxu0
  %2783 = vdwg.mxu0
  %v2785 = vsel %vm1363, %v900, 0
  %v2788 = vsel %vm1363, %v990, 0
  %2790 = vmatprep.subr.mxu0 0.0
  %2791 = vmatpush1.xpose.msra.mxu0 %v2788
  %2792 = vmatprep.subr.mxu0 0.0
  %2793 = vmatpush1.xpose.msra.mxu0 0.0
  %2794 = vmatprep.subr.mxu0 0.0
  %2795 = vmatpush1.xpose.msra.mxu0 0.0
  %2796 = vmatprep.subr.mxu0 0.0
  %2797 = vmatpush1.xpose.msra.mxu0 0.0
  %2798 = vmatprep.subr.mxu0 0.0
  %2799 = vmatpush1.xpose.msra.mxu0 0.0
  %2800 = vmatprep.subr.mxu0 0.0
  %2801 = vmatpush1.xpose.msra.mxu0 0.0
  %2802 = vmatprep.subr.mxu0 0.0
  %2803 = vmatpush1.xpose.msra.mxu0 0.0
  %2804 = vmatprep.subr.mxu0 0.0
  %2805 = vmatpush1.xpose.msra.mxu0 0.0
  %2806 = vmatprep.subr.mxu0 0.0
  %2807 = vmatpush1.xpose.msra.mxu0 0.0
  %2808 = vmatprep.subr.mxu0 0.0
  %2809 = vmatpush1.xpose.msra.mxu0 0.0
  %2810 = vmatprep.subr.mxu0 0.0
  %2811 = vmatpush1.xpose.msra.mxu0 0.0
  %2812 = vmatprep.subr.mxu0 0.0
  %2813 = vmatpush1.xpose.msra.mxu0 0.0
  %2814 = vmatprep.subr.mxu0 0.0
  %2815 = vmatpush1.xpose.msra.mxu0 0.0
  %2816 = vmatprep.subr.mxu0 0.0
  %2817 = vmatpush1.xpose.msra.mxu0 0.0
  %2818 = vmatprep.subr.mxu0 0.0
  %2819 = vmatpush1.xpose.msra.mxu0 0.0
  %2820 = vmatprep.subr.mxu0 0.0
  %2821 = vmatpush1.xpose.msra.mxu0 0.0
  %2822 = vmatprep.subr.mxu0 0.0
  %2823 = vmatpush1.xpose.msra.mxu0 0.0
  %2824 = vmatprep.subr.mxu0 0.0
  %2825 = vmatpush1.xpose.msra.mxu0 0.0
  %2826 = vmatprep.subr.mxu0 0.0
  %2827 = vmatpush1.xpose.msra.mxu0 0.0
  %2828 = vmatprep.subr.mxu0 0.0
  %2829 = vmatpush1.xpose.msra.mxu0 0.0
  %2830 = vmatprep.subr.mxu0 0.0
  %2831 = vmatpush1.xpose.msra.mxu0 0.0
  %2832 = vmatprep.subr.mxu0 0.0
  %2833 = vmatpush1.xpose.msra.mxu0 0.0
  %2834 = vmatprep.subr.mxu0 0.0
  %2835 = vmatpush1.xpose.msra.mxu0 0.0
  %2836 = vmatprep.subr.mxu0 0.0
  %2837 = vmatpush1.xpose.msra.mxu0 0.0
  %2838 = vmatprep.subr.mxu0 0.0
  %2839 = vmatpush1.xpose.msra.mxu0 0.0
  %2840 = vmatprep.subr.mxu0 0.0
  %2841 = vmatpush1.xpose.msra.mxu0 0.0
  %2842 = vmatprep.subr.mxu0 0.0
  %2843 = vmatpush1.xpose.msra.mxu0 0.0
  %2844 = vmatprep.subr.mxu0 0.0
  %2845 = vmatpush1.xpose.msra.mxu0 0.0
  %2846 = vmatprep.subr.mxu0 0.0
  %2847 = vmatpush1.xpose.msra.mxu0 0.0
  %2848 = vmatprep.subr.mxu0 0.0
  %2849 = vmatpush1.xpose.msra.mxu0 0.0
  %2850 = vmatprep.subr.mxu0 0.0
  %2851 = vmatpush1.xpose.msra.mxu0 0.0
  %2852 = vmatprep.subr.mxu0 0.0
  %2853 = vmatpush1.xpose.msra.mxu0 0.0
  %2854 = vmatprep.mubr.f32.mxu0 0.0
  %2855 = vmatmul.mubr.f32.gmra.mrb[0].mxu0 %v2785
  %v2856 = vpop.f32.mrb[0].mxu0
  %v2857 = vadd.f32 0.0, %v2856
  %v2858 = vpop.f32.mrb[0].mxu0
  %2859 = vdwg.mxu0
  %v2860 = vsel %vm1440, %v2857, -inf
  %2861 = vmax.xlane.f32.xlu0 %v2860
  %v2862 = vpop.xlane.xlu0 %2861
  %v2863 = vsub.f32 %v2857, %v2862
  %v2864 = vmul.f32 %v2863, 1.442695
  %v2865 = vpow.pop %v2864
  %v2866 = vsel %vm1440, %v2865, 0.0
  %2867 = vadd.xlane.f32.xlu0 %v2866
  %v2868 = vpop.xlane.xlu0 %2867
  %v2869 = vrcp.pop %v2868
  %v2870 = vmul.f32 %v2865, %v2869
  %v2872 = vsel %vm1440, %v2870, 0
  %2874 = vmatprep.subr.mxu0 0.0
  %2875 = vmatpush1.msra.mxu0 %v1082
  %2876 = vmatprep.subr.mxu0 0.0
  %2877 = vmatpush1.msra.mxu0 0.0
  %2878 = vmatprep.subr.mxu0 0.0
  %2879 = vmatpush1.msra.mxu0 0.0
  %2880 = vmatprep.subr.mxu0 0.0
  %2881 = vmatpush1.msra.mxu0 0.0
  %2882 = vmatprep.subr.mxu0 0.0
  %2883 = vmatpush1.msra.mxu0 0.0
  %2884 = vmatprep.subr.mxu0 0.0
  %2885 = vmatpush1.msra.mxu0 0.0
  %2886 = vmatprep.subr.mxu0 0.0
  %2887 = vmatpush1.msra.mxu0 0.0
  %2888 = vmatprep.subr.mxu0 0.0
  %2889 = vmatpush1.msra.mxu0 0.0
  %2890 = vmatprep.subr.mxu0 0.0
  %2891 = vmatpush1.msra.mxu0 0.0
  %2892 = vmatprep.subr.mxu0 0.0
  %2893 = vmatpush1.msra.mxu0 0.0
  %2894 = vmatprep.subr.mxu0 0.0
  %2895 = vmatpush1.msra.mxu0 0.0
  %2896 = vmatprep.subr.mxu0 0.0
  %2897 = vmatpush1.msra.mxu0 0.0
  %2898 = vmatprep.subr.mxu0 0.0
  %2899 = vmatpush1.msra.mxu0 0.0
  %2900 = vmatprep.subr.mxu0 0.0
  %2901 = vmatpush1.msra.mxu0 0.0
  %2902 = vmatprep.subr.mxu0 0.0
  %2903 = vmatpush1.msra.mxu0 0.0
  %2904 = vmatprep.subr.mxu0 0.0
  %2905 = vmatpush1.msra.mxu0 0.0
  %2906 = vmatprep.subr.mxu0 0.0
  %2907 = vmatpush1.msra.mxu0 0.0
  %2908 = vmatprep.subr.mxu0 0.0
  %2909 = vmatpush1.msra.mxu0 0.0
  %2910 = vmatprep.subr.mxu0 0.0
  %2911 = vmatpush1.msra.mxu0 0.0
  %2912 = vmatprep.subr.mxu0 0.0
  %2913 = vmatpush1.msra.mxu0 0.0
  %2914 = vmatprep.subr.mxu0 0.0
  %2915 = vmatpush1.msra.mxu0 0.0
  %2916 = vmatprep.subr.mxu0 0.0
  %2917 = vmatpush1.msra.mxu0 0.0
  %2918 = vmatprep.subr.mxu0 0.0
  %2919 = vmatpush1.msra.mxu0 0.0
  %2920 = vmatprep.subr.mxu0 0.0
  %2921 = vmatpush1.msra.mxu0 0.0
  %2922 = vmatprep.subr.mxu0 0.0
  %2923 = vmatpush1.msra.mxu0 0.0
  %2924 = vmatprep.subr.mxu0 0.0
  %2925 = vmatpush1.msra.mxu0 0.0
  %2926 = vmatprep.subr.mxu0 0.0
  %2927 = vmatpush1.msra.mxu0 0.0
  %2928 = vmatprep.subr.mxu0 0.0
  %2929 = vmatpush1.msra.mxu0 0.0
  %2930 = vmatprep.subr.mxu0 0.0
  %2931 = vmatpush1.msra.mxu0 0.0
  %2932 = vmatprep.subr.mxu0 0.0
  %2933 = vmatpush1.msra.mxu0 0.0
  %2934 = vmatprep.subr.mxu0 0.0
  %2935 = vmatpush1.msra.mxu0 0.0
  %2936 = vmatprep.subr.mxu0 0.0
  %2937 = vmatpush1.msra.mxu0 0.0
  %2938 = vmatprep.mubr.f32.mxu0 0.0
  %2939 = vmatmul.mubr.f32.gmra.mrb[0].mxu0 %v2872
  %v2940 = vpop.f32.mrb[0].mxu0
  %v2941 = vadd.f32 0.0, %v2940
  %v2942 = vpop.f32.mrb[0].mxu0
  %2943 = vdwg.mxu0
  %v2945 = vsel %vm1363, %v2941, 0
  %2947 = vmatprep.subr.mxu0 0.0
  %2948 = vmatpush1.msra.mxu0 %v1997
  %2949 = vmatprep.subr.mxu0 0.0
  %2950 = vmatpush1.msra.mxu0 %v1998
  %2951 = vmatprep.subr.mxu0 0.0
  %2952 = vmatpush1.msra.mxu0 0.0
  %2953 = vmatprep.subr.mxu0 0.0
  %2954 = vmatpush1.msra.mxu0 0.0
  %2955 = vmatprep.subr.mxu0 0.0
  %2956 = vmatpush1.msra.mxu0 0.0
  %2957 = vmatprep.subr.mxu0 0.0
  %2958 = vmatpush1.msra.mxu0 0.0
  %2959 = vmatprep.subr.mxu0 0.0
  %2960 = vmatpush1.msra.mxu0 0.0
  %2961 = vmatprep.subr.mxu0 0.0
  %2962 = vmatpush1.msra.mxu0 0.0
  %2963 = vmatprep.subr.mxu0 0.0
  %2964 = vmatpush1.msra.mxu0 0.0
  %2965 = vmatprep.subr.mxu0 0.0
  %2966 = vmatpush1.msra.mxu0 0.0
  %2967 = vmatprep.subr.mxu0 0.0
  %2968 = vmatpush1.msra.mxu0 0.0
  %2969 = vmatprep.subr.mxu0 0.0
  %2970 = vmatpush1.msra.mxu0 0.0
  %2971 = vmatprep.subr.mxu0 0.0
  %2972 = vmatpush1.msra.mxu0 0.0
  %2973 = vmatprep.subr.mxu0 0.0
  %2974 = vmatpush1.msra.mxu0 0.0
  %2975 = vmatprep.subr.mxu0 0.0
  %2976 = vmatpush1.msra.mxu0 0.0
  %2977 = vmatprep.subr.mxu0 0.0
  %2978 = vmatpush1.msra.mxu0 0.0
  %2979 = vmatprep.subr.mxu0 0.0
  %2980 = vmatpush1.msra.mxu0 0.0
  %2981 = vmatprep.subr.mxu0 0.0
  %2982 = vmatpush1.msra.mxu0 0.0
  %2983 = vmatprep.subr.mxu0 0.0
  %2984 = vmatpush1.msra.mxu0 0.0
  %2985 = vmatprep.subr.mxu0 0.0
  %2986 = vmatpush1.msra.mxu0 0.0
  %2987 = vmatprep.subr.mxu0 0.0
  %2988 = vmatpush1.msra.mxu0 0.0
  %2989 = vmatprep.subr.mxu0 0.0
  %2990 = vmatpush1.msra.mxu0 0.0
  %2991 = vmatprep.subr.mxu0 0.0
  %2992 = vmatpush1.msra.mxu0 0.0
  %2993 = vmatprep.subr.mxu0 0.0
  %2994 = vmatpush1.msra.mxu0 0.0
  %2995 = vmatprep.subr.mxu0 0.0
  %2996 = vmatpush1.msra.mxu0 0.0
  %2997 = vmatprep.subr.mxu0 0.0
  %2998 = vmatpush1.msra.mxu0 0.0
  %2999 = vmatprep.subr.mxu0 0.0
  %3000 = vmatpush1.msra.mxu0 0.0
  %3001 = vmatprep.subr.mxu0 0.0
  %3002 = vmatpush1.msra.mxu0 0.0
  %3003 = vmatprep.subr.mxu0 0.0
  %3004 = vmatpush1.msra.mxu0 0.0
  %3005 = vmatprep.subr.mxu0 0.0
  %3006 = vmatpush1.msra.mxu0 0.0
  %3007 = vmatprep.subr.mxu0 0.0
  %3008 = vmatpush1.msra.mxu0 0.0
  %3009 = vmatprep.subr.mxu0 0.0
  %3010 = vmatpush1.msra.mxu0 0.0
  %3011 = vmatprep.mubr.f32.mxu0 0.0
  %3012 = vmatmul.mubr.f32.gmra.mrb[0].mxu0 %v2945
  %v3013 = vpop.f32.mrb[0].mxu0
  %v3014 = vadd.f32 0.0, %v3013
  %v3015 = vpop.f32.mrb[0].mxu0
  %3016 = vdwg.mxu0
  %v3017 = vadd.f32 %v2781, %v3014
  %v3019 = vsel %vm1363, %v1178, 0
  %v3022 = vsel %vm1363, %v1268, 0
  %3024 = vmatprep.subr.mxu0 0.0
  %3025 = vmatpush1.xpose.msra.mxu0 %v3022
  %3026 = vmatprep.subr.mxu0 0.0
  %3027 = vmatpush1.xpose.msra.mxu0 0.0
  %3028 = vmatprep.subr.mxu0 0.0
  %3029 = vmatpush1.xpose.msra.mxu0 0.0
  %3030 = vmatprep.subr.mxu0 0.0
  %3031 = vmatpush1.xpose.msra.mxu0 0.0
  %3032 = vmatprep.subr.mxu0 0.0
  %3033 = vmatpush1.xpose.msra.mxu0 0.0
  %3034 = vmatprep.subr.mxu0 0.0
  %3035 = vmatpush1.xpose.msra.mxu0 0.0
  %3036 = vmatprep.subr.mxu0 0.0
  %3037 = vmatpush1.xpose.msra.mxu0 0.0
  %3038 = vmatprep.subr.mxu0 0.0
  %3039 = vmatpush1.xpose.msra.mxu0 0.0
  %3040 = vmatprep.subr.mxu0 0.0
  %3041 = vmatpush1.xpose.msra.mxu0 0.0
  %3042 = vmatprep.subr.mxu0 0.0
  %3043 = vmatpush1.xpose.msra.mxu0 0.0
  %3044 = vmatprep.subr.mxu0 0.0
  %3045 = vmatpush1.xpose.msra.mxu0 0.0
  %3046 = vmatprep.subr.mxu0 0.0
  %3047 = vmatpush1.xpose.msra.mxu0 0.0
  %3048 = vmatprep.subr.mxu0 0.0
  %3049 = vmatpush1.xpose.msra.mxu0 0.0
  %3050 = vmatprep.subr.mxu0 0.0
  %3051 = vmatpush1.xpose.msra.mxu0 0.0
  %3052 = vmatprep.subr.mxu0 0.0
  %3053 = vmatpush1.xpose.msra.mxu0 0.0
  %3054 = vmatprep.subr.mxu0 0.0
  %3055 = vmatpush1.xpose.msra.mxu0 0.0
  %3056 = vmatprep.subr.mxu0 0.0
  %3057 = vmatpush1.xpose.msra.mxu0 0.0
  %3058 = vmatprep.subr.mxu0 0.0
  %3059 = vmatpush1.xpose.msra.mxu0 0.0
  %3060 = vmatprep.subr.mxu0 0.0
  %3061 = vmatpush1.xpose.msra.mxu0 0.0
  %3062 = vmatprep.subr.mxu0 0.0
  %3063 = vmatpush1.xpose.msra.mxu0 0.0
  %3064 = vmatprep.subr.mxu0 0.0
  %3065 = vmatpush1.xpose.msra.mxu0 0.0
  %3066 = vmatprep.subr.mxu0 0.0
  %3067 = vmatpush1.xpose.msra.mxu0 0.0
  %3068 = vmatprep.subr.mxu0 0.0
  %3069 = vmatpush1.xpose.msra.mxu0 0.0
  %3070 = vmatprep.subr.mxu0 0.0
  %3071 = vmatpush1.xpose.msra.mxu0 0.0
  %3072 = vmatprep.subr.mxu0 0.0
  %3073 = vmatpush1.xpose.msra.mxu0 0.0
  %3074 = vmatprep.subr.mxu0 0.0
  %3075 = vmatpush1.xpose.msra.mxu0 0.0
  %3076 = vmatprep.subr.mxu0 0.0
  %3077 = vmatpush1.xpose.msra.mxu0 0.0
  %3078 = vmatprep.subr.mxu0 0.0
  %3079 = vmatpush1.xpose.msra.mxu0 0.0
  %3080 = vmatprep.subr.mxu0 0.0
  %3081 = vmatpush1.xpose.msra.mxu0 0.0
  %3082 = vmatprep.subr.mxu0 0.0
  %3083 = vmatpush1.xpose.msra.mxu0 0.0
  %3084 = vmatprep.subr.mxu0 0.0
  %3085 = vmatpush1.xpose.msra.mxu0 0.0
  %3086 = vmatprep.subr.mxu0 0.0
  %3087 = vmatpush1.xpose.msra.mxu0 0.0
  %3088 = vmatprep.mubr.f32.mxu0 0.0
  %3089 = vmatmul.mubr.f32.gmra.mrb[0].mxu0 %v3019
  %v3090 = vpop.f32.mrb[0].mxu0
  %v3091 = vadd.f32 0.0, %v3090
  %v3092 = vpop.f32.mrb[0].mxu0
  %3093 = vdwg.mxu0
  %v3094 = vsel %vm1440, %v3091, -inf
  %3095 = vmax.xlane.f32.xlu0 %v3094
  %v3096 = vpop.xlane.xlu0 %3095
  %v3097 = vsub.f32 %v3091, %v3096
  %v3098 = vmul.f32 %v3097, 1.442695
  %v3099 = vpow.pop %v3098
  %v3100 = vsel %vm1440, %v3099, 0.0
  %3101 = vadd.xlane.f32.xlu0 %v3100
  %v3102 = vpop.xlane.xlu0 %3101
  %v3103 = vrcp.pop %v3102
  %v3104 = vmul.f32 %v3099, %v3103
  %v3106 = vsel %vm1440, %v3104, 0
  %3108 = vmatprep.subr.mxu0 0.0
  %3109 = vmatpush1.msra.mxu0 %v1360
  %3110 = vmatprep.subr.mxu0 0.0
  %3111 = vmatpush1.msra.mxu0 0.0
  %3112 = vmatprep.subr.mxu0 0.0
  %3113 = vmatpush1.msra.mxu0 0.0
  %3114 = vmatprep.subr.mxu0 0.0
  %3115 = vmatpush1.msra.mxu0 0.0
  %3116 = vmatprep.subr.mxu0 0.0
  %3117 = vmatpush1.msra.mxu0 0.0
  %3118 = vmatprep.subr.mxu0 0.0
  %3119 = vmatpush1.msra.mxu0 0.0
  %3120 = vmatprep.subr.mxu0 0.0
  %3121 = vmatpush1.msra.mxu0 0.0
  %3122 = vmatprep.subr.mxu0 0.0
  %3123 = vmatpush1.msra.mxu0 0.0
  %3124 = vmatprep.subr.mxu0 0.0
  %3125 = vmatpush1.msra.mxu0 0.0
  %3126 = vmatprep.subr.mxu0 0.0
  %3127 = vmatpush1.msra.mxu0 0.0
  %3128 = vmatprep.subr.mxu0 0.0
  %3129 = vmatpush1.msra.mxu0 0.0
  %3130 = vmatprep.subr.mxu0 0.0
  %3131 = vmatpush1.msra.mxu0 0.0
  %3132 = vmatprep.subr.mxu0 0.0
  %3133 = vmatpush1.msra.mxu0 0.0
  %3134 = vmatprep.subr.mxu0 0.0
  %3135 = vmatpush1.msra.mxu0 0.0
  %3136 = vmatprep.subr.mxu0 0.0
  %3137 = vmatpush1.msra.mxu0 0.0
  %3138 = vmatprep.subr.mxu0 0.0
  %3139 = vmatpush1.msra.mxu0 0.0
  %3140 = vmatprep.subr.mxu0 0.0
  %3141 = vmatpush1.msra.mxu0 0.0
  %3142 = vmatprep.subr.mxu0 0.0
  %3143 = vmatpush1.msra.mxu0 0.0
  %3144 = vmatprep.subr.mxu0 0.0
  %3145 = vmatpush1.msra.mxu0 0.0
  %3146 = vmatprep.subr.mxu0 0.0
  %3147 = vmatpush1.msra.mxu0 0.0
  %3148 = vmatprep.subr.mxu0 0.0
  %3149 = vmatpush1.msra.mxu0 0.0
  %3150 = vmatprep.subr.mxu0 0.0
  %3151 = vmatpush1.msra.mxu0 0.0
  %3152 = vmatprep.subr.mxu0 0.0
  %3153 = vmatpush1.msra.mxu0 0.0
  %3154 = vmatprep.subr.mxu0 0.0
  %3155 = vmatpush1.msra.mxu0 0.0
  %3156 = vmatprep.subr.mxu0 0.0
  %3157 = vmatpush1.msra.mxu0 0.0
  %3158 = vmatprep.subr.mxu0 0.0
  %3159 = vmatpush1.msra.mxu0 0.0
  %3160 = vmatprep.subr.mxu0 0.0
  %3161 = vmatpush1.msra.mxu0 0.0
  %3162 = vmatprep.subr.mxu0 0.0
  %3163 = vmatpush1.msra.mxu0 0.0
  %3164 = vmatprep.subr.mxu0 0.0
  %3165 = vmatpush1.msra.mxu0 0.0
  %3166 = vmatprep.subr.mxu0 0.0
  %3167 = vmatpush1.msra.mxu0 0.0
  %3168 = vmatprep.subr.mxu0 0.0
  %3169 = vmatpush1.msra.mxu0 0.0
  %3170 = vmatprep.subr.mxu0 0.0
  %3171 = vmatpush1.msra.mxu0 0.0
  %3172 = vmatprep.mubr.f32.mxu0 0.0
  %3173 = vmatmul.mubr.f32.gmra.mrb[0].mxu0 %v3106
  %v3174 = vpop.f32.mrb[0].mxu0
  %v3175 = vadd.f32 0.0, %v3174
  %v3176 = vpop.f32.mrb[0].mxu0
  %3177 = vdwg.mxu0
  %v3179 = vsel %vm1363, %v3175, 0
  %3181 = vmatprep.subr.mxu0 0.0
  %3182 = vmatpush1.msra.mxu0 %v2234
  %3183 = vmatprep.subr.mxu0 0.0
  %3184 = vmatpush1.msra.mxu0 %v2235
  %3185 = vmatprep.subr.mxu0 0.0
  %3186 = vmatpush1.msra.mxu0 0.0
  %3187 = vmatprep.subr.mxu0 0.0
  %3188 = vmatpush1.msra.mxu0 0.0
  %3189 = vmatprep.subr.mxu0 0.0
  %3190 = vmatpush1.msra.mxu0 0.0
  %3191 = vmatprep.subr.mxu0 0.0
  %3192 = vmatpush1.msra.mxu0 0.0
  %3193 = vmatprep.subr.mxu0 0.0
  %3194 = vmatpush1.msra.mxu0 0.0
  %3195 = vmatprep.subr.mxu0 0.0
  %3196 = vmatpush1.msra.mxu0 0.0
  %3197 = vmatprep.subr.mxu0 0.0
  %3198 = vmatpush1.msra.mxu0 0.0
  %3199 = vmatprep.subr.mxu0 0.0
  %3200 = vmatpush1.msra.mxu0 0.0
  %3201 = vmatprep.subr.mxu0 0.0
  %3202 = vmatpush1.msra.mxu0 0.0
  %3203 = vmatprep.subr.mxu0 0.0
  %3204 = vmatpush1.msra.mxu0 0.0
  %3205 = vmatprep.subr.mxu0 0.0
  %3206 = vmatpush1.msra.mxu0 0.0
  %3207 = vmatprep.subr.mxu0 0.0
  %3208 = vmatpush1.msra.mxu0 0.0
  %3209 = vmatprep.subr.mxu0 0.0
  %3210 = vmatpush1.msra.mxu0 0.0
  %3211 = vmatprep.subr.mxu0 0.0
  %3212 = vmatpush1.msra.mxu0 0.0
  %3213 = vmatprep.subr.mxu0 0.0
  %3214 = vmatpush1.msra.mxu0 0.0
  %3215 = vmatprep.subr.mxu0 0.0
  %3216 = vmatpush1.msra.mxu0 0.0
  %3217 = vmatprep.subr.mxu0 0.0
  %3218 = vmatpush1.msra.mxu0 0.0
  %3219 = vmatprep.subr.mxu0 0.0
  %3220 = vmatpush1.msra.mxu0 0.0
  %3221 = vmatprep.subr.mxu0 0.0
  %3222 = vmatpush1.msra.mxu0 0.0
  %3223 = vmatprep.subr.mxu0 0.0
  %3224 = vmatpush1.msra.mxu0 0.0
  %3225 = vmatprep.subr.mxu0 0.0
  %3226 = vmatpush1.msra.mxu0 0.0
  %3227 = vmatprep.subr.mxu0 0.0
  %3228 = vmatpush1.msra.mxu0 0.0
  %3229 = vmatprep.subr.mxu0 0.0
  %3230 = vmatpush1.msra.mxu0 0.0
  %3231 = vmatprep.subr.mxu0 0.0
  %3232 = vmatpush1.msra.mxu0 0.0
  %3233 = vmatprep.subr.mxu0 0.0
  %3234 = vmatpush1.msra.mxu0 0.0
  %3235 = vmatprep.subr.mxu0 0.0
  %3236 = vmatpush1.msra.mxu0 0.0
  %3237 = vmatprep.subr.mxu0 0.0
  %3238 = vmatpush1.msra.mxu0 0.0
  %3239 = vmatprep.subr.mxu0 0.0
  %3240 = vmatpush1.msra.mxu0 0.0
  %3241 = vmatprep.subr.mxu0 0.0
  %3242 = vmatpush1.msra.mxu0 0.0
  %3243 = vmatprep.subr.mxu0 0.0
  %3244 = vmatpush1.msra.mxu0 0.0
  %3245 = vmatprep.mubr.f32.mxu0 0.0
  %3246 = vmatmul.mubr.f32.gmra.mrb[0].mxu0 %v3179
  %v3247 = vpop.f32.mrb[0].mxu0
  %v3248 = vadd.f32 0.0, %v3247
  %v3249 = vpop.f32.mrb[0].mxu0
  %3250 = vdwg.mxu0
  %v3251 = vadd.f32 %v3017, %v3248
  %v3252 = vadd.f32 %v3251, %v2315
  %v3253 = vld [vmem:[%s35] sm:$0x1]
  %v3254 = vld [vmem:[%s37] sm:$0x1]
  %v3255 = vadd.f32 %v242, %v2317
  %v3256 = vadd.f32 %v247, %v3252
  %v3257 = vsel %vm265, %v3255, 0.0
  %3258 = vadd.xlane.f32.xlu0 %v3257
  %v3259 = vpop.xlane.xlu0 %3258
  %v3260 = vsel %vm265, %v3256, 0.0
  %3261 = vadd.xlane.f32.xlu0 %v3260
  %v3262 = vpop.xlane.xlu0 %3261
  %v3263 = vrcp.pop 64.0
  %v3264 = vmul.f32 %v3259, %v3263
  %v3265 = vmul.f32 %v3262, %v3263
  %v3266 = vsub.f32 %v3255, %v3264
  %v3267 = vsub.f32 %v3256, %v3265
  %v3268 = vmul.f32 %v3266, %v3266
  %v3269 = vmul.f32 %v3267, %v3267
  %v3270 = vsel %vm265, %v3268, 0.0
  %3271 = vadd.xlane.f32.xlu0 %v3270
  %v3272 = vpop.xlane.xlu0 %3271
  %v3273 = vsel %vm265, %v3269, 0.0
  %3274 = vadd.xlane.f32.xlu0 %v3273
  %v3275 = vpop.xlane.xlu0 %3274
  %v3276 = vmul.f32 %v3272, %v3263
  %v3277 = vmul.f32 %v3275, %v3263
  %v3278 = vadd.f32 %v3276, 1e-05
  %v3279 = vadd.f32 %v3277, 1e-05
  %v3280 = vrsqrt.pop %v3278
  %v3281 = vrsqrt.pop %v3279
  %v3282 = vmul.f32 %v3266, %v3280
  %v3283 = vmul.f32 %v3267, %v3281
  %v3285 = vlaneseq
  %v3286 = vshrl.u32 %v3285, 7
  %v3287 = vsub.s32 0, %v3286
  %v3288 = vrot.slane %v3253, %v3287
  %v3290 = vmul.f32 %v3282, %v3288
  %v3291 = vmul.f32 %v3283, %v3288
  %v3293 = vlaneseq
  %v3294 = vshrl.u32 %v3293, 7
  %v3295 = vsub.s32 0, %v3294
  %v3296 = vrot.slane %v3254, %v3295
  %v3298 = vadd.f32 %v3290, %v3296
  %v3299 = vadd.f32 %v3291, %v3296
  %v3300 = vpack.c.bf16 %v3299, %v3298
  %v3301 = vld [vmem:[%s27] sm:$0xff]
  %v3302 = vld [vmem:[%s27 + $0x8] sm:$0xff]
  %v3303 = vld [vmem:[%s27 + $0x10] sm:$0xff]
  %v3304 = vld [vmem:[%s27 + $0x18] sm:$0xff]
  %v3305 = vld [vmem:[%s27 + $0x20] sm:$0xff]
  %v3306 = vld [vmem:[%s27 + $0x28] sm:$0xff]
  %v3307 = vld [vmem:[%s27 + $0x30] sm:$0xff]
  %v3308 = vld [vmem:[%s27 + $0x38] sm:$0xff]
  %v3309 = vld [vmem:[%s27 + $0x40] sm:$0xff]
  %v3310 = vld [vmem:[%s27 + $0x48] sm:$0xff]
  %v3311 = vld [vmem:[%s27 + $0x50] sm:$0xff]
  %v3312 = vld [vmem:[%s27 + $0x58] sm:$0xff]
  %v3313 = vld [vmem:[%s27 + $0x60] sm:$0xff]
  %v3314 = vld [vmem:[%s27 + $0x68] sm:$0xff]
  %v3315 = vld [vmem:[%s27 + $0x70] sm:$0xff]
  %v3316 = vld [vmem:[%s27 + $0x78] sm:$0xff]
  %v3317 = vld [vmem:[%s27 + $0x80] sm:$0xff]
  %v3318 = vld [vmem:[%s27 + $0x88] sm:$0xff]
  %v3319 = vld [vmem:[%s27 + $0x90] sm:$0xff]
  %v3320 = vld [vmem:[%s27 + $0x98] sm:$0xff]
  %v3321 = vld [vmem:[%s27 + $0xa0] sm:$0xff]
  %v3322 = vld [vmem:[%s27 + $0xa8] sm:$0xff]
  %v3323 = vld [vmem:[%s27 + $0xb0] sm:$0xff]
  %v3324 = vld [vmem:[%s27 + $0xb8] sm:$0xff]
  %v3325 = vld [vmem:[%s27 + $0xc0] sm:$0xff]
  %v3326 = vld [vmem:[%s27 + $0xc8] sm:$0xff]
  %v3327 = vld [vmem:[%s27 + $0xd0] sm:$0xff]
  %v3328 = vld [vmem:[%s27 + $0xd8] sm:$0xff]
  %v3329 = vld [vmem:[%s27 + $0xe0] sm:$0xff]
  %v3330 = vld [vmem:[%s27 + $0xe8] sm:$0xff]
  %v3331 = vld [vmem:[%s27 + $0xf0] sm:$0xff]
  %v3332 = vld [vmem:[%s27 + $0xf8] sm:$0xff]
  %v3333 = vld [vmem:[%s27 + $0x100] sm:$0xff]
  %v3334 = vld [vmem:[%s27 + $0x108] sm:$0xff]
  %v3335 = vld [vmem:[%s27 + $0x110] sm:$0xff]
  %v3336 = vld [vmem:[%s27 + $0x118] sm:$0xff]
  %v3337 = vld [vmem:[%s27 + $0x120] sm:$0xff]
  %v3338 = vld [vmem:[%s27 + $0x128] sm:$0xff]
  %v3339 = vld [vmem:[%s27 + $0x130] sm:$0xff]
  %v3340 = vld [vmem:[%s27 + $0x138] sm:$0xff]
  %v3341 = vld [vmem:[%s27 + $0x140] sm:$0xff]
  %v3342 = vld [vmem:[%s27 + $0x148] sm:$0xff]
  %v3343 = vld [vmem:[%s27 + $0x150] sm:$0xff]
  %v3344 = vld [vmem:[%s27 + $0x158] sm:$0xff]
  %v3345 = vld [vmem:[%s27 + $0x160] sm:$0xff]
  %v3346 = vld [vmem:[%s27 + $0x168] sm:$0xff]
  %v3347 = vld [vmem:[%s27 + $0x170] sm:$0xff]
  %v3348 = vld [vmem:[%s27 + $0x178] sm:$0xff]
  %v3349 = vld [vmem:[%s27 + $0x180] sm:$0xff]
  %v3350 = vld [vmem:[%s27 + $0x188] sm:$0xff]
  %v3351 = vld [vmem:[%s27 + $0x190] sm:$0xff]
  %v3352 = vld [vmem:[%s27 + $0x198] sm:$0xff]
  %v3353 = vld [vmem:[%s27 + $0x1a0] sm:$0xff]
  %v3354 = vld [vmem:[%s27 + $0x1a8] sm:$0xff]
  %v3355 = vld [vmem:[%s27 + $0x1b0] sm:$0xff]
  %v3356 = vld [vmem:[%s27 + $0x1b8] sm:$0xff]
  %v3357 = vld [vmem:[%s27 + $0x1c0] sm:$0xff]
  %v3358 = vld [vmem:[%s27 + $0x1c8] sm:$0xff]
  %v3359 = vld [vmem:[%s27 + $0x1d0] sm:$0xff]
  %v3360 = vld [vmem:[%s27 + $0x1d8] sm:$0xff]
  %v3361 = vld [vmem:[%s27 + $0x1e0] sm:$0xff]
  %v3362 = vld [vmem:[%s27 + $0x1e8] sm:$0xff]
  %v3363 = vld [vmem:[%s27 + $0x1f0] sm:$0xff]
  %v3364 = vld [vmem:[%s27 + $0x1f8] sm:$0xff]
  %v3365 = vld [vmem:[%s29] sm:$0xff]
  %v3366 = vld [vmem:[%s29 + $0x8] sm:$0xff]
  %v3369 = vlaneseq
  %v3370 = vshrl.u32 %v3369, 7
  %v3371 = vsub.s32 0, %v3370
  %v3372 = vrot.slane %v3365, %v3371
  %v3373 = vlaneseq
  %v3374 = vshrl.u32 %v3373, 7
  %v3375 = vsub.s32 1, %v3374
  %v3376 = vrot.slane %v3365, %v3375
  %v3377 = vlaneseq
  %v3378 = vshrl.u32 %v3377, 7
  %v3379 = vsub.s32 2, %v3378
  %v3380 = vrot.slane %v3365, %v3379
  %v3381 = vlaneseq
  %v3382 = vshrl.u32 %v3381, 7
  %v3383 = vsub.s32 3, %v3382
  %v3384 = vrot.slane %v3365, %v3383
  %v3385 = vlaneseq
  %v3386 = vshrl.u32 %v3385, 7
  %v3387 = vsub.s32 4, %v3386
  %v3388 = vrot.slane %v3365, %v3387
  %v3389 = vlaneseq
  %v3390 = vshrl.u32 %v3389, 7
  %v3391 = vsub.s32 5, %v3390
  %v3392 = vrot.slane %v3365, %v3391
  %v3393 = vlaneseq
  %v3394 = vshrl.u32 %v3393, 7
  %v3395 = vsub.s32 6, %v3394
  %v3396 = vrot.slane %v3365, %v3395
  %v3397 = vlaneseq
  %v3398 = vshrl.u32 %v3397, 7
  %v3399 = vsub.s32 7, %v3398
  %v3400 = vrot.slane %v3365, %v3399
  %v3401 = vlaneseq
  %v3402 = vshrl.u32 %v3401, 7
  %v3403 = vsub.s32 0, %v3402
  %v3404 = vrot.slane %v3366, %v3403
  %v3405 = vlaneseq
  %v3406 = vshrl.u32 %v3405, 7
  %v3407 = vsub.s32 1, %v3406
  %v3408 = vrot.slane %v3366, %v3407
  %v3409 = vlaneseq
  %v3410 = vshrl.u32 %v3409, 7
  %v3411 = vsub.s32 2, %v3410
  %v3412 = vrot.slane %v3366, %v3411
  %v3413 = vlaneseq
  %v3414 = vshrl.u32 %v3413, 7
  %v3415 = vsub.s32 3, %v3414
  %v3416 = vrot.slane %v3366, %v3415
  %v3417 = vlaneseq
  %v3418 = vshrl.u32 %v3417, 7
  %v3419 = vsub.s32 4, %v3418
  %v3420 = vrot.slane %v3366, %v3419
  %v3421 = vlaneseq
  %v3422 = vshrl.u32 %v3421, 7
  %v3423 = vsub.s32 5, %v3422
  %v3424 = vrot.slane %v3366, %v3423
  %v3425 = vlaneseq
  %v3426 = vshrl.u32 %v3425, 7
  %v3427 = vsub.s32 6, %v3426
  %v3428 = vrot.slane %v3366, %v3427
  %v3429 = vlaneseq
  %v3430 = vshrl.u32 %v3429, 7
  %v3431 = vsub.s32 7, %v3430
  %v3432 = vrot.slane %v3366, %v3431
  %v3513 = vunpack.c.l.b16 %v3301
  %v3514 = vunpack.c.h.b16 %v3301
  %v3515 = vunpack.c.l.b16 %v3302
  %v3516 = vunpack.c.h.b16 %v3302
  %v3517 = vunpack.c.l.b16 %v3303
  %v3518 = vunpack.c.h.b16 %v3303
  %v3519 = vunpack.c.l.b16 %v3304
  %v3520 = vunpack.c.h.b16 %v3304
  %v3521 = vunpack.c.l.b16 %v3305
  %v3522 = vunpack.c.h.b16 %v3305
  %v3523 = vunpack.c.l.b16 %v3306
  %v3524 = vunpack.c.h.b16 %v3306
  %v3525 = vunpack.c.l.b16 %v3307
  %v3526 = vunpack.c.h.b16 %v3307
  %v3527 = vunpack.c.l.b16 %v3308
  %v3528 = vunpack.c.h.b16 %v3308
  %v3529 = vunpack.c.l.b16 %v3309
  %v3530 = vunpack.c.h.b16 %v3309
  %v3531 = vunpack.c.l.b16 %v3310
  %v3532 = vunpack.c.h.b16 %v3310
  %v3533 = vunpack.c.l.b16 %v3311
  %v3534 = vunpack.c.h.b16 %v3311
  %v3535 = vunpack.c.l.b16 %v3312
  %v3536 = vunpack.c.h.b16 %v3312
  %v3537 = vunpack.c.l.b16 %v3313
  %v3538 = vunpack.c.h.b16 %v3313
  %v3539 = vunpack.c.l.b16 %v3314
  %v3540 = vunpack.c.h.b16 %v3314
  %v3541 = vunpack.c.l.b16 %v3315
  %v3542 = vunpack.c.h.b16 %v3315
  %v3543 = vunpack.c.l.b16 %v3316
  %v3544 = vunpack.c.h.b16 %v3316
  %v3545 = vunpack.c.l.b16 %v3317
  %v3546 = vunpack.c.h.b16 %v3317
  %v3547 = vunpack.c.l.b16 %v3318
  %v3548 = vunpack.c.h.b16 %v3318
  %v3549 = vunpack.c.l.b16 %v3319
  %v3550 = vunpack.c.h.b16 %v3319
  %v3551 = vunpack.c.l.b16 %v3320
  %v3552 = vunpack.c.h.b16 %v3320
  %v3553 = vunpack.c.l.b16 %v3321
  %v3554 = vunpack.c.h.b16 %v3321
  %v3555 = vunpack.c.l.b16 %v3322
  %v3556 = vunpack.c.h.b16 %v3322
  %v3557 = vunpack.c.l.b16 %v3323
  %v3558 = vunpack.c.h.b16 %v3323
  %v3559 = vunpack.c.l.b16 %v3324
  %v3560 = vunpack.c.h.b16 %v3324
  %v3561 = vunpack.c.l.b16 %v3325
  %v3562 = vunpack.c.h.b16 %v3325
  %v3563 = vunpack.c.l.b16 %v3326
  %v3564 = vunpack.c.h.b16 %v3326
  %v3565 = vunpack.c.l.b16 %v3327
  %v3566 = vunpack.c.h.b16 %v3327
  %v3567 = vunpack.c.l.b16 %v3328
  %v3568 = vunpack.c.h.b16 %v3328
  %v3569 = vunpack.c.l.b16 %v3329
  %v3570 = vunpack.c.h.b16 %v3329
  %v3571 = vunpack.c.l.b16 %v3330
  %v3572 = vunpack.c.h.b16 %v3330
  %v3573 = vunpack.c.l.b16 %v3331
  %v3574 = vunpack.c.h.b16 %v3331
  %v3575 = vunpack.c.l.b16 %v3332
  %v3576 = vunpack.c.h.b16 %v3332
  %v3577 = vunpack.c.l.b16 %v3333
  %v3578 = vunpack.c.h.b16 %v3333
  %v3579 = vunpack.c.l.b16 %v3334
  %v3580 = vunpack.c.h.b16 %v3334
  %v3581 = vunpack.c.l.b16 %v3335
  %v3582 = vunpack.c.h.b16 %v3335
  %v3583 = vunpack.c.l.b16 %v3336
  %v3584 = vunpack.c.h.b16 %v3336
  %v3585 = vunpack.c.l.b16 %v3337
  %v3586 = vunpack.c.h.b16 %v3337
  %v3587 = vunpack.c.l.b16 %v3338
  %v3588 = vunpack.c.h.b16 %v3338
  %v3589 = vunpack.c.l.b16 %v3339
  %v3590 = vunpack.c.h.b16 %v3339
  %v3591 = vunpack.c.l.b16 %v3340
  %v3592 = vunpack.c.h.b16 %v3340
  %v3593 = vunpack.c.l.b16 %v3341
  %v3594 = vunpack.c.h.b16 %v3341
  %v3595 = vunpack.c.l.b16 %v3342
  %v3596 = vunpack.c.h.b16 %v3342
  %v3597 = vunpack.c.l.b16 %v3343
  %v3598 = vunpack.c.h.b16 %v3343
  %v3599 = vunpack.c.l.b16 %v3344
  %v3600 = vunpack.c.h.b16 %v3344
  %v3601 = vunpack.c.l.b16 %v3345
  %v3602 = vunpack.c.h.b16 %v3345
  %v3603 = vunpack.c.l.b16 %v3346
  %v3604 = vunpack.c.h.b16 %v3346
  %v3605 = vunpack.c.l.b16 %v3347
  %v3606 = vunpack.c.h.b16 %v3347
  %v3607 = vunpack.c.l.b16 %v3348
  %v3608 = vunpack.c.h.b16 %v3348
  %v3609 = vunpack.c.l.b16 %v3349
  %v3610 = vunpack.c.h.b16 %v3349
  %v3611 = vunpack.c.l.b16 %v3350
  %v3612 = vunpack.c.h.b16 %v3350
  %v3613 = vunpack.c.l.b16 %v3351
  %v3614 = vunpack.c.h.b16 %v3351
  %v3615 = vunpack.c.l.b16 %v3352
  %v3616 = vunpack.c.h.b16 %v3352
  %v3617 = vunpack.c.l.b16 %v3353
  %v3618 = vunpack.c.h.b16 %v3353
  %v3619 = vunpack.c.l.b16 %v3354
  %v3620 = vunpack.c.h.b16 %v3354
  %v3621 = vunpack.c.l.b16 %v3355
  %v3622 = vunpack.c.h.b16 %v3355
  %v3623 = vunpack.c.l.b16 %v3356
  %v3624 = vunpack.c.h.b16 %v3356
  %v3625 = vunpack.c.l.b16 %v3357
  %v3626 = vunpack.c.h.b16 %v3357
  %v3627 = vunpack.c.l.b16 %v3358
  %v3628 = vunpack.c.h.b16 %v3358
  %v3629 = vunpack.c.l.b16 %v3359
  %v3630 = vunpack.c.h.b16 %v3359
  %v3631 = vunpack.c.l.b16 %v3360
  %v3632 = vunpack.c.h.b16 %v3360
  %v3633 = vunpack.c.l.b16 %v3361
  %v3634 = vunpack.c.h.b16 %v3361
  %v3635 = vunpack.c.l.b16 %v3362
  %v3636 = vunpack.c.h.b16 %v3362
  %v3637 = vunpack.c.l.b16 %v3363
  %v3638 = vunpack.c.h.b16 %v3363
  %v3639 = vunpack.c.l.b16 %v3364
  %v3640 = vunpack.c.h.b16 %v3364
  %v3641 = vpack.c.b16 %v3529, %v3513
  %v3642 = vpack.c.b16 %v3530, %v3514
  %v3643 = vpack.c.b16 %v3531, %v3515
  %v3644 = vpack.c.b16 %v3532, %v3516
  %v3645 = vpack.c.b16 %v3533, %v3517
  %v3646 = vpack.c.b16 %v3534, %v3518
  %v3647 = vpack.c.b16 %v3535, %v3519
  %v3648 = vpack.c.b16 %v3536, %v3520
  %v3649 = vpack.c.b16 %v3537, %v3521
  %v3650 = vpack.c.b16 %v3538, %v3522
  %v3651 = vpack.c.b16 %v3539, %v3523
  %v3652 = vpack.c.b16 %v3540, %v3524
  %v3653 = vpack.c.b16 %v3541, %v3525
  %v3654 = vpack.c.b16 %v3542, %v3526
  %v3655 = vpack.c.b16 %v3543, %v3527
  %v3656 = vpack.c.b16 %v3544, %v3528
  %v3657 = vpack.c.b16 %v3561, %v3545
  %v3658 = vpack.c.b16 %v3562, %v3546
  %v3659 = vpack.c.b16 %v3563, %v3547
  %v3660 = vpack.c.b16 %v3564, %v3548
  %v3661 = vpack.c.b16 %v3565, %v3549
  %v3662 = vpack.c.b16 %v3566, %v3550
  %v3663 = vpack.c.b16 %v3567, %v3551
  %v3664 = vpack.c.b16 %v3568, %v3552
  %v3665 = vpack.c.b16 %v3569, %v3553
  %v3666 = vpack.c.b16 %v3570, %v3554
  %v3667 = vpack.c.b16 %v3571, %v3555
  %v3668 = vpack.c.b16 %v3572, %v3556
  %v3669 = vpack.c.b16 %v3573, %v3557
  %v3670 = vpack.c.b16 %v3574, %v3558
  %v3671 = vpack.c.b16 %v3575, %v3559
  %v3672 = vpack.c.b16 %v3576, %v3560
  %v3673 = vpack.c.b16 %v3593, %v3577
  %v3674 = vpack.c.b16 %v3594, %v3578
  %v3675 = vpack.c.b16 %v3595, %v3579
  %v3676 = vpack.c.b16 %v3596, %v3580
  %v3677 = vpack.c.b16 %v3597, %v3581
  %v3678 = vpack.c.b16 %v3598, %v3582
  %v3679 = vpack.c.b16 %v3599, %v3583
  %v3680 = vpack.c.b16 %v3600, %v3584
  %v3681 = vpack.c.b16 %v3601, %v3585
  %v3682 = vpack.c.b16 %v3602, %v3586
  %v3683 = vpack.c.b16 %v3603, %v3587
  %v3684 = vpack.c.b16 %v3604, %v3588
  %v3685 = vpack.c.b16 %v3605, %v3589
  %v3686 = vpack.c.b16 %v3606, %v3590
  %v3687 = vpack.c.b16 %v3607, %v3591
  %v3688 = vpack.c.b16 %v3608, %v3592
  %v3689 = vpack.c.b16 %v3625, %v3609
  %v3690 = vpack.c.b16 %v3626, %v3610
  %v3691 = vpack.c.b16 %v3627, %v3611
  %v3692 = vpack.c.b16 %v3628, %v3612
  %v3693 = vpack.c.b16 %v3629, %v3613
  %v3694 = vpack.c.b16 %v3630, %v3614
  %v3695 = vpack.c.b16 %v3631, %v3615
  %v3696 = vpack.c.b16 %v3632, %v3616
  %v3697 = vpack.c.b16 %v3633, %v3617
  %v3698 = vpack.c.b16 %v3634, %v3618
  %v3699 = vpack.c.b16 %v3635, %v3619
  %v3700 = vpack.c.b16 %v3636, %v3620
  %v3701 = vpack.c.b16 %v3637, %v3621
  %v3702 = vpack.c.b16 %v3638, %v3622
  %v3703 = vpack.c.b16 %v3639, %v3623
  %v3704 = vpack.c.b16 %v3640, %v3624
  %v3770 = vsel %vm265, %v3300, 0
  %3772 = vmatprep.subr.bf16.mxu0 %v3642
  %3773 = vmatpush1.bf16.msra.mxu0 %v3641
  %3774 = vmatprep.subr.bf16.mxu0 %v3658
  %3775 = vmatpush1.bf16.msra.mxu0 %v3657
  %3776 = vmatprep.subr.bf16.mxu0 %v3674
  %3777 = vmatpush1.bf16.msra.mxu0 %v3673
  %3778 = vmatprep.subr.bf16.mxu0 %v3690
  %3779 = vmatpush1.bf16.msra.mxu0 %v3689
  %3780 = vmatprep.subr.bf16.mxu0 0
  %3781 = vmatpush1.bf16.msra.mxu0 0
  %3782 = vmatprep.subr.bf16.mxu0 0
  %3783 = vmatpush1.bf16.msra.mxu0 0
  %3784 = vmatprep.subr.bf16.mxu0 0
  %3785 = vmatpush1.bf16.msra.mxu0 0
  %3786 = vmatprep.subr.bf16.mxu0 0
  %3787 = vmatpush1.bf16.msra.mxu0 0
  %3788 = vmatprep.subr.bf16.mxu0 0
  %3789 = vmatpush1.bf16.msra.mxu0 0
  %3790 = vmatprep.subr.bf16.mxu0 0
  %3791 = vmatpush1.bf16.msra.mxu0 0
  %3792 = vmatprep.subr.bf16.mxu0 0
  %3793 = vmatpush1.bf16.msra.mxu0 0
  %3794 = vmatprep.subr.bf16.mxu0 0
  %3795 = vmatpush1.bf16.msra.mxu0 0
  %3796 = vmatprep.subr.bf16.mxu0 0
  %3797 = vmatpush1.bf16.msra.mxu0 0
  %3798 = vmatprep.subr.bf16.mxu0 0
  %3799 = vmatpush1.bf16.msra.mxu0 0
  %3800 = vmatprep.subr.bf16.mxu0 0
  %3801 = vmatpush1.bf16.msra.mxu0 0
  %3802 = vmatprep.subr.bf16.mxu0 0
  %3803 = vmatpush1.bf16.msra.mxu0 0
  %3804 = vmatprep.mubr.bf16.mxu0 0
  %3805 = vmatmul.mubr.bf16.gmra.mrb[0].mxu0 %v3770
  %v3806 = vpop.f32.mrb[0].mxu0
  %v3807 = vadd.f32 %v3372, %v3806
  %v3808 = vpop.f32.mrb[0].mxu0
  %v3809 = vadd.f32 %v3376, %v3808
  %v3810 = vpop.f32.mrb[0].mxu0
  %v3811 = vadd.f32 %v3372, %v3810
  %v3812 = vpop.f32.mrb[0].mxu0
  %v3813 = vadd.f32 %v3376, %v3812
  %3814 = vdwg.mxu0
  %3815 = vmatprep.subr.bf16.mxu0 %v3644
  %3816 = vmatpush1.bf16.msra.mxu0 %v3643
  %3817 = vmatprep.subr.bf16.mxu0 %v3660
  %3818 = vmatpush1.bf16.msra.mxu0 %v3659
  %3819 = vmatprep.subr.bf16.mxu0 %v3676
  %3820 = vmatpush1.bf16.msra.mxu0 %v3675
  %3821 = vmatprep.subr.bf16.mxu0 %v3692
  %3822 = vmatpush1.bf16.msra.mxu0 %v3691
  %3823 = vmatprep.subr.bf16.mxu0 0
  %3824 = vmatpush1.bf16.msra.mxu0 0
  %3825 = vmatprep.subr.bf16.mxu0 0
  %3826 = vmatpush1.bf16.msra.mxu0 0
  %3827 = vmatprep.subr.bf16.mxu0 0
  %3828 = vmatpush1.bf16.msra.mxu0 0
  %3829 = vmatprep.subr.bf16.mxu0 0
  %3830 = vmatpush1.bf16.msra.mxu0 0
  %3831 = vmatprep.subr.bf16.mxu0 0
  %3832 = vmatpush1.bf16.msra.mxu0 0
  %3833 = vmatprep.subr.bf16.mxu0 0
  %3834 = vmatpush1.bf16.msra.mxu0 0
  %3835 = vmatprep.subr.bf16.mxu0 0
  %3836 = vmatpush1.bf16.msra.mxu0 0
  %3837 = vmatprep.subr.bf16.mxu0 0
  %3838 = vmatpush1.bf16.msra.mxu0 0
  %3839 = vmatprep.subr.bf16.mxu0 0
  %3840 = vmatpush1.bf16.msra.mxu0 0
  %3841 = vmatprep.subr.bf16.mxu0 0
  %3842 = vmatpush1.bf16.msra.mxu0 0
  %3843 = vmatprep.subr.bf16.mxu0 0
  %3844 = vmatpush1.bf16.msra.mxu0 0
  %3845 = vmatprep.subr.bf16.mxu0 0
  %3846 = vmatpush1.bf16.msra.mxu0 0
  %3847 = vmatprep.mubr.bf16.mxu0 0
  %3848 = vmatmul.mubr.bf16.gmra.mrb[0].mxu0 %v3770
  %v3849 = vpop.f32.mrb[0].mxu0
  %v3850 = vadd.f32 %v3380, %v3849
  %v3851 = vpop.f32.mrb[0].mxu0
  %v3852 = vadd.f32 %v3384, %v3851
  %v3853 = vpop.f32.mrb[0].mxu0
  %v3854 = vadd.f32 %v3380, %v3853
  %v3855 = vpop.f32.mrb[0].mxu0
  %v3856 = vadd.f32 %v3384, %v3855
  %3857 = vdwg.mxu0
  %3858 = vmatprep.subr.bf16.mxu0 %v3646
  %3859 = vmatpush1.bf16.msra.mxu0 %v3645
  %3860 = vmatprep.subr.bf16.mxu0 %v3662
  %3861 = vmatpush1.bf16.msra.mxu0 %v3661
  %3862 = vmatprep.subr.bf16.mxu0 %v3678
  %3863 = vmatpush1.bf16.msra.mxu0 %v3677
  %3864 = vmatprep.subr.bf16.mxu0 %v3694
  %3865 = vmatpush1.bf16.msra.mxu0 %v3693
  %3866 = vmatprep.subr.bf16.mxu0 0
  %3867 = vmatpush1.bf16.msra.mxu0 0
  %3868 = vmatprep.subr.bf16.mxu0 0
  %3869 = vmatpush1.bf16.msra.mxu0 0
  %3870 = vmatprep.subr.bf16.mxu0 0
  %3871 = vmatpush1.bf16.msra.mxu0 0
  %3872 = vmatprep.subr.bf16.mxu0 0
  %3873 = vmatpush1.bf16.msra.mxu0 0
  %3874 = vmatprep.subr.bf16.mxu0 0
  %3875 = vmatpush1.bf16.msra.mxu0 0
  %3876 = vmatprep.subr.bf16.mxu0 0
  %3877 = vmatpush1.bf16.msra.mxu0 0
  %3878 = vmatprep.subr.bf16.mxu0 0
  %3879 = vmatpush1.bf16.msra.mxu0 0
  %3880 = vmatprep.subr.bf16.mxu0 0
  %3881 = vmatpush1.bf16.msra.mxu0 0
  %3882 = vmatprep.subr.bf16.mxu0 0
  %3883 = vmatpush1.bf16.msra.mxu0 0
  %3884 = vmatprep.subr.bf16.mxu0 0
  %3885 = vmatpush1.bf16.msra.mxu0 0
  %3886 = vmatprep.subr.bf16.mxu0 0
  %3887 = vmatpush1.bf16.msra.mxu0 0
  %3888 = vmatprep.subr.bf16.mxu0 0
  %3889 = vmatpush1.bf16.msra.mxu0 0
  %3890 = vmatprep.mubr.bf16.mxu0 0
  %3891 = vmatmul.mubr.bf16.gmra.mrb[0].mxu0 %v3770
  %v3892 = vpop.f32.mrb[0].mxu0
  %v3893 = vadd.f32 %v3388, %v3892
  %v3894 = vpop.f32.mrb[0].mxu0
  %v3895 = vadd.f32 %v3392, %v3894
  %v3896 = vpop.f32.mrb[0].mxu0
  %v3897 = vadd.f32 %v3388, %v3896
  %v3898 = vpop.f32.mrb[0].mxu0
  %v3899 = vadd.f32 %v3392, %v3898
  %3900 = vdwg.mxu0
  %3901 = vmatprep.subr.bf16.mxu0 %v3648
  %3902 = vmatpush1.bf16.msra.mxu0 %v3647
  %3903 = vmatprep.subr.bf16.mxu0 %v3664
  %3904 = vmatpush1.bf16.msra.mxu0 %v3663
  %3905 = vmatprep.subr.bf16.mxu0 %v3680
  %3906 = vmatpush1.bf16.msra.mxu0 %v3679
  %3907 = vmatprep.subr.bf16.mxu0 %v3696
  %3908 = vmatpush1.bf16.msra.mxu0 %v3695
  %3909 = vmatprep.subr.bf16.mxu0 0
  %3910 = vmatpush1.bf16.msra.mxu0 0
  %3911 = vmatprep.subr.bf16.mxu0 0
  %3912 = vmatpush1.bf16.msra.mxu0 0
  %3913 = vmatprep.subr.bf16.mxu0 0
  %3914 = vmatpush1.bf16.msra.mxu0 0
  %3915 = vmatprep.subr.bf16.mxu0 0
  %3916 = vmatpush1.bf16.msra.mxu0 0
  %3917 = vmatprep.subr.bf16.mxu0 0
  %3918 = vmatpush1.bf16.msra.mxu0 0
  %3919 = vmatprep.subr.bf16.mxu0 0
  %3920 = vmatpush1.bf16.msra.mxu0 0
  %3921 = vmatprep.subr.bf16.mxu0 0
  %3922 = vmatpush1.bf16.msra.mxu0 0
  %3923 = vmatprep.subr.bf16.mxu0 0
  %3924 = vmatpush1.bf16.msra.mxu0 0
  %3925 = vmatprep.subr.bf16.mxu0 0
  %3926 = vmatpush1.bf16.msra.mxu0 0
  %3927 = vmatprep.subr.bf16.mxu0 0
  %3928 = vmatpush1.bf16.msra.mxu0 0
  %3929 = vmatprep.subr.bf16.mxu0 0
  %3930 = vmatpush1.bf16.msra.mxu0 0
  %3931 = vmatprep.subr.bf16.mxu0 0
  %3932 = vmatpush1.bf16.msra.mxu0 0
  %3933 = vmatprep.mubr.bf16.mxu0 0
  %3934 = vmatmul.mubr.bf16.gmra.mrb[0].mxu0 %v3770
  %v3935 = vpop.f32.mrb[0].mxu0
  %v3936 = vadd.f32 %v3396, %v3935
  %v3937 = vpop.f32.mrb[0].mxu0
  %v3938 = vadd.f32 %v3400, %v3937
  %v3939 = vpop.f32.mrb[0].mxu0
  %v3940 = vadd.f32 %v3396, %v3939
  %v3941 = vpop.f32.mrb[0].mxu0
  %v3942 = vadd.f32 %v3400, %v3941
  %3943 = vdwg.mxu0
  %3944 = vmatprep.subr.bf16.mxu0 %v3650
  %3945 = vmatpush1.bf16.msra.mxu0 %v3649
  %3946 = vmatprep.subr.bf16.mxu0 %v3666
  %3947 = vmatpush1.bf16.msra.mxu0 %v3665
  %3948 = vmatprep.subr.bf16.mxu0 %v3682
  %3949 = vmatpush1.bf16.msra.mxu0 %v3681
  %3950 = vmatprep.subr.bf16.mxu0 %v3698
  %3951 = vmatpush1.bf16.msra.mxu0 %v3697
  %3952 = vmatprep.subr.bf16.mxu0 0
  %3953 = vmatpush1.bf16.msra.mxu0 0
  %3954 = vmatprep.subr.bf16.mxu0 0
  %3955 = vmatpush1.bf16.msra.mxu0 0
  %3956 = vmatprep.subr.bf16.mxu0 0
  %3957 = vmatpush1.bf16.msra.mxu0 0
  %3958 = vmatprep.subr.bf16.mxu0 0
  %3959 = vmatpush1.bf16.msra.mxu0 0
  %3960 = vmatprep.subr.bf16.mxu0 0
  %3961 = vmatpush1.bf16.msra.mxu0 0
  %3962 = vmatprep.subr.bf16.mxu0 0
  %3963 = vmatpush1.bf16.msra.mxu0 0
  %3964 = vmatprep.subr.bf16.mxu0 0
  %3965 = vmatpush1.bf16.msra.mxu0 0
  %3966 = vmatprep.subr.bf16.mxu0 0
  %3967 = vmatpush1.bf16.msra.mxu0 0
  %3968 = vmatprep.subr.bf16.mxu0 0
  %3969 = vmatpush1.bf16.msra.mxu0 0
  %3970 = vmatprep.subr.bf16.mxu0 0
  %3971 = vmatpush1.bf16.msra.mxu0 0
  %3972 = vmatprep.subr.bf16.mxu0 0
  %3973 = vmatpush1.bf16.msra.mxu0 0
  %3974 = vmatprep.subr.bf16.mxu0 0
  %3975 = vmatpush1.bf16.msra.mxu0 0
  %3976 = vmatprep.mubr.bf16.mxu0 0
  %3977 = vmatmul.mubr.bf16.gmra.mrb[0].mxu0 %v3770
  %v3978 = vpop.f32.mrb[0].mxu0
  %v3979 = vadd.f32 %v3404, %v3978
  %v3980 = vpop.f32.mrb[0].mxu0
  %v3981 = vadd.f32 %v3408, %v3980
  %v3982 = vpop.f32.mrb[0].mxu0
  %v3983 = vadd.f32 %v3404, %v3982
  %v3984 = vpop.f32.mrb[0].mxu0
  %v3985 = vadd.f32 %v3408, %v3984
  %3986 = vdwg.mxu0
  %3987 = vmatprep.subr.bf16.mxu0 %v3652
  %3988 = vmatpush1.bf16.msra.mxu0 %v3651
  %3989 = vmatprep.subr.bf16.mxu0 %v3668
  %3990 = vmatpush1.bf16.msra.mxu0 %v3667
  %3991 = vmatprep.subr.bf16.mxu0 %v3684
  %3992 = vmatpush1.bf16.msra.mxu0 %v3683
  %3993 = vmatprep.subr.bf16.mxu0 %v3700
  %3994 = vmatpush1.bf16.msra.mxu0 %v3699
  %3995 = vmatprep.subr.bf16.mxu0 0
  %3996 = vmatpush1.bf16.msra.mxu0 0
  %3997 = vmatprep.subr.bf16.mxu0 0
  %3998 = vmatpush1.bf16.msra.mxu0 0
  %3999 = vmatprep.subr.bf16.mxu0 0
  %4000 = vmatpush1.bf16.msra.mxu0 0
  %4001 = vmatprep.subr.bf16.mxu0 0
  %4002 = vmatpush1.bf16.msra.mxu0 0
  %4003 = vmatprep.subr.bf16.mxu0 0
  %4004 = vmatpush1.bf16.msra.mxu0 0
  %4005 = vmatprep.subr.bf16.mxu0 0
  %4006 = vmatpush1.bf16.msra.mxu0 0
  %4007 = vmatprep.subr.bf16.mxu0 0
  %4008 = vmatpush1.bf16.msra.mxu0 0
  %4009 = vmatprep.subr.bf16.mxu0 0
  %4010 = vmatpush1.bf16.msra.mxu0 0
  %4011 = vmatprep.subr.bf16.mxu0 0
  %4012 = vmatpush1.bf16.msra.mxu0 0
  %4013 = vmatprep.subr.bf16.mxu0 0
  %4014 = vmatpush1.bf16.msra.mxu0 0
  %4015 = vmatprep.subr.bf16.mxu0 0
  %4016 = vmatpush1.bf16.msra.mxu0 0
  %4017 = vmatprep.subr.bf16.mxu0 0
  %4018 = vmatpush1.bf16.msra.mxu0 0
  %4019 = vmatprep.mubr.bf16.mxu0 0
  %4020 = vmatmul.mubr.bf16.gmra.mrb[0].mxu0 %v3770
  %v4021 = vpop.f32.mrb[0].mxu0
  %v4022 = vadd.f32 %v3412, %v4021
  %v4023 = vpop.f32.mrb[0].mxu0
  %v4024 = vadd.f32 %v3416, %v4023
  %v4025 = vpop.f32.mrb[0].mxu0
  %v4026 = vadd.f32 %v3412, %v4025
  %v4027 = vpop.f32.mrb[0].mxu0
  %v4028 = vadd.f32 %v3416, %v4027
  %4029 = vdwg.mxu0
  %4030 = vmatprep.subr.bf16.mxu0 %v3654
  %4031 = vmatpush1.bf16.msra.mxu0 %v3653
  %4032 = vmatprep.subr.bf16.mxu0 %v3670
  %4033 = vmatpush1.bf16.msra.mxu0 %v3669
  %4034 = vmatprep.subr.bf16.mxu0 %v3686
  %4035 = vmatpush1.bf16.msra.mxu0 %v3685
  %4036 = vmatprep.subr.bf16.mxu0 %v3702
  %4037 = vmatpush1.bf16.msra.mxu0 %v3701
  %4038 = vmatprep.subr.bf16.mxu0 0
  %4039 = vmatpush1.bf16.msra.mxu0 0
  %4040 = vmatprep.subr.bf16.mxu0 0
  %4041 = vmatpush1.bf16.msra.mxu0 0
  %4042 = vmatprep.subr.bf16.mxu0 0
  %4043 = vmatpush1.bf16.msra.mxu0 0
  %4044 = vmatprep.subr.bf16.mxu0 0
  %4045 = vmatpush1.bf16.msra.mxu0 0
  %4046 = vmatprep.subr.bf16.mxu0 0
  %4047 = vmatpush1.bf16.msra.mxu0 0
  %4048 = vmatprep.subr.bf16.mxu0 0
  %4049 = vmatpush1.bf16.msra.mxu0 0
  %4050 = vmatprep.subr.bf16.mxu0 0
  %4051 = vmatpush1.bf16.msra.mxu0 0
  %4052 = vmatprep.subr.bf16.mxu0 0
  %4053 = vmatpush1.bf16.msra.mxu0 0
  %4054 = vmatprep.subr.bf16.mxu0 0
  %4055 = vmatpush1.bf16.msra.mxu0 0
  %4056 = vmatprep.subr.bf16.mxu0 0
  %4057 = vmatpush1.bf16.msra.mxu0 0
  %4058 = vmatprep.subr.bf16.mxu0 0
  %4059 = vmatpush1.bf16.msra.mxu0 0
  %4060 = vmatprep.subr.bf16.mxu0 0
  %4061 = vmatpush1.bf16.msra.mxu0 0
  %4062 = vmatprep.mubr.bf16.mxu0 0
  %4063 = vmatmul.mubr.bf16.gmra.mrb[0].mxu0 %v3770
  %v4064 = vpop.f32.mrb[0].mxu0
  %v4065 = vadd.f32 %v3420, %v4064
  %v4066 = vpop.f32.mrb[0].mxu0
  %v4067 = vadd.f32 %v3424, %v4066
  %v4068 = vpop.f32.mrb[0].mxu0
  %v4069 = vadd.f32 %v3420, %v4068
  %v4070 = vpop.f32.mrb[0].mxu0
  %v4071 = vadd.f32 %v3424, %v4070
  %4072 = vdwg.mxu0
  %4073 = vmatprep.subr.bf16.mxu0 %v3656
  %4074 = vmatpush1.bf16.msra.mxu0 %v3655
  %4075 = vmatprep.subr.bf16.mxu0 %v3672
  %4076 = vmatpush1.bf16.msra.mxu0 %v3671
  %4077 = vmatprep.subr.bf16.mxu0 %v3688
  %4078 = vmatpush1.bf16.msra.mxu0 %v3687
  %4079 = vmatprep.subr.bf16.mxu0 %v3704
  %4080 = vmatpush1.bf16.msra.mxu0 %v3703
  %4081 = vmatprep.subr.bf16.mxu0 0
  %4082 = vmatpush1.bf16.msra.mxu0 0
  %4083 = vmatprep.subr.bf16.mxu0 0
  %4084 = vmatpush1.bf16.msra.mxu0 0
  %4085 = vmatprep.subr.bf16.mxu0 0
  %4086 = vmatpush1.bf16.msra.mxu0 0
  %4087 = vmatprep.subr.bf16.mxu0 0
  %4088 = vmatpush1.bf16.msra.mxu0 0
  %4089 = vmatprep.subr.bf16.mxu0 0
  %4090 = vmatpush1.bf16.msra.mxu0 0
  %4091 = vmatprep.subr.bf16.mxu0 0
  %4092 = vmatpush1.bf16.msra.mxu0 0
  %4093 = vmatprep.subr.bf16.mxu0 0
  %4094 = vmatpush1.bf16.msra.mxu0 0
  %4095 = vmatprep.subr.bf16.mxu0 0
  %4096 = vmatpush1.bf16.msra.mxu0 0
  %4097 = vmatprep.subr.bf16.mxu0 0
  %4098 = vmatpush1.bf16.msra.mxu0 0
  %4099 = vmatprep.subr.bf16.mxu0 0
  %4100 = vmatpush1.bf16.msra.mxu0 0
  %4101 = vmatprep.subr.bf16.mxu0 0
  %4102 = vmatpush1.bf16.msra.mxu0 0
  %4103 = vmatprep.subr.bf16.mxu0 0
  %4104 = vmatpush1.bf16.msra.mxu0 0
  %4105 = vmatprep.mubr.bf16.mxu0 0
  %4106 = vmatmul.mubr.bf16.gmra.mrb[0].mxu0 %v3770
  %v4107 = vpop.f32.mrb[0].mxu0
  %v4108 = vadd.f32 %v3428, %v4107
  %v4109 = vpop.f32.mrb[0].mxu0
  %v4110 = vadd.f32 %v3432, %v4109
  %v4111 = vpop.f32.mrb[0].mxu0
  %v4112 = vadd.f32 %v3428, %v4111
  %v4113 = vpop.f32.mrb[0].mxu0
  %v4114 = vadd.f32 %v3432, %v4113
  %4115 = vdwg.mxu0
  %v4116 = vmax.f32 %v3807, 0.0
  %v4117 = vmax.f32 %v3809, 0.0
  %v4118 = vmax.f32 %v3850, 0.0
  %v4119 = vmax.f32 %v3852, 0.0
  %v4120 = vmax.f32 %v3893, 0.0
  %v4121 = vmax.f32 %v3895, 0.0
  %v4122 = vmax.f32 %v3936, 0.0
  %v4123 = vmax.f32 %v3938, 0.0
  %v4124 = vmax.f32 %v3979, 0.0
  %v4125 = vmax.f32 %v3981, 0.0
  %v4126 = vmax.f32 %v4022, 0.0
  %v4127 = vmax.f32 %v4024, 0.0
  %v4128 = vmax.f32 %v4065, 0.0
  %v4129 = vmax.f32 %v4067, 0.0
  %v4130 = vmax.f32 %v4108, 0.0
  %v4131 = vmax.f32 %v4110, 0.0
  %v4132 = vmax.f32 %v3811, 0.0
  %v4133 = vmax.f32 %v3813, 0.0
  %v4134 = vmax.f32 %v3854, 0.0
  %v4135 = vmax.f32 %v3856, 0.0
  %v4136 = vmax.f32 %v3897, 0.0
  %v4137 = vmax.f32 %v3899, 0.0
  %v4138 = vmax.f32 %v3940, 0.0
  %v4139 = vmax.f32 %v3942, 0.0
  %v4140 = vmax.f32 %v3983, 0.0
  %v4141 = vmax.f32 %v3985, 0.0
  %v4142 = vmax.f32 %v4026, 0.0
  %v4143 = vmax.f32 %v4028, 0.0
  %v4144 = vmax.f32 %v4069, 0.0
  %v4145 = vmax.f32 %v4071, 0.0
  %v4146 = vmax.f32 %v4112, 0.0
  %v4147 = vmax.f32 %v4114, 0.0
  %v4148 = vpack.c.bf16 %v4132, %v4116
  %v4149 = vpack.c.bf16 %v4133, %v4117
  %v4150 = vpack.c.bf16 %v4134, %v4118
  %v4151 = vpack.c.bf16 %v4135, %v4119
  %v4152 = vpack.c.bf16 %v4136, %v4120
  %v4153 = vpack.c.bf16 %v4137, %v4121
  %v4154 = vpack.c.bf16 %v4138, %v4122
  %v4155 = vpack.c.bf16 %v4139, %v4123
  %v4156 = vpack.c.bf16 %v4140, %v4124
  %v4157 = vpack.c.bf16 %v4141, %v4125
  %v4158 = vpack.c.bf16 %v4142, %v4126
  %v4159 = vpack.c.bf16 %v4143, %v4127
  %v4160 = vpack.c.bf16 %v4144, %v4128
  %v4161 = vpack.c.bf16 %v4145, %v4129
  %v4162 = vpack.c.bf16 %v4146, %v4130
  %v4163 = vpack.c.bf16 %v4147, %v4131
  %v4164 = vld [vmem:[%s31] sm:$0xf]
  %v4165 = vld [vmem:[%s31 + $0x4] sm:$0xf]
  %v4166 = vld [vmem:[%s31 + $0x8] sm:$0xf]
  %v4167 = vld [vmem:[%s31 + $0xc] sm:$0xf]
  %v4168 = vld [vmem:[%s31 + $0x10] sm:$0xf]
  %v4169 = vld [vmem:[%s31 + $0x14] sm:$0xf]
  %v4170 = vld [vmem:[%s31 + $0x18] sm:$0xf]
  %v4171 = vld [vmem:[%s31 + $0x1c] sm:$0xf]
  %v4172 = vld [vmem:[%s31 + $0x20] sm:$0xf]
  %v4173 = vld [vmem:[%s31 + $0x24] sm:$0xf]
  %v4174 = vld [vmem:[%s31 + $0x28] sm:$0xf]
  %v4175 = vld [vmem:[%s31 + $0x2c] sm:$0xf]
  %v4176 = vld [vmem:[%s31 + $0x30] sm:$0xf]
  %v4177 = vld [vmem:[%s31 + $0x34] sm:$0xf]
  %v4178 = vld [vmem:[%s31 + $0x38] sm:$0xf]
  %v4179 = vld [vmem:[%s31 + $0x3c] sm:$0xf]
  %v4180 = vld [vmem:[%s31 + $0x40] sm:$0xf]
  %v4181 = vld [vmem:[%s31 + $0x44] sm:$0xf]
  %v4182 = vld [vmem:[%s31 + $0x48] sm:$0xf]
  %v4183 = vld [vmem:[%s31 + $0x4c] sm:$0xf]
  %v4184 = vld [vmem:[%s31 + $0x50] sm:$0xf]
  %v4185 = vld [vmem:[%s31 + $0x54] sm:$0xf]
  %v4186 = vld [vmem:[%s31 + $0x58] sm:$0xf]
  %v4187 = vld [vmem:[%s31 + $0x5c] sm:$0xf]
  %v4188 = vld [vmem:[%s31 + $0x60] sm:$0xf]
  %v4189 = vld [vmem:[%s31 + $0x64] sm:$0xf]
  %v4190 = vld [vmem:[%s31 + $0x68] sm:$0xf]
  %v4191 = vld [vmem:[%s31 + $0x6c] sm:$0xf]
  %v4192 = vld [vmem:[%s31 + $0x70] sm:$0xf]
  %v4193 = vld [vmem:[%s31 + $0x74] sm:$0xf]
  %v4194 = vld [vmem:[%s31 + $0x78] sm:$0xf]
  %v4195 = vld [vmem:[%s31 + $0x7c] sm:$0xf]
  %v4196 = vld [vmem:[%s31 + $0x80] sm:$0xf]
  %v4197 = vld [vmem:[%s31 + $0x84] sm:$0xf]
  %v4198 = vld [vmem:[%s31 + $0x88] sm:$0xf]
  %v4199 = vld [vmem:[%s31 + $0x8c] sm:$0xf]
  %v4200 = vld [vmem:[%s31 + $0x90] sm:$0xf]
  %v4201 = vld [vmem:[%s31 + $0x94] sm:$0xf]
  %v4202 = vld [vmem:[%s31 + $0x98] sm:$0xf]
  %v4203 = vld [vmem:[%s31 + $0x9c] sm:$0xf]
  %v4204 = vld [vmem:[%s31 + $0xa0] sm:$0xf]
  %v4205 = vld [vmem:[%s31 + $0xa4] sm:$0xf]
  %v4206 = vld [vmem:[%s31 + $0xa8] sm:$0xf]
  %v4207 = vld [vmem:[%s31 + $0xac] sm:$0xf]
  %v4208 = vld [vmem:[%s31 + $0xb0] sm:$0xf]
  %v4209 = vld [vmem:[%s31 + $0xb4] sm:$0xf]
  %v4210 = vld [vmem:[%s31 + $0xb8] sm:$0xf]
  %v4211 = vld [vmem:[%s31 + $0xbc] sm:$0xf]
  %v4212 = vld [vmem:[%s31 + $0xc0] sm:$0xf]
  %v4213 = vld [vmem:[%s31 + $0xc4] sm:$0xf]
  %v4214 = vld [vmem:[%s31 + $0xc8] sm:$0xf]
  %v4215 = vld [vmem:[%s31 + $0xcc] sm:$0xf]
  %v4216 = vld [vmem:[%s31 + $0xd0] sm:$0xf]
  %v4217 = vld [vmem:[%s31 + $0xd4] sm:$0xf]
  %v4218 = vld [vmem:[%s31 + $0xd8] sm:$0xf]
  %v4219 = vld [vmem:[%s31 + $0xdc] sm:$0xf]
  %v4220 = vld [vmem:[%s31 + $0xe0] sm:$0xf]
  %v4221 = vld [vmem:[%s31 + $0xe4] sm:$0xf]
  %v4222 = vld [vmem:[%s31 + $0xe8] sm:$0xf]
  %v4223 = vld [vmem:[%s31 + $0xec] sm:$0xf]
  %v4224 = vld [vmem:[%s31 + $0xf0] sm:$0xf]
  %v4225 = vld [vmem:[%s31 + $0xf4] sm:$0xf]
  %v4226 = vld [vmem:[%s31 + $0xf8] sm:$0xf]
  %v4227 = vld [vmem:[%s31 + $0xfc] sm:$0xf]
  %v4228 = vld [vmem:[%s31 + $0x100] sm:$0xf]
  %v4229 = vld [vmem:[%s31 + $0x104] sm:$0xf]
  %v4230 = vld [vmem:[%s31 + $0x108] sm:$0xf]
  %v4231 = vld [vmem:[%s31 + $0x10c] sm:$0xf]
  %v4232 = vld [vmem:[%s31 + $0x110] sm:$0xf]
  %v4233 = vld [vmem:[%s31 + $0x114] sm:$0xf]
  %v4234 = vld [vmem:[%s31 + $0x118] sm:$0xf]
  %v4235 = vld [vmem:[%s31 + $0x11c] sm:$0xf]
  %v4236 = vld [vmem:[%s31 + $0x120] sm:$0xf]
  %v4237 = vld [vmem:[%s31 + $0x124] sm:$0xf]
  %v4238 = vld [vmem:[%s31 + $0x128] sm:$0xf]
  %v4239 = vld [vmem:[%s31 + $0x12c] sm:$0xf]
  %v4240 = vld [vmem:[%s31 + $0x130] sm:$0xf]
  %v4241 = vld [vmem:[%s31 + $0x134] sm:$0xf]
  %v4242 = vld [vmem:[%s31 + $0x138] sm:$0xf]
  %v4243 = vld [vmem:[%s31 + $0x13c] sm:$0xf]
  %v4244 = vld [vmem:[%s31 + $0x140] sm:$0xf]
  %v4245 = vld [vmem:[%s31 + $0x144] sm:$0xf]
  %v4246 = vld [vmem:[%s31 + $0x148] sm:$0xf]
  %v4247 = vld [vmem:[%s31 + $0x14c] sm:$0xf]
  %v4248 = vld [vmem:[%s31 + $0x150] sm:$0xf]
  %v4249 = vld [vmem:[%s31 + $0x154] sm:$0xf]
  %v4250 = vld [vmem:[%s31 + $0x158] sm:$0xf]
  %v4251 = vld [vmem:[%s31 + $0x15c] sm:$0xf]
  %v4252 = vld [vmem:[%s31 + $0x160] sm:$0xf]
  %v4253 = vld [vmem:[%s31 + $0x164] sm:$0xf]
  %v4254 = vld [vmem:[%s31 + $0x168] sm:$0xf]
  %v4255 = vld [vmem:[%s31 + $0x16c] sm:$0xf]
  %v4256 = vld [vmem:[%s31 + $0x170] sm:$0xf]
  %v4257 = vld [vmem:[%s31 + $0x174] sm:$0xf]
  %v4258 = vld [vmem:[%s31 + $0x178] sm:$0xf]
  %v4259 = vld [vmem:[%s31 + $0x17c] sm:$0xf]
  %v4260 = vld [vmem:[%s31 + $0x180] sm:$0xf]
  %v4261 = vld [vmem:[%s31 + $0x184] sm:$0xf]
  %v4262 = vld [vmem:[%s31 + $0x188] sm:$0xf]
  %v4263 = vld [vmem:[%s31 + $0x18c] sm:$0xf]
  %v4264 = vld [vmem:[%s31 + $0x190] sm:$0xf]
  %v4265 = vld [vmem:[%s31 + $0x194] sm:$0xf]
  %v4266 = vld [vmem:[%s31 + $0x198] sm:$0xf]
  %v4267 = vld [vmem:[%s31 + $0x19c] sm:$0xf]
  %v4268 = vld [vmem:[%s31 + $0x1a0] sm:$0xf]
  %v4269 = vld [vmem:[%s31 + $0x1a4] sm:$0xf]
  %v4270 = vld [vmem:[%s31 + $0x1a8] sm:$0xf]
  %v4271 = vld [vmem:[%s31 + $0x1ac] sm:$0xf]
  %v4272 = vld [vmem:[%s31 + $0x1b0] sm:$0xf]
  %v4273 = vld [vmem:[%s31 + $0x1b4] sm:$0xf]
  %v4274 = vld [vmem:[%s31 + $0x1b8] sm:$0xf]
  %v4275 = vld [vmem:[%s31 + $0x1bc] sm:$0xf]
  %v4276 = vld [vmem:[%s31 + $0x1c0] sm:$0xf]
  %v4277 = vld [vmem:[%s31 + $0x1c4] sm:$0xf]
  %v4278 = vld [vmem:[%s31 + $0x1c8] sm:$0xf]
  %v4279 = vld [vmem:[%s31 + $0x1cc] sm:$0xf]
  %v4280 = vld [vmem:[%s31 + $0x1d0] sm:$0xf]
  %v4281 = vld [vmem:[%s31 + $0x1d4] sm:$0xf]
  %v4282 = vld [vmem:[%s31 + $0x1d8] sm:$0xf]
  %v4283 = vld [vmem:[%s31 + $0x1dc] sm:$0xf]
  %v4284 = vld [vmem:[%s31 + $0x1e0] sm:$0xf]
  %v4285 = vld [vmem:[%s31 + $0x1e4] sm:$0xf]
  %v4286 = vld [vmem:[%s31 + $0x1e8] sm:$0xf]
  %v4287 = vld [vmem:[%s31 + $0x1ec] sm:$0xf]
  %v4288 = vld [vmem:[%s31 + $0x1f0] sm:$0xf]
  %v4289 = vld [vmem:[%s31 + $0x1f4] sm:$0xf]
  %v4290 = vld [vmem:[%s31 + $0x1f8] sm:$0xf]
  %v4291 = vld [vmem:[%s31 + $0x1fc] sm:$0xf]
  %v4292 = vld [vmem:[%s31 + $0x200] sm:$0xf]
  %v4293 = vld [vmem:[%s31 + $0x204] sm:$0xf]
  %v4294 = vld [vmem:[%s31 + $0x208] sm:$0xf]
  %v4295 = vld [vmem:[%s31 + $0x20c] sm:$0xf]
  %v4296 = vld [vmem:[%s31 + $0x210] sm:$0xf]
  %v4297 = vld [vmem:[%s31 + $0x214] sm:$0xf]
  %v4298 = vld [vmem:[%s31 + $0x218] sm:$0xf]
  %v4299 = vld [vmem:[%s31 + $0x21c] sm:$0xf]
  %v4300 = vld [vmem:[%s31 + $0x220] sm:$0xf]
  %v4301 = vld [vmem:[%s31 + $0x224] sm:$0xf]
  %v4302 = vld [vmem:[%s31 + $0x228] sm:$0xf]
  %v4303 = vld [vmem:[%s31 + $0x22c] sm:$0xf]
  %v4304 = vld [vmem:[%s31 + $0x230] sm:$0xf]
  %v4305 = vld [vmem:[%s31 + $0x234] sm:$0xf]
  %v4306 = vld [vmem:[%s31 + $0x238] sm:$0xf]
  %v4307 = vld [vmem:[%s31 + $0x23c] sm:$0xf]
  %v4308 = vld [vmem:[%s31 + $0x240] sm:$0xf]
  %v4309 = vld [vmem:[%s31 + $0x244] sm:$0xf]
  %v4310 = vld [vmem:[%s31 + $0x248] sm:$0xf]
  %v4311 = vld [vmem:[%s31 + $0x24c] sm:$0xf]
  %v4312 = vld [vmem:[%s31 + $0x250] sm:$0xf]
  %v4313 = vld [vmem:[%s31 + $0x254] sm:$0xf]
  %v4314 = vld [vmem:[%s31 + $0x258] sm:$0xf]
  %v4315 = vld [vmem:[%s31 + $0x25c] sm:$0xf]
  %v4316 = vld [vmem:[%s31 + $0x260] sm:$0xf]
  %v4317 = vld [vmem:[%s31 + $0x264] sm:$0xf]
  %v4318 = vld [vmem:[%s31 + $0x268] sm:$0xf]
  %v4319 = vld [vmem:[%s31 + $0x26c] sm:$0xf]
  %v4320 = vld [vmem:[%s31 + $0x270] sm:$0xf]
  %v4321 = vld [vmem:[%s31 + $0x274] sm:$0xf]
  %v4322 = vld [vmem:[%s31 + $0x278] sm:$0xf]
  %v4323 = vld [vmem:[%s31 + $0x27c] sm:$0xf]
  %v4324 = vld [vmem:[%s31 + $0x280] sm:$0xf]
  %v4325 = vld [vmem:[%s31 + $0x284] sm:$0xf]
  %v4326 = vld [vmem:[%s31 + $0x288] sm:$0xf]
  %v4327 = vld [vmem:[%s31 + $0x28c] sm:$0xf]
  %v4328 = vld [vmem:[%s31 + $0x290] sm:$0xf]
  %v4329 = vld [vmem:[%s31 + $0x294] sm:$0xf]
  %v4330 = vld [vmem:[%s31 + $0x298] sm:$0xf]
  %v4331 = vld [vmem:[%s31 + $0x29c] sm:$0xf]
  %v4332 = vld [vmem:[%s31 + $0x2a0] sm:$0xf]
  %v4333 = vld [vmem:[%s31 + $0x2a4] sm:$0xf]
  %v4334 = vld [vmem:[%s31 + $0x2a8] sm:$0xf]
  %v4335 = vld [vmem:[%s31 + $0x2ac] sm:$0xf]
  %v4336 = vld [vmem:[%s31 + $0x2b0] sm:$0xf]
  %v4337 = vld [vmem:[%s31 + $0x2b4] sm:$0xf]
  %v4338 = vld [vmem:[%s31 + $0x2b8] sm:$0xf]
  %v4339 = vld [vmem:[%s31 + $0x2bc] sm:$0xf]
  %v4340 = vld [vmem:[%s31 + $0x2c0] sm:$0xf]
  %v4341 = vld [vmem:[%s31 + $0x2c4] sm:$0xf]
  %v4342 = vld [vmem:[%s31 + $0x2c8] sm:$0xf]
  %v4343 = vld [vmem:[%s31 + $0x2cc] sm:$0xf]
  %v4344 = vld [vmem:[%s31 + $0x2d0] sm:$0xf]
  %v4345 = vld [vmem:[%s31 + $0x2d4] sm:$0xf]
  %v4346 = vld [vmem:[%s31 + $0x2d8] sm:$0xf]
  %v4347 = vld [vmem:[%s31 + $0x2dc] sm:$0xf]
  %v4348 = vld [vmem:[%s31 + $0x2e0] sm:$0xf]
  %v4349 = vld [vmem:[%s31 + $0x2e4] sm:$0xf]
  %v4350 = vld [vmem:[%s31 + $0x2e8] sm:$0xf]
  %v4351 = vld [vmem:[%s31 + $0x2ec] sm:$0xf]
  %v4352 = vld [vmem:[%s31 + $0x2f0] sm:$0xf]
  %v4353 = vld [vmem:[%s31 + $0x2f4] sm:$0xf]
  %v4354 = vld [vmem:[%s31 + $0x2f8] sm:$0xf]
  %v4355 = vld [vmem:[%s31 + $0x2fc] sm:$0xf]
  %v4356 = vld [vmem:[%s31 + $0x300] sm:$0xf]
  %v4357 = vld [vmem:[%s31 + $0x304] sm:$0xf]
  %v4358 = vld [vmem:[%s31 + $0x308] sm:$0xf]
  %v4359 = vld [vmem:[%s31 + $0x30c] sm:$0xf]
  %v4360 = vld [vmem:[%s31 + $0x310] sm:$0xf]
  %v4361 = vld [vmem:[%s31 + $0x314] sm:$0xf]
  %v4362 = vld [vmem:[%s31 + $0x318] sm:$0xf]
  %v4363 = vld [vmem:[%s31 + $0x31c] sm:$0xf]
  %v4364 = vld [vmem:[%s31 + $0x320] sm:$0xf]
  %v4365 = vld [vmem:[%s31 + $0x324] sm:$0xf]
  %v4366 = vld [vmem:[%s31 + $0x328] sm:$0xf]
  %v4367 = vld [vmem:[%s31 + $0x32c] sm:$0xf]
  %v4368 = vld [vmem:[%s31 + $0x330] sm:$0xf]
  %v4369 = vld [vmem:[%s31 + $0x334] sm:$0xf]
  %v4370 = vld [vmem:[%s31 + $0x338] sm:$0xf]
  %v4371 = vld [vmem:[%s31 + $0x33c] sm:$0xf]
  %v4372 = vld [vmem:[%s31 + $0x340] sm:$0xf]
  %v4373 = vld [vmem:[%s31 + $0x344] sm:$0xf]
  %v4374 = vld [vmem:[%s31 + $0x348] sm:$0xf]
  %v4375 = vld [vmem:[%s31 + $0x34c] sm:$0xf]
  %v4376 = vld [vmem:[%s31 + $0x350] sm:$0xf]
  %v4377 = vld [vmem:[%s31 + $0x354] sm:$0xf]
  %v4378 = vld [vmem:[%s31 + $0x358] sm:$0xf]
  %v4379 = vld [vmem:[%s31 + $0x35c] sm:$0xf]
  %v4380 = vld [vmem:[%s31 + $0x360] sm:$0xf]
  %v4381 = vld [vmem:[%s31 + $0x364] sm:$0xf]
  %v4382 = vld [vmem:[%s31 + $0x368] sm:$0xf]
  %v4383 = vld [vmem:[%s31 + $0x36c] sm:$0xf]
  %v4384 = vld [vmem:[%s31 + $0x370] sm:$0xf]
  %v4385 = vld [vmem:[%s31 + $0x374] sm:$0xf]
  %v4386 = vld [vmem:[%s31 + $0x378] sm:$0xf]
  %v4387 = vld [vmem:[%s31 + $0x37c] sm:$0xf]
  %v4388 = vld [vmem:[%s31 + $0x380] sm:$0xf]
  %v4389 = vld [vmem:[%s31 + $0x384] sm:$0xf]
  %v4390 = vld [vmem:[%s31 + $0x388] sm:$0xf]
  %v4391 = vld [vmem:[%s31 + $0x38c] sm:$0xf]
  %v4392 = vld [vmem:[%s31 + $0x390] sm:$0xf]
  %v4393 = vld [vmem:[%s31 + $0x394] sm:$0xf]
  %v4394 = vld [vmem:[%s31 + $0x398] sm:$0xf]
  %v4395 = vld [vmem:[%s31 + $0x39c] sm:$0xf]
  %v4396 = vld [vmem:[%s31 + $0x3a0] sm:$0xf]
  %v4397 = vld [vmem:[%s31 + $0x3a4] sm:$0xf]
  %v4398 = vld [vmem:[%s31 + $0x3a8] sm:$0xf]
  %v4399 = vld [vmem:[%s31 + $0x3ac] sm:$0xf]
  %v4400 = vld [vmem:[%s31 + $0x3b0] sm:$0xf]
  %v4401 = vld [vmem:[%s31 + $0x3b4] sm:$0xf]
  %v4402 = vld [vmem:[%s31 + $0x3b8] sm:$0xf]
  %v4403 = vld [vmem:[%s31 + $0x3bc] sm:$0xf]
  %v4404 = vld [vmem:[%s31 + $0x3c0] sm:$0xf]
  %v4405 = vld [vmem:[%s31 + $0x3c4] sm:$0xf]
  %v4406 = vld [vmem:[%s31 + $0x3c8] sm:$0xf]
  %v4407 = vld [vmem:[%s31 + $0x3cc] sm:$0xf]
  %v4408 = vld [vmem:[%s31 + $0x3d0] sm:$0xf]
  %v4409 = vld [vmem:[%s31 + $0x3d4] sm:$0xf]
  %v4410 = vld [vmem:[%s31 + $0x3d8] sm:$0xf]
  %v4411 = vld [vmem:[%s31 + $0x3dc] sm:$0xf]
  %v4412 = vld [vmem:[%s31 + $0x3e0] sm:$0xf]
  %v4413 = vld [vmem:[%s31 + $0x3e4] sm:$0xf]
  %v4414 = vld [vmem:[%s31 + $0x3e8] sm:$0xf]
  %v4415 = vld [vmem:[%s31 + $0x3ec] sm:$0xf]
  %v4416 = vld [vmem:[%s31 + $0x3f0] sm:$0xf]
  %v4417 = vld [vmem:[%s31 + $0x3f4] sm:$0xf]
  %v4418 = vld [vmem:[%s31 + $0x3f8] sm:$0xf]
  %v4419 = vld [vmem:[%s31 + $0x3fc] sm:$0xf]
  %v4420 = vld [vmem:[%s33] sm:$0x1]
  %v4422 = vlaneseq
  %v4423 = vshrl.u32 %v4422, 7
  %v4424 = vsub.s32 0, %v4423
  %v4425 = vrot.slane %v4420, %v4424
  %v4683 = vunpack.c.l.b16 %v4164
  %v4684 = vunpack.c.l.b16 %v4165
  %v4685 = vunpack.c.l.b16 %v4166
  %v4686 = vunpack.c.l.b16 %v4167
  %v4687 = vunpack.c.l.b16 %v4168
  %v4688 = vunpack.c.l.b16 %v4169
  %v4689 = vunpack.c.l.b16 %v4170
  %v4690 = vunpack.c.l.b16 %v4171
  %v4691 = vunpack.c.l.b16 %v4172
  %v4692 = vunpack.c.l.b16 %v4173
  %v4693 = vunpack.c.l.b16 %v4174
  %v4694 = vunpack.c.l.b16 %v4175
  %v4695 = vunpack.c.l.b16 %v4176
  %v4696 = vunpack.c.l.b16 %v4177
  %v4697 = vunpack.c.l.b16 %v4178
  %v4698 = vunpack.c.l.b16 %v4179
  %v4699 = vunpack.c.l.b16 %v4180
  %v4700 = vunpack.c.l.b16 %v4181
  %v4701 = vunpack.c.l.b16 %v4182
  %v4702 = vunpack.c.l.b16 %v4183
  %v4703 = vunpack.c.l.b16 %v4184
  %v4704 = vunpack.c.l.b16 %v4185
  %v4705 = vunpack.c.l.b16 %v4186
  %v4706 = vunpack.c.l.b16 %v4187
  %v4707 = vunpack.c.l.b16 %v4188
  %v4708 = vunpack.c.l.b16 %v4189
  %v4709 = vunpack.c.l.b16 %v4190
  %v4710 = vunpack.c.l.b16 %v4191
  %v4711 = vunpack.c.l.b16 %v4192
  %v4712 = vunpack.c.l.b16 %v4193
  %v4713 = vunpack.c.l.b16 %v4194
  %v4714 = vunpack.c.l.b16 %v4195
  %v4715 = vunpack.c.l.b16 %v4196
  %v4716 = vunpack.c.l.b16 %v4197
  %v4717 = vunpack.c.l.b16 %v4198
  %v4718 = vunpack.c.l.b16 %v4199
  %v4719 = vunpack.c.l.b16 %v4200
  %v4720 = vunpack.c.l.b16 %v4201
  %v4721 = vunpack.c.l.b16 %v4202
  %v4722 = vunpack.c.l.b16 %v4203
  %v4723 = vunpack.c.l.b16 %v4204
  %v4724 = vunpack.c.l.b16 %v4205
  %v4725 = vunpack.c.l.b16 %v4206
  %v4726 = vunpack.c.l.b16 %v4207
  %v4727 = vunpack.c.l.b16 %v4208
  %v4728 = vunpack.c.l.b16 %v4209
  %v4729 = vunpack.c.l.b16 %v4210
  %v4730 = vunpack.c.l.b16 %v4211
  %v4731 = vunpack.c.l.b16 %v4212
  %v4732 = vunpack.c.l.b16 %v4213
  %v4733 = vunpack.c.l.b16 %v4214
  %v4734 = vunpack.c.l.b16 %v4215
  %v4735 = vunpack.c.l.b16 %v4216
  %v4736 = vunpack.c.l.b16 %v4217
  %v4737 = vunpack.c.l.b16 %v4218
  %v4738 = vunpack.c.l.b16 %v4219
  %v4739 = vunpack.c.l.b16 %v4220
  %v4740 = vunpack.c.l.b16 %v4221
  %v4741 = vunpack.c.l.b16 %v4222
  %v4742 = vunpack.c.l.b16 %v4223
  %v4743 = vunpack.c.l.b16 %v4224
  %v4744 = vunpack.c.l.b16 %v4225
  %v4745 = vunpack.c.l.b16 %v4226
  %v4746 = vunpack.c.l.b16 %v4227
  %v4747 = vunpack.c.l.b16 %v4228
  %v4748 = vunpack.c.l.b16 %v4229
  %v4749 = vunpack.c.l.b16 %v4230
  %v4750 = vunpack.c.l.b16 %v4231
  %v4751 = vunpack.c.l.b16 %v4232
  %v4752 = vunpack.c.l.b16 %v4233
  %v4753 = vunpack.c.l.b16 %v4234
  %v4754 = vunpack.c.l.b16 %v4235
  %v4755 = vunpack.c.l.b16 %v4236
  %v4756 = vunpack.c.l.b16 %v4237
  %v4757 = vunpack.c.l.b16 %v4238
  %v4758 = vunpack.c.l.b16 %v4239
  %v4759 = vunpack.c.l.b16 %v4240
  %v4760 = vunpack.c.l.b16 %v4241
  %v4761 = vunpack.c.l.b16 %v4242
  %v4762 = vunpack.c.l.b16 %v4243
  %v4763 = vunpack.c.l.b16 %v4244
  %v4764 = vunpack.c.l.b16 %v4245
  %v4765 = vunpack.c.l.b16 %v4246
  %v4766 = vunpack.c.l.b16 %v4247
  %v4767 = vunpack.c.l.b16 %v4248
  %v4768 = vunpack.c.l.b16 %v4249
  %v4769 = vunpack.c.l.b16 %v4250
  %v4770 = vunpack.c.l.b16 %v4251
  %v4771 = vunpack.c.l.b16 %v4252
  %v4772 = vunpack.c.l.b16 %v4253
  %v4773 = vunpack.c.l.b16 %v4254
  %v4774 = vunpack.c.l.b16 %v4255
  %v4775 = vunpack.c.l.b16 %v4256
  %v4776 = vunpack.c.l.b16 %v4257
  %v4777 = vunpack.c.l.b16 %v4258
  %v4778 = vunpack.c.l.b16 %v4259
  %v4779 = vunpack.c.l.b16 %v4260
  %v4780 = vunpack.c.l.b16 %v4261
  %v4781 = vunpack.c.l.b16 %v4262
  %v4782 = vunpack.c.l.b16 %v4263
  %v4783 = vunpack.c.l.b16 %v4264
  %v4784 = vunpack.c.l.b16 %v4265
  %v4785 = vunpack.c.l.b16 %v4266
  %v4786 = vunpack.c.l.b16 %v4267
  %v4787 = vunpack.c.l.b16 %v4268
  %v4788 = vunpack.c.l.b16 %v4269
  %v4789 = vunpack.c.l.b16 %v4270
  %v4790 = vunpack.c.l.b16 %v4271
  %v4791 = vunpack.c.l.b16 %v4272
  %v4792 = vunpack.c.l.b16 %v4273
  %v4793 = vunpack.c.l.b16 %v4274
  %v4794 = vunpack.c.l.b16 %v4275
  %v4795 = vunpack.c.l.b16 %v4276
  %v4796 = vunpack.c.l.b16 %v4277
  %v4797 = vunpack.c.l.b16 %v4278
  %v4798 = vunpack.c.l.b16 %v4279
  %v4799 = vunpack.c.l.b16 %v4280
  %v4800 = vunpack.c.l.b16 %v4281
  %v4801 = vunpack.c.l.b16 %v4282
  %v4802 = vunpack.c.l.b16 %v4283
  %v4803 = vunpack.c.l.b16 %v4284
  %v4804 = vunpack.c.l.b16 %v4285
  %v4805 = vunpack.c.l.b16 %v4286
  %v4806 = vunpack.c.l.b16 %v4287
  %v4807 = vunpack.c.l.b16 %v4288
  %v4808 = vunpack.c.l.b16 %v4289
  %v4809 = vunpack.c.l.b16 %v4290
  %v4810 = vunpack.c.l.b16 %v4291
  %v4811 = vunpack.c.l.b16 %v4292
  %v4812 = vunpack.c.l.b16 %v4293
  %v4813 = vunpack.c.l.b16 %v4294
  %v4814 = vunpack.c.l.b16 %v4295
  %v4815 = vunpack.c.l.b16 %v4296
  %v4816 = vunpack.c.l.b16 %v4297
  %v4817 = vunpack.c.l.b16 %v4298
  %v4818 = vunpack.c.l.b16 %v4299
  %v4819 = vunpack.c.l.b16 %v4300
  %v4820 = vunpack.c.l.b16 %v4301
  %v4821 = vunpack.c.l.b16 %v4302
  %v4822 = vunpack.c.l.b16 %v4303
  %v4823 = vunpack.c.l.b16 %v4304
  %v4824 = vunpack.c.l.b16 %v4305
  %v4825 = vunpack.c.l.b16 %v4306
  %v4826 = vunpack.c.l.b16 %v4307
  %v4827 = vunpack.c.l.b16 %v4308
  %v4828 = vunpack.c.l.b16 %v4309
  %v4829 = vunpack.c.l.b16 %v4310
  %v4830 = vunpack.c.l.b16 %v4311
  %v4831 = vunpack.c.l.b16 %v4312
  %v4832 = vunpack.c.l.b16 %v4313
  %v4833 = vunpack.c.l.b16 %v4314
  %v4834 = vunpack.c.l.b16 %v4315
  %v4835 = vunpack.c.l.b16 %v4316
  %v4836 = vunpack.c.l.b16 %v4317
  %v4837 = vunpack.c.l.b16 %v4318
  %v4838 = vunpack.c.l.b16 %v4319
  %v4839 = vunpack.c.l.b16 %v4320
  %v4840 = vunpack.c.l.b16 %v4321
  %v4841 = vunpack.c.l.b16 %v4322
  %v4842 = vunpack.c.l.b16 %v4323
  %v4843 = vunpack.c.l.b16 %v4324
  %v4844 = vunpack.c.l.b16 %v4325
  %v4845 = vunpack.c.l.b16 %v4326
  %v4846 = vunpack.c.l.b16 %v4327
  %v4847 = vunpack.c.l.b16 %v4328
  %v4848 = vunpack.c.l.b16 %v4329
  %v4849 = vunpack.c.l.b16 %v4330
  %v4850 = vunpack.c.l.b16 %v4331
  %v4851 = vunpack.c.l.b16 %v4332
  %v4852 = vunpack.c.l.b16 %v4333
  %v4853 = vunpack.c.l.b16 %v4334
  %v4854 = vunpack.c.l.b16 %v4335
  %v4855 = vunpack.c.l.b16 %v4336
  %v4856 = vunpack.c.l.b16 %v4337
  %v4857 = vunpack.c.l.b16 %v4338
  %v4858 = vunpack.c.l.b16 %v4339
  %v4859 = vunpack.c.l.b16 %v4340
  %v4860 = vunpack.c.l.b16 %v4341
  %v4861 = vunpack.c.l.b16 %v4342
  %v4862 = vunpack.c.l.b16 %v4343
  %v4863 = vunpack.c.l.b16 %v4344
  %v4864 = vunpack.c.l.b16 %v4345
  %v4865 = vunpack.c.l.b16 %v4346
  %v4866 = vunpack.c.l.b16 %v4347
  %v4867 = vunpack.c.l.b16 %v4348
  %v4868 = vunpack.c.l.b16 %v4349
  %v4869 = vunpack.c.l.b16 %v4350
  %v4870 = vunpack.c.l.b16 %v4351
  %v4871 = vunpack.c.l.b16 %v4352
  %v4872 = vunpack.c.l.b16 %v4353
  %v4873 = vunpack.c.l.b16 %v4354
  %v4874 = vunpack.c.l.b16 %v4355
  %v4875 = vunpack.c.l.b16 %v4356
  %v4876 = vunpack.c.l.b16 %v4357
  %v4877 = vunpack.c.l.b16 %v4358
  %v4878 = vunpack.c.l.b16 %v4359
  %v4879 = vunpack.c.l.b16 %v4360
  %v4880 = vunpack.c.l.b16 %v4361
  %v4881 = vunpack.c.l.b16 %v4362
  %v4882 = vunpack.c.l.b16 %v4363
  %v4883 = vunpack.c.l.b16 %v4364
  %v4884 = vunpack.c.l.b16 %v4365
  %v4885 = vunpack.c.l.b16 %v4366
  %v4886 = vunpack.c.l.b16 %v4367
  %v4887 = vunpack.c.l.b16 %v4368
  %v4888 = vunpack.c.l.b16 %v4369
  %v4889 = vunpack.c.l.b16 %v4370
  %v4890 = vunpack.c.l.b16 %v4371
  %v4891 = vunpack.c.l.b16 %v4372
  %v4892 = vunpack.c.l.b16 %v4373
  %v4893 = vunpack.c.l.b16 %v4374
  %v4894 = vunpack.c.l.b16 %v4375
  %v4895 = vunpack.c.l.b16 %v4376
  %v4896 = vunpack.c.l.b16 %v4377
  %v4897 = vunpack.c.l.b16 %v4378
  %v4898 = vunpack.c.l.b16 %v4379
  %v4899 = vunpack.c.l.b16 %v4380
  %v4900 = vunpack.c.l.b16 %v4381
  %v4901 = vunpack.c.l.b16 %v4382
  %v4902 = vunpack.c.l.b16 %v4383
  %v4903 = vunpack.c.l.b16 %v4384
  %v4904 = vunpack.c.l.b16 %v4385
  %v4905 = vunpack.c.l.b16 %v4386
  %v4906 = vunpack.c.l.b16 %v4387
  %v4907 = vunpack.c.l.b16 %v4388
  %v4908 = vunpack.c.l.b16 %v4389
  %v4909 = vunpack.c.l.b16 %v4390
  %v4910 = vunpack.c.l.b16 %v4391
  %v4911 = vunpack.c.l.b16 %v4392
  %v4912 = vunpack.c.l.b16 %v4393
  %v4913 = vunpack.c.l.b16 %v4394
  %v4914 = vunpack.c.l.b16 %v4395
  %v4915 = vunpack.c.l.b16 %v4396
  %v4916 = vunpack.c.l.b16 %v4397
  %v4917 = vunpack.c.l.b16 %v4398
  %v4918 = vunpack.c.l.b16 %v4399
  %v4919 = vunpack.c.l.b16 %v4400
  %v4920 = vunpack.c.l.b16 %v4401
  %v4921 = vunpack.c.l.b16 %v4402
  %v4922 = vunpack.c.l.b16 %v4403
  %v4923 = vunpack.c.l.b16 %v4404
  %v4924 = vunpack.c.l.b16 %v4405
  %v4925 = vunpack.c.l.b16 %v4406
  %v4926 = vunpack.c.l.b16 %v4407
  %v4927 = vunpack.c.l.b16 %v4408
  %v4928 = vunpack.c.l.b16 %v4409
  %v4929 = vunpack.c.l.b16 %v4410
  %v4930 = vunpack.c.l.b16 %v4411
  %v4931 = vunpack.c.l.b16 %v4412
  %v4932 = vunpack.c.l.b16 %v4413
  %v4933 = vunpack.c.l.b16 %v4414
  %v4934 = vunpack.c.l.b16 %v4415
  %v4935 = vunpack.c.l.b16 %v4416
  %v4936 = vunpack.c.l.b16 %v4417
  %v4937 = vunpack.c.l.b16 %v4418
  %v4938 = vunpack.c.l.b16 %v4419
  %v4939 = vpack.c.b16 %v4684, %v4683
  %v4940 = vpack.c.b16 %v4686, %v4685
  %v4941 = vpack.c.b16 %v4688, %v4687
  %v4942 = vpack.c.b16 %v4690, %v4689
  %v4943 = vpack.c.b16 %v4692, %v4691
  %v4944 = vpack.c.b16 %v4694, %v4693
  %v4945 = vpack.c.b16 %v4696, %v4695
  %v4946 = vpack.c.b16 %v4698, %v4697
  %v4947 = vpack.c.b16 %v4700, %v4699
  %v4948 = vpack.c.b16 %v4702, %v4701
  %v4949 = vpack.c.b16 %v4704, %v4703
  %v4950 = vpack.c.b16 %v4706, %v4705
  %v4951 = vpack.c.b16 %v4708, %v4707
  %v4952 = vpack.c.b16 %v4710, %v4709
  %v4953 = vpack.c.b16 %v4712, %v4711
  %v4954 = vpack.c.b16 %v4714, %v4713
  %v4955 = vpack.c.b16 %v4716, %v4715
  %v4956 = vpack.c.b16 %v4718, %v4717
  %v4957 = vpack.c.b16 %v4720, %v4719
  %v4958 = vpack.c.b16 %v4722, %v4721
  %v4959 = vpack.c.b16 %v4724, %v4723
  %v4960 = vpack.c.b16 %v4726, %v4725
  %v4961 = vpack.c.b16 %v4728, %v4727
  %v4962 = vpack.c.b16 %v4730, %v4729
  %v4963 = vpack.c.b16 %v4732, %v4731
  %v4964 = vpack.c.b16 %v4734, %v4733
  %v4965 = vpack.c.b16 %v4736, %v4735
  %v4966 = vpack.c.b16 %v4738, %v4737
  %v4967 = vpack.c.b16 %v4740, %v4739
  %v4968 = vpack.c.b16 %v4742, %v4741
  %v4969 = vpack.c.b16 %v4744, %v4743
  %v4970 = vpack.c.b16 %v4746, %v4745
  %v4971 = vpack.c.b16 %v4748, %v4747
  %v4972 = vpack.c.b16 %v4750, %v4749
  %v4973 = vpack.c.b16 %v4752, %v4751
  %v4974 = vpack.c.b16 %v4754, %v4753
  %v4975 = vpack.c.b16 %v4756, %v4755
  %v4976 = vpack.c.b16 %v4758, %v4757
  %v4977 = vpack.c.b16 %v4760, %v4759
  %v4978 = vpack.c.b16 %v4762, %v4761
  %v4979 = vpack.c.b16 %v4764, %v4763
  %v4980 = vpack.c.b16 %v4766, %v4765
  %v4981 = vpack.c.b16 %v4768, %v4767
  %v4982 = vpack.c.b16 %v4770, %v4769
  %v4983 = vpack.c.b16 %v4772, %v4771
  %v4984 = vpack.c.b16 %v4774, %v4773
  %v4985 = vpack.c.b16 %v4776, %v4775
  %v4986 = vpack.c.b16 %v4778, %v4777
  %v4987 = vpack.c.b16 %v4780, %v4779
  %v4988 = vpack.c.b16 %v4782, %v4781
  %v4989 = vpack.c.b16 %v4784, %v4783
  %v4990 = vpack.c.b16 %v4786, %v4785
  %v4991 = vpack.c.b16 %v4788, %v4787
  %v4992 = vpack.c.b16 %v4790, %v4789
  %v4993 = vpack.c.b16 %v4792, %v4791
  %v4994 = vpack.c.b16 %v4794, %v4793
  %v4995 = vpack.c.b16 %v4796, %v4795
  %v4996 = vpack.c.b16 %v4798, %v4797
  %v4997 = vpack.c.b16 %v4800, %v4799
  %v4998 = vpack.c.b16 %v4802, %v4801
  %v4999 = vpack.c.b16 %v4804, %v4803
  %v5000 = vpack.c.b16 %v4806, %v4805
  %v5001 = vpack.c.b16 %v4808, %v4807
  %v5002 = vpack.c.b16 %v4810, %v4809
  %v5003 = vpack.c.b16 %v4812, %v4811
  %v5004 = vpack.c.b16 %v4814, %v4813
  %v5005 = vpack.c.b16 %v4816, %v4815
  %v5006 = vpack.c.b16 %v4818, %v4817
  %v5007 = vpack.c.b16 %v4820, %v4819
  %v5008 = vpack.c.b16 %v4822, %v4821
  %v5009 = vpack.c.b16 %v4824, %v4823
  %v5010 = vpack.c.b16 %v4826, %v4825
  %v5011 = vpack.c.b16 %v4828, %v4827
  %v5012 = vpack.c.b16 %v4830, %v4829
  %v5013 = vpack.c.b16 %v4832, %v4831
  %v5014 = vpack.c.b16 %v4834, %v4833
  %v5015 = vpack.c.b16 %v4836, %v4835
  %v5016 = vpack.c.b16 %v4838, %v4837
  %v5017 = vpack.c.b16 %v4840, %v4839
  %v5018 = vpack.c.b16 %v4842, %v4841
  %v5019 = vpack.c.b16 %v4844, %v4843
  %v5020 = vpack.c.b16 %v4846, %v4845
  %v5021 = vpack.c.b16 %v4848, %v4847
  %v5022 = vpack.c.b16 %v4850, %v4849
  %v5023 = vpack.c.b16 %v4852, %v4851
  %v5024 = vpack.c.b16 %v4854, %v4853
  %v5025 = vpack.c.b16 %v4856, %v4855
  %v5026 = vpack.c.b16 %v4858, %v4857
  %v5027 = vpack.c.b16 %v4860, %v4859
  %v5028 = vpack.c.b16 %v4862, %v4861
  %v5029 = vpack.c.b16 %v4864, %v4863
  %v5030 = vpack.c.b16 %v4866, %v4865
  %v5031 = vpack.c.b16 %v4868, %v4867
  %v5032 = vpack.c.b16 %v4870, %v4869
  %v5033 = vpack.c.b16 %v4872, %v4871
  %v5034 = vpack.c.b16 %v4874, %v4873
  %v5035 = vpack.c.b16 %v4876, %v4875
  %v5036 = vpack.c.b16 %v4878, %v4877
  %v5037 = vpack.c.b16 %v4880, %v4879
  %v5038 = vpack.c.b16 %v4882, %v4881
  %v5039 = vpack.c.b16 %v4884, %v4883
  %v5040 = vpack.c.b16 %v4886, %v4885
  %v5041 = vpack.c.b16 %v4888, %v4887
  %v5042 = vpack.c.b16 %v4890, %v4889
  %v5043 = vpack.c.b16 %v4892, %v4891
  %v5044 = vpack.c.b16 %v4894, %v4893
  %v5045 = vpack.c.b16 %v4896, %v4895
  %v5046 = vpack.c.b16 %v4898, %v4897
  %v5047 = vpack.c.b16 %v4900, %v4899
  %v5048 = vpack.c.b16 %v4902, %v4901
  %v5049 = vpack.c.b16 %v4904, %v4903
  %v5050 = vpack.c.b16 %v4906, %v4905
  %v5051 = vpack.c.b16 %v4908, %v4907
  %v5052 = vpack.c.b16 %v4910, %v4909
  %v5053 = vpack.c.b16 %v4912, %v4911
  %v5054 = vpack.c.b16 %v4914, %v4913
  %v5055 = vpack.c.b16 %v4916, %v4915
  %v5056 = vpack.c.b16 %v4918, %v4917
  %v5057 = vpack.c.b16 %v4920, %v4919
  %v5058 = vpack.c.b16 %v4922, %v4921
  %v5059 = vpack.c.b16 %v4924, %v4923
  %v5060 = vpack.c.b16 %v4926, %v4925
  %v5061 = vpack.c.b16 %v4928, %v4927
  %v5062 = vpack.c.b16 %v4930, %v4929
  %v5063 = vpack.c.b16 %v4932, %v4931
  %v5064 = vpack.c.b16 %v4934, %v4933
  %v5065 = vpack.c.b16 %v4936, %v4935
  %v5066 = vpack.c.b16 %v4938, %v4937
  %5195 = vmatprep.subr.bf16.mxu0 0
  %5196 = vmatpush1.bf16.msra.mxu0 %v4939
  %5197 = vmatprep.subr.bf16.mxu0 0
  %5198 = vmatpush1.bf16.msra.mxu0 %v4940
  %5199 = vmatprep.subr.bf16.mxu0 0
  %5200 = vmatpush1.bf16.msra.mxu0 %v4941
  %5201 = vmatprep.subr.bf16.mxu0 0
  %5202 = vmatpush1.bf16.msra.mxu0 %v4942
  %5203 = vmatprep.subr.bf16.mxu0 0
  %5204 = vmatpush1.bf16.msra.mxu0 %v4943
  %5205 = vmatprep.subr.bf16.mxu0 0
  %5206 = vmatpush1.bf16.msra.mxu0 %v4944
  %5207 = vmatprep.subr.bf16.mxu0 0
  %5208 = vmatpush1.bf16.msra.mxu0 %v4945
  %5209 = vmatprep.subr.bf16.mxu0 0
  %5210 = vmatpush1.bf16.msra.mxu0 %v4946
  %5211 = vmatprep.subr.bf16.mxu0 0
  %5212 = vmatpush1.bf16.msra.mxu0 %v4947
  %5213 = vmatprep.subr.bf16.mxu0 0
  %5214 = vmatpush1.bf16.msra.mxu0 %v4948
  %5215 = vmatprep.subr.bf16.mxu0 0
  %5216 = vmatpush1.bf16.msra.mxu0 %v4949
  %5217 = vmatprep.subr.bf16.mxu0 0
  %5218 = vmatpush1.bf16.msra.mxu0 %v4950
  %5219 = vmatprep.subr.bf16.mxu0 0
  %5220 = vmatpush1.bf16.msra.mxu0 %v4951
  %5221 = vmatprep.subr.bf16.mxu0 0
  %5222 = vmatpush1.bf16.msra.mxu0 %v4952
  %5223 = vmatprep.subr.bf16.mxu0 0
  %5224 = vmatpush1.bf16.msra.mxu0 %v4953
  %5225 = vmatprep.subr.bf16.mxu0 0
  %5226 = vmatpush1.bf16.msra.mxu0 %v4954
  %5227 = vmatprep.mubr.bf16.mxu0 %v4149
  %5228 = vmatmul.mubr.bf16.gmra.mrb[0].mxu0 %v4148
  %v5229 = vpop.f32.mrb[0].mxu0
  %v5230 = vadd.f32 %v4425, %v5229
  %v5231 = vpop.f32.mrb[0].mxu0
  %v5232 = vpop.f32.mrb[0].mxu0
  %v5233 = vadd.f32 %v4425, %v5232
  %v5234 = vpop.f32.mrb[0].mxu0
  %5235 = vdwg.mxu0
  %5236 = vmatprep.subr.bf16.mxu0 0
  %5237 = vmatpush1.bf16.msra.mxu0 %v4955
  %5238 = vmatprep.subr.bf16.mxu0 0
  %5239 = vmatpush1.bf16.msra.mxu0 %v4956
  %5240 = vmatprep.subr.bf16.mxu0 0
  %5241 = vmatpush1.bf16.msra.mxu0 %v4957
  %5242 = vmatprep.subr.bf16.mxu0 0
  %5243 = vmatpush1.bf16.msra.mxu0 %v4958
  %5244 = vmatprep.subr.bf16.mxu0 0
  %5245 = vmatpush1.bf16.msra.mxu0 %v4959
  %5246 = vmatprep.subr.bf16.mxu0 0
  %5247 = vmatpush1.bf16.msra.mxu0 %v4960
  %5248 = vmatprep.subr.bf16.mxu0 0
  %5249 = vmatpush1.bf16.msra.mxu0 %v4961
  %5250 = vmatprep.subr.bf16.mxu0 0
  %5251 = vmatpush1.bf16.msra.mxu0 %v4962
  %5252 = vmatprep.subr.bf16.mxu0 0
  %5253 = vmatpush1.bf16.msra.mxu0 %v4963
  %5254 = vmatprep.subr.bf16.mxu0 0
  %5255 = vmatpush1.bf16.msra.mxu0 %v4964
  %5256 = vmatprep.subr.bf16.mxu0 0
  %5257 = vmatpush1.bf16.msra.mxu0 %v4965
  %5258 = vmatprep.subr.bf16.mxu0 0
  %5259 = vmatpush1.bf16.msra.mxu0 %v4966
  %5260 = vmatprep.subr.bf16.mxu0 0
  %5261 = vmatpush1.bf16.msra.mxu0 %v4967
  %5262 = vmatprep.subr.bf16.mxu0 0
  %5263 = vmatpush1.bf16.msra.mxu0 %v4968
  %5264 = vmatprep.subr.bf16.mxu0 0
  %5265 = vmatpush1.bf16.msra.mxu0 %v4969
  %5266 = vmatprep.subr.bf16.mxu0 0
  %5267 = vmatpush1.bf16.msra.mxu0 %v4970
  %5268 = vmatprep.mubr.bf16.mxu0 %v4151
  %5269 = vmatmul.mubr.bf16.gmra.mrb[0].mxu0 %v4150
  %v5270 = vpop.f32.mrb[0].mxu0
  %v5271 = vadd.f32 %v5230, %v5270
  %v5272 = vpop.f32.mrb[0].mxu0
  %v5273 = vpop.f32.mrb[0].mxu0
  %v5274 = vadd.f32 %v5233, %v5273
  %v5275 = vpop.f32.mrb[0].mxu0
  %5276 = vdwg.mxu0
  %5277 = vmatprep.subr.bf16.mxu0 0
  %5278 = vmatpush1.bf16.msra.mxu0 %v4971
  %5279 = vmatprep.subr.bf16.mxu0 0
  %5280 = vmatpush1.bf16.msra.mxu0 %v4972
  %5281 = vmatprep.subr.bf16.mxu0 0
  %5282 = vmatpush1.bf16.msra.mxu0 %v4973
  %5283 = vmatprep.subr.bf16.mxu0 0
  %5284 = vmatpush1.bf16.msra.mxu0 %v4974
  %5285 = vmatprep.subr.bf16.mxu0 0
  %5286 = vmatpush1.bf16.msra.mxu0 %v4975
  %5287 = vmatprep.subr.bf16.mxu0 0
  %5288 = vmatpush1.bf16.msra.mxu0 %v4976
  %5289 = vmatprep.subr.bf16.mxu0 0
  %5290 = vmatpush1.bf16.msra.mxu0 %v4977
  %5291 = vmatprep.subr.bf16.mxu0 0
  %5292 = vmatpush1.bf16.msra.mxu0 %v4978
  %5293 = vmatprep.subr.bf16.mxu0 0
  %5294 = vmatpush1.bf16.msra.mxu0 %v4979
  %5295 = vmatprep.subr.bf16.mxu0 0
  %5296 = vmatpush1.bf16.msra.mxu0 %v4980
  %5297 = vmatprep.subr.bf16.mxu0 0
  %5298 = vmatpush1.bf16.msra.mxu0 %v4981
  %5299 = vmatprep.subr.bf16.mxu0 0
  %5300 = vmatpush1.bf16.msra.mxu0 %v4982
  %5301 = vmatprep.subr.bf16.mxu0 0
  %5302 = vmatpush1.bf16.msra.mxu0 %v4983
  %5303 = vmatprep.subr.bf16.mxu0 0
  %5304 = vmatpush1.bf16.msra.mxu0 %v4984
  %5305 = vmatprep.subr.bf16.mxu0 0
  %5306 = vmatpush1.bf16.msra.mxu0 %v4985
  %5307 = vmatprep.subr.bf16.mxu0 0
  %5308 = vmatpush1.bf16.msra.mxu0 %v4986
  %5309 = vmatprep.mubr.bf16.mxu0 %v4153
  %5310 = vmatmul.mubr.bf16.gmra.mrb[0].mxu0 %v4152
  %v5311 = vpop.f32.mrb[0].mxu0
  %v5312 = vadd.f32 %v5271, %v5311
  %v5313 = vpop.f32.mrb[0].mxu0
  %v5314 = vpop.f32.mrb[0].mxu0
  %v5315 = vadd.f32 %v5274, %v5314
  %v5316 = vpop.f32.mrb[0].mxu0
  %5317 = vdwg.mxu0
  %5318 = vmatprep.subr.bf16.mxu0 0
  %5319 = vmatpush1.bf16.msra.mxu0 %v4987
  %5320 = vmatprep.subr.bf16.mxu0 0
  %5321 = vmatpush1.bf16.msra.mxu0 %v4988
  %5322 = vmatprep.subr.bf16.mxu0 0
  %5323 = vmatpush1.bf16.msra.mxu0 %v4989
  %5324 = vmatprep.subr.bf16.mxu0 0
  %5325 = vmatpush1.bf16.msra.mxu0 %v4990
  %5326 = vmatprep.subr.bf16.mxu0 0
  %5327 = vmatpush1.bf16.msra.mxu0 %v4991
  %5328 = vmatprep.subr.bf16.mxu0 0
  %5329 = vmatpush1.bf16.msra.mxu0 %v4992
  %5330 = vmatprep.subr.bf16.mxu0 0
  %5331 = vmatpush1.bf16.msra.mxu0 %v4993
  %5332 = vmatprep.subr.bf16.mxu0 0
  %5333 = vmatpush1.bf16.msra.mxu0 %v4994
  %5334 = vmatprep.subr.bf16.mxu0 0
  %5335 = vmatpush1.bf16.msra.mxu0 %v4995
  %5336 = vmatprep.subr.bf16.mxu0 0
  %5337 = vmatpush1.bf16.msra.mxu0 %v4996
  %5338 = vmatprep.subr.bf16.mxu0 0
  %5339 = vmatpush1.bf16.msra.mxu0 %v4997
  %5340 = vmatprep.subr.bf16.mxu0 0
  %5341 = vmatpush1.bf16.msra.mxu0 %v4998
  %5342 = vmatprep.subr.bf16.mxu0 0
  %5343 = vmatpush1.bf16.msra.mxu0 %v4999
  %5344 = vmatprep.subr.bf16.mxu0 0
  %5345 = vmatpush1.bf16.msra.mxu0 %v5000
  %5346 = vmatprep.subr.bf16.mxu0 0
  %5347 = vmatpush1.bf16.msra.mxu0 %v5001
  %5348 = vmatprep.subr.bf16.mxu0 0
  %5349 = vmatpush1.bf16.msra.mxu0 %v5002
  %5350 = vmatprep.mubr.bf16.mxu0 %v4155
  %5351 = vmatmul.mubr.bf16.gmra.mrb[0].mxu0 %v4154
  %v5352 = vpop.f32.mrb[0].mxu0
  %v5353 = vadd.f32 %v5312, %v5352
  %v5354 = vpop.f32.mrb[0].mxu0
  %v5355 = vpop.f32.mrb[0].mxu0
  %v5356 = vadd.f32 %v5315, %v5355
  %v5357 = vpop.f32.mrb[0].mxu0
  %5358 = vdwg.mxu0
  %5359 = vmatprep.subr.bf16.mxu0 0
  %5360 = vmatpush1.bf16.msra.mxu0 %v5003
  %5361 = vmatprep.subr.bf16.mxu0 0
  %5362 = vmatpush1.bf16.msra.mxu0 %v5004
  %5363 = vmatprep.subr.bf16.mxu0 0
  %5364 = vmatpush1.bf16.msra.mxu0 %v5005
  %5365 = vmatprep.subr.bf16.mxu0 0
  %5366 = vmatpush1.bf16.msra.mxu0 %v5006
  %5367 = vmatprep.subr.bf16.mxu0 0
  %5368 = vmatpush1.bf16.msra.mxu0 %v5007
  %5369 = vmatprep.subr.bf16.mxu0 0
  %5370 = vmatpush1.bf16.msra.mxu0 %v5008
  %5371 = vmatprep.subr.bf16.mxu0 0
  %5372 = vmatpush1.bf16.msra.mxu0 %v5009
  %5373 = vmatprep.subr.bf16.mxu0 0
  %5374 = vmatpush1.bf16.msra.mxu0 %v5010
  %5375 = vmatprep.subr.bf16.mxu0 0
  %5376 = vmatpush1.bf16.msra.mxu0 %v5011
  %5377 = vmatprep.subr.bf16.mxu0 0
  %5378 = vmatpush1.bf16.msra.mxu0 %v5012
  %5379 = vmatprep.subr.bf16.mxu0 0
  %5380 = vmatpush1.bf16.msra.mxu0 %v5013
  %5381 = vmatprep.subr.bf16.mxu0 0
  %5382 = vmatpush1.bf16.msra.mxu0 %v5014
  %5383 = vmatprep.subr.bf16.mxu0 0
  %5384 = vmatpush1.bf16.msra.mxu0 %v5015
  %5385 = vmatprep.subr.bf16.mxu0 0
  %5386 = vmatpush1.bf16.msra.mxu0 %v5016
  %5387 = vmatprep.subr.bf16.mxu0 0
  %5388 = vmatpush1.bf16.msra.mxu0 %v5017
  %5389 = vmatprep.subr.bf16.mxu0 0
  %5390 = vmatpush1.bf16.msra.mxu0 %v5018
  %5391 = vmatprep.mubr.bf16.mxu0 %v4157
  %5392 = vmatmul.mubr.bf16.gmra.mrb[0].mxu0 %v4156
  %v5393 = vpop.f32.mrb[0].mxu0
  %v5394 = vadd.f32 %v5353, %v5393
  %v5395 = vpop.f32.mrb[0].mxu0
  %v5396 = vpop.f32.mrb[0].mxu0
  %v5397 = vadd.f32 %v5356, %v5396
  %v5398 = vpop.f32.mrb[0].mxu0
  %5399 = vdwg.mxu0
  %5400 = vmatprep.subr.bf16.mxu0 0
  %5401 = vmatpush1.bf16.msra.mxu0 %v5019
  %5402 = vmatprep.subr.bf16.mxu0 0
  %5403 = vmatpush1.bf16.msra.mxu0 %v5020
  %5404 = vmatprep.subr.bf16.mxu0 0
  %5405 = vmatpush1.bf16.msra.mxu0 %v5021
  %5406 = vmatprep.subr.bf16.mxu0 0
  %5407 = vmatpush1.bf16.msra.mxu0 %v5022
  %5408 = vmatprep.subr.bf16.mxu0 0
  %5409 = vmatpush1.bf16.msra.mxu0 %v5023
  %5410 = vmatprep.subr.bf16.mxu0 0
  %5411 = vmatpush1.bf16.msra.mxu0 %v5024
  %5412 = vmatprep.subr.bf16.mxu0 0
  %5413 = vmatpush1.bf16.msra.mxu0 %v5025
  %5414 = vmatprep.subr.bf16.mxu0 0
  %5415 = vmatpush1.bf16.msra.mxu0 %v5026
  %5416 = vmatprep.subr.bf16.mxu0 0
  %5417 = vmatpush1.bf16.msra.mxu0 %v5027
  %5418 = vmatprep.subr.bf16.mxu0 0
  %5419 = vmatpush1.bf16.msra.mxu0 %v5028
  %5420 = vmatprep.subr.bf16.mxu0 0
  %5421 = vmatpush1.bf16.msra.mxu0 %v5029
  %5422 = vmatprep.subr.bf16.mxu0 0
  %5423 = vmatpush1.bf16.msra.mxu0 %v5030
  %5424 = vmatprep.subr.bf16.mxu0 0
  %5425 = vmatpush1.bf16.msra.mxu0 %v5031
  %5426 = vmatprep.subr.bf16.mxu0 0
  %5427 = vmatpush1.bf16.msra.mxu0 %v5032
  %5428 = vmatprep.subr.bf16.mxu0 0
  %5429 = vmatpush1.bf16.msra.mxu0 %v5033
  %5430 = vmatprep.subr.bf16.mxu0 0
  %5431 = vmatpush1.bf16.msra.mxu0 %v5034
  %5432 = vmatprep.mubr.bf16.mxu0 %v4159
  %5433 = vmatmul.mubr.bf16.gmra.mrb[0].mxu0 %v4158
  %v5434 = vpop.f32.mrb[0].mxu0
  %v5435 = vadd.f32 %v5394, %v5434
  %v5436 = vpop.f32.mrb[0].mxu0
  %v5437 = vpop.f32.mrb[0].mxu0
  %v5438 = vadd.f32 %v5397, %v5437
  %v5439 = vpop.f32.mrb[0].mxu0
  %5440 = vdwg.mxu0
  %5441 = vmatprep.subr.bf16.mxu0 0
  %5442 = vmatpush1.bf16.msra.mxu0 %v5035
  %5443 = vmatprep.subr.bf16.mxu0 0
  %5444 = vmatpush1.bf16.msra.mxu0 %v5036
  %5445 = vmatprep.subr.bf16.mxu0 0
  %5446 = vmatpush1.bf16.msra.mxu0 %v5037
  %5447 = vmatprep.subr.bf16.mxu0 0
  %5448 = vmatpush1.bf16.msra.mxu0 %v5038
  %5449 = vmatprep.subr.bf16.mxu0 0
  %5450 = vmatpush1.bf16.msra.mxu0 %v5039
  %5451 = vmatprep.subr.bf16.mxu0 0
  %5452 = vmatpush1.bf16.msra.mxu0 %v5040
  %5453 = vmatprep.subr.bf16.mxu0 0
  %5454 = vmatpush1.bf16.msra.mxu0 %v5041
  %5455 = vmatprep.subr.bf16.mxu0 0
  %5456 = vmatpush1.bf16.msra.mxu0 %v5042
  %5457 = vmatprep.subr.bf16.mxu0 0
  %5458 = vmatpush1.bf16.msra.mxu0 %v5043
  %5459 = vmatprep.subr.bf16.mxu0 0
  %5460 = vmatpush1.bf16.msra.mxu0 %v5044
  %5461 = vmatprep.subr.bf16.mxu0 0
  %5462 = vmatpush1.bf16.msra.mxu0 %v5045
  %5463 = vmatprep.subr.bf16.mxu0 0
  %5464 = vmatpush1.bf16.msra.mxu0 %v5046
  %5465 = vmatprep.subr.bf16.mxu0 0
  %5466 = vmatpush1.bf16.msra.mxu0 %v5047
  %5467 = vmatprep.subr.bf16.mxu0 0
  %5468 = vmatpush1.bf16.msra.mxu0 %v5048
  %5469 = vmatprep.subr.bf16.mxu0 0
  %5470 = vmatpush1.bf16.msra.mxu0 %v5049
  %5471 = vmatprep.subr.bf16.mxu0 0
  %5472 = vmatpush1.bf16.msra.mxu0 %v5050
  %5473 = vmatprep.mubr.bf16.mxu0 %v4161
  %5474 = vmatmul.mubr.bf16.gmra.mrb[0].mxu0 %v4160
  %v5475 = vpop.f32.mrb[0].mxu0
  %v5476 = vadd.f32 %v5435, %v5475
  %v5477 = vpop.f32.mrb[0].mxu0
  %v5478 = vpop.f32.mrb[0].mxu0
  %v5479 = vadd.f32 %v5438, %v5478
  %v5480 = vpop.f32.mrb[0].mxu0
  %5481 = vdwg.mxu0
  %5482 = vmatprep.subr.bf16.mxu0 0
  %5483 = vmatpush1.bf16.msra.mxu0 %v5051
  %5484 = vmatprep.subr.bf16.mxu0 0
  %5485 = vmatpush1.bf16.msra.mxu0 %v5052
  %5486 = vmatprep.subr.bf16.mxu0 0
  %5487 = vmatpush1.bf16.msra.mxu0 %v5053
  %5488 = vmatprep.subr.bf16.mxu0 0
  %5489 = vmatpush1.bf16.msra.mxu0 %v5054
  %5490 = vmatprep.subr.bf16.mxu0 0
  %5491 = vmatpush1.bf16.msra.mxu0 %v5055
  %5492 = vmatprep.subr.bf16.mxu0 0
  %5493 = vmatpush1.bf16.msra.mxu0 %v5056
  %5494 = vmatprep.subr.bf16.mxu0 0
  %5495 = vmatpush1.bf16.msra.mxu0 %v5057
  %5496 = vmatprep.subr.bf16.mxu0 0
  %5497 = vmatpush1.bf16.msra.mxu0 %v5058
  %5498 = vmatprep.subr.bf16.mxu0 0
  %5499 = vmatpush1.bf16.msra.mxu0 %v5059
  %5500 = vmatprep.subr.bf16.mxu0 0
  %5501 = vmatpush1.bf16.msra.mxu0 %v5060
  %5502 = vmatprep.subr.bf16.mxu0 0
  %5503 = vmatpush1.bf16.msra.mxu0 %v5061
  %5504 = vmatprep.subr.bf16.mxu0 0
  %5505 = vmatpush1.bf16.msra.mxu0 %v5062
  %5506 = vmatprep.subr.bf16.mxu0 0
  %5507 = vmatpush1.bf16.msra.mxu0 %v5063
  %5508 = vmatprep.subr.bf16.mxu0 0
  %5509 = vmatpush1.bf16.msra.mxu0 %v5064
  %5510 = vmatprep.subr.bf16.mxu0 0
  %5511 = vmatpush1.bf16.msra.mxu0 %v5065
  %5512 = vmatprep.subr.bf16.mxu0 0
  %5513 = vmatpush1.bf16.msra.mxu0 %v5066
  %5514 = vmatprep.mubr.bf16.mxu0 %v4163
  %5515 = vmatmul.mubr.bf16.gmra.mrb[0].mxu0 %v4162
  %v5516 = vpop.f32.mrb[0].mxu0
  %v5517 = vadd.f32 %v5476, %v5516
  %v5518 = vpop.f32.mrb[0].mxu0
  %v5519 = vpop.f32.mrb[0].mxu0
  %v5520 = vadd.f32 %v5479, %v5519
  %v5521 = vpop.f32.mrb[0].mxu0
  %5522 = vdwg.mxu0
  %v5523 = vld [vmem:[%s39] sm:$0x1]
  %v5524 = vld [vmem:[%s41] sm:$0x1]
  %v5525 = vadd.f32 %v3298, %v5517
  %v5526 = vadd.f32 %v3299, %v5520
  %v5527 = vsel %vm265, %v5525, 0.0
  %5528 = vadd.xlane.f32.xlu0 %v5527
  %v5529 = vpop.xlane.xlu0 %5528
  %v5530 = vsel %vm265, %v5526, 0.0
  %5531 = vadd.xlane.f32.xlu0 %v5530
  %v5532 = vpop.xlane.xlu0 %5531
  %v5533 = vmul.f32 %v5529, %v3263
  %v5534 = vmul.f32 %v5532, %v3263
  %v5535 = vsub.f32 %v5525, %v5533
  %v5536 = vsub.f32 %v5526, %v5534
  %v5537 = vmul.f32 %v5535, %v5535
  %v5538 = vmul.f32 %v5536, %v5536
  %v5539 = vsel %vm265, %v5537, 0.0
  %5540 = vadd.xlane.f32.xlu0 %v5539
  %v5541 = vpop.xlane.xlu0 %5540
  %v5542 = vsel %vm265, %v5538, 0.0
  %5543 = vadd.xlane.f32.xlu0 %v5542
  %v5544 = vpop.xlane.xlu0 %5543
  %v5545 = vmul.f32 %v5541, %v3263
  %v5546 = vmul.f32 %v5544, %v3263
  %v5547 = vadd.f32 %v5545, 1e-05
  %v5548 = vadd.f32 %v5546, 1e-05
  %v5549 = vrsqrt.pop %v5547
  %v5550 = vrsqrt.pop %v5548
  %v5551 = vmul.f32 %v5535, %v5549
  %v5552 = vmul.f32 %v5536, %v5550
  %v5554 = vlaneseq
  %v5555 = vshrl.u32 %v5554, 7
  %v5556 = vsub.s32 0, %v5555
  %v5557 = vrot.slane %v5523, %v5556
  %v5559 = vmul.f32 %v5551, %v5557
  %v5560 = vmul.f32 %v5552, %v5557
  %v5562 = vlaneseq
  %v5563 = vshrl.u32 %v5562, 7
  %v5564 = vsub.s32 0, %v5563
  %v5565 = vrot.slane %v5524, %v5564
  %v5567 = vadd.f32 %v5559, %v5565
  %v5568 = vadd.f32 %v5560, %v5565
  %v5569 = vld [vmem:[%s43] sm:$0xff]
  %v5570 = vld [vmem:[%s43 + $0x8] sm:$0xff]
  %v5571 = vld [vmem:[%s43 + $0x10] sm:$0xff]
  %v5572 = vld [vmem:[%s43 + $0x18] sm:$0xff]
  %v5573 = vld [vmem:[%s43 + $0x20] sm:$0xff]
  %v5574 = vld [vmem:[%s43 + $0x28] sm:$0xff]
  %v5575 = vld [vmem:[%s43 + $0x30] sm:$0xff]
  %v5576 = vld [vmem:[%s43 + $0x38] sm:$0xff]
  %v5577 = vld [vmem:[%s49] sm:$0x1]
  %v5579 = vlaneseq
  %v5580 = vshrl.u32 %v5579, 7
  %v5581 = vsub.s32 0, %v5580
  %v5582 = vrot.slane %v5577, %v5581
  %v5585 = vsel %vm265, %v5567, 0
  %v5588 = vsel %vm265, %v5568, 0
  %5590 = vmatprep.subr.mxu0 0.0
  %5591 = vmatpush1.msra.mxu0 %v5569
  %5592 = vmatprep.subr.mxu0 0.0
  %5593 = vmatpush1.msra.mxu0 %v5570
  %5594 = vmatprep.subr.mxu0 0.0
  %5595 = vmatpush1.msra.mxu0 %v5571
  %5596 = vmatprep.subr.mxu0 0.0
  %5597 = vmatpush1.msra.mxu0 %v5572
  %5598 = vmatprep.subr.mxu0 0.0
  %5599 = vmatpush1.msra.mxu0 %v5573
  %5600 = vmatprep.subr.mxu0 0.0
  %5601 = vmatpush1.msra.mxu0 %v5574
  %5602 = vmatprep.subr.mxu0 0.0
  %5603 = vmatpush1.msra.mxu0 %v5575
  %5604 = vmatprep.subr.mxu0 0.0
  %5605 = vmatpush1.msra.mxu0 %v5576
  %5606 = vmatprep.subr.mxu0 0.0
  %5607 = vmatpush1.msra.mxu0 0.0
  %5608 = vmatprep.subr.mxu0 0.0
  %5609 = vmatpush1.msra.mxu0 0.0
  %5610 = vmatprep.subr.mxu0 0.0
  %5611 = vmatpush1.msra.mxu0 0.0
  %5612 = vmatprep.subr.mxu0 0.0
  %5613 = vmatpush1.msra.mxu0 0.0
  %5614 = vmatprep.subr.mxu0 0.0
  %5615 = vmatpush1.msra.mxu0 0.0
  %5616 = vmatprep.subr.mxu0 0.0
  %5617 = vmatpush1.msra.mxu0 0.0
  %5618 = vmatprep.subr.mxu0 0.0
  %5619 = vmatpush1.msra.mxu0 0.0
  %5620 = vmatprep.subr.mxu0 0.0
  %5621 = vmatpush1.msra.mxu0 0.0
  %5622 = vmatprep.subr.mxu0 0.0
  %5623 = vmatpush1.msra.mxu0 0.0
  %5624 = vmatprep.subr.mxu0 0.0
  %5625 = vmatpush1.msra.mxu0 0.0
  %5626 = vmatprep.subr.mxu0 0.0
  %5627 = vmatpush1.msra.mxu0 0.0
  %5628 = vmatprep.subr.mxu0 0.0
  %5629 = vmatpush1.msra.mxu0 0.0
  %5630 = vmatprep.subr.mxu0 0.0
  %5631 = vmatpush1.msra.mxu0 0.0
  %5632 = vmatprep.subr.mxu0 0.0
  %5633 = vmatpush1.msra.mxu0 0.0
  %5634 = vmatprep.subr.mxu0 0.0
  %5635 = vmatpush1.msra.mxu0 0.0
  %5636 = vmatprep.subr.mxu0 0.0
  %5637 = vmatpush1.msra.mxu0 0.0
  %5638 = vmatprep.subr.mxu0 0.0
  %5639 = vmatpush1.msra.mxu0 0.0
  %5640 = vmatprep.subr.mxu0 0.0
  %5641 = vmatpush1.msra.mxu0 0.0
  %5642 = vmatprep.subr.mxu0 0.0
  %5643 = vmatpush1.msra.mxu0 0.0
  %5644 = vmatprep.subr.mxu0 0.0
  %5645 = vmatpush1.msra.mxu0 0.0
  %5646 = vmatprep.subr.mxu0 0.0
  %5647 = vmatpush1.msra.mxu0 0.0
  %5648 = vmatprep.subr.mxu0 0.0
  %5649 = vmatpush1.msra.mxu0 0.0
  %5650 = vmatprep.subr.mxu0 0.0
  %5651 = vmatpush1.msra.mxu0 0.0
  %5652 = vmatprep.subr.mxu0 0.0
  %5653 = vmatpush1.msra.mxu0 0.0
  %5654 = vmatprep.mubr.f32.mxu0 0.0
  %5655 = vmatmul.mubr.f32.gmra.mrb[0].mxu0 %v5585
  %v5656 = vpop.f32.mrb[0].mxu0
  %v5657 = vadd.f32 %v5582, %v5656
  %v5658 = vpop.f32.mrb[0].mxu0
  %5659 = vmatprep.mubr.f32.mxu0 0.0
  %5660 = vmatmul.mubr.f32.gmra.mrb[0].mxu0 %v5588
  %v5661 = vpop.f32.mrb[0].mxu0
  %v5662 = vadd.f32 %v5582, %v5661
  %v5663 = vpop.f32.mrb[0].mxu0
  %5664 = vdwg.mxu0
  %v5665 = vmul.f32 %v5657, 0.25
  %v5666 = vmul.f32 %v5662, 0.25
  %v5667 = vld [vmem:[%s45] sm:$0xff]
  %v5668 = vld [vmem:[%s45 + $0x8] sm:$0xff]
  %v5669 = vld [vmem:[%s45 + $0x10] sm:$0xff]
  %v5670 = vld [vmem:[%s45 + $0x18] sm:$0xff]
  %v5671 = vld [vmem:[%s45 + $0x20] sm:$0xff]
  %v5672 = vld [vmem:[%s45 + $0x28] sm:$0xff]
  %v5673 = vld [vmem:[%s45 + $0x30] sm:$0xff]
  %v5674 = vld [vmem:[%s45 + $0x38] sm:$0xff]
  %v5675 = vld [vmem:[%s51] sm:$0x1]
  %v5677 = vlaneseq
  %v5678 = vshrl.u32 %v5677, 7
  %v5679 = vsub.s32 0, %v5678
  %v5680 = vrot.slane %v5675, %v5679
  %5682 = vmatprep.subr.mxu0 0.0
  %5683 = vmatpush1.msra.mxu0 %v5667
  %5684 = vmatprep.subr.mxu0 0.0
  %5685 = vmatpush1.msra.mxu0 %v5668
  %5686 = vmatprep.subr.mxu0 0.0
  %5687 = vmatpush1.msra.mxu0 %v5669
  %5688 = vmatprep.subr.mxu0 0.0
  %5689 = vmatpush1.msra.mxu0 %v5670
  %5690 = vmatprep.subr.mxu0 0.0
  %5691 = vmatpush1.msra.mxu0 %v5671
  %5692 = vmatprep.subr.mxu0 0.0
  %5693 = vmatpush1.msra.mxu0 %v5672
  %5694 = vmatprep.subr.mxu0 0.0
  %5695 = vmatpush1.msra.mxu0 %v5673
  %5696 = vmatprep.subr.mxu0 0.0
  %5697 = vmatpush1.msra.mxu0 %v5674
  %5698 = vmatprep.subr.mxu0 0.0
  %5699 = vmatpush1.msra.mxu0 0.0
  %5700 = vmatprep.subr.mxu0 0.0
  %5701 = vmatpush1.msra.mxu0 0.0
  %5702 = vmatprep.subr.mxu0 0.0
  %5703 = vmatpush1.msra.mxu0 0.0
  %5704 = vmatprep.subr.mxu0 0.0
  %5705 = vmatpush1.msra.mxu0 0.0
  %5706 = vmatprep.subr.mxu0 0.0
  %5707 = vmatpush1.msra.mxu0 0.0
  %5708 = vmatprep.subr.mxu0 0.0
  %5709 = vmatpush1.msra.mxu0 0.0
  %5710 = vmatprep.subr.mxu0 0.0
  %5711 = vmatpush1.msra.mxu0 0.0
  %5712 = vmatprep.subr.mxu0 0.0
  %5713 = vmatpush1.msra.mxu0 0.0
  %5714 = vmatprep.subr.mxu0 0.0
  %5715 = vmatpush1.msra.mxu0 0.0
  %5716 = vmatprep.subr.mxu0 0.0
  %5717 = vmatpush1.msra.mxu0 0.0
  %5718 = vmatprep.subr.mxu0 0.0
  %5719 = vmatpush1.msra.mxu0 0.0
  %5720 = vmatprep.subr.mxu0 0.0
  %5721 = vmatpush1.msra.mxu0 0.0
  %5722 = vmatprep.subr.mxu0 0.0
  %5723 = vmatpush1.msra.mxu0 0.0
  %5724 = vmatprep.subr.mxu0 0.0
  %5725 = vmatpush1.msra.mxu0 0.0
  %5726 = vmatprep.subr.mxu0 0.0
  %5727 = vmatpush1.msra.mxu0 0.0
  %5728 = vmatprep.subr.mxu0 0.0
  %5729 = vmatpush1.msra.mxu0 0.0
  %5730 = vmatprep.subr.mxu0 0.0
  %5731 = vmatpush1.msra.mxu0 0.0
  %5732 = vmatprep.subr.mxu0 0.0
  %5733 = vmatpush1.msra.mxu0 0.0
  %5734 = vmatprep.subr.mxu0 0.0
  %5735 = vmatpush1.msra.mxu0 0.0
  %5736 = vmatprep.subr.mxu0 0.0
  %5737 = vmatpush1.msra.mxu0 0.0
  %5738 = vmatprep.subr.mxu0 0.0
  %5739 = vmatpush1.msra.mxu0 0.0
  %5740 = vmatprep.subr.mxu0 0.0
  %5741 = vmatpush1.msra.mxu0 0.0
  %5742 = vmatprep.subr.mxu0 0.0
  %5743 = vmatpush1.msra.mxu0 0.0
  %5744 = vmatprep.subr.mxu0 0.0
  %5745 = vmatpush1.msra.mxu0 0.0
  %5746 = vmatprep.mubr.f32.mxu0 0.0
  %5747 = vmatmul.mubr.f32.gmra.mrb[0].mxu0 %v5585
  %v5748 = vpop.f32.mrb[0].mxu0
  %v5749 = vadd.f32 %v5680, %v5748
  %v5750 = vpop.f32.mrb[0].mxu0
  %5751 = vmatprep.mubr.f32.mxu0 0.0
  %5752 = vmatmul.mubr.f32.gmra.mrb[0].mxu0 %v5588
  %v5753 = vpop.f32.mrb[0].mxu0
  %v5754 = vadd.f32 %v5680, %v5753
  %v5755 = vpop.f32.mrb[0].mxu0
  %5756 = vdwg.mxu0
  %v5757 = vld [vmem:[%s47] sm:$0xff]
  %v5758 = vld [vmem:[%s47 + $0x8] sm:$0xff]
  %v5759 = vld [vmem:[%s47 + $0x10] sm:$0xff]
  %v5760 = vld [vmem:[%s47 + $0x18] sm:$0xff]
  %v5761 = vld [vmem:[%s47 + $0x20] sm:$0xff]
  %v5762 = vld [vmem:[%s47 + $0x28] sm:$0xff]
  %v5763 = vld [vmem:[%s47 + $0x30] sm:$0xff]
  %v5764 = vld [vmem:[%s47 + $0x38] sm:$0xff]
  %v5765 = vld [vmem:[%s53] sm:$0x1]
  %v5767 = vlaneseq
  %v5768 = vshrl.u32 %v5767, 7
  %v5769 = vsub.s32 0, %v5768
  %v5770 = vrot.slane %v5765, %v5769
  %5772 = vmatprep.subr.mxu0 0.0
  %5773 = vmatpush1.msra.mxu0 %v5757
  %5774 = vmatprep.subr.mxu0 0.0
  %5775 = vmatpush1.msra.mxu0 %v5758
  %5776 = vmatprep.subr.mxu0 0.0
  %5777 = vmatpush1.msra.mxu0 %v5759
  %5778 = vmatprep.subr.mxu0 0.0
  %5779 = vmatpush1.msra.mxu0 %v5760
  %5780 = vmatprep.subr.mxu0 0.0
  %5781 = vmatpush1.msra.mxu0 %v5761
  %5782 = vmatprep.subr.mxu0 0.0
  %5783 = vmatpush1.msra.mxu0 %v5762
  %5784 = vmatprep.subr.mxu0 0.0
  %5785 = vmatpush1.msra.mxu0 %v5763
  %5786 = vmatprep.subr.mxu0 0.0
  %5787 = vmatpush1.msra.mxu0 %v5764
  %5788 = vmatprep.subr.mxu0 0.0
  %5789 = vmatpush1.msra.mxu0 0.0
  %5790 = vmatprep.subr.mxu0 0.0
  %5791 = vmatpush1.msra.mxu0 0.0
  %5792 = vmatprep.subr.mxu0 0.0
  %5793 = vmatpush1.msra.mxu0 0.0
  %5794 = vmatprep.subr.mxu0 0.0
  %5795 = vmatpush1.msra.mxu0 0.0
  %5796 = vmatprep.subr.mxu0 0.0
  %5797 = vmatpush1.msra.mxu0 0.0
  %5798 = vmatprep.subr.mxu0 0.0
  %5799 = vmatpush1.msra.mxu0 0.0
  %5800 = vmatprep.subr.mxu0 0.0
  %5801 = vmatpush1.msra.mxu0 0.0
  %5802 = vmatprep.subr.mxu0 0.0
  %5803 = vmatpush1.msra.mxu0 0.0
  %5804 = vmatprep.subr.mxu0 0.0
  %5805 = vmatpush1.msra.mxu0 0.0
  %5806 = vmatprep.subr.mxu0 0.0
  %5807 = vmatpush1.msra.mxu0 0.0
  %5808 = vmatprep.subr.mxu0 0.0
  %5809 = vmatpush1.msra.mxu0 0.0
  %5810 = vmatprep.subr.mxu0 0.0
  %5811 = vmatpush1.msra.mxu0 0.0
  %5812 = vmatprep.subr.mxu0 0.0
  %5813 = vmatpush1.msra.mxu0 0.0
  %5814 = vmatprep.subr.mxu0 0.0
  %5815 = vmatpush1.msra.mxu0 0.0
  %5816 = vmatprep.subr.mxu0 0.0
  %5817 = vmatpush1.msra.mxu0 0.0
  %5818 = vmatprep.subr.mxu0 0.0
  %5819 = vmatpush1.msra.mxu0 0.0
  %5820 = vmatprep.subr.mxu0 0.0
  %5821 = vmatpush1.msra.mxu0 0.0
  %5822 = vmatprep.subr.mxu0 0.0
  %5823 = vmatpush1.msra.mxu0 0.0
  %5824 = vmatprep.subr.mxu0 0.0
  %5825 = vmatpush1.msra.mxu0 0.0
  %5826 = vmatprep.subr.mxu0 0.0
  %5827 = vmatpush1.msra.mxu0 0.0
  %5828 = vmatprep.subr.mxu0 0.0
  %5829 = vmatpush1.msra.mxu0 0.0
  %5830 = vmatprep.subr.mxu0 0.0
  %5831 = vmatpush1.msra.mxu0 0.0
  %5832 = vmatprep.subr.mxu0 0.0
  %5833 = vmatpush1.msra.mxu0 0.0
  %5834 = vmatprep.subr.mxu0 0.0
  %5835 = vmatpush1.msra.mxu0 0.0
  %5836 = vmatprep.mubr.f32.mxu0 0.0
  %5837 = vmatmul.mubr.f32.gmra.mrb[0].mxu0 %v5585
  %v5838 = vpop.f32.mrb[0].mxu0
  %v5839 = vadd.f32 %v5770, %v5838
  %v5840 = vpop.f32.mrb[0].mxu0
  %5841 = vmatprep.mubr.f32.mxu0 0.0
  %5842 = vmatmul.mubr.f32.gmra.mrb[0].mxu0 %v5588
  %v5843 = vpop.f32.mrb[0].mxu0
  %v5844 = vadd.f32 %v5770, %v5843
  %v5845 = vpop.f32.mrb[0].mxu0
  %5846 = vdwg.mxu0
  %s5847 = scalar_lea.vmem %s43, 64
  %v5848 = vld [vmem:[%s5847] sm:$0xff]
  %v5849 = vld [vmem:[%s5847 + $0x8] sm:$0xff]
  %v5850 = vld [vmem:[%s5847 + $0x10] sm:$0xff]
  %v5851 = vld [vmem:[%s5847 + $0x18] sm:$0xff]
  %v5852 = vld [vmem:[%s5847 + $0x20] sm:$0xff]
  %v5853 = vld [vmem:[%s5847 + $0x28] sm:$0xff]
  %v5854 = vld [vmem:[%s5847 + $0x30] sm:$0xff]
  %v5855 = vld [vmem:[%s5847 + $0x38] sm:$0xff]
  %s5856 = scalar_lea.vmem %s49, 1
  %v5857 = vld [vmem:[%s5856] sm:$0x1]
  %v5859 = vlaneseq
  %v5860 = vshrl.u32 %v5859, 7
  %v5861 = vsub.s32 0, %v5860
  %v5862 = vrot.slane %v5857, %v5861
  %5864 = vmatprep.subr.mxu0 0.0
  %5865 = vmatpush1.msra.mxu0 %v5848
  %5866 = vmatprep.subr.mxu0 0.0
  %5867 = vmatpush1.msra.mxu0 %v5849
  %5868 = vmatprep.subr.mxu0 0.0
  %5869 = vmatpush1.msra.mxu0 %v5850
  %5870 = vmatprep.subr.mxu0 0.0
  %5871 = vmatpush1.msra.mxu0 %v5851
  %5872 = vmatprep.subr.mxu0 0.0
  %5873 = vmatpush1.msra.mxu0 %v5852
  %5874 = vmatprep.subr.mxu0 0.0
  %5875 = vmatpush1.msra.mxu0 %v5853
  %5876 = vmatprep.subr.mxu0 0.0
  %5877 = vmatpush1.msra.mxu0 %v5854
  %5878 = vmatprep.subr.mxu0 0.0
  %5879 = vmatpush1.msra.mxu0 %v5855
  %5880 = vmatprep.subr.mxu0 0.0
  %5881 = vmatpush1.msra.mxu0 0.0
  %5882 = vmatprep.subr.mxu0 0.0
  %5883 = vmatpush1.msra.mxu0 0.0
  %5884 = vmatprep.subr.mxu0 0.0
  %5885 = vmatpush1.msra.mxu0 0.0
  %5886 = vmatprep.subr.mxu0 0.0
  %5887 = vmatpush1.msra.mxu0 0.0
  %5888 = vmatprep.subr.mxu0 0.0
  %5889 = vmatpush1.msra.mxu0 0.0
  %5890 = vmatprep.subr.mxu0 0.0
  %5891 = vmatpush1.msra.mxu0 0.0
  %5892 = vmatprep.subr.mxu0 0.0
  %5893 = vmatpush1.msra.mxu0 0.0
  %5894 = vmatprep.subr.mxu0 0.0
  %5895 = vmatpush1.msra.mxu0 0.0
  %5896 = vmatprep.subr.mxu0 0.0
  %5897 = vmatpush1.msra.mxu0 0.0
  %5898 = vmatprep.subr.mxu0 0.0
  %5899 = vmatpush1.msra.mxu0 0.0
  %5900 = vmatprep.subr.mxu0 0.0
  %5901 = vmatpush1.msra.mxu0 0.0
  %5902 = vmatprep.subr.mxu0 0.0
  %5903 = vmatpush1.msra.mxu0 0.0
  %5904 = vmatprep.subr.mxu0 0.0
  %5905 = vmatpush1.msra.mxu0 0.0
  %5906 = vmatprep.subr.mxu0 0.0
  %5907 = vmatpush1.msra.mxu0 0.0
  %5908 = vmatprep.subr.mxu0 0.0
  %5909 = vmatpush1.msra.mxu0 0.0
  %5910 = vmatprep.subr.mxu0 0.0
  %5911 = vmatpush1.msra.mxu0 0.0
  %5912 = vmatprep.subr.mxu0 0.0
  %5913 = vmatpush1.msra.mxu0 0.0
  %5914 = vmatprep.subr.mxu0 0.0
  %5915 = vmatpush1.msra.mxu0 0.0
  %5916 = vmatprep.subr.mxu0 0.0
  %5917 = vmatpush1.msra.mxu0 0.0
  %5918 = vmatprep.subr.mxu0 0.0
  %5919 = vmatpush1.msra.mxu0 0.0
  %5920 = vmatprep.subr.mxu0 0.0
  %5921 = vmatpush1.msra.mxu0 0.0
  %5922 = vmatprep.subr.mxu0 0.0
  %5923 = vmatpush1.msra.mxu0 0.0
  %5924 = vmatprep.subr.mxu0 0.0
  %5925 = vmatpush1.msra.mxu0 0.0
  %5926 = vmatprep.subr.mxu0 0.0
  %5927 = vmatpush1.msra.mxu0 0.0
  %5928 = vmatprep.mubr.f32.mxu0 0.0
  %5929 = vmatmul.mubr.f32.gmra.mrb[0].mxu0 %v5585
  %v5930 = vpop.f32.mrb[0].mxu0
  %v5931 = vadd.f32 %v5862, %v5930
  %v5932 = vpop.f32.mrb[0].mxu0
  %5933 = vmatprep.mubr.f32.mxu0 0.0
  %5934 = vmatmul.mubr.f32.gmra.mrb[0].mxu0 %v5588
  %v5935 = vpop.f32.mrb[0].mxu0
  %v5936 = vadd.f32 %v5862, %v5935
  %v5937 = vpop.f32.mrb[0].mxu0
  %5938 = vdwg.mxu0
  %v5939 = vmul.f32 %v5931, 0.25
  %v5940 = vmul.f32 %v5936, 0.25
  %s5941 = scalar_lea.vmem %s45, 64
  %v5942 = vld [vmem:[%s5941] sm:$0xff]
  %v5943 = vld [vmem:[%s5941 + $0x8] sm:$0xff]
  %v5944 = vld [vmem:[%s5941 + $0x10] sm:$0xff]
  %v5945 = vld [vmem:[%s5941 + $0x18] sm:$0xff]
  %v5946 = vld [vmem:[%s5941 + $0x20] sm:$0xff]
  %v5947 = vld [vmem:[%s5941 + $0x28] sm:$0xff]
  %v5948 = vld [vmem:[%s5941 + $0x30] sm:$0xff]
  %v5949 = vld [vmem:[%s5941 + $0x38] sm:$0xff]
  %s5950 = scalar_lea.vmem %s51, 1
  %v5951 = vld [vmem:[%s5950] sm:$0x1]
  %v5953 = vlaneseq
  %v5954 = vshrl.u32 %v5953, 7
  %v5955 = vsub.s32 0, %v5954
  %v5956 = vrot.slane %v5951, %v5955
  %5958 = vmatprep.subr.mxu0 0.0
  %5959 = vmatpush1.msra.mxu0 %v5942
  %5960 = vmatprep.subr.mxu0 0.0
  %5961 = vmatpush1.msra.mxu0 %v5943
  %5962 = vmatprep.subr.mxu0 0.0
  %5963 = vmatpush1.msra.mxu0 %v5944
  %5964 = vmatprep.subr.mxu0 0.0
  %5965 = vmatpush1.msra.mxu0 %v5945
  %5966 = vmatprep.subr.mxu0 0.0
  %5967 = vmatpush1.msra.mxu0 %v5946
  %5968 = vmatprep.subr.mxu0 0.0
  %5969 = vmatpush1.msra.mxu0 %v5947
  %5970 = vmatprep.subr.mxu0 0.0
  %5971 = vmatpush1.msra.mxu0 %v5948
  %5972 = vmatprep.subr.mxu0 0.0
  %5973 = vmatpush1.msra.mxu0 %v5949
  %5974 = vmatprep.subr.mxu0 0.0
  %5975 = vmatpush1.msra.mxu0 0.0
  %5976 = vmatprep.subr.mxu0 0.0
  %5977 = vmatpush1.msra.mxu0 0.0
  %5978 = vmatprep.subr.mxu0 0.0
  %5979 = vmatpush1.msra.mxu0 0.0
  %5980 = vmatprep.subr.mxu0 0.0
  %5981 = vmatpush1.msra.mxu0 0.0
  %5982 = vmatprep.subr.mxu0 0.0
  %5983 = vmatpush1.msra.mxu0 0.0
  %5984 = vmatprep.subr.mxu0 0.0
  %5985 = vmatpush1.msra.mxu0 0.0
  %5986 = vmatprep.subr.mxu0 0.0
  %5987 = vmatpush1.msra.mxu0 0.0
  %5988 = vmatprep.subr.mxu0 0.0
  %5989 = vmatpush1.msra.mxu0 0.0
  %5990 = vmatprep.subr.mxu0 0.0
  %5991 = vmatpush1.msra.mxu0 0.0
  %5992 = vmatprep.subr.mxu0 0.0
  %5993 = vmatpush1.msra.mxu0 0.0
  %5994 = vmatprep.subr.mxu0 0.0
  %5995 = vmatpush1.msra.mxu0 0.0
  %5996 = vmatprep.subr.mxu0 0.0
  %5997 = vmatpush1.msra.mxu0 0.0
  %5998 = vmatprep.subr.mxu0 0.0
  %5999 = vmatpush1.msra.mxu0 0.0
  %6000 = vmatprep.subr.mxu0 0.0
  %6001 = vmatpush1.msra.mxu0 0.0
  %6002 = vmatprep.subr.mxu0 0.0
  %6003 = vmatpush1.msra.mxu0 0.0
  %6004 = vmatprep.subr.mxu0 0.0
  %6005 = vmatpush1.msra.mxu0 0.0
  %6006 = vmatprep.subr.mxu0 0.0
  %6007 = vmatpush1.msra.mxu0 0.0
  %6008 = vmatprep.subr.mxu0 0.0
  %6009 = vmatpush1.msra.mxu0 0.0
  %6010 = vmatprep.subr.mxu0 0.0
  %6011 = vmatpush1.msra.mxu0 0.0
  %6012 = vmatprep.subr.mxu0 0.0
  %6013 = vmatpush1.msra.mxu0 0.0
  %6014 = vmatprep.subr.mxu0 0.0
  %6015 = vmatpush1.msra.mxu0 0.0
  %6016 = vmatprep.subr.mxu0 0.0
  %6017 = vmatpush1.msra.mxu0 0.0
  %6018 = vmatprep.subr.mxu0 0.0
  %6019 = vmatpush1.msra.mxu0 0.0
  %6020 = vmatprep.subr.mxu0 0.0
  %6021 = vmatpush1.msra.mxu0 0.0
  %6022 = vmatprep.mubr.f32.mxu0 0.0
  %6023 = vmatmul.mubr.f32.gmra.mrb[0].mxu0 %v5585
  %v6024 = vpop.f32.mrb[0].mxu0
  %v6025 = vadd.f32 %v5956, %v6024
  %v6026 = vpop.f32.mrb[0].mxu0
  %6027 = vmatprep.mubr.f32.mxu0 0.0
  %6028 = vmatmul.mubr.f32.gmra.mrb[0].mxu0 %v5588
  %v6029 = vpop.f32.mrb[0].mxu0
  %v6030 = vadd.f32 %v5956, %v6029
  %v6031 = vpop.f32.mrb[0].mxu0
  %6032 = vdwg.mxu0
  %s6033 = scalar_lea.vmem %s47, 64
  %v6034 = vld [vmem:[%s6033] sm:$0xff]
  %v6035 = vld [vmem:[%s6033 + $0x8] sm:$0xff]
  %v6036 = vld [vmem:[%s6033 + $0x10] sm:$0xff]
  %v6037 = vld [vmem:[%s6033 + $0x18] sm:$0xff]
  %v6038 = vld [vmem:[%s6033 + $0x20] sm:$0xff]
  %v6039 = vld [vmem:[%s6033 + $0x28] sm:$0xff]
  %v6040 = vld [vmem:[%s6033 + $0x30] sm:$0xff]
  %v6041 = vld [vmem:[%s6033 + $0x38] sm:$0xff]
  %s6042 = scalar_lea.vmem %s53, 1
  %v6043 = vld [vmem:[%s6042] sm:$0x1]
  %v6045 = vlaneseq
  %v6046 = vshrl.u32 %v6045, 7
  %v6047 = vsub.s32 0, %v6046
  %v6048 = vrot.slane %v6043, %v6047
  %6050 = vmatprep.subr.mxu0 0.0
  %6051 = vmatpush1.msra.mxu0 %v6034
  %6052 = vmatprep.subr.mxu0 0.0
  %6053 = vmatpush1.msra.mxu0 %v6035
  %6054 = vmatprep.subr.mxu0 0.0
  %6055 = vmatpush1.msra.mxu0 %v6036
  %6056 = vmatprep.subr.mxu0 0.0
  %6057 = vmatpush1.msra.mxu0 %v6037
  %6058 = vmatprep.subr.mxu0 0.0
  %6059 = vmatpush1.msra.mxu0 %v6038
  %6060 = vmatprep.subr.mxu0 0.0
  %6061 = vmatpush1.msra.mxu0 %v6039
  %6062 = vmatprep.subr.mxu0 0.0
  %6063 = vmatpush1.msra.mxu0 %v6040
  %6064 = vmatprep.subr.mxu0 0.0
  %6065 = vmatpush1.msra.mxu0 %v6041
  %6066 = vmatprep.subr.mxu0 0.0
  %6067 = vmatpush1.msra.mxu0 0.0
  %6068 = vmatprep.subr.mxu0 0.0
  %6069 = vmatpush1.msra.mxu0 0.0
  %6070 = vmatprep.subr.mxu0 0.0
  %6071 = vmatpush1.msra.mxu0 0.0
  %6072 = vmatprep.subr.mxu0 0.0
  %6073 = vmatpush1.msra.mxu0 0.0
  %6074 = vmatprep.subr.mxu0 0.0
  %6075 = vmatpush1.msra.mxu0 0.0
  %6076 = vmatprep.subr.mxu0 0.0
  %6077 = vmatpush1.msra.mxu0 0.0
  %6078 = vmatprep.subr.mxu0 0.0
  %6079 = vmatpush1.msra.mxu0 0.0
  %6080 = vmatprep.subr.mxu0 0.0
  %6081 = vmatpush1.msra.mxu0 0.0
  %6082 = vmatprep.subr.mxu0 0.0
  %6083 = vmatpush1.msra.mxu0 0.0
  %6084 = vmatprep.subr.mxu0 0.0
  %6085 = vmatpush1.msra.mxu0 0.0
  %6086 = vmatprep.subr.mxu0 0.0
  %6087 = vmatpush1.msra.mxu0 0.0
  %6088 = vmatprep.subr.mxu0 0.0
  %6089 = vmatpush1.msra.mxu0 0.0
  %6090 = vmatprep.subr.mxu0 0.0
  %6091 = vmatpush1.msra.mxu0 0.0
  %6092 = vmatprep.subr.mxu0 0.0
  %6093 = vmatpush1.msra.mxu0 0.0
  %6094 = vmatprep.subr.mxu0 0.0
  %6095 = vmatpush1.msra.mxu0 0.0
  %6096 = vmatprep.subr.mxu0 0.0
  %6097 = vmatpush1.msra.mxu0 0.0
  %6098 = vmatprep.subr.mxu0 0.0
  %6099 = vmatpush1.msra.mxu0 0.0
  %6100 = vmatprep.subr.mxu0 0.0
  %6101 = vmatpush1.msra.mxu0 0.0
  %6102 = vmatprep.subr.mxu0 0.0
  %6103 = vmatpush1.msra.mxu0 0.0
  %6104 = vmatprep.subr.mxu0 0.0
  %6105 = vmatpush1.msra.mxu0 0.0
  %6106 = vmatprep.subr.mxu0 0.0
  %6107 = vmatpush1.msra.mxu0 0.0
  %6108 = vmatprep.subr.mxu0 0.0
  %6109 = vmatpush1.msra.mxu0 0.0
  %6110 = vmatprep.subr.mxu0 0.0
  %6111 = vmatpush1.msra.mxu0 0.0
  %6112 = vmatprep.subr.mxu0 0.0
  %6113 = vmatpush1.msra.mxu0 0.0
  %6114 = vmatprep.mubr.f32.mxu0 0.0
  %6115 = vmatmul.mubr.f32.gmra.mrb[0].mxu0 %v5585
  %v6116 = vpop.f32.mrb[0].mxu0
  %v6117 = vadd.f32 %v6048, %v6116
  %v6118 = vpop.f32.mrb[0].mxu0
  %6119 = vmatprep.mubr.f32.mxu0 0.0
  %6120 = vmatmul.mubr.f32.gmra.mrb[0].mxu0 %v5588
  %v6121 = vpop.f32.mrb[0].mxu0
  %v6122 = vadd.f32 %v6048, %v6121
  %v6123 = vpop.f32.mrb[0].mxu0
  %6124 = vdwg.mxu0
  %s6125 = scalar_lea.vmem %s43, 128
  %v6126 = vld [vmem:[%s6125] sm:$0xff]
  %v6127 = vld [vmem:[%s6125 + $0x8] sm:$0xff]
  %v6128 = vld [vmem:[%s6125 + $0x10] sm:$0xff]
  %v6129 = vld [vmem:[%s6125 + $0x18] sm:$0xff]
  %v6130 = vld [vmem:[%s6125 + $0x20] sm:$0xff]
  %v6131 = vld [vmem:[%s6125 + $0x28] sm:$0xff]
  %v6132 = vld [vmem:[%s6125 + $0x30] sm:$0xff]
  %v6133 = vld [vmem:[%s6125 + $0x38] sm:$0xff]
  %s6134 = scalar_lea.vmem %s49, 2
  %v6135 = vld [vmem:[%s6134] sm:$0x1]
  %v6137 = vlaneseq
  %v6138 = vshrl.u32 %v6137, 7
  %v6139 = vsub.s32 0, %v6138
  %v6140 = vrot.slane %v6135, %v6139
  %6142 = vmatprep.subr.mxu0 0.0
  %6143 = vmatpush1.msra.mxu0 %v6126
  %6144 = vmatprep.subr.mxu0 0.0
  %6145 = vmatpush1.msra.mxu0 %v6127
  %6146 = vmatprep.subr.mxu0 0.0
  %6147 = vmatpush1.msra.mxu0 %v6128
  %6148 = vmatprep.subr.mxu0 0.0
  %6149 = vmatpush1.msra.mxu0 %v6129
  %6150 = vmatprep.subr.mxu0 0.0
  %6151 = vmatpush1.msra.mxu0 %v6130
  %6152 = vmatprep.subr.mxu0 0.0
  %6153 = vmatpush1.msra.mxu0 %v6131
  %6154 = vmatprep.subr.mxu0 0.0
  %6155 = vmatpush1.msra.mxu0 %v6132
  %6156 = vmatprep.subr.mxu0 0.0
  %6157 = vmatpush1.msra.mxu0 %v6133
  %6158 = vmatprep.subr.mxu0 0.0
  %6159 = vmatpush1.msra.mxu0 0.0
  %6160 = vmatprep.subr.mxu0 0.0
  %6161 = vmatpush1.msra.mxu0 0.0
  %6162 = vmatprep.subr.mxu0 0.0
  %6163 = vmatpush1.msra.mxu0 0.0
  %6164 = vmatprep.subr.mxu0 0.0
  %6165 = vmatpush1.msra.mxu0 0.0
  %6166 = vmatprep.subr.mxu0 0.0
  %6167 = vmatpush1.msra.mxu0 0.0
  %6168 = vmatprep.subr.mxu0 0.0
  %6169 = vmatpush1.msra.mxu0 0.0
  %6170 = vmatprep.subr.mxu0 0.0
  %6171 = vmatpush1.msra.mxu0 0.0
  %6172 = vmatprep.subr.mxu0 0.0
  %6173 = vmatpush1.msra.mxu0 0.0
  %6174 = vmatprep.subr.mxu0 0.0
  %6175 = vmatpush1.msra.mxu0 0.0
  %6176 = vmatprep.subr.mxu0 0.0
  %6177 = vmatpush1.msra.mxu0 0.0
  %6178 = vmatprep.subr.mxu0 0.0
  %6179 = vmatpush1.msra.mxu0 0.0
  %6180 = vmatprep.subr.mxu0 0.0
  %6181 = vmatpush1.msra.mxu0 0.0
  %6182 = vmatprep.subr.mxu0 0.0
  %6183 = vmatpush1.msra.mxu0 0.0
  %6184 = vmatprep.subr.mxu0 0.0
  %6185 = vmatpush1.msra.mxu0 0.0
  %6186 = vmatprep.subr.mxu0 0.0
  %6187 = vmatpush1.msra.mxu0 0.0
  %6188 = vmatprep.subr.mxu0 0.0
  %6189 = vmatpush1.msra.mxu0 0.0
  %6190 = vmatprep.subr.mxu0 0.0
  %6191 = vmatpush1.msra.mxu0 0.0
  %6192 = vmatprep.subr.mxu0 0.0
  %6193 = vmatpush1.msra.mxu0 0.0
  %6194 = vmatprep.subr.mxu0 0.0
  %6195 = vmatpush1.msra.mxu0 0.0
  %6196 = vmatprep.subr.mxu0 0.0
  %6197 = vmatpush1.msra.mxu0 0.0
  %6198 = vmatprep.subr.mxu0 0.0
  %6199 = vmatpush1.msra.mxu0 0.0
  %6200 = vmatprep.subr.mxu0 0.0
  %6201 = vmatpush1.msra.mxu0 0.0
  %6202 = vmatprep.subr.mxu0 0.0
  %6203 = vmatpush1.msra.mxu0 0.0
  %6204 = vmatprep.subr.mxu0 0.0
  %6205 = vmatpush1.msra.mxu0 0.0
  %6206 = vmatprep.mubr.f32.mxu0 0.0
  %6207 = vmatmul.mubr.f32.gmra.mrb[0].mxu0 %v5585
  %v6208 = vpop.f32.mrb[0].mxu0
  %v6209 = vadd.f32 %v6140, %v6208
  %v6210 = vpop.f32.mrb[0].mxu0
  %6211 = vmatprep.mubr.f32.mxu0 0.0
  %6212 = vmatmul.mubr.f32.gmra.mrb[0].mxu0 %v5588
  %v6213 = vpop.f32.mrb[0].mxu0
  %v6214 = vadd.f32 %v6140, %v6213
  %v6215 = vpop.f32.mrb[0].mxu0
  %6216 = vdwg.mxu0
  %v6217 = vmul.f32 %v6209, 0.25
  %v6218 = vmul.f32 %v6214, 0.25
  %s6219 = scalar_lea.vmem %s45, 128
  %v6220 = vld [vmem:[%s6219] sm:$0xff]
  %v6221 = vld [vmem:[%s6219 + $0x8] sm:$0xff]
  %v6222 = vld [vmem:[%s6219 + $0x10] sm:$0xff]
  %v6223 = vld [vmem:[%s6219 + $0x18] sm:$0xff]
  %v6224 = vld [vmem:[%s6219 + $0x20] sm:$0xff]
  %v6225 = vld [vmem:[%s6219 + $0x28] sm:$0xff]
  %v6226 = vld [vmem:[%s6219 + $0x30] sm:$0xff]
  %v6227 = vld [vmem:[%s6219 + $0x38] sm:$0xff]
  %s6228 = scalar_lea.vmem %s51, 2
  %v6229 = vld [vmem:[%s6228] sm:$0x1]
  %v6231 = vlaneseq
  %v6232 = vshrl.u32 %v6231, 7
  %v6233 = vsub.s32 0, %v6232
  %v6234 = vrot.slane %v6229, %v6233
  %6236 = vmatprep.subr.mxu0 0.0
  %6237 = vmatpush1.msra.mxu0 %v6220
  %6238 = vmatprep.subr.mxu0 0.0
  %6239 = vmatpush1.msra.mxu0 %v6221
  %6240 = vmatprep.subr.mxu0 0.0
  %6241 = vmatpush1.msra.mxu0 %v6222
  %6242 = vmatprep.subr.mxu0 0.0
  %6243 = vmatpush1.msra.mxu0 %v6223
  %6244 = vmatprep.subr.mxu0 0.0
  %6245 = vmatpush1.msra.mxu0 %v6224
  %6246 = vmatprep.subr.mxu0 0.0
  %6247 = vmatpush1.msra.mxu0 %v6225
  %6248 = vmatprep.subr.mxu0 0.0
  %6249 = vmatpush1.msra.mxu0 %v6226
  %6250 = vmatprep.subr.mxu0 0.0
  %6251 = vmatpush1.msra.mxu0 %v6227
  %6252 = vmatprep.subr.mxu0 0.0
  %6253 = vmatpush1.msra.mxu0 0.0
  %6254 = vmatprep.subr.mxu0 0.0
  %6255 = vmatpush1.msra.mxu0 0.0
  %6256 = vmatprep.subr.mxu0 0.0
  %6257 = vmatpush1.msra.mxu0 0.0
  %6258 = vmatprep.subr.mxu0 0.0
  %6259 = vmatpush1.msra.mxu0 0.0
  %6260 = vmatprep.subr.mxu0 0.0
  %6261 = vmatpush1.msra.mxu0 0.0
  %6262 = vmatprep.subr.mxu0 0.0
  %6263 = vmatpush1.msra.mxu0 0.0
  %6264 = vmatprep.subr.mxu0 0.0
  %6265 = vmatpush1.msra.mxu0 0.0
  %6266 = vmatprep.subr.mxu0 0.0
  %6267 = vmatpush1.msra.mxu0 0.0
  %6268 = vmatprep.subr.mxu0 0.0
  %6269 = vmatpush1.msra.mxu0 0.0
  %6270 = vmatprep.subr.mxu0 0.0
  %6271 = vmatpush1.msra.mxu0 0.0
  %6272 = vmatprep.subr.mxu0 0.0
  %6273 = vmatpush1.msra.mxu0 0.0
  %6274 = vmatprep.subr.mxu0 0.0
  %6275 = vmatpush1.msra.mxu0 0.0
  %6276 = vmatprep.subr.mxu0 0.0
  %6277 = vmatpush1.msra.mxu0 0.0
  %6278 = vmatprep.subr.mxu0 0.0
  %6279 = vmatpush1.msra.mxu0 0.0
  %6280 = vmatprep.subr.mxu0 0.0
  %6281 = vmatpush1.msra.mxu0 0.0
  %6282 = vmatprep.subr.mxu0 0.0
  %6283 = vmatpush1.msra.mxu0 0.0
  %6284 = vmatprep.subr.mxu0 0.0
  %6285 = vmatpush1.msra.mxu0 0.0
  %6286 = vmatprep.subr.mxu0 0.0
  %6287 = vmatpush1.msra.mxu0 0.0
  %6288 = vmatprep.subr.mxu0 0.0
  %6289 = vmatpush1.msra.mxu0 0.0
  %6290 = vmatprep.subr.mxu0 0.0
  %6291 = vmatpush1.msra.mxu0 0.0
  %6292 = vmatprep.subr.mxu0 0.0
  %6293 = vmatpush1.msra.mxu0 0.0
  %6294 = vmatprep.subr.mxu0 0.0
  %6295 = vmatpush1.msra.mxu0 0.0
  %6296 = vmatprep.subr.mxu0 0.0
  %6297 = vmatpush1.msra.mxu0 0.0
  %6298 = vmatprep.subr.mxu0 0.0
  %6299 = vmatpush1.msra.mxu0 0.0
  %6300 = vmatprep.mubr.f32.mxu0 0.0
  %6301 = vmatmul.mubr.f32.gmra.mrb[0].mxu0 %v5585
  %v6302 = vpop.f32.mrb[0].mxu0
  %v6303 = vadd.f32 %v6234, %v6302
  %v6304 = vpop.f32.mrb[0].mxu0
  %6305 = vmatprep.mubr.f32.mxu0 0.0
  %6306 = vmatmul.mubr.f32.gmra.mrb[0].mxu0 %v5588
  %v6307 = vpop.f32.mrb[0].mxu0
  %v6308 = vadd.f32 %v6234, %v6307
  %v6309 = vpop.f32.mrb[0].mxu0
  %6310 = vdwg.mxu0
  %s6311 = scalar_lea.vmem %s47, 128
  %v6312 = vld [vmem:[%s6311] sm:$0xff]
  %v6313 = vld [vmem:[%s6311 + $0x8] sm:$0xff]
  %v6314 = vld [vmem:[%s6311 + $0x10] sm:$0xff]
  %v6315 = vld [vmem:[%s6311 + $0x18] sm:$0xff]
  %v6316 = vld [vmem:[%s6311 + $0x20] sm:$0xff]
  %v6317 = vld [vmem:[%s6311 + $0x28] sm:$0xff]
  %v6318 = vld [vmem:[%s6311 + $0x30] sm:$0xff]
  %v6319 = vld [vmem:[%s6311 + $0x38] sm:$0xff]
  %s6320 = scalar_lea.vmem %s53, 2
  %v6321 = vld [vmem:[%s6320] sm:$0x1]
  %v6323 = vlaneseq
  %v6324 = vshrl.u32 %v6323, 7
  %v6325 = vsub.s32 0, %v6324
  %v6326 = vrot.slane %v6321, %v6325
  %6328 = vmatprep.subr.mxu0 0.0
  %6329 = vmatpush1.msra.mxu0 %v6312
  %6330 = vmatprep.subr.mxu0 0.0
  %6331 = vmatpush1.msra.mxu0 %v6313
  %6332 = vmatprep.subr.mxu0 0.0
  %6333 = vmatpush1.msra.mxu0 %v6314
  %6334 = vmatprep.subr.mxu0 0.0
  %6335 = vmatpush1.msra.mxu0 %v6315
  %6336 = vmatprep.subr.mxu0 0.0
  %6337 = vmatpush1.msra.mxu0 %v6316
  %6338 = vmatprep.subr.mxu0 0.0
  %6339 = vmatpush1.msra.mxu0 %v6317
  %6340 = vmatprep.subr.mxu0 0.0
  %6341 = vmatpush1.msra.mxu0 %v6318
  %6342 = vmatprep.subr.mxu0 0.0
  %6343 = vmatpush1.msra.mxu0 %v6319
  %6344 = vmatprep.subr.mxu0 0.0
  %6345 = vmatpush1.msra.mxu0 0.0
  %6346 = vmatprep.subr.mxu0 0.0
  %6347 = vmatpush1.msra.mxu0 0.0
  %6348 = vmatprep.subr.mxu0 0.0
  %6349 = vmatpush1.msra.mxu0 0.0
  %6350 = vmatprep.subr.mxu0 0.0
  %6351 = vmatpush1.msra.mxu0 0.0
  %6352 = vmatprep.subr.mxu0 0.0
  %6353 = vmatpush1.msra.mxu0 0.0
  %6354 = vmatprep.subr.mxu0 0.0
  %6355 = vmatpush1.msra.mxu0 0.0
  %6356 = vmatprep.subr.mxu0 0.0
  %6357 = vmatpush1.msra.mxu0 0.0
  %6358 = vmatprep.subr.mxu0 0.0
  %6359 = vmatpush1.msra.mxu0 0.0
  %6360 = vmatprep.subr.mxu0 0.0
  %6361 = vmatpush1.msra.mxu0 0.0
  %6362 = vmatprep.subr.mxu0 0.0
  %6363 = vmatpush1.msra.mxu0 0.0
  %6364 = vmatprep.subr.mxu0 0.0
  %6365 = vmatpush1.msra.mxu0 0.0
  %6366 = vmatprep.subr.mxu0 0.0
  %6367 = vmatpush1.msra.mxu0 0.0
  %6368 = vmatprep.subr.mxu0 0.0
  %6369 = vmatpush1.msra.mxu0 0.0
  %6370 = vmatprep.subr.mxu0 0.0
  %6371 = vmatpush1.msra.mxu0 0.0
  %6372 = vmatprep.subr.mxu0 0.0
  %6373 = vmatpush1.msra.mxu0 0.0
  %6374 = vmatprep.subr.mxu0 0.0
  %6375 = vmatpush1.msra.mxu0 0.0
  %6376 = vmatprep.subr.mxu0 0.0
  %6377 = vmatpush1.msra.mxu0 0.0
  %6378 = vmatprep.subr.mxu0 0.0
  %6379 = vmatpush1.msra.mxu0 0.0
  %6380 = vmatprep.subr.mxu0 0.0
  %6381 = vmatpush1.msra.mxu0 0.0
  %6382 = vmatprep.subr.mxu0 0.0
  %6383 = vmatpush1.msra.mxu0 0.0
  %6384 = vmatprep.subr.mxu0 0.0
  %6385 = vmatpush1.msra.mxu0 0.0
  %6386 = vmatprep.subr.mxu0 0.0
  %6387 = vmatpush1.msra.mxu0 0.0
  %6388 = vmatprep.subr.mxu0 0.0
  %6389 = vmatpush1.msra.mxu0 0.0
  %6390 = vmatprep.subr.mxu0 0.0
  %6391 = vmatpush1.msra.mxu0 0.0
  %6392 = vmatprep.mubr.f32.mxu0 0.0
  %6393 = vmatmul.mubr.f32.gmra.mrb[0].mxu0 %v5585
  %v6394 = vpop.f32.mrb[0].mxu0
  %v6395 = vadd.f32 %v6326, %v6394
  %v6396 = vpop.f32.mrb[0].mxu0
  %6397 = vmatprep.mubr.f32.mxu0 0.0
  %6398 = vmatmul.mubr.f32.gmra.mrb[0].mxu0 %v5588
  %v6399 = vpop.f32.mrb[0].mxu0
  %v6400 = vadd.f32 %v6326, %v6399
  %v6401 = vpop.f32.mrb[0].mxu0
  %6402 = vdwg.mxu0
  %s6403 = scalar_lea.vmem %s43, 192
  %v6404 = vld [vmem:[%s6403] sm:$0xff]
  %v6405 = vld [vmem:[%s6403 + $0x8] sm:$0xff]
  %v6406 = vld [vmem:[%s6403 + $0x10] sm:$0xff]
  %v6407 = vld [vmem:[%s6403 + $0x18] sm:$0xff]
  %v6408 = vld [vmem:[%s6403 + $0x20] sm:$0xff]
  %v6409 = vld [vmem:[%s6403 + $0x28] sm:$0xff]
  %v6410 = vld [vmem:[%s6403 + $0x30] sm:$0xff]
  %v6411 = vld [vmem:[%s6403 + $0x38] sm:$0xff]
  %s6412 = scalar_lea.vmem %s49, 3
  %v6413 = vld [vmem:[%s6412] sm:$0x1]
  %v6415 = vlaneseq
  %v6416 = vshrl.u32 %v6415, 7
  %v6417 = vsub.s32 0, %v6416
  %v6418 = vrot.slane %v6413, %v6417
  %6420 = vmatprep.subr.mxu0 0.0
  %6421 = vmatpush1.msra.mxu0 %v6404
  %6422 = vmatprep.subr.mxu0 0.0
  %6423 = vmatpush1.msra.mxu0 %v6405
  %6424 = vmatprep.subr.mxu0 0.0
  %6425 = vmatpush1.msra.mxu0 %v6406
  %6426 = vmatprep.subr.mxu0 0.0
  %6427 = vmatpush1.msra.mxu0 %v6407
  %6428 = vmatprep.subr.mxu0 0.0
  %6429 = vmatpush1.msra.mxu0 %v6408
  %6430 = vmatprep.subr.mxu0 0.0
  %6431 = vmatpush1.msra.mxu0 %v6409
  %6432 = vmatprep.subr.mxu0 0.0
  %6433 = vmatpush1.msra.mxu0 %v6410
  %6434 = vmatprep.subr.mxu0 0.0
  %6435 = vmatpush1.msra.mxu0 %v6411
  %6436 = vmatprep.subr.mxu0 0.0
  %6437 = vmatpush1.msra.mxu0 0.0
  %6438 = vmatprep.subr.mxu0 0.0
  %6439 = vmatpush1.msra.mxu0 0.0
  %6440 = vmatprep.subr.mxu0 0.0
  %6441 = vmatpush1.msra.mxu0 0.0
  %6442 = vmatprep.subr.mxu0 0.0
  %6443 = vmatpush1.msra.mxu0 0.0
  %6444 = vmatprep.subr.mxu0 0.0
  %6445 = vmatpush1.msra.mxu0 0.0
  %6446 = vmatprep.subr.mxu0 0.0
  %6447 = vmatpush1.msra.mxu0 0.0
  %6448 = vmatprep.subr.mxu0 0.0
  %6449 = vmatpush1.msra.mxu0 0.0
  %6450 = vmatprep.subr.mxu0 0.0
  %6451 = vmatpush1.msra.mxu0 0.0
  %6452 = vmatprep.subr.mxu0 0.0
  %6453 = vmatpush1.msra.mxu0 0.0
  %6454 = vmatprep.subr.mxu0 0.0
  %6455 = vmatpush1.msra.mxu0 0.0
  %6456 = vmatprep.subr.mxu0 0.0
  %6457 = vmatpush1.msra.mxu0 0.0
  %6458 = vmatprep.subr.mxu0 0.0
  %6459 = vmatpush1.msra.mxu0 0.0
  %6460 = vmatprep.subr.mxu0 0.0
  %6461 = vmatpush1.msra.mxu0 0.0
  %6462 = vmatprep.subr.mxu0 0.0
  %6463 = vmatpush1.msra.mxu0 0.0
  %6464 = vmatprep.subr.mxu0 0.0
  %6465 = vmatpush1.msra.mxu0 0.0
  %6466 = vmatprep.subr.mxu0 0.0
  %6467 = vmatpush1.msra.mxu0 0.0
  %6468 = vmatprep.subr.mxu0 0.0
  %6469 = vmatpush1.msra.mxu0 0.0
  %6470 = vmatprep.subr.mxu0 0.0
  %6471 = vmatpush1.msra.mxu0 0.0
  %6472 = vmatprep.subr.mxu0 0.0
  %6473 = vmatpush1.msra.mxu0 0.0
  %6474 = vmatprep.subr.mxu0 0.0
  %6475 = vmatpush1.msra.mxu0 0.0
  %6476 = vmatprep.subr.mxu0 0.0
  %6477 = vmatpush1.msra.mxu0 0.0
  %6478 = vmatprep.subr.mxu0 0.0
  %6479 = vmatpush1.msra.mxu0 0.0
  %6480 = vmatprep.subr.mxu0 0.0
  %6481 = vmatpush1.msra.mxu0 0.0
  %6482 = vmatprep.subr.mxu0 0.0
  %6483 = vmatpush1.msra.mxu0 0.0
  %6484 = vmatprep.mubr.f32.mxu0 0.0
  %6485 = vmatmul.mubr.f32.gmra.mrb[0].mxu0 %v5585
  %v6486 = vpop.f32.mrb[0].mxu0
  %v6487 = vadd.f32 %v6418, %v6486
  %v6488 = vpop.f32.mrb[0].mxu0
  %6489 = vmatprep.mubr.f32.mxu0 0.0
  %6490 = vmatmul.mubr.f32.gmra.mrb[0].mxu0 %v5588
  %v6491 = vpop.f32.mrb[0].mxu0
  %v6492 = vadd.f32 %v6418, %v6491
  %v6493 = vpop.f32.mrb[0].mxu0
  %6494 = vdwg.mxu0
  %v6495 = vmul.f32 %v6487, 0.25
  %v6496 = vmul.f32 %v6492, 0.25
  %s6497 = scalar_lea.vmem %s45, 192
  %v6498 = vld [vmem:[%s6497] sm:$0xff]
  %v6499 = vld [vmem:[%s6497 + $0x8] sm:$0xff]
  %v6500 = vld [vmem:[%s6497 + $0x10] sm:$0xff]
  %v6501 = vld [vmem:[%s6497 + $0x18] sm:$0xff]
  %v6502 = vld [vmem:[%s6497 + $0x20] sm:$0xff]
  %v6503 = vld [vmem:[%s6497 + $0x28] sm:$0xff]
  %v6504 = vld [vmem:[%s6497 + $0x30] sm:$0xff]
  %v6505 = vld [vmem:[%s6497 + $0x38] sm:$0xff]
  %s6506 = scalar_lea.vmem %s51, 3
  %v6507 = vld [vmem:[%s6506] sm:$0x1]
  %v6509 = vlaneseq
  %v6510 = vshrl.u32 %v6509, 7
  %v6511 = vsub.s32 0, %v6510
  %v6512 = vrot.slane %v6507, %v6511
  %6514 = vmatprep.subr.mxu0 0.0
  %6515 = vmatpush1.msra.mxu0 %v6498
  %6516 = vmatprep.subr.mxu0 0.0
  %6517 = vmatpush1.msra.mxu0 %v6499
  %6518 = vmatprep.subr.mxu0 0.0
  %6519 = vmatpush1.msra.mxu0 %v6500
  %6520 = vmatprep.subr.mxu0 0.0
  %6521 = vmatpush1.msra.mxu0 %v6501
  %6522 = vmatprep.subr.mxu0 0.0
  %6523 = vmatpush1.msra.mxu0 %v6502
  %6524 = vmatprep.subr.mxu0 0.0
  %6525 = vmatpush1.msra.mxu0 %v6503
  %6526 = vmatprep.subr.mxu0 0.0
  %6527 = vmatpush1.msra.mxu0 %v6504
  %6528 = vmatprep.subr.mxu0 0.0
  %6529 = vmatpush1.msra.mxu0 %v6505
  %6530 = vmatprep.subr.mxu0 0.0
  %6531 = vmatpush1.msra.mxu0 0.0
  %6532 = vmatprep.subr.mxu0 0.0
  %6533 = vmatpush1.msra.mxu0 0.0
  %6534 = vmatprep.subr.mxu0 0.0
  %6535 = vmatpush1.msra.mxu0 0.0
  %6536 = vmatprep.subr.mxu0 0.0
  %6537 = vmatpush1.msra.mxu0 0.0
  %6538 = vmatprep.subr.mxu0 0.0
  %6539 = vmatpush1.msra.mxu0 0.0
  %6540 = vmatprep.subr.mxu0 0.0
  %6541 = vmatpush1.msra.mxu0 0.0
  %6542 = vmatprep.subr.mxu0 0.0
  %6543 = vmatpush1.msra.mxu0 0.0
  %6544 = vmatprep.subr.mxu0 0.0
  %6545 = vmatpush1.msra.mxu0 0.0
  %6546 = vmatprep.subr.mxu0 0.0
  %6547 = vmatpush1.msra.mxu0 0.0
  %6548 = vmatprep.subr.mxu0 0.0
  %6549 = vmatpush1.msra.mxu0 0.0
  %6550 = vmatprep.subr.mxu0 0.0
  %6551 = vmatpush1.msra.mxu0 0.0
  %6552 = vmatprep.subr.mxu0 0.0
  %6553 = vmatpush1.msra.mxu0 0.0
  %6554 = vmatprep.subr.mxu0 0.0
  %6555 = vmatpush1.msra.mxu0 0.0
  %6556 = vmatprep.subr.mxu0 0.0
  %6557 = vmatpush1.msra.mxu0 0.0
  %6558 = vmatprep.subr.mxu0 0.0
  %6559 = vmatpush1.msra.mxu0 0.0
  %6560 = vmatprep.subr.mxu0 0.0
  %6561 = vmatpush1.msra.mxu0 0.0
  %6562 = vmatprep.subr.mxu0 0.0
  %6563 = vmatpush1.msra.mxu0 0.0
  %6564 = vmatprep.subr.mxu0 0.0
  %6565 = vmatpush1.msra.mxu0 0.0
  %6566 = vmatprep.subr.mxu0 0.0
  %6567 = vmatpush1.msra.mxu0 0.0
  %6568 = vmatprep.subr.mxu0 0.0
  %6569 = vmatpush1.msra.mxu0 0.0
  %6570 = vmatprep.subr.mxu0 0.0
  %6571 = vmatpush1.msra.mxu0 0.0
  %6572 = vmatprep.subr.mxu0 0.0
  %6573 = vmatpush1.msra.mxu0 0.0
  %6574 = vmatprep.subr.mxu0 0.0
  %6575 = vmatpush1.msra.mxu0 0.0
  %6576 = vmatprep.subr.mxu0 0.0
  %6577 = vmatpush1.msra.mxu0 0.0
  %6578 = vmatprep.mubr.f32.mxu0 0.0
  %6579 = vmatmul.mubr.f32.gmra.mrb[0].mxu0 %v5585
  %v6580 = vpop.f32.mrb[0].mxu0
  %v6581 = vadd.f32 %v6512, %v6580
  %v6582 = vpop.f32.mrb[0].mxu0
  %6583 = vmatprep.mubr.f32.mxu0 0.0
  %6584 = vmatmul.mubr.f32.gmra.mrb[0].mxu0 %v5588
  %v6585 = vpop.f32.mrb[0].mxu0
  %v6586 = vadd.f32 %v6512, %v6585
  %v6587 = vpop.f32.mrb[0].mxu0
  %6588 = vdwg.mxu0
  %s6589 = scalar_lea.vmem %s47, 192
  %v6590 = vld [vmem:[%s6589] sm:$0xff]
  %v6591 = vld [vmem:[%s6589 + $0x8] sm:$0xff]
  %v6592 = vld [vmem:[%s6589 + $0x10] sm:$0xff]
  %v6593 = vld [vmem:[%s6589 + $0x18] sm:$0xff]
  %v6594 = vld [vmem:[%s6589 + $0x20] sm:$0xff]
  %v6595 = vld [vmem:[%s6589 + $0x28] sm:$0xff]
  %v6596 = vld [vmem:[%s6589 + $0x30] sm:$0xff]
  %v6597 = vld [vmem:[%s6589 + $0x38] sm:$0xff]
  %s6598 = scalar_lea.vmem %s53, 3
  %v6599 = vld [vmem:[%s6598] sm:$0x1]
  %v6601 = vlaneseq
  %v6602 = vshrl.u32 %v6601, 7
  %v6603 = vsub.s32 0, %v6602
  %v6604 = vrot.slane %v6599, %v6603
  %6606 = vmatprep.subr.mxu0 0.0
  %6607 = vmatpush1.msra.mxu0 %v6590
  %6608 = vmatprep.subr.mxu0 0.0
  %6609 = vmatpush1.msra.mxu0 %v6591
  %6610 = vmatprep.subr.mxu0 0.0
  %6611 = vmatpush1.msra.mxu0 %v6592
  %6612 = vmatprep.subr.mxu0 0.0
  %6613 = vmatpush1.msra.mxu0 %v6593
  %6614 = vmatprep.subr.mxu0 0.0
  %6615 = vmatpush1.msra.mxu0 %v6594
  %6616 = vmatprep.subr.mxu0 0.0
  %6617 = vmatpush1.msra.mxu0 %v6595
  %6618 = vmatprep.subr.mxu0 0.0
  %6619 = vmatpush1.msra.mxu0 %v6596
  %6620 = vmatprep.subr.mxu0 0.0
  %6621 = vmatpush1.msra.mxu0 %v6597
  %6622 = vmatprep.subr.mxu0 0.0
  %6623 = vmatpush1.msra.mxu0 0.0
  %6624 = vmatprep.subr.mxu0 0.0
  %6625 = vmatpush1.msra.mxu0 0.0
  %6626 = vmatprep.subr.mxu0 0.0
  %6627 = vmatpush1.msra.mxu0 0.0
  %6628 = vmatprep.subr.mxu0 0.0
  %6629 = vmatpush1.msra.mxu0 0.0
  %6630 = vmatprep.subr.mxu0 0.0
  %6631 = vmatpush1.msra.mxu0 0.0
  %6632 = vmatprep.subr.mxu0 0.0
  %6633 = vmatpush1.msra.mxu0 0.0
  %6634 = vmatprep.subr.mxu0 0.0
  %6635 = vmatpush1.msra.mxu0 0.0
  %6636 = vmatprep.subr.mxu0 0.0
  %6637 = vmatpush1.msra.mxu0 0.0
  %6638 = vmatprep.subr.mxu0 0.0
  %6639 = vmatpush1.msra.mxu0 0.0
  %6640 = vmatprep.subr.mxu0 0.0
  %6641 = vmatpush1.msra.mxu0 0.0
  %6642 = vmatprep.subr.mxu0 0.0
  %6643 = vmatpush1.msra.mxu0 0.0
  %6644 = vmatprep.subr.mxu0 0.0
  %6645 = vmatpush1.msra.mxu0 0.0
  %6646 = vmatprep.subr.mxu0 0.0
  %6647 = vmatpush1.msra.mxu0 0.0
  %6648 = vmatprep.subr.mxu0 0.0
  %6649 = vmatpush1.msra.mxu0 0.0
  %6650 = vmatprep.subr.mxu0 0.0
  %6651 = vmatpush1.msra.mxu0 0.0
  %6652 = vmatprep.subr.mxu0 0.0
  %6653 = vmatpush1.msra.mxu0 0.0
  %6654 = vmatprep.subr.mxu0 0.0
  %6655 = vmatpush1.msra.mxu0 0.0
  %6656 = vmatprep.subr.mxu0 0.0
  %6657 = vmatpush1.msra.mxu0 0.0
  %6658 = vmatprep.subr.mxu0 0.0
  %6659 = vmatpush1.msra.mxu0 0.0
  %6660 = vmatprep.subr.mxu0 0.0
  %6661 = vmatpush1.msra.mxu0 0.0
  %6662 = vmatprep.subr.mxu0 0.0
  %6663 = vmatpush1.msra.mxu0 0.0
  %6664 = vmatprep.subr.mxu0 0.0
  %6665 = vmatpush1.msra.mxu0 0.0
  %6666 = vmatprep.subr.mxu0 0.0
  %6667 = vmatpush1.msra.mxu0 0.0
  %6668 = vmatprep.subr.mxu0 0.0
  %6669 = vmatpush1.msra.mxu0 0.0
  %6670 = vmatprep.mubr.f32.mxu0 0.0
  %6671 = vmatmul.mubr.f32.gmra.mrb[0].mxu0 %v5585
  %v6672 = vpop.f32.mrb[0].mxu0
  %v6673 = vadd.f32 %v6604, %v6672
  %v6674 = vpop.f32.mrb[0].mxu0
  %6675 = vmatprep.mubr.f32.mxu0 0.0
  %6676 = vmatmul.mubr.f32.gmra.mrb[0].mxu0 %v5588
  %v6677 = vpop.f32.mrb[0].mxu0
  %v6678 = vadd.f32 %v6604, %v6677
  %v6679 = vpop.f32.mrb[0].mxu0
  %6680 = vdwg.mxu0
  %v6682 = vsel %vm1363, %v5665, 0
  %v6685 = vsel %vm1363, %v5749, 0
  %6687 = vmatprep.subr.mxu0 0.0
  %6688 = vmatpush1.xpose.msra.mxu0 %v6685
  %6689 = vmatprep.subr.mxu0 0.0
  %6690 = vmatpush1.xpose.msra.mxu0 0.0
  %6691 = vmatprep.subr.mxu0 0.0
  %6692 = vmatpush1.xpose.msra.mxu0 0.0
  %6693 = vmatprep.subr.mxu0 0.0
  %6694 = vmatpush1.xpose.msra.mxu0 0.0
  %6695 = vmatprep.subr.mxu0 0.0
  %6696 = vmatpush1.xpose.msra.mxu0 0.0
  %6697 = vmatprep.subr.mxu0 0.0
  %6698 = vmatpush1.xpose.msra.mxu0 0.0
  %6699 = vmatprep.subr.mxu0 0.0
  %6700 = vmatpush1.xpose.msra.mxu0 0.0
  %6701 = vmatprep.subr.mxu0 0.0
  %6702 = vmatpush1.xpose.msra.mxu0 0.0
  %6703 = vmatprep.subr.mxu0 0.0
  %6704 = vmatpush1.xpose.msra.mxu0 0.0
  %6705 = vmatprep.subr.mxu0 0.0
  %6706 = vmatpush1.xpose.msra.mxu0 0.0
  %6707 = vmatprep.subr.mxu0 0.0
  %6708 = vmatpush1.xpose.msra.mxu0 0.0
  %6709 = vmatprep.subr.mxu0 0.0
  %6710 = vmatpush1.xpose.msra.mxu0 0.0
  %6711 = vmatprep.subr.mxu0 0.0
  %6712 = vmatpush1.xpose.msra.mxu0 0.0
  %6713 = vmatprep.subr.mxu0 0.0
  %6714 = vmatpush1.xpose.msra.mxu0 0.0
  %6715 = vmatprep.subr.mxu0 0.0
  %6716 = vmatpush1.xpose.msra.mxu0 0.0
  %6717 = vmatprep.subr.mxu0 0.0
  %6718 = vmatpush1.xpose.msra.mxu0 0.0
  %6719 = vmatprep.subr.mxu0 0.0
  %6720 = vmatpush1.xpose.msra.mxu0 0.0
  %6721 = vmatprep.subr.mxu0 0.0
  %6722 = vmatpush1.xpose.msra.mxu0 0.0
  %6723 = vmatprep.subr.mxu0 0.0
  %6724 = vmatpush1.xpose.msra.mxu0 0.0
  %6725 = vmatprep.subr.mxu0 0.0
  %6726 = vmatpush1.xpose.msra.mxu0 0.0
  %6727 = vmatprep.subr.mxu0 0.0
  %6728 = vmatpush1.xpose.msra.mxu0 0.0
  %6729 = vmatprep.subr.mxu0 0.0
  %6730 = vmatpush1.xpose.msra.mxu0 0.0
  %6731 = vmatprep.subr.mxu0 0.0
  %6732 = vmatpush1.xpose.msra.mxu0 0.0
  %6733 = vmatprep.subr.mxu0 0.0
  %6734 = vmatpush1.xpose.msra.mxu0 0.0
  %6735 = vmatprep.subr.mxu0 0.0
  %6736 = vmatpush1.xpose.msra.mxu0 0.0
  %6737 = vmatprep.subr.mxu0 0.0
  %6738 = vmatpush1.xpose.msra.mxu0 0.0
  %6739 = vmatprep.subr.mxu0 0.0
  %6740 = vmatpush1.xpose.msra.mxu0 0.0
  %6741 = vmatprep.subr.mxu0 0.0
  %6742 = vmatpush1.xpose.msra.mxu0 0.0
  %6743 = vmatprep.subr.mxu0 0.0
  %6744 = vmatpush1.xpose.msra.mxu0 0.0
  %6745 = vmatprep.subr.mxu0 0.0
  %6746 = vmatpush1.xpose.msra.mxu0 0.0
  %6747 = vmatprep.subr.mxu0 0.0
  %6748 = vmatpush1.xpose.msra.mxu0 0.0
  %6749 = vmatprep.subr.mxu0 0.0
  %6750 = vmatpush1.xpose.msra.mxu0 0.0
  %6751 = vmatprep.mubr.f32.mxu0 0.0
  %6752 = vmatmul.mubr.f32.gmra.mrb[0].mxu0 %v6682
  %v6753 = vpop.f32.mrb[0].mxu0
  %v6754 = vadd.f32 0.0, %v6753
  %v6755 = vpop.f32.mrb[0].mxu0
  %6756 = vdwg.mxu0
  %v6757 = vsel %vm1440, %v6754, -inf
  %6758 = vmax.xlane.f32.xlu0 %v6757
  %v6759 = vpop.xlane.xlu0 %6758
  %v6760 = vsub.f32 %v6754, %v6759
  %v6761 = vmul.f32 %v6760, 1.442695
  %v6762 = vpow.pop %v6761
  %v6763 = vsel %vm1440, %v6762, 0.0
  %6764 = vadd.xlane.f32.xlu0 %v6763
  %v6765 = vpop.xlane.xlu0 %6764
  %v6766 = vrcp.pop %v6765
  %v6767 = vmul.f32 %v6762, %v6766
  %v6769 = vsel %vm1440, %v6767, 0
  %6771 = vmatprep.subr.mxu0 0.0
  %6772 = vmatpush1.msra.mxu0 %v5839
  %6773 = vmatprep.subr.mxu0 0.0
  %6774 = vmatpush1.msra.mxu0 0.0
  %6775 = vmatprep.subr.mxu0 0.0
  %6776 = vmatpush1.msra.mxu0 0.0
  %6777 = vmatprep.subr.mxu0 0.0
  %6778 = vmatpush1.msra.mxu0 0.0
  %6779 = vmatprep.subr.mxu0 0.0
  %6780 = vmatpush1.msra.mxu0 0.0
  %6781 = vmatprep.subr.mxu0 0.0
  %6782 = vmatpush1.msra.mxu0 0.0
  %6783 = vmatprep.subr.mxu0 0.0
  %6784 = vmatpush1.msra.mxu0 0.0
  %6785 = vmatprep.subr.mxu0 0.0
  %6786 = vmatpush1.msra.mxu0 0.0
  %6787 = vmatprep.subr.mxu0 0.0
  %6788 = vmatpush1.msra.mxu0 0.0
  %6789 = vmatprep.subr.mxu0 0.0
  %6790 = vmatpush1.msra.mxu0 0.0
  %6791 = vmatprep.subr.mxu0 0.0
  %6792 = vmatpush1.msra.mxu0 0.0
  %6793 = vmatprep.subr.mxu0 0.0
  %6794 = vmatpush1.msra.mxu0 0.0
  %6795 = vmatprep.subr.mxu0 0.0
  %6796 = vmatpush1.msra.mxu0 0.0
  %6797 = vmatprep.subr.mxu0 0.0
  %6798 = vmatpush1.msra.mxu0 0.0
  %6799 = vmatprep.subr.mxu0 0.0
  %6800 = vmatpush1.msra.mxu0 0.0
  %6801 = vmatprep.subr.mxu0 0.0
  %6802 = vmatpush1.msra.mxu0 0.0
  %6803 = vmatprep.subr.mxu0 0.0
  %6804 = vmatpush1.msra.mxu0 0.0
  %6805 = vmatprep.subr.mxu0 0.0
  %6806 = vmatpush1.msra.mxu0 0.0
  %6807 = vmatprep.subr.mxu0 0.0
  %6808 = vmatpush1.msra.mxu0 0.0
  %6809 = vmatprep.subr.mxu0 0.0
  %6810 = vmatpush1.msra.mxu0 0.0
  %6811 = vmatprep.subr.mxu0 0.0
  %6812 = vmatpush1.msra.mxu0 0.0
  %6813 = vmatprep.subr.mxu0 0.0
  %6814 = vmatpush1.msra.mxu0 0.0
  %6815 = vmatprep.subr.mxu0 0.0
  %6816 = vmatpush1.msra.mxu0 0.0
  %6817 = vmatprep.subr.mxu0 0.0
  %6818 = vmatpush1.msra.mxu0 0.0
  %6819 = vmatprep.subr.mxu0 0.0
  %6820 = vmatpush1.msra.mxu0 0.0
  %6821 = vmatprep.subr.mxu0 0.0
  %6822 = vmatpush1.msra.mxu0 0.0
  %6823 = vmatprep.subr.mxu0 0.0
  %6824 = vmatpush1.msra.mxu0 0.0
  %6825 = vmatprep.subr.mxu0 0.0
  %6826 = vmatpush1.msra.mxu0 0.0
  %6827 = vmatprep.subr.mxu0 0.0
  %6828 = vmatpush1.msra.mxu0 0.0
  %6829 = vmatprep.subr.mxu0 0.0
  %6830 = vmatpush1.msra.mxu0 0.0
  %6831 = vmatprep.subr.mxu0 0.0
  %6832 = vmatpush1.msra.mxu0 0.0
  %6833 = vmatprep.subr.mxu0 0.0
  %6834 = vmatpush1.msra.mxu0 0.0
  %6835 = vmatprep.mubr.f32.mxu0 0.0
  %6836 = vmatmul.mubr.f32.gmra.mrb[0].mxu0 %v6769
  %v6837 = vpop.f32.mrb[0].mxu0
  %v6838 = vadd.f32 0.0, %v6837
  %v6839 = vpop.f32.mrb[0].mxu0
  %6840 = vdwg.mxu0
  %v6841 = vld [vmem:[%s55] sm:$0xff]
  %v6842 = vld [vmem:[%s55 + $0x8] sm:$0xff]
  %v6844 = vsel %vm1363, %v5939, 0
  %v6847 = vsel %vm1363, %v6025, 0
  %6849 = vmatprep.subr.mxu0 0.0
  %6850 = vmatpush1.xpose.msra.mxu0 %v6847
  %6851 = vmatprep.subr.mxu0 0.0
  %6852 = vmatpush1.xpose.msra.mxu0 0.0
  %6853 = vmatprep.subr.mxu0 0.0
  %6854 = vmatpush1.xpose.msra.mxu0 0.0
  %6855 = vmatprep.subr.mxu0 0.0
  %6856 = vmatpush1.xpose.msra.mxu0 0.0
  %6857 = vmatprep.subr.mxu0 0.0
  %6858 = vmatpush1.xpose.msra.mxu0 0.0
  %6859 = vmatprep.subr.mxu0 0.0
  %6860 = vmatpush1.xpose.msra.mxu0 0.0
  %6861 = vmatprep.subr.mxu0 0.0
  %6862 = vmatpush1.xpose.msra.mxu0 0.0
  %6863 = vmatprep.subr.mxu0 0.0
  %6864 = vmatpush1.xpose.msra.mxu0 0.0
  %6865 = vmatprep.subr.mxu0 0.0
  %6866 = vmatpush1.xpose.msra.mxu0 0.0
  %6867 = vmatprep.subr.mxu0 0.0
  %6868 = vmatpush1.xpose.msra.mxu0 0.0
  %6869 = vmatprep.subr.mxu0 0.0
  %6870 = vmatpush1.xpose.msra.mxu0 0.0
  %6871 = vmatprep.subr.mxu0 0.0
  %6872 = vmatpush1.xpose.msra.mxu0 0.0
  %6873 = vmatprep.subr.mxu0 0.0
  %6874 = vmatpush1.xpose.msra.mxu0 0.0
  %6875 = vmatprep.subr.mxu0 0.0
  %6876 = vmatpush1.xpose.msra.mxu0 0.0
  %6877 = vmatprep.subr.mxu0 0.0
  %6878 = vmatpush1.xpose.msra.mxu0 0.0
  %6879 = vmatprep.subr.mxu0 0.0
  %6880 = vmatpush1.xpose.msra.mxu0 0.0
  %6881 = vmatprep.subr.mxu0 0.0
  %6882 = vmatpush1.xpose.msra.mxu0 0.0
  %6883 = vmatprep.subr.mxu0 0.0
  %6884 = vmatpush1.xpose.msra.mxu0 0.0
  %6885 = vmatprep.subr.mxu0 0.0
  %6886 = vmatpush1.xpose.msra.mxu0 0.0
  %6887 = vmatprep.subr.mxu0 0.0
  %6888 = vmatpush1.xpose.msra.mxu0 0.0
  %6889 = vmatprep.subr.mxu0 0.0
  %6890 = vmatpush1.xpose.msra.mxu0 0.0
  %6891 = vmatprep.subr.mxu0 0.0
  %6892 = vmatpush1.xpose.msra.mxu0 0.0
  %6893 = vmatprep.subr.mxu0 0.0
  %6894 = vmatpush1.xpose.msra.mxu0 0.0
  %6895 = vmatprep.subr.mxu0 0.0
  %6896 = vmatpush1.xpose.msra.mxu0 0.0
  %6897 = vmatprep.subr.mxu0 0.0
  %6898 = vmatpush1.xpose.msra.mxu0 0.0
  %6899 = vmatprep.subr.mxu0 0.0
  %6900 = vmatpush1.xpose.msra.mxu0 0.0
  %6901 = vmatprep.subr.mxu0 0.0
  %6902 = vmatpush1.xpose.msra.mxu0 0.0
  %6903 = vmatprep.subr.mxu0 0.0
  %6904 = vmatpush1.xpose.msra.mxu0 0.0
  %6905 = vmatprep.subr.mxu0 0.0
  %6906 = vmatpush1.xpose.msra.mxu0 0.0
  %6907 = vmatprep.subr.mxu0 0.0
  %6908 = vmatpush1.xpose.msra.mxu0 0.0
  %6909 = vmatprep.subr.mxu0 0.0
  %6910 = vmatpush1.xpose.msra.mxu0 0.0
  %6911 = vmatprep.subr.mxu0 0.0
  %6912 = vmatpush1.xpose.msra.mxu0 0.0
  %6913 = vmatprep.mubr.f32.mxu0 0.0
  %6914 = vmatmul.mubr.f32.gmra.mrb[0].mxu0 %v6844
  %v6915 = vpop.f32.mrb[0].mxu0
  %v6916 = vadd.f32 0.0, %v6915
  %v6917 = vpop.f32.mrb[0].mxu0
  %6918 = vdwg.mxu0
  %v6919 = vsel %vm1440, %v6916, -inf
  %6920 = vmax.xlane.f32.xlu0 %v6919
  %v6921 = vpop.xlane.xlu0 %6920
  %v6922 = vsub.f32 %v6916, %v6921
  %v6923 = vmul.f32 %v6922, 1.442695
  %v6924 = vpow.pop %v6923
  %v6925 = vsel %vm1440, %v6924, 0.0
  %6926 = vadd.xlane.f32.xlu0 %v6925
  %v6927 = vpop.xlane.xlu0 %6926
  %v6928 = vrcp.pop %v6927
  %v6929 = vmul.f32 %v6924, %v6928
  %v6931 = vsel %vm1440, %v6929, 0
  %6933 = vmatprep.subr.mxu0 0.0
  %6934 = vmatpush1.msra.mxu0 %v6117
  %6935 = vmatprep.subr.mxu0 0.0
  %6936 = vmatpush1.msra.mxu0 0.0
  %6937 = vmatprep.subr.mxu0 0.0
  %6938 = vmatpush1.msra.mxu0 0.0
  %6939 = vmatprep.subr.mxu0 0.0
  %6940 = vmatpush1.msra.mxu0 0.0
  %6941 = vmatprep.subr.mxu0 0.0
  %6942 = vmatpush1.msra.mxu0 0.0
  %6943 = vmatprep.subr.mxu0 0.0
  %6944 = vmatpush1.msra.mxu0 0.0
  %6945 = vmatprep.subr.mxu0 0.0
  %6946 = vmatpush1.msra.mxu0 0.0
  %6947 = vmatprep.subr.mxu0 0.0
  %6948 = vmatpush1.msra.mxu0 0.0
  %6949 = vmatprep.subr.mxu0 0.0
  %6950 = vmatpush1.msra.mxu0 0.0
  %6951 = vmatprep.subr.mxu0 0.0
  %6952 = vmatpush1.msra.mxu0 0.0
  %6953 = vmatprep.subr.mxu0 0.0
  %6954 = vmatpush1.msra.mxu0 0.0
  %6955 = vmatprep.subr.mxu0 0.0
  %6956 = vmatpush1.msra.mxu0 0.0
  %6957 = vmatprep.subr.mxu0 0.0
  %6958 = vmatpush1.msra.mxu0 0.0
  %6959 = vmatprep.subr.mxu0 0.0
  %6960 = vmatpush1.msra.mxu0 0.0
  %6961 = vmatprep.subr.mxu0 0.0
  %6962 = vmatpush1.msra.mxu0 0.0
  %6963 = vmatprep.subr.mxu0 0.0
  %6964 = vmatpush1.msra.mxu0 0.0
  %6965 = vmatprep.subr.mxu0 0.0
  %6966 = vmatpush1.msra.mxu0 0.0
  %6967 = vmatprep.subr.mxu0 0.0
  %6968 = vmatpush1.msra.mxu0 0.0
  %6969 = vmatprep.subr.mxu0 0.0
  %6970 = vmatpush1.msra.mxu0 0.0
  %6971 = vmatprep.subr.mxu0 0.0
  %6972 = vmatpush1.msra.mxu0 0.0
  %6973 = vmatprep.subr.mxu0 0.0
  %6974 = vmatpush1.msra.mxu0 0.0
  %6975 = vmatprep.subr.mxu0 0.0
  %6976 = vmatpush1.msra.mxu0 0.0
  %6977 = vmatprep.subr.mxu0 0.0
  %6978 = vmatpush1.msra.mxu0 0.0
  %6979 = vmatprep.subr.mxu0 0.0
  %6980 = vmatpush1.msra.mxu0 0.0
  %6981 = vmatprep.subr.mxu0 0.0
  %6982 = vmatpush1.msra.mxu0 0.0
  %6983 = vmatprep.subr.mxu0 0.0
  %6984 = vmatpush1.msra.mxu0 0.0
  %6985 = vmatprep.subr.mxu0 0.0
  %6986 = vmatpush1.msra.mxu0 0.0
  %6987 = vmatprep.subr.mxu0 0.0
  %6988 = vmatpush1.msra.mxu0 0.0
  %6989 = vmatprep.subr.mxu0 0.0
  %6990 = vmatpush1.msra.mxu0 0.0
  %6991 = vmatprep.subr.mxu0 0.0
  %6992 = vmatpush1.msra.mxu0 0.0
  %6993 = vmatprep.subr.mxu0 0.0
  %6994 = vmatpush1.msra.mxu0 0.0
  %6995 = vmatprep.subr.mxu0 0.0
  %6996 = vmatpush1.msra.mxu0 0.0
  %6997 = vmatprep.mubr.f32.mxu0 0.0
  %6998 = vmatmul.mubr.f32.gmra.mrb[0].mxu0 %v6931
  %v6999 = vpop.f32.mrb[0].mxu0
  %v7000 = vadd.f32 0.0, %v6999
  %v7001 = vpop.f32.mrb[0].mxu0
  %7002 = vdwg.mxu0
  %s7003 = scalar_lea.vmem %s55, 16
  %v7004 = vld [vmem:[%s7003] sm:$0xff]
  %v7005 = vld [vmem:[%s7003 + $0x8] sm:$0xff]
  %v7007 = vsel %vm1363, %v7000, 0
  %7009 = vmatprep.subr.mxu0 0.0
  %7010 = vmatpush1.msra.mxu0 %v7004
  %7011 = vmatprep.subr.mxu0 0.0
  %7012 = vmatpush1.msra.mxu0 %v7005
  %7013 = vmatprep.subr.mxu0 0.0
  %7014 = vmatpush1.msra.mxu0 0.0
  %7015 = vmatprep.subr.mxu0 0.0
  %7016 = vmatpush1.msra.mxu0 0.0
  %7017 = vmatprep.subr.mxu0 0.0
  %7018 = vmatpush1.msra.mxu0 0.0
  %7019 = vmatprep.subr.mxu0 0.0
  %7020 = vmatpush1.msra.mxu0 0.0
  %7021 = vmatprep.subr.mxu0 0.0
  %7022 = vmatpush1.msra.mxu0 0.0
  %7023 = vmatprep.subr.mxu0 0.0
  %7024 = vmatpush1.msra.mxu0 0.0
  %7025 = vmatprep.subr.mxu0 0.0
  %7026 = vmatpush1.msra.mxu0 0.0
  %7027 = vmatprep.subr.mxu0 0.0
  %7028 = vmatpush1.msra.mxu0 0.0
  %7029 = vmatprep.subr.mxu0 0.0
  %7030 = vmatpush1.msra.mxu0 0.0
  %7031 = vmatprep.subr.mxu0 0.0
  %7032 = vmatpush1.msra.mxu0 0.0
  %7033 = vmatprep.subr.mxu0 0.0
  %7034 = vmatpush1.msra.mxu0 0.0
  %7035 = vmatprep.subr.mxu0 0.0
  %7036 = vmatpush1.msra.mxu0 0.0
  %7037 = vmatprep.subr.mxu0 0.0
  %7038 = vmatpush1.msra.mxu0 0.0
  %7039 = vmatprep.subr.mxu0 0.0
  %7040 = vmatpush1.msra.mxu0 0.0
  %7041 = vmatprep.subr.mxu0 0.0
  %7042 = vmatpush1.msra.mxu0 0.0
  %7043 = vmatprep.subr.mxu0 0.0
  %7044 = vmatpush1.msra.mxu0 0.0
  %7045 = vmatprep.subr.mxu0 0.0
  %7046 = vmatpush1.msra.mxu0 0.0
  %7047 = vmatprep.subr.mxu0 0.0
  %7048 = vmatpush1.msra.mxu0 0.0
  %7049 = vmatprep.subr.mxu0 0.0
  %7050 = vmatpush1.msra.mxu0 0.0
  %7051 = vmatprep.subr.mxu0 0.0
  %7052 = vmatpush1.msra.mxu0 0.0
  %7053 = vmatprep.subr.mxu0 0.0
  %7054 = vmatpush1.msra.mxu0 0.0
  %7055 = vmatprep.subr.mxu0 0.0
  %7056 = vmatpush1.msra.mxu0 0.0
  %7057 = vmatprep.subr.mxu0 0.0
  %7058 = vmatpush1.msra.mxu0 0.0
  %7059 = vmatprep.subr.mxu0 0.0
  %7060 = vmatpush1.msra.mxu0 0.0
  %7061 = vmatprep.subr.mxu0 0.0
  %7062 = vmatpush1.msra.mxu0 0.0
  %7063 = vmatprep.subr.mxu0 0.0
  %7064 = vmatpush1.msra.mxu0 0.0
  %7065 = vmatprep.subr.mxu0 0.0
  %7066 = vmatpush1.msra.mxu0 0.0
  %7067 = vmatprep.subr.mxu0 0.0
  %7068 = vmatpush1.msra.mxu0 0.0
  %7069 = vmatprep.subr.mxu0 0.0
  %7070 = vmatpush1.msra.mxu0 0.0
  %7071 = vmatprep.subr.mxu0 0.0
  %7072 = vmatpush1.msra.mxu0 0.0
  %7073 = vmatprep.mubr.f32.mxu0 0.0
  %7074 = vmatmul.mubr.f32.gmra.mrb[0].mxu0 %v7007
  %v7075 = vpop.f32.mrb[0].mxu0
  %v7076 = vadd.f32 0.0, %v7075
  %v7077 = vpop.f32.mrb[0].mxu0
  %7078 = vdwg.mxu0
  %v7080 = vsel %vm1363, %v6838, 0
  %7082 = vmatprep.subr.mxu0 0.0
  %7083 = vmatpush1.msra.mxu0 %v6841
  %7084 = vmatprep.subr.mxu0 0.0
  %7085 = vmatpush1.msra.mxu0 %v6842
  %7086 = vmatprep.subr.mxu0 0.0
  %7087 = vmatpush1.msra.mxu0 0.0
  %7088 = vmatprep.subr.mxu0 0.0
  %7089 = vmatpush1.msra.mxu0 0.0
  %7090 = vmatprep.subr.mxu0 0.0
  %7091 = vmatpush1.msra.mxu0 0.0
  %7092 = vmatprep.subr.mxu0 0.0
  %7093 = vmatpush1.msra.mxu0 0.0
  %7094 = vmatprep.subr.mxu0 0.0
  %7095 = vmatpush1.msra.mxu0 0.0
  %7096 = vmatprep.subr.mxu0 0.0
  %7097 = vmatpush1.msra.mxu0 0.0
  %7098 = vmatprep.subr.mxu0 0.0
  %7099 = vmatpush1.msra.mxu0 0.0
  %7100 = vmatprep.subr.mxu0 0.0
  %7101 = vmatpush1.msra.mxu0 0.0
  %7102 = vmatprep.subr.mxu0 0.0
  %7103 = vmatpush1.msra.mxu0 0.0
  %7104 = vmatprep.subr.mxu0 0.0
  %7105 = vmatpush1.msra.mxu0 0.0
  %7106 = vmatprep.subr.mxu0 0.0
  %7107 = vmatpush1.msra.mxu0 0.0
  %7108 = vmatprep.subr.mxu0 0.0
  %7109 = vmatpush1.msra.mxu0 0.0
  %7110 = vmatprep.subr.mxu0 0.0
  %7111 = vmatpush1.msra.mxu0 0.0
  %7112 = vmatprep.subr.mxu0 0.0
  %7113 = vmatpush1.msra.mxu0 0.0
  %7114 = vmatprep.subr.mxu0 0.0
  %7115 = vmatpush1.msra.mxu0 0.0
  %7116 = vmatprep.subr.mxu0 0.0
  %7117 = vmatpush1.msra.mxu0 0.0
  %7118 = vmatprep.subr.mxu0 0.0
  %7119 = vmatpush1.msra.mxu0 0.0
  %7120 = vmatprep.subr.mxu0 0.0
  %7121 = vmatpush1.msra.mxu0 0.0
  %7122 = vmatprep.subr.mxu0 0.0
  %7123 = vmatpush1.msra.mxu0 0.0
  %7124 = vmatprep.subr.mxu0 0.0
  %7125 = vmatpush1.msra.mxu0 0.0
  %7126 = vmatprep.subr.mxu0 0.0
  %7127 = vmatpush1.msra.mxu0 0.0
  %7128 = vmatprep.subr.mxu0 0.0
  %7129 = vmatpush1.msra.mxu0 0.0
  %7130 = vmatprep.subr.mxu0 0.0
  %7131 = vmatpush1.msra.mxu0 0.0
  %7132 = vmatprep.subr.mxu0 0.0
  %7133 = vmatpush1.msra.mxu0 0.0
  %7134 = vmatprep.subr.mxu0 0.0
  %7135 = vmatpush1.msra.mxu0 0.0
  %7136 = vmatprep.subr.mxu0 0.0
  %7137 = vmatpush1.msra.mxu0 0.0
  %7138 = vmatprep.subr.mxu0 0.0
  %7139 = vmatpush1.msra.mxu0 0.0
  %7140 = vmatprep.subr.mxu0 0.0
  %7141 = vmatpush1.msra.mxu0 0.0
  %7142 = vmatprep.subr.mxu0 0.0
  %7143 = vmatpush1.msra.mxu0 0.0
  %7144 = vmatprep.subr.mxu0 0.0
  %7145 = vmatpush1.msra.mxu0 0.0
  %7146 = vmatprep.mubr.f32.mxu0 0.0
  %7147 = vmatmul.mubr.f32.gmra.mrb[0].mxu0 %v7080
  %v7148 = vpop.f32.mrb[0].mxu0
  %v7149 = vadd.f32 %v7076, %v7148
  %v7150 = vpop.f32.mrb[0].mxu0
  %7151 = vdwg.mxu0
  %v7153 = vsel %vm1363, %v6217, 0
  %v7156 = vsel %vm1363, %v6303, 0
  %7158 = vmatprep.subr.mxu0 0.0
  %7159 = vmatpush1.xpose.msra.mxu0 %v7156
  %7160 = vmatprep.subr.mxu0 0.0
  %7161 = vmatpush1.xpose.msra.mxu0 0.0
  %7162 = vmatprep.subr.mxu0 0.0
  %7163 = vmatpush1.xpose.msra.mxu0 0.0
  %7164 = vmatprep.subr.mxu0 0.0
  %7165 = vmatpush1.xpose.msra.mxu0 0.0
  %7166 = vmatprep.subr.mxu0 0.0
  %7167 = vmatpush1.xpose.msra.mxu0 0.0
  %7168 = vmatprep.subr.mxu0 0.0
  %7169 = vmatpush1.xpose.msra.mxu0 0.0
  %7170 = vmatprep.subr.mxu0 0.0
  %7171 = vmatpush1.xpose.msra.mxu0 0.0
  %7172 = vmatprep.subr.mxu0 0.0
  %7173 = vmatpush1.xpose.msra.mxu0 0.0
  %7174 = vmatprep.subr.mxu0 0.0
  %7175 = vmatpush1.xpose.msra.mxu0 0.0
  %7176 = vmatprep.subr.mxu0 0.0
  %7177 = vmatpush1.xpose.msra.mxu0 0.0
  %7178 = vmatprep.subr.mxu0 0.0
  %7179 = vmatpush1.xpose.msra.mxu0 0.0
  %7180 = vmatprep.subr.mxu0 0.0
  %7181 = vmatpush1.xpose.msra.mxu0 0.0
  %7182 = vmatprep.subr.mxu0 0.0
  %7183 = vmatpush1.xpose.msra.mxu0 0.0
  %7184 = vmatprep.subr.mxu0 0.0
  %7185 = vmatpush1.xpose.msra.mxu0 0.0
  %7186 = vmatprep.subr.mxu0 0.0
  %7187 = vmatpush1.xpose.msra.mxu0 0.0
  %7188 = vmatprep.subr.mxu0 0.0
  %7189 = vmatpush1.xpose.msra.mxu0 0.0
  %7190 = vmatprep.subr.mxu0 0.0
  %7191 = vmatpush1.xpose.msra.mxu0 0.0
  %7192 = vmatprep.subr.mxu0 0.0
  %7193 = vmatpush1.xpose.msra.mxu0 0.0
  %7194 = vmatprep.subr.mxu0 0.0
  %7195 = vmatpush1.xpose.msra.mxu0 0.0
  %7196 = vmatprep.subr.mxu0 0.0
  %7197 = vmatpush1.xpose.msra.mxu0 0.0
  %7198 = vmatprep.subr.mxu0 0.0
  %7199 = vmatpush1.xpose.msra.mxu0 0.0
  %7200 = vmatprep.subr.mxu0 0.0
  %7201 = vmatpush1.xpose.msra.mxu0 0.0
  %7202 = vmatprep.subr.mxu0 0.0
  %7203 = vmatpush1.xpose.msra.mxu0 0.0
  %7204 = vmatprep.subr.mxu0 0.0
  %7205 = vmatpush1.xpose.msra.mxu0 0.0
  %7206 = vmatprep.subr.mxu0 0.0
  %7207 = vmatpush1.xpose.msra.mxu0 0.0
  %7208 = vmatprep.subr.mxu0 0.0
  %7209 = vmatpush1.xpose.msra.mxu0 0.0
  %7210 = vmatprep.subr.mxu0 0.0
  %7211 = vmatpush1.xpose.msra.mxu0 0.0
  %7212 = vmatprep.subr.mxu0 0.0
  %7213 = vmatpush1.xpose.msra.mxu0 0.0
  %7214 = vmatprep.subr.mxu0 0.0
  %7215 = vmatpush1.xpose.msra.mxu0 0.0
  %7216 = vmatprep.subr.mxu0 0.0
  %7217 = vmatpush1.xpose.msra.mxu0 0.0
  %7218 = vmatprep.subr.mxu0 0.0
  %7219 = vmatpush1.xpose.msra.mxu0 0.0
  %7220 = vmatprep.subr.mxu0 0.0
  %7221 = vmatpush1.xpose.msra.mxu0 0.0
  %7222 = vmatprep.mubr.f32.mxu0 0.0
  %7223 = vmatmul.mubr.f32.gmra.mrb[0].mxu0 %v7153
  %v7224 = vpop.f32.mrb[0].mxu0
  %v7225 = vadd.f32 0.0, %v7224
  %v7226 = vpop.f32.mrb[0].mxu0
  %7227 = vdwg.mxu0
  %v7228 = vsel %vm1440, %v7225, -inf
  %7229 = vmax.xlane.f32.xlu0 %v7228
  %v7230 = vpop.xlane.xlu0 %7229
  %v7231 = vsub.f32 %v7225, %v7230
  %v7232 = vmul.f32 %v7231, 1.442695
  %v7233 = vpow.pop %v7232
  %v7234 = vsel %vm1440, %v7233, 0.0
  %7235 = vadd.xlane.f32.xlu0 %v7234
  %v7236 = vpop.xlane.xlu0 %7235
  %v7237 = vrcp.pop %v7236
  %v7238 = vmul.f32 %v7233, %v7237
  %v7240 = vsel %vm1440, %v7238, 0
  %7242 = vmatprep.subr.mxu0 0.0
  %7243 = vmatpush1.msra.mxu0 %v6395
  %7244 = vmatprep.subr.mxu0 0.0
  %7245 = vmatpush1.msra.mxu0 0.0
  %7246 = vmatprep.subr.mxu0 0.0
  %7247 = vmatpush1.msra.mxu0 0.0
  %7248 = vmatprep.subr.mxu0 0.0
  %7249 = vmatpush1.msra.mxu0 0.0
  %7250 = vmatprep.subr.mxu0 0.0
  %7251 = vmatpush1.msra.mxu0 0.0
  %7252 = vmatprep.subr.mxu0 0.0
  %7253 = vmatpush1.msra.mxu0 0.0
  %7254 = vmatprep.subr.mxu0 0.0
  %7255 = vmatpush1.msra.mxu0 0.0
  %7256 = vmatprep.subr.mxu0 0.0
  %7257 = vmatpush1.msra.mxu0 0.0
  %7258 = vmatprep.subr.mxu0 0.0
  %7259 = vmatpush1.msra.mxu0 0.0
  %7260 = vmatprep.subr.mxu0 0.0
  %7261 = vmatpush1.msra.mxu0 0.0
  %7262 = vmatprep.subr.mxu0 0.0
  %7263 = vmatpush1.msra.mxu0 0.0
  %7264 = vmatprep.subr.mxu0 0.0
  %7265 = vmatpush1.msra.mxu0 0.0
  %7266 = vmatprep.subr.mxu0 0.0
  %7267 = vmatpush1.msra.mxu0 0.0
  %7268 = vmatprep.subr.mxu0 0.0
  %7269 = vmatpush1.msra.mxu0 0.0
  %7270 = vmatprep.subr.mxu0 0.0
  %7271 = vmatpush1.msra.mxu0 0.0
  %7272 = vmatprep.subr.mxu0 0.0
  %7273 = vmatpush1.msra.mxu0 0.0
  %7274 = vmatprep.subr.mxu0 0.0
  %7275 = vmatpush1.msra.mxu0 0.0
  %7276 = vmatprep.subr.mxu0 0.0
  %7277 = vmatpush1.msra.mxu0 0.0
  %7278 = vmatprep.subr.mxu0 0.0
  %7279 = vmatpush1.msra.mxu0 0.0
  %7280 = vmatprep.subr.mxu0 0.0
  %7281 = vmatpush1.msra.mxu0 0.0
  %7282 = vmatprep.subr.mxu0 0.0
  %7283 = vmatpush1.msra.mxu0 0.0
  %7284 = vmatprep.subr.mxu0 0.0
  %7285 = vmatpush1.msra.mxu0 0.0
  %7286 = vmatprep.subr.mxu0 0.0
  %7287 = vmatpush1.msra.mxu0 0.0
  %7288 = vmatprep.subr.mxu0 0.0
  %7289 = vmatpush1.msra.mxu0 0.0
  %7290 = vmatprep.subr.mxu0 0.0
  %7291 = vmatpush1.msra.mxu0 0.0
  %7292 = vmatprep.subr.mxu0 0.0
  %7293 = vmatpush1.msra.mxu0 0.0
  %7294 = vmatprep.subr.mxu0 0.0
  %7295 = vmatpush1.msra.mxu0 0.0
  %7296 = vmatprep.subr.mxu0 0.0
  %7297 = vmatpush1.msra.mxu0 0.0
  %7298 = vmatprep.subr.mxu0 0.0
  %7299 = vmatpush1.msra.mxu0 0.0
  %7300 = vmatprep.subr.mxu0 0.0
  %7301 = vmatpush1.msra.mxu0 0.0
  %7302 = vmatprep.subr.mxu0 0.0
  %7303 = vmatpush1.msra.mxu0 0.0
  %7304 = vmatprep.subr.mxu0 0.0
  %7305 = vmatpush1.msra.mxu0 0.0
  %7306 = vmatprep.mubr.f32.mxu0 0.0
  %7307 = vmatmul.mubr.f32.gmra.mrb[0].mxu0 %v7240
  %v7308 = vpop.f32.mrb[0].mxu0
  %v7309 = vadd.f32 0.0, %v7308
  %v7310 = vpop.f32.mrb[0].mxu0
  %7311 = vdwg.mxu0
  %s7312 = scalar_lea.vmem %s55, 32
  %v7313 = vld [vmem:[%s7312] sm:$0xff]
  %v7314 = vld [vmem:[%s7312 + $0x8] sm:$0xff]
  %v7316 = vsel %vm1363, %v7309, 0
  %7318 = vmatprep.subr.mxu0 0.0
  %7319 = vmatpush1.msra.mxu0 %v7313
  %7320 = vmatprep.subr.mxu0 0.0
  %7321 = vmatpush1.msra.mxu0 %v7314
  %7322 = vmatprep.subr.mxu0 0.0
  %7323 = vmatpush1.msra.mxu0 0.0
  %7324 = vmatprep.subr.mxu0 0.0
  %7325 = vmatpush1.msra.mxu0 0.0
  %7326 = vmatprep.subr.mxu0 0.0
  %7327 = vmatpush1.msra.mxu0 0.0
  %7328 = vmatprep.subr.mxu0 0.0
  %7329 = vmatpush1.msra.mxu0 0.0
  %7330 = vmatprep.subr.mxu0 0.0
  %7331 = vmatpush1.msra.mxu0 0.0
  %7332 = vmatprep.subr.mxu0 0.0
  %7333 = vmatpush1.msra.mxu0 0.0
  %7334 = vmatprep.subr.mxu0 0.0
  %7335 = vmatpush1.msra.mxu0 0.0
  %7336 = vmatprep.subr.mxu0 0.0
  %7337 = vmatpush1.msra.mxu0 0.0
  %7338 = vmatprep.subr.mxu0 0.0
  %7339 = vmatpush1.msra.mxu0 0.0
  %7340 = vmatprep.subr.mxu0 0.0
  %7341 = vmatpush1.msra.mxu0 0.0
  %7342 = vmatprep.subr.mxu0 0.0
  %7343 = vmatpush1.msra.mxu0 0.0
  %7344 = vmatprep.subr.mxu0 0.0
  %7345 = vmatpush1.msra.mxu0 0.0
  %7346 = vmatprep.subr.mxu0 0.0
  %7347 = vmatpush1.msra.mxu0 0.0
  %7348 = vmatprep.subr.mxu0 0.0
  %7349 = vmatpush1.msra.mxu0 0.0
  %7350 = vmatprep.subr.mxu0 0.0
  %7351 = vmatpush1.msra.mxu0 0.0
  %7352 = vmatprep.subr.mxu0 0.0
  %7353 = vmatpush1.msra.mxu0 0.0
  %7354 = vmatprep.subr.mxu0 0.0
  %7355 = vmatpush1.msra.mxu0 0.0
  %7356 = vmatprep.subr.mxu0 0.0
  %7357 = vmatpush1.msra.mxu0 0.0
  %7358 = vmatprep.subr.mxu0 0.0
  %7359 = vmatpush1.msra.mxu0 0.0
  %7360 = vmatprep.subr.mxu0 0.0
  %7361 = vmatpush1.msra.mxu0 0.0
  %7362 = vmatprep.subr.mxu0 0.0
  %7363 = vmatpush1.msra.mxu0 0.0
  %7364 = vmatprep.subr.mxu0 0.0
  %7365 = vmatpush1.msra.mxu0 0.0
  %7366 = vmatprep.subr.mxu0 0.0
  %7367 = vmatpush1.msra.mxu0 0.0
  %7368 = vmatprep.subr.mxu0 0.0
  %7369 = vmatpush1.msra.mxu0 0.0
  %7370 = vmatprep.subr.mxu0 0.0
  %7371 = vmatpush1.msra.mxu0 0.0
  %7372 = vmatprep.subr.mxu0 0.0
  %7373 = vmatpush1.msra.mxu0 0.0
  %7374 = vmatprep.subr.mxu0 0.0
  %7375 = vmatpush1.msra.mxu0 0.0
  %7376 = vmatprep.subr.mxu0 0.0
  %7377 = vmatpush1.msra.mxu0 0.0
  %7378 = vmatprep.subr.mxu0 0.0
  %7379 = vmatpush1.msra.mxu0 0.0
  %7380 = vmatprep.subr.mxu0 0.0
  %7381 = vmatpush1.msra.mxu0 0.0
  %7382 = vmatprep.mubr.f32.mxu0 0.0
  %7383 = vmatmul.mubr.f32.gmra.mrb[0].mxu0 %v7316
  %v7384 = vpop.f32.mrb[0].mxu0
  %v7385 = vadd.f32 0.0, %v7384
  %v7386 = vpop.f32.mrb[0].mxu0
  %7387 = vdwg.mxu0
  %v7388 = vadd.f32 %v7149, %v7385
  %v7390 = vsel %vm1363, %v6495, 0
  %v7393 = vsel %vm1363, %v6581, 0
  %7395 = vmatprep.subr.mxu0 0.0
  %7396 = vmatpush1.xpose.msra.mxu0 %v7393
  %7397 = vmatprep.subr.mxu0 0.0
  %7398 = vmatpush1.xpose.msra.mxu0 0.0
  %7399 = vmatprep.subr.mxu0 0.0
  %7400 = vmatpush1.xpose.msra.mxu0 0.0
  %7401 = vmatprep.subr.mxu0 0.0
  %7402 = vmatpush1.xpose.msra.mxu0 0.0
  %7403 = vmatprep.subr.mxu0 0.0
  %7404 = vmatpush1.xpose.msra.mxu0 0.0
  %7405 = vmatprep.subr.mxu0 0.0
  %7406 = vmatpush1.xpose.msra.mxu0 0.0
  %7407 = vmatprep.subr.mxu0 0.0
  %7408 = vmatpush1.xpose.msra.mxu0 0.0
  %7409 = vmatprep.subr.mxu0 0.0
  %7410 = vmatpush1.xpose.msra.mxu0 0.0
  %7411 = vmatprep.subr.mxu0 0.0
  %7412 = vmatpush1.xpose.msra.mxu0 0.0
  %7413 = vmatprep.subr.mxu0 0.0
  %7414 = vmatpush1.xpose.msra.mxu0 0.0
  %7415 = vmatprep.subr.mxu0 0.0
  %7416 = vmatpush1.xpose.msra.mxu0 0.0
  %7417 = vmatprep.subr.mxu0 0.0
  %7418 = vmatpush1.xpose.msra.mxu0 0.0
  %7419 = vmatprep.subr.mxu0 0.0
  %7420 = vmatpush1.xpose.msra.mxu0 0.0
  %7421 = vmatprep.subr.mxu0 0.0
  %7422 = vmatpush1.xpose.msra.mxu0 0.0
  %7423 = vmatprep.subr.mxu0 0.0
  %7424 = vmatpush1.xpose.msra.mxu0 0.0
  %7425 = vmatprep.subr.mxu0 0.0
  %7426 = vmatpush1.xpose.msra.mxu0 0.0
  %7427 = vmatprep.subr.mxu0 0.0
  %7428 = vmatpush1.xpose.msra.mxu0 0.0
  %7429 = vmatprep.subr.mxu0 0.0
  %7430 = vmatpush1.xpose.msra.mxu0 0.0
  %7431 = vmatprep.subr.mxu0 0.0
  %7432 = vmatpush1.xpose.msra.mxu0 0.0
  %7433 = vmatprep.subr.mxu0 0.0
  %7434 = vmatpush1.xpose.msra.mxu0 0.0
  %7435 = vmatprep.subr.mxu0 0.0
  %7436 = vmatpush1.xpose.msra.mxu0 0.0
  %7437 = vmatprep.subr.mxu0 0.0
  %7438 = vmatpush1.xpose.msra.mxu0 0.0
  %7439 = vmatprep.subr.mxu0 0.0
  %7440 = vmatpush1.xpose.msra.mxu0 0.0
  %7441 = vmatprep.subr.mxu0 0.0
  %7442 = vmatpush1.xpose.msra.mxu0 0.0
  %7443 = vmatprep.subr.mxu0 0.0
  %7444 = vmatpush1.xpose.msra.mxu0 0.0
  %7445 = vmatprep.subr.mxu0 0.0
  %7446 = vmatpush1.xpose.msra.mxu0 0.0
  %7447 = vmatprep.subr.mxu0 0.0
  %7448 = vmatpush1.xpose.msra.mxu0 0.0
  %7449 = vmatprep.subr.mxu0 0.0
  %7450 = vmatpush1.xpose.msra.mxu0 0.0
  %7451 = vmatprep.subr.mxu0 0.0
  %7452 = vmatpush1.xpose.msra.mxu0 0.0
  %7453 = vmatprep.subr.mxu0 0.0
  %7454 = vmatpush1.xpose.msra.mxu0 0.0
  %7455 = vmatprep.subr.mxu0 0.0
  %7456 = vmatpush1.xpose.msra.mxu0 0.0
  %7457 = vmatprep.subr.mxu0 0.0
  %7458 = vmatpush1.xpose.msra.mxu0 0.0
  %7459 = vmatprep.mubr.f32.mxu0 0.0
  %7460 = vmatmul.mubr.f32.gmra.mrb[0].mxu0 %v7390
  %v7461 = vpop.f32.mrb[0].mxu0
  %v7462 = vadd.f32 0.0, %v7461
  %v7463 = vpop.f32.mrb[0].mxu0
  %7464 = vdwg.mxu0
  %v7465 = vsel %vm1440, %v7462, -inf
  %7466 = vmax.xlane.f32.xlu0 %v7465
  %v7467 = vpop.xlane.xlu0 %7466
  %v7468 = vsub.f32 %v7462, %v7467
  %v7469 = vmul.f32 %v7468, 1.442695
  %v7470 = vpow.pop %v7469
  %v7471 = vsel %vm1440, %v7470, 0.0
  %7472 = vadd.xlane.f32.xlu0 %v7471
  %v7473 = vpop.xlane.xlu0 %7472
  %v7474 = vrcp.pop %v7473
  %v7475 = vmul.f32 %v7470, %v7474
  %v7477 = vsel %vm1440, %v7475, 0
  %7479 = vmatprep.subr.mxu0 0.0
  %7480 = vmatpush1.msra.mxu0 %v6673
  %7481 = vmatprep.subr.mxu0 0.0
  %7482 = vmatpush1.msra.mxu0 0.0
  %7483 = vmatprep.subr.mxu0 0.0
  %7484 = vmatpush1.msra.mxu0 0.0
  %7485 = vmatprep.subr.mxu0 0.0
  %7486 = vmatpush1.msra.mxu0 0.0
  %7487 = vmatprep.subr.mxu0 0.0
  %7488 = vmatpush1.msra.mxu0 0.0
  %7489 = vmatprep.subr.mxu0 0.0
  %7490 = vmatpush1.msra.mxu0 0.0
  %7491 = vmatprep.subr.mxu0 0.0
  %7492 = vmatpush1.msra.mxu0 0.0
  %7493 = vmatprep.subr.mxu0 0.0
  %7494 = vmatpush1.msra.mxu0 0.0
  %7495 = vmatprep.subr.mxu0 0.0
  %7496 = vmatpush1.msra.mxu0 0.0
  %7497 = vmatprep.subr.mxu0 0.0
  %7498 = vmatpush1.msra.mxu0 0.0
  %7499 = vmatprep.subr.mxu0 0.0
  %7500 = vmatpush1.msra.mxu0 0.0
  %7501 = vmatprep.subr.mxu0 0.0
  %7502 = vmatpush1.msra.mxu0 0.0
  %7503 = vmatprep.subr.mxu0 0.0
  %7504 = vmatpush1.msra.mxu0 0.0
  %7505 = vmatprep.subr.mxu0 0.0
  %7506 = vmatpush1.msra.mxu0 0.0
  %7507 = vmatprep.subr.mxu0 0.0
  %7508 = vmatpush1.msra.mxu0 0.0
  %7509 = vmatprep.subr.mxu0 0.0
  %7510 = vmatpush1.msra.mxu0 0.0
  %7511 = vmatprep.subr.mxu0 0.0
  %7512 = vmatpush1.msra.mxu0 0.0
  %7513 = vmatprep.subr.mxu0 0.0
  %7514 = vmatpush1.msra.mxu0 0.0
  %7515 = vmatprep.subr.mxu0 0.0
  %7516 = vmatpush1.msra.mxu0 0.0
  %7517 = vmatprep.subr.mxu0 0.0
  %7518 = vmatpush1.msra.mxu0 0.0
  %7519 = vmatprep.subr.mxu0 0.0
  %7520 = vmatpush1.msra.mxu0 0.0
  %7521 = vmatprep.subr.mxu0 0.0
  %7522 = vmatpush1.msra.mxu0 0.0
  %7523 = vmatprep.subr.mxu0 0.0
  %7524 = vmatpush1.msra.mxu0 0.0
  %7525 = vmatprep.subr.mxu0 0.0
  %7526 = vmatpush1.msra.mxu0 0.0
  %7527 = vmatprep.subr.mxu0 0.0
  %7528 = vmatpush1.msra.mxu0 0.0
  %7529 = vmatprep.subr.mxu0 0.0
  %7530 = vmatpush1.msra.mxu0 0.0
  %7531 = vmatprep.subr.mxu0 0.0
  %7532 = vmatpush1.msra.mxu0 0.0
  %7533 = vmatprep.subr.mxu0 0.0
  %7534 = vmatpush1.msra.mxu0 0.0
  %7535 = vmatprep.subr.mxu0 0.0
  %7536 = vmatpush1.msra.mxu0 0.0
  %7537 = vmatprep.subr.mxu0 0.0
  %7538 = vmatpush1.msra.mxu0 0.0
  %7539 = vmatprep.subr.mxu0 0.0
  %7540 = vmatpush1.msra.mxu0 0.0
  %7541 = vmatprep.subr.mxu0 0.0
  %7542 = vmatpush1.msra.mxu0 0.0
  %7543 = vmatprep.mubr.f32.mxu0 0.0
  %7544 = vmatmul.mubr.f32.gmra.mrb[0].mxu0 %v7477
  %v7545 = vpop.f32.mrb[0].mxu0
  %v7546 = vadd.f32 0.0, %v7545
  %v7547 = vpop.f32.mrb[0].mxu0
  %7548 = vdwg.mxu0
  %s7549 = scalar_lea.vmem %s55, 48
  %v7550 = vld [vmem:[%s7549] sm:$0xff]
  %v7551 = vld [vmem:[%s7549 + $0x8] sm:$0xff]
  %v7553 = vsel %vm1363, %v7546, 0
  %7555 = vmatprep.subr.mxu0 0.0
  %7556 = vmatpush1.msra.mxu0 %v7550
  %7557 = vmatprep.subr.mxu0 0.0
  %7558 = vmatpush1.msra.mxu0 %v7551
  %7559 = vmatprep.subr.mxu0 0.0
  %7560 = vmatpush1.msra.mxu0 0.0
  %7561 = vmatprep.subr.mxu0 0.0
  %7562 = vmatpush1.msra.mxu0 0.0
  %7563 = vmatprep.subr.mxu0 0.0
  %7564 = vmatpush1.msra.mxu0 0.0
  %7565 = vmatprep.subr.mxu0 0.0
  %7566 = vmatpush1.msra.mxu0 0.0
  %7567 = vmatprep.subr.mxu0 0.0
  %7568 = vmatpush1.msra.mxu0 0.0
  %7569 = vmatprep.subr.mxu0 0.0
  %7570 = vmatpush1.msra.mxu0 0.0
  %7571 = vmatprep.subr.mxu0 0.0
  %7572 = vmatpush1.msra.mxu0 0.0
  %7573 = vmatprep.subr.mxu0 0.0
  %7574 = vmatpush1.msra.mxu0 0.0
  %7575 = vmatprep.subr.mxu0 0.0
  %7576 = vmatpush1.msra.mxu0 0.0
  %7577 = vmatprep.subr.mxu0 0.0
  %7578 = vmatpush1.msra.mxu0 0.0
  %7579 = vmatprep.subr.mxu0 0.0
  %7580 = vmatpush1.msra.mxu0 0.0
  %7581 = vmatprep.subr.mxu0 0.0
  %7582 = vmatpush1.msra.mxu0 0.0
  %7583 = vmatprep.subr.mxu0 0.0
  %7584 = vmatpush1.msra.mxu0 0.0
  %7585 = vmatprep.subr.mxu0 0.0
  %7586 = vmatpush1.msra.mxu0 0.0
  %7587 = vmatprep.subr.mxu0 0.0
  %7588 = vmatpush1.msra.mxu0 0.0
  %7589 = vmatprep.subr.mxu0 0.0
  %7590 = vmatpush1.msra.mxu0 0.0
  %7591 = vmatprep.subr.mxu0 0.0
  %7592 = vmatpush1.msra.mxu0 0.0
  %7593 = vmatprep.subr.mxu0 0.0
  %7594 = vmatpush1.msra.mxu0 0.0
  %7595 = vmatprep.subr.mxu0 0.0
  %7596 = vmatpush1.msra.mxu0 0.0
  %7597 = vmatprep.subr.mxu0 0.0
  %7598 = vmatpush1.msra.mxu0 0.0
  %7599 = vmatprep.subr.mxu0 0.0
  %7600 = vmatpush1.msra.mxu0 0.0
  %7601 = vmatprep.subr.mxu0 0.0
  %7602 = vmatpush1.msra.mxu0 0.0
  %7603 = vmatprep.subr.mxu0 0.0
  %7604 = vmatpush1.msra.mxu0 0.0
  %7605 = vmatprep.subr.mxu0 0.0
  %7606 = vmatpush1.msra.mxu0 0.0
  %7607 = vmatprep.subr.mxu0 0.0
  %7608 = vmatpush1.msra.mxu0 0.0
  %7609 = vmatprep.subr.mxu0 0.0
  %7610 = vmatpush1.msra.mxu0 0.0
  %7611 = vmatprep.subr.mxu0 0.0
  %7612 = vmatpush1.msra.mxu0 0.0
  %7613 = vmatprep.subr.mxu0 0.0
  %7614 = vmatpush1.msra.mxu0 0.0
  %7615 = vmatprep.subr.mxu0 0.0
  %7616 = vmatpush1.msra.mxu0 0.0
  %7617 = vmatprep.subr.mxu0 0.0
  %7618 = vmatpush1.msra.mxu0 0.0
  %7619 = vmatprep.mubr.f32.mxu0 0.0
  %7620 = vmatmul.mubr.f32.gmra.mrb[0].mxu0 %v7553
  %v7621 = vpop.f32.mrb[0].mxu0
  %v7622 = vadd.f32 0.0, %v7621
  %v7623 = vpop.f32.mrb[0].mxu0
  %7624 = vdwg.mxu0
  %v7625 = vadd.f32 %v7388, %v7622
  %v7626 = vld [vmem:[%s57] sm:$0x1]
  %v7628 = vlaneseq
  %v7629 = vshrl.u32 %v7628, 7
  %v7630 = vsub.s32 0, %v7629
  %v7631 = vrot.slane %v7626, %v7630
  %v7633 = vadd.f32 %v7625, %v7631
  %v7635 = vsel %vm1363, %v5666, 0
  %v7638 = vsel %vm1363, %v5754, 0
  %7640 = vmatprep.subr.mxu0 0.0
  %7641 = vmatpush1.xpose.msra.mxu0 %v7638
  %7642 = vmatprep.subr.mxu0 0.0
  %7643 = vmatpush1.xpose.msra.mxu0 0.0
  %7644 = vmatprep.subr.mxu0 0.0
  %7645 = vmatpush1.xpose.msra.mxu0 0.0
  %7646 = vmatprep.subr.mxu0 0.0
  %7647 = vmatpush1.xpose.msra.mxu0 0.0
  %7648 = vmatprep.subr.mxu0 0.0
  %7649 = vmatpush1.xpose.msra.mxu0 0.0
  %7650 = vmatprep.subr.mxu0 0.0
  %7651 = vmatpush1.xpose.msra.mxu0 0.0
  %7652 = vmatprep.subr.mxu0 0.0
  %7653 = vmatpush1.xpose.msra.mxu0 0.0
  %7654 = vmatprep.subr.mxu0 0.0
  %7655 = vmatpush1.xpose.msra.mxu0 0.0
  %7656 = vmatprep.subr.mxu0 0.0
  %7657 = vmatpush1.xpose.msra.mxu0 0.0
  %7658 = vmatprep.subr.mxu0 0.0
  %7659 = vmatpush1.xpose.msra.mxu0 0.0
  %7660 = vmatprep.subr.mxu0 0.0
  %7661 = vmatpush1.xpose.msra.mxu0 0.0
  %7662 = vmatprep.subr.mxu0 0.0
  %7663 = vmatpush1.xpose.msra.mxu0 0.0
  %7664 = vmatprep.subr.mxu0 0.0
  %7665 = vmatpush1.xpose.msra.mxu0 0.0
  %7666 = vmatprep.subr.mxu0 0.0
  %7667 = vmatpush1.xpose.msra.mxu0 0.0
  %7668 = vmatprep.subr.mxu0 0.0
  %7669 = vmatpush1.xpose.msra.mxu0 0.0
  %7670 = vmatprep.subr.mxu0 0.0
  %7671 = vmatpush1.xpose.msra.mxu0 0.0
  %7672 = vmatprep.subr.mxu0 0.0
  %7673 = vmatpush1.xpose.msra.mxu0 0.0
  %7674 = vmatprep.subr.mxu0 0.0
  %7675 = vmatpush1.xpose.msra.mxu0 0.0
  %7676 = vmatprep.subr.mxu0 0.0
  %7677 = vmatpush1.xpose.msra.mxu0 0.0
  %7678 = vmatprep.subr.mxu0 0.0
  %7679 = vmatpush1.xpose.msra.mxu0 0.0
  %7680 = vmatprep.subr.mxu0 0.0
  %7681 = vmatpush1.xpose.msra.mxu0 0.0
  %7682 = vmatprep.subr.mxu0 0.0
  %7683 = vmatpush1.xpose.msra.mxu0 0.0
  %7684 = vmatprep.subr.mxu0 0.0
  %7685 = vmatpush1.xpose.msra.mxu0 0.0
  %7686 = vmatprep.subr.mxu0 0.0
  %7687 = vmatpush1.xpose.msra.mxu0 0.0
  %7688 = vmatprep.subr.mxu0 0.0
  %7689 = vmatpush1.xpose.msra.mxu0 0.0
  %7690 = vmatprep.subr.mxu0 0.0
  %7691 = vmatpush1.xpose.msra.mxu0 0.0
  %7692 = vmatprep.subr.mxu0 0.0
  %7693 = vmatpush1.xpose.msra.mxu0 0.0
  %7694 = vmatprep.subr.mxu0 0.0
  %7695 = vmatpush1.xpose.msra.mxu0 0.0
  %7696 = vmatprep.subr.mxu0 0.0
  %7697 = vmatpush1.xpose.msra.mxu0 0.0
  %7698 = vmatprep.subr.mxu0 0.0
  %7699 = vmatpush1.xpose.msra.mxu0 0.0
  %7700 = vmatprep.subr.mxu0 0.0
  %7701 = vmatpush1.xpose.msra.mxu0 0.0
  %7702 = vmatprep.subr.mxu0 0.0
  %7703 = vmatpush1.xpose.msra.mxu0 0.0
  %7704 = vmatprep.mubr.f32.mxu0 0.0
  %7705 = vmatmul.mubr.f32.gmra.mrb[0].mxu0 %v7635
  %v7706 = vpop.f32.mrb[0].mxu0
  %v7707 = vadd.f32 0.0, %v7706
  %v7708 = vpop.f32.mrb[0].mxu0
  %7709 = vdwg.mxu0
  %v7710 = vsel %vm1440, %v7707, -inf
  %7711 = vmax.xlane.f32.xlu0 %v7710
  %v7712 = vpop.xlane.xlu0 %7711
  %v7713 = vsub.f32 %v7707, %v7712
  %v7714 = vmul.f32 %v7713, 1.442695
  %v7715 = vpow.pop %v7714
  %v7716 = vsel %vm1440, %v7715, 0.0
  %7717 = vadd.xlane.f32.xlu0 %v7716
  %v7718 = vpop.xlane.xlu0 %7717
  %v7719 = vrcp.pop %v7718
  %v7720 = vmul.f32 %v7715, %v7719
  %v7722 = vsel %vm1440, %v7720, 0
  %7724 = vmatprep.subr.mxu0 0.0
  %7725 = vmatpush1.msra.mxu0 %v5844
  %7726 = vmatprep.subr.mxu0 0.0
  %7727 = vmatpush1.msra.mxu0 0.0
  %7728 = vmatprep.subr.mxu0 0.0
  %7729 = vmatpush1.msra.mxu0 0.0
  %7730 = vmatprep.subr.mxu0 0.0
  %7731 = vmatpush1.msra.mxu0 0.0
  %7732 = vmatprep.subr.mxu0 0.0
  %7733 = vmatpush1.msra.mxu0 0.0
  %7734 = vmatprep.subr.mxu0 0.0
  %7735 = vmatpush1.msra.mxu0 0.0
  %7736 = vmatprep.subr.mxu0 0.0
  %7737 = vmatpush1.msra.mxu0 0.0
  %7738 = vmatprep.subr.mxu0 0.0
  %7739 = vmatpush1.msra.mxu0 0.0
  %7740 = vmatprep.subr.mxu0 0.0
  %7741 = vmatpush1.msra.mxu0 0.0
  %7742 = vmatprep.subr.mxu0 0.0
  %7743 = vmatpush1.msra.mxu0 0.0
  %7744 = vmatprep.subr.mxu0 0.0
  %7745 = vmatpush1.msra.mxu0 0.0
  %7746 = vmatprep.subr.mxu0 0.0
  %7747 = vmatpush1.msra.mxu0 0.0
  %7748 = vmatprep.subr.mxu0 0.0
  %7749 = vmatpush1.msra.mxu0 0.0
  %7750 = vmatprep.subr.mxu0 0.0
  %7751 = vmatpush1.msra.mxu0 0.0
  %7752 = vmatprep.subr.mxu0 0.0
  %7753 = vmatpush1.msra.mxu0 0.0
  %7754 = vmatprep.subr.mxu0 0.0
  %7755 = vmatpush1.msra.mxu0 0.0
  %7756 = vmatprep.subr.mxu0 0.0
  %7757 = vmatpush1.msra.mxu0 0.0
  %7758 = vmatprep.subr.mxu0 0.0
  %7759 = vmatpush1.msra.mxu0 0.0
  %7760 = vmatprep.subr.mxu0 0.0
  %7761 = vmatpush1.msra.mxu0 0.0
  %7762 = vmatprep.subr.mxu0 0.0
  %7763 = vmatpush1.msra.mxu0 0.0
  %7764 = vmatprep.subr.mxu0 0.0
  %7765 = vmatpush1.msra.mxu0 0.0
  %7766 = vmatprep.subr.mxu0 0.0
  %7767 = vmatpush1.msra.mxu0 0.0
  %7768 = vmatprep.subr.mxu0 0.0
  %7769 = vmatpush1.msra.mxu0 0.0
  %7770 = vmatprep.subr.mxu0 0.0
  %7771 = vmatpush1.msra.mxu0 0.0
  %7772 = vmatprep.subr.mxu0 0.0
  %7773 = vmatpush1.msra.mxu0 0.0
  %7774 = vmatprep.subr.mxu0 0.0
  %7775 = vmatpush1.msra.mxu0 0.0
  %7776 = vmatprep.subr.mxu0 0.0
  %7777 = vmatpush1.msra.mxu0 0.0
  %7778 = vmatprep.subr.mxu0 0.0
  %7779 = vmatpush1.msra.mxu0 0.0
  %7780 = vmatprep.subr.mxu0 0.0
  %7781 = vmatpush1.msra.mxu0 0.0
  %7782 = vmatprep.subr.mxu0 0.0
  %7783 = vmatpush1.msra.mxu0 0.0
  %7784 = vmatprep.subr.mxu0 0.0
  %7785 = vmatpush1.msra.mxu0 0.0
  %7786 = vmatprep.subr.mxu0 0.0
  %7787 = vmatpush1.msra.mxu0 0.0
  %7788 = vmatprep.mubr.f32.mxu0 0.0
  %7789 = vmatmul.mubr.f32.gmra.mrb[0].mxu0 %v7722
  %v7790 = vpop.f32.mrb[0].mxu0
  %v7791 = vadd.f32 0.0, %v7790
  %v7792 = vpop.f32.mrb[0].mxu0
  %7793 = vdwg.mxu0
  %v7795 = vsel %vm1363, %v5940, 0
  %v7798 = vsel %vm1363, %v6030, 0
  %7800 = vmatprep.subr.mxu0 0.0
  %7801 = vmatpush1.xpose.msra.mxu0 %v7798
  %7802 = vmatprep.subr.mxu0 0.0
  %7803 = vmatpush1.xpose.msra.mxu0 0.0
  %7804 = vmatprep.subr.mxu0 0.0
  %7805 = vmatpush1.xpose.msra.mxu0 0.0
  %7806 = vmatprep.subr.mxu0 0.0
  %7807 = vmatpush1.xpose.msra.mxu0 0.0
  %7808 = vmatprep.subr.mxu0 0.0
  %7809 = vmatpush1.xpose.msra.mxu0 0.0
  %7810 = vmatprep.subr.mxu0 0.0
  %7811 = vmatpush1.xpose.msra.mxu0 0.0
  %7812 = vmatprep.subr.mxu0 0.0
  %7813 = vmatpush1.xpose.msra.mxu0 0.0
  %7814 = vmatprep.subr.mxu0 0.0
  %7815 = vmatpush1.xpose.msra.mxu0 0.0
  %7816 = vmatprep.subr.mxu0 0.0
  %7817 = vmatpush1.xpose.msra.mxu0 0.0
  %7818 = vmatprep.subr.mxu0 0.0
  %7819 = vmatpush1.xpose.msra.mxu0 0.0
  %7820 = vmatprep.subr.mxu0 0.0
  %7821 = vmatpush1.xpose.msra.mxu0 0.0
  %7822 = vmatprep.subr.mxu0 0.0
  %7823 = vmatpush1.xpose.msra.mxu0 0.0
  %7824 = vmatprep.subr.mxu0 0.0
  %7825 = vmatpush1.xpose.msra.mxu0 0.0
  %7826 = vmatprep.subr.mxu0 0.0
  %7827 = vmatpush1.xpose.msra.mxu0 0.0
  %7828 = vmatprep.subr.mxu0 0.0
  %7829 = vmatpush1.xpose.msra.mxu0 0.0
  %7830 = vmatprep.subr.mxu0 0.0
  %7831 = vmatpush1.xpose.msra.mxu0 0.0
  %7832 = vmatprep.subr.mxu0 0.0
  %7833 = vmatpush1.xpose.msra.mxu0 0.0
  %7834 = vmatprep.subr.mxu0 0.0
  %7835 = vmatpush1.xpose.msra.mxu0 0.0
  %7836 = vmatprep.subr.mxu0 0.0
  %7837 = vmatpush1.xpose.msra.mxu0 0.0
  %7838 = vmatprep.subr.mxu0 0.0
  %7839 = vmatpush1.xpose.msra.mxu0 0.0
  %7840 = vmatprep.subr.mxu0 0.0
  %7841 = vmatpush1.xpose.msra.mxu0 0.0
  %7842 = vmatprep.subr.mxu0 0.0
  %7843 = vmatpush1.xpose.msra.mxu0 0.0
  %7844 = vmatprep.subr.mxu0 0.0
  %7845 = vmatpush1.xpose.msra.mxu0 0.0
  %7846 = vmatprep.subr.mxu0 0.0
  %7847 = vmatpush1.xpose.msra.mxu0 0.0
  %7848 = vmatprep.subr.mxu0 0.0
  %7849 = vmatpush1.xpose.msra.mxu0 0.0
  %7850 = vmatprep.subr.mxu0 0.0
  %7851 = vmatpush1.xpose.msra.mxu0 0.0
  %7852 = vmatprep.subr.mxu0 0.0
  %7853 = vmatpush1.xpose.msra.mxu0 0.0
  %7854 = vmatprep.subr.mxu0 0.0
  %7855 = vmatpush1.xpose.msra.mxu0 0.0
  %7856 = vmatprep.subr.mxu0 0.0
  %7857 = vmatpush1.xpose.msra.mxu0 0.0
  %7858 = vmatprep.subr.mxu0 0.0
  %7859 = vmatpush1.xpose.msra.mxu0 0.0
  %7860 = vmatprep.subr.mxu0 0.0
  %7861 = vmatpush1.xpose.msra.mxu0 0.0
  %7862 = vmatprep.subr.mxu0 0.0
  %7863 = vmatpush1.xpose.msra.mxu0 0.0
  %7864 = vmatprep.mubr.f32.mxu0 0.0
  %7865 = vmatmul.mubr.f32.gmra.mrb[0].mxu0 %v7795
  %v7866 = vpop.f32.mrb[0].mxu0
  %v7867 = vadd.f32 0.0, %v7866
  %v7868 = vpop.f32.mrb[0].mxu0
  %7869 = vdwg.mxu0
  %v7870 = vsel %vm1440, %v7867, -inf
  %7871 = vmax.xlane.f32.xlu0 %v7870
  %v7872 = vpop.xlane.xlu0 %7871
  %v7873 = vsub.f32 %v7867, %v7872
  %v7874 = vmul.f32 %v7873, 1.442695
  %v7875 = vpow.pop %v7874
  %v7876 = vsel %vm1440, %v7875, 0.0
  %7877 = vadd.xlane.f32.xlu0 %v7876
  %v7878 = vpop.xlane.xlu0 %7877
  %v7879 = vrcp.pop %v7878
  %v7880 = vmul.f32 %v7875, %v7879
  %v7882 = vsel %vm1440, %v7880, 0
  %7884 = vmatprep.subr.mxu0 0.0
  %7885 = vmatpush1.msra.mxu0 %v6122
  %7886 = vmatprep.subr.mxu0 0.0
  %7887 = vmatpush1.msra.mxu0 0.0
  %7888 = vmatprep.subr.mxu0 0.0
  %7889 = vmatpush1.msra.mxu0 0.0
  %7890 = vmatprep.subr.mxu0 0.0
  %7891 = vmatpush1.msra.mxu0 0.0
  %7892 = vmatprep.subr.mxu0 0.0
  %7893 = vmatpush1.msra.mxu0 0.0
  %7894 = vmatprep.subr.mxu0 0.0
  %7895 = vmatpush1.msra.mxu0 0.0
  %7896 = vmatprep.subr.mxu0 0.0
  %7897 = vmatpush1.msra.mxu0 0.0
  %7898 = vmatprep.subr.mxu0 0.0
  %7899 = vmatpush1.msra.mxu0 0.0
  %7900 = vmatprep.subr.mxu0 0.0
  %7901 = vmatpush1.msra.mxu0 0.0
  %7902 = vmatprep.subr.mxu0 0.0
  %7903 = vmatpush1.msra.mxu0 0.0
  %7904 = vmatprep.subr.mxu0 0.0
  %7905 = vmatpush1.msra.mxu0 0.0
  %7906 = vmatprep.subr.mxu0 0.0
  %7907 = vmatpush1.msra.mxu0 0.0
  %7908 = vmatprep.subr.mxu0 0.0
  %7909 = vmatpush1.msra.mxu0 0.0
  %7910 = vmatprep.subr.mxu0 0.0
  %7911 = vmatpush1.msra.mxu0 0.0
  %7912 = vmatprep.subr.mxu0 0.0
  %7913 = vmatpush1.msra.mxu0 0.0
  %7914 = vmatprep.subr.mxu0 0.0
  %7915 = vmatpush1.msra.mxu0 0.0
  %7916 = vmatprep.subr.mxu0 0.0
  %7917 = vmatpush1.msra.mxu0 0.0
  %7918 = vmatprep.subr.mxu0 0.0
  %7919 = vmatpush1.msra.mxu0 0.0
  %7920 = vmatprep.subr.mxu0 0.0
  %7921 = vmatpush1.msra.mxu0 0.0
  %7922 = vmatprep.subr.mxu0 0.0
  %7923 = vmatpush1.msra.mxu0 0.0
  %7924 = vmatprep.subr.mxu0 0.0
  %7925 = vmatpush1.msra.mxu0 0.0
  %7926 = vmatprep.subr.mxu0 0.0
  %7927 = vmatpush1.msra.mxu0 0.0
  %7928 = vmatprep.subr.mxu0 0.0
  %7929 = vmatpush1.msra.mxu0 0.0
  %7930 = vmatprep.subr.mxu0 0.0
  %7931 = vmatpush1.msra.mxu0 0.0
  %7932 = vmatprep.subr.mxu0 0.0
  %7933 = vmatpush1.msra.mxu0 0.0
  %7934 = vmatprep.subr.mxu0 0.0
  %7935 = vmatpush1.msra.mxu0 0.0
  %7936 = vmatprep.subr.mxu0 0.0
  %7937 = vmatpush1.msra.mxu0 0.0
  %7938 = vmatprep.subr.mxu0 0.0
  %7939 = vmatpush1.msra.mxu0 0.0
  %7940 = vmatprep.subr.mxu0 0.0
  %7941 = vmatpush1.msra.mxu0 0.0
  %7942 = vmatprep.subr.mxu0 0.0
  %7943 = vmatpush1.msra.mxu0 0.0
  %7944 = vmatprep.subr.mxu0 0.0
  %7945 = vmatpush1.msra.mxu0 0.0
  %7946 = vmatprep.subr.mxu0 0.0
  %7947 = vmatpush1.msra.mxu0 0.0
  %7948 = vmatprep.mubr.f32.mxu0 0.0
  %7949 = vmatmul.mubr.f32.gmra.mrb[0].mxu0 %v7882
  %v7950 = vpop.f32.mrb[0].mxu0
  %v7951 = vadd.f32 0.0, %v7950
  %v7952 = vpop.f32.mrb[0].mxu0
  %7953 = vdwg.mxu0
  %v7955 = vsel %vm1363, %v7951, 0
  %7957 = vmatprep.subr.mxu0 0.0
  %7958 = vmatpush1.msra.mxu0 %v7004
  %7959 = vmatprep.subr.mxu0 0.0
  %7960 = vmatpush1.msra.mxu0 %v7005
  %7961 = vmatprep.subr.mxu0 0.0
  %7962 = vmatpush1.msra.mxu0 0.0
  %7963 = vmatprep.subr.mxu0 0.0
  %7964 = vmatpush1.msra.mxu0 0.0
  %7965 = vmatprep.subr.mxu0 0.0
  %7966 = vmatpush1.msra.mxu0 0.0
  %7967 = vmatprep.subr.mxu0 0.0
  %7968 = vmatpush1.msra.mxu0 0.0
  %7969 = vmatprep.subr.mxu0 0.0
  %7970 = vmatpush1.msra.mxu0 0.0
  %7971 = vmatprep.subr.mxu0 0.0
  %7972 = vmatpush1.msra.mxu0 0.0
  %7973 = vmatprep.subr.mxu0 0.0
  %7974 = vmatpush1.msra.mxu0 0.0
  %7975 = vmatprep.subr.mxu0 0.0
  %7976 = vmatpush1.msra.mxu0 0.0
  %7977 = vmatprep.subr.mxu0 0.0
  %7978 = vmatpush1.msra.mxu0 0.0
  %7979 = vmatprep.subr.mxu0 0.0
  %7980 = vmatpush1.msra.mxu0 0.0
  %7981 = vmatprep.subr.mxu0 0.0
  %7982 = vmatpush1.msra.mxu0 0.0
  %7983 = vmatprep.subr.mxu0 0.0
  %7984 = vmatpush1.msra.mxu0 0.0
  %7985 = vmatprep.subr.mxu0 0.0
  %7986 = vmatpush1.msra.mxu0 0.0
  %7987 = vmatprep.subr.mxu0 0.0
  %7988 = vmatpush1.msra.mxu0 0.0
  %7989 = vmatprep.subr.mxu0 0.0
  %7990 = vmatpush1.msra.mxu0 0.0
  %7991 = vmatprep.subr.mxu0 0.0
  %7992 = vmatpush1.msra.mxu0 0.0
  %7993 = vmatprep.subr.mxu0 0.0
  %7994 = vmatpush1.msra.mxu0 0.0
  %7995 = vmatprep.subr.mxu0 0.0
  %7996 = vmatpush1.msra.mxu0 0.0
  %7997 = vmatprep.subr.mxu0 0.0
  %7998 = vmatpush1.msra.mxu0 0.0
  %7999 = vmatprep.subr.mxu0 0.0
  %8000 = vmatpush1.msra.mxu0 0.0
  %8001 = vmatprep.subr.mxu0 0.0
  %8002 = vmatpush1.msra.mxu0 0.0
  %8003 = vmatprep.subr.mxu0 0.0
  %8004 = vmatpush1.msra.mxu0 0.0
  %8005 = vmatprep.subr.mxu0 0.0
  %8006 = vmatpush1.msra.mxu0 0.0
  %8007 = vmatprep.subr.mxu0 0.0
  %8008 = vmatpush1.msra.mxu0 0.0
  %8009 = vmatprep.subr.mxu0 0.0
  %8010 = vmatpush1.msra.mxu0 0.0
  %8011 = vmatprep.subr.mxu0 0.0
  %8012 = vmatpush1.msra.mxu0 0.0
  %8013 = vmatprep.subr.mxu0 0.0
  %8014 = vmatpush1.msra.mxu0 0.0
  %8015 = vmatprep.subr.mxu0 0.0
  %8016 = vmatpush1.msra.mxu0 0.0
  %8017 = vmatprep.subr.mxu0 0.0
  %8018 = vmatpush1.msra.mxu0 0.0
  %8019 = vmatprep.subr.mxu0 0.0
  %8020 = vmatpush1.msra.mxu0 0.0
  %8021 = vmatprep.mubr.f32.mxu0 0.0
  %8022 = vmatmul.mubr.f32.gmra.mrb[0].mxu0 %v7955
  %v8023 = vpop.f32.mrb[0].mxu0
  %v8024 = vadd.f32 0.0, %v8023
  %v8025 = vpop.f32.mrb[0].mxu0
  %8026 = vdwg.mxu0
  %v8028 = vsel %vm1363, %v7791, 0
  %8030 = vmatprep.subr.mxu0 0.0
  %8031 = vmatpush1.msra.mxu0 %v6841
  %8032 = vmatprep.subr.mxu0 0.0
  %8033 = vmatpush1.msra.mxu0 %v6842
  %8034 = vmatprep.subr.mxu0 0.0
  %8035 = vmatpush1.msra.mxu0 0.0
  %8036 = vmatprep.subr.mxu0 0.0
  %8037 = vmatpush1.msra.mxu0 0.0
  %8038 = vmatprep.subr.mxu0 0.0
  %8039 = vmatpush1.msra.mxu0 0.0
  %8040 = vmatprep.subr.mxu0 0.0
  %8041 = vmatpush1.msra.mxu0 0.0
  %8042 = vmatprep.subr.mxu0 0.0
  %8043 = vmatpush1.msra.mxu0 0.0
  %8044 = vmatprep.subr.mxu0 0.0
  %8045 = vmatpush1.msra.mxu0 0.0
  %8046 = vmatprep.subr.mxu0 0.0
  %8047 = vmatpush1.msra.mxu0 0.0
  %8048 = vmatprep.subr.mxu0 0.0
  %8049 = vmatpush1.msra.mxu0 0.0
  %8050 = vmatprep.subr.mxu0 0.0
  %8051 = vmatpush1.msra.mxu0 0.0
  %8052 = vmatprep.subr.mxu0 0.0
  %8053 = vmatpush1.msra.mxu0 0.0
  %8054 = vmatprep.subr.mxu0 0.0
  %8055 = vmatpush1.msra.mxu0 0.0
  %8056 = vmatprep.subr.mxu0 0.0
  %8057 = vmatpush1.msra.mxu0 0.0
  %8058 = vmatprep.subr.mxu0 0.0
  %8059 = vmatpush1.msra.mxu0 0.0
  %8060 = vmatprep.subr.mxu0 0.0
  %8061 = vmatpush1.msra.mxu0 0.0
  %8062 = vmatprep.subr.mxu0 0.0
  %8063 = vmatpush1.msra.mxu0 0.0
  %8064 = vmatprep.subr.mxu0 0.0
  %8065 = vmatpush1.msra.mxu0 0.0
  %8066 = vmatprep.subr.mxu0 0.0
  %8067 = vmatpush1.msra.mxu0 0.0
  %8068 = vmatprep.subr.mxu0 0.0
  %8069 = vmatpush1.msra.mxu0 0.0
  %8070 = vmatprep.subr.mxu0 0.0
  %8071 = vmatpush1.msra.mxu0 0.0
  %8072 = vmatprep.subr.mxu0 0.0
  %8073 = vmatpush1.msra.mxu0 0.0
  %8074 = vmatprep.subr.mxu0 0.0
  %8075 = vmatpush1.msra.mxu0 0.0
  %8076 = vmatprep.subr.mxu0 0.0
  %8077 = vmatpush1.msra.mxu0 0.0
  %8078 = vmatprep.subr.mxu0 0.0
  %8079 = vmatpush1.msra.mxu0 0.0
  %8080 = vmatprep.subr.mxu0 0.0
  %8081 = vmatpush1.msra.mxu0 0.0
  %8082 = vmatprep.subr.mxu0 0.0
  %8083 = vmatpush1.msra.mxu0 0.0
  %8084 = vmatprep.subr.mxu0 0.0
  %8085 = vmatpush1.msra.mxu0 0.0
  %8086 = vmatprep.subr.mxu0 0.0
  %8087 = vmatpush1.msra.mxu0 0.0
  %8088 = vmatprep.subr.mxu0 0.0
  %8089 = vmatpush1.msra.mxu0 0.0
  %8090 = vmatprep.subr.mxu0 0.0
  %8091 = vmatpush1.msra.mxu0 0.0
  %8092 = vmatprep.subr.mxu0 0.0
  %8093 = vmatpush1.msra.mxu0 0.0
  %8094 = vmatprep.mubr.f32.mxu0 0.0
  %8095 = vmatmul.mubr.f32.gmra.mrb[0].mxu0 %v8028
  %v8096 = vpop.f32.mrb[0].mxu0
  %v8097 = vadd.f32 %v8024, %v8096
  %v8098 = vpop.f32.mrb[0].mxu0
  %8099 = vdwg.mxu0
  %v8101 = vsel %vm1363, %v6218, 0
  %v8104 = vsel %vm1363, %v6308, 0
  %8106 = vmatprep.subr.mxu0 0.0
  %8107 = vmatpush1.xpose.msra.mxu0 %v8104
  %8108 = vmatprep.subr.mxu0 0.0
  %8109 = vmatpush1.xpose.msra.mxu0 0.0
  %8110 = vmatprep.subr.mxu0 0.0
  %8111 = vmatpush1.xpose.msra.mxu0 0.0
  %8112 = vmatprep.subr.mxu0 0.0
  %8113 = vmatpush1.xpose.msra.mxu0 0.0
  %8114 = vmatprep.subr.mxu0 0.0
  %8115 = vmatpush1.xpose.msra.mxu0 0.0
  %8116 = vmatprep.subr.mxu0 0.0
  %8117 = vmatpush1.xpose.msra.mxu0 0.0
  %8118 = vmatprep.subr.mxu0 0.0
  %8119 = vmatpush1.xpose.msra.mxu0 0.0
  %8120 = vmatprep.subr.mxu0 0.0
  %8121 = vmatpush1.xpose.msra.mxu0 0.0
  %8122 = vmatprep.subr.mxu0 0.0
  %8123 = vmatpush1.xpose.msra.mxu0 0.0
  %8124 = vmatprep.subr.mxu0 0.0
  %8125 = vmatpush1.xpose.msra.mxu0 0.0
  %8126 = vmatprep.subr.mxu0 0.0
  %8127 = vmatpush1.xpose.msra.mxu0 0.0
  %8128 = vmatprep.subr.mxu0 0.0
  %8129 = vmatpush1.xpose.msra.mxu0 0.0
  %8130 = vmatprep.subr.mxu0 0.0
  %8131 = vmatpush1.xpose.msra.mxu0 0.0
  %8132 = vmatprep.subr.mxu0 0.0
  %8133 = vmatpush1.xpose.msra.mxu0 0.0
  %8134 = vmatprep.subr.mxu0 0.0
  %8135 = vmatpush1.xpose.msra.mxu0 0.0
  %8136 = vmatprep.subr.mxu0 0.0
  %8137 = vmatpush1.xpose.msra.mxu0 0.0
  %8138 = vmatprep.subr.mxu0 0.0
  %8139 = vmatpush1.xpose.msra.mxu0 0.0
  %8140 = vmatprep.subr.mxu0 0.0
  %8141 = vmatpush1.xpose.msra.mxu0 0.0
  %8142 = vmatprep.subr.mxu0 0.0
  %8143 = vmatpush1.xpose.msra.mxu0 0.0
  %8144 = vmatprep.subr.mxu0 0.0
  %8145 = vmatpush1.xpose.msra.mxu0 0.0
  %8146 = vmatprep.subr.mxu0 0.0
  %8147 = vmatpush1.xpose.msra.mxu0 0.0
  %8148 = vmatprep.subr.mxu0 0.0
  %8149 = vmatpush1.xpose.msra.mxu0 0.0
  %8150 = vmatprep.subr.mxu0 0.0
  %8151 = vmatpush1.xpose.msra.mxu0 0.0
  %8152 = vmatprep.subr.mxu0 0.0
  %8153 = vmatpush1.xpose.msra.mxu0 0.0
  %8154 = vmatprep.subr.mxu0 0.0
  %8155 = vmatpush1.xpose.msra.mxu0 0.0
  %8156 = vmatprep.subr.mxu0 0.0
  %8157 = vmatpush1.xpose.msra.mxu0 0.0
  %8158 = vmatprep.subr.mxu0 0.0
  %8159 = vmatpush1.xpose.msra.mxu0 0.0
  %8160 = vmatprep.subr.mxu0 0.0
  %8161 = vmatpush1.xpose.msra.mxu0 0.0
  %8162 = vmatprep.subr.mxu0 0.0
  %8163 = vmatpush1.xpose.msra.mxu0 0.0
  %8164 = vmatprep.subr.mxu0 0.0
  %8165 = vmatpush1.xpose.msra.mxu0 0.0
  %8166 = vmatprep.subr.mxu0 0.0
  %8167 = vmatpush1.xpose.msra.mxu0 0.0
  %8168 = vmatprep.subr.mxu0 0.0
  %8169 = vmatpush1.xpose.msra.mxu0 0.0
  %8170 = vmatprep.mubr.f32.mxu0 0.0
  %8171 = vmatmul.mubr.f32.gmra.mrb[0].mxu0 %v8101
  %v8172 = vpop.f32.mrb[0].mxu0
  %v8173 = vadd.f32 0.0, %v8172
  %v8174 = vpop.f32.mrb[0].mxu0
  %8175 = vdwg.mxu0
  %v8176 = vsel %vm1440, %v8173, -inf
  %8177 = vmax.xlane.f32.xlu0 %v8176
  %v8178 = vpop.xlane.xlu0 %8177
  %v8179 = vsub.f32 %v8173, %v8178
  %v8180 = vmul.f32 %v8179, 1.442695
  %v8181 = vpow.pop %v8180
  %v8182 = vsel %vm1440, %v8181, 0.0
  %8183 = vadd.xlane.f32.xlu0 %v8182
  %v8184 = vpop.xlane.xlu0 %8183
  %v8185 = vrcp.pop %v8184
  %v8186 = vmul.f32 %v8181, %v8185
  %v8188 = vsel %vm1440, %v8186, 0
  %8190 = vmatprep.subr.mxu0 0.0
  %8191 = vmatpush1.msra.mxu0 %v6400
  %8192 = vmatprep.subr.mxu0 0.0
  %8193 = vmatpush1.msra.mxu0 0.0
  %8194 = vmatprep.subr.mxu0 0.0
  %8195 = vmatpush1.msra.mxu0 0.0
  %8196 = vmatprep.subr.mxu0 0.0
  %8197 = vmatpush1.msra.mxu0 0.0
  %8198 = vmatprep.subr.mxu0 0.0
  %8199 = vmatpush1.msra.mxu0 0.0
  %8200 = vmatprep.subr.mxu0 0.0
  %8201 = vmatpush1.msra.mxu0 0.0
  %8202 = vmatprep.subr.mxu0 0.0
  %8203 = vmatpush1.msra.mxu0 0.0
  %8204 = vmatprep.subr.mxu0 0.0
  %8205 = vmatpush1.msra.mxu0 0.0
  %8206 = vmatprep.subr.mxu0 0.0
  %8207 = vmatpush1.msra.mxu0 0.0
  %8208 = vmatprep.subr.mxu0 0.0
  %8209 = vmatpush1.msra.mxu0 0.0
  %8210 = vmatprep.subr.mxu0 0.0
  %8211 = vmatpush1.msra.mxu0 0.0
  %8212 = vmatprep.subr.mxu0 0.0
  %8213 = vmatpush1.msra.mxu0 0.0
  %8214 = vmatprep.subr.mxu0 0.0
  %8215 = vmatpush1.msra.mxu0 0.0
  %8216 = vmatprep.subr.mxu0 0.0
  %8217 = vmatpush1.msra.mxu0 0.0
  %8218 = vmatprep.subr.mxu0 0.0
  %8219 = vmatpush1.msra.mxu0 0.0
  %8220 = vmatprep.subr.mxu0 0.0
  %8221 = vmatpush1.msra.mxu0 0.0
  %8222 = vmatprep.subr.mxu0 0.0
  %8223 = vmatpush1.msra.mxu0 0.0
  %8224 = vmatprep.subr.mxu0 0.0
  %8225 = vmatpush1.msra.mxu0 0.0
  %8226 = vmatprep.subr.mxu0 0.0
  %8227 = vmatpush1.msra.mxu0 0.0
  %8228 = vmatprep.subr.mxu0 0.0
  %8229 = vmatpush1.msra.mxu0 0.0
  %8230 = vmatprep.subr.mxu0 0.0
  %8231 = vmatpush1.msra.mxu0 0.0
  %8232 = vmatprep.subr.mxu0 0.0
  %8233 = vmatpush1.msra.mxu0 0.0
  %8234 = vmatprep.subr.mxu0 0.0
  %8235 = vmatpush1.msra.mxu0 0.0
  %8236 = vmatprep.subr.mxu0 0.0
  %8237 = vmatpush1.msra.mxu0 0.0
  %8238 = vmatprep.subr.mxu0 0.0
  %8239 = vmatpush1.msra.mxu0 0.0
  %8240 = vmatprep.subr.mxu0 0.0
  %8241 = vmatpush1.msra.mxu0 0.0
  %8242 = vmatprep.subr.mxu0 0.0
  %8243 = vmatpush1.msra.mxu0 0.0
  %8244 = vmatprep.subr.mxu0 0.0
  %8245 = vmatpush1.msra.mxu0 0.0
  %8246 = vmatprep.subr.mxu0 0.0
  %8247 = vmatpush1.msra.mxu0 0.0
  %8248 = vmatprep.subr.mxu0 0.0
  %8249 = vmatpush1.msra.mxu0 0.0
  %8250 = vmatprep.subr.mxu0 0.0
  %8251 = vmatpush1.msra.mxu0 0.0
  %8252 = vmatprep.subr.mxu0 0.0
  %8253 = vmatpush1.msra.mxu0 0.0
  %8254 = vmatprep.mubr.f32.mxu0 0.0
  %8255 = vmatmul.mubr.f32.gmra.mrb[0].mxu0 %v8188
  %v8256 = vpop.f32.mrb[0].mxu0
  %v8257 = vadd.f32 0.0, %v8256
  %v8258 = vpop.f32.mrb[0].mxu0
  %8259 = vdwg.mxu0
  %v8261 = vsel %vm1363, %v8257, 0
  %8263 = vmatprep.subr.mxu0 0.0
  %8264 = vmatpush1.msra.mxu0 %v7313
  %8265 = vmatprep.subr.mxu0 0.0
  %8266 = vmatpush1.msra.mxu0 %v7314
  %8267 = vmatprep.subr.mxu0 0.0
  %8268 = vmatpush1.msra.mxu0 0.0
  %8269 = vmatprep.subr.mxu0 0.0
  %8270 = vmatpush1.msra.mxu0 0.0
  %8271 = vmatprep.subr.mxu0 0.0
  %8272 = vmatpush1.msra.mxu0 0.0
  %8273 = vmatprep.subr.mxu0 0.0
  %8274 = vmatpush1.msra.mxu0 0.0
  %8275 = vmatprep.subr.mxu0 0.0
  %8276 = vmatpush1.msra.mxu0 0.0
  %8277 = vmatprep.subr.mxu0 0.0
  %8278 = vmatpush1.msra.mxu0 0.0
  %8279 = vmatprep.subr.mxu0 0.0
  %8280 = vmatpush1.msra.mxu0 0.0
  %8281 = vmatprep.subr.mxu0 0.0
  %8282 = vmatpush1.msra.mxu0 0.0
  %8283 = vmatprep.subr.mxu0 0.0
  %8284 = vmatpush1.msra.mxu0 0.0
  %8285 = vmatprep.subr.mxu0 0.0
  %8286 = vmatpush1.msra.mxu0 0.0
  %8287 = vmatprep.subr.mxu0 0.0
  %8288 = vmatpush1.msra.mxu0 0.0
  %8289 = vmatprep.subr.mxu0 0.0
  %8290 = vmatpush1.msra.mxu0 0.0
  %8291 = vmatprep.subr.mxu0 0.0
  %8292 = vmatpush1.msra.mxu0 0.0
  %8293 = vmatprep.subr.mxu0 0.0
  %8294 = vmatpush1.msra.mxu0 0.0
  %8295 = vmatprep.subr.mxu0 0.0
  %8296 = vmatpush1.msra.mxu0 0.0
  %8297 = vmatprep.subr.mxu0 0.0
  %8298 = vmatpush1.msra.mxu0 0.0
  %8299 = vmatprep.subr.mxu0 0.0
  %8300 = vmatpush1.msra.mxu0 0.0
  %8301 = vmatprep.subr.mxu0 0.0
  %8302 = vmatpush1.msra.mxu0 0.0
  %8303 = vmatprep.subr.mxu0 0.0
  %8304 = vmatpush1.msra.mxu0 0.0
  %8305 = vmatprep.subr.mxu0 0.0
  %8306 = vmatpush1.msra.mxu0 0.0
  %8307 = vmatprep.subr.mxu0 0.0
  %8308 = vmatpush1.msra.mxu0 0.0
  %8309 = vmatprep.subr.mxu0 0.0
  %8310 = vmatpush1.msra.mxu0 0.0
  %8311 = vmatprep.subr.mxu0 0.0
  %8312 = vmatpush1.msra.mxu0 0.0
  %8313 = vmatprep.subr.mxu0 0.0
  %8314 = vmatpush1.msra.mxu0 0.0
  %8315 = vmatprep.subr.mxu0 0.0
  %8316 = vmatpush1.msra.mxu0 0.0
  %8317 = vmatprep.subr.mxu0 0.0
  %8318 = vmatpush1.msra.mxu0 0.0
  %8319 = vmatprep.subr.mxu0 0.0
  %8320 = vmatpush1.msra.mxu0 0.0
  %8321 = vmatprep.subr.mxu0 0.0
  %8322 = vmatpush1.msra.mxu0 0.0
  %8323 = vmatprep.subr.mxu0 0.0
  %8324 = vmatpush1.msra.mxu0 0.0
  %8325 = vmatprep.subr.mxu0 0.0
  %8326 = vmatpush1.msra.mxu0 0.0
  %8327 = vmatprep.mubr.f32.mxu0 0.0
  %8328 = vmatmul.mubr.f32.gmra.mrb[0].mxu0 %v8261
  %v8329 = vpop.f32.mrb[0].mxu0
  %v8330 = vadd.f32 0.0, %v8329
  %v8331 = vpop.f32.mrb[0].mxu0
  %8332 = vdwg.mxu0
  %v8333 = vadd.f32 %v8097, %v8330
  %v8335 = vsel %vm1363, %v6496, 0
  %v8338 = vsel %vm1363, %v6586, 0
  %8340 = vmatprep.subr.mxu0 0.0
  %8341 = vmatpush1.xpose.msra.mxu0 %v8338
  %8342 = vmatprep.subr.mxu0 0.0
  %8343 = vmatpush1.xpose.msra.mxu0 0.0
  %8344 = vmatprep.subr.mxu0 0.0
  %8345 = vmatpush1.xpose.msra.mxu0 0.0
  %8346 = vmatprep.subr.mxu0 0.0
  %8347 = vmatpush1.xpose.msra.mxu0 0.0
  %8348 = vmatprep.subr.mxu0 0.0
  %8349 = vmatpush1.xpose.msra.mxu0 0.0
  %8350 = vmatprep.subr.mxu0 0.0
  %8351 = vmatpush1.xpose.msra.mxu0 0.0
  %8352 = vmatprep.subr.mxu0 0.0
  %8353 = vmatpush1.xpose.msra.mxu0 0.0
  %8354 = vmatprep.subr.mxu0 0.0
  %8355 = vmatpush1.xpose.msra.mxu0 0.0
  %8356 = vmatprep.subr.mxu0 0.0
  %8357 = vmatpush1.xpose.msra.mxu0 0.0
  %8358 = vmatprep.subr.mxu0 0.0
  %8359 = vmatpush1.xpose.msra.mxu0 0.0
  %8360 = vmatprep.subr.mxu0 0.0
  %8361 = vmatpush1.xpose.msra.mxu0 0.0
  %8362 = vmatprep.subr.mxu0 0.0
  %8363 = vmatpush1.xpose.msra.mxu0 0.0
  %8364 = vmatprep.subr.mxu0 0.0
  %8365 = vmatpush1.xpose.msra.mxu0 0.0
  %8366 = vmatprep.subr.mxu0 0.0
  %8367 = vmatpush1.xpose.msra.mxu0 0.0
  %8368 = vmatprep.subr.mxu0 0.0
  %8369 = vmatpush1.xpose.msra.mxu0 0.0
  %8370 = vmatprep.subr.mxu0 0.0
  %8371 = vmatpush1.xpose.msra.mxu0 0.0
  %8372 = vmatprep.subr.mxu0 0.0
  %8373 = vmatpush1.xpose.msra.mxu0 0.0
  %8374 = vmatprep.subr.mxu0 0.0
  %8375 = vmatpush1.xpose.msra.mxu0 0.0
  %8376 = vmatprep.subr.mxu0 0.0
  %8377 = vmatpush1.xpose.msra.mxu0 0.0
  %8378 = vmatprep.subr.mxu0 0.0
  %8379 = vmatpush1.xpose.msra.mxu0 0.0
  %8380 = vmatprep.subr.mxu0 0.0
  %8381 = vmatpush1.xpose.msra.mxu0 0.0
  %8382 = vmatprep.subr.mxu0 0.0
  %8383 = vmatpush1.xpose.msra.mxu0 0.0
  %8384 = vmatprep.subr.mxu0 0.0
  %8385 = vmatpush1.xpose.msra.mxu0 0.0
  %8386 = vmatprep.subr.mxu0 0.0
  %8387 = vmatpush1.xpose.msra.mxu0 0.0
  %8388 = vmatprep.subr.mxu0 0.0
  %8389 = vmatpush1.xpose.msra.mxu0 0.0
  %8390 = vmatprep.subr.mxu0 0.0
  %8391 = vmatpush1.xpose.msra.mxu0 0.0
  %8392 = vmatprep.subr.mxu0 0.0
  %8393 = vmatpush1.xpose.msra.mxu0 0.0
  %8394 = vmatprep.subr.mxu0 0.0
  %8395 = vmatpush1.xpose.msra.mxu0 0.0
  %8396 = vmatprep.subr.mxu0 0.0
  %8397 = vmatpush1.xpose.msra.mxu0 0.0
  %8398 = vmatprep.subr.mxu0 0.0
  %8399 = vmatpush1.xpose.msra.mxu0 0.0
  %8400 = vmatprep.subr.mxu0 0.0
  %8401 = vmatpush1.xpose.msra.mxu0 0.0
  %8402 = vmatprep.subr.mxu0 0.0
  %8403 = vmatpush1.xpose.msra.mxu0 0.0
  %8404 = vmatprep.mubr.f32.mxu0 0.0
  %8405 = vmatmul.mubr.f32.gmra.mrb[0].mxu0 %v8335
  %v8406 = vpop.f32.mrb[0].mxu0
  %v8407 = vadd.f32 0.0, %v8406
  %v8408 = vpop.f32.mrb[0].mxu0
  %8409 = vdwg.mxu0
  %v8410 = vsel %vm1440, %v8407, -inf
  %8411 = vmax.xlane.f32.xlu0 %v8410
  %v8412 = vpop.xlane.xlu0 %8411
  %v8413 = vsub.f32 %v8407, %v8412
  %v8414 = vmul.f32 %v8413, 1.442695
  %v8415 = vpow.pop %v8414
  %v8416 = vsel %vm1440, %v8415, 0.0
  %8417 = vadd.xlane.f32.xlu0 %v8416
  %v8418 = vpop.xlane.xlu0 %8417
  %v8419 = vrcp.pop %v8418
  %v8420 = vmul.f32 %v8415, %v8419
  %v8422 = vsel %vm1440, %v8420, 0
  %8424 = vmatprep.subr.mxu0 0.0
  %8425 = vmatpush1.msra.mxu0 %v6678
  %8426 = vmatprep.subr.mxu0 0.0
  %8427 = vmatpush1.msra.mxu0 0.0
  %8428 = vmatprep.subr.mxu0 0.0
  %8429 = vmatpush1.msra.mxu0 0.0
  %8430 = vmatprep.subr.mxu0 0.0
  %8431 = vmatpush1.msra.mxu0 0.0
  %8432 = vmatprep.subr.mxu0 0.0
  %8433 = vmatpush1.msra.mxu0 0.0
  %8434 = vmatprep.subr.mxu0 0.0
  %8435 = vmatpush1.msra.mxu0 0.0
  %8436 = vmatprep.subr.mxu0 0.0
  %8437 = vmatpush1.msra.mxu0 0.0
  %8438 = vmatprep.subr.mxu0 0.0
  %8439 = vmatpush1.msra.mxu0 0.0
  %8440 = vmatprep.subr.mxu0 0.0
  %8441 = vmatpush1.msra.mxu0 0.0
  %8442 = vmatprep.subr.mxu0 0.0
  %8443 = vmatpush1.msra.mxu0 0.0
  %8444 = vmatprep.subr.mxu0 0.0
  %8445 = vmatpush1.msra.mxu0 0.0
  %8446 = vmatprep.subr.mxu0 0.0
  %8447 = vmatpush1.msra.mxu0 0.0
  %8448 = vmatprep.subr.mxu0 0.0
  %8449 = vmatpush1.msra.mxu0 0.0
  %8450 = vmatprep.subr.mxu0 0.0
  %8451 = vmatpush1.msra.mxu0 0.0
  %8452 = vmatprep.subr.mxu0 0.0
  %8453 = vmatpush1.msra.mxu0 0.0
  %8454 = vmatprep.subr.mxu0 0.0
  %8455 = vmatpush1.msra.mxu0 0.0
  %8456 = vmatprep.subr.mxu0 0.0
  %8457 = vmatpush1.msra.mxu0 0.0
  %8458 = vmatprep.subr.mxu0 0.0
  %8459 = vmatpush1.msra.mxu0 0.0
  %8460 = vmatprep.subr.mxu0 0.0
  %8461 = vmatpush1.msra.mxu0 0.0
  %8462 = vmatprep.subr.mxu0 0.0
  %8463 = vmatpush1.msra.mxu0 0.0
  %8464 = vmatprep.subr.mxu0 0.0
  %8465 = vmatpush1.msra.mxu0 0.0
  %8466 = vmatprep.subr.mxu0 0.0
  %8467 = vmatpush1.msra.mxu0 0.0
  %8468 = vmatprep.subr.mxu0 0.0
  %8469 = vmatpush1.msra.mxu0 0.0
  %8470 = vmatprep.subr.mxu0 0.0
  %8471 = vmatpush1.msra.mxu0 0.0
  %8472 = vmatprep.subr.mxu0 0.0
  %8473 = vmatpush1.msra.mxu0 0.0
  %8474 = vmatprep.subr.mxu0 0.0
  %8475 = vmatpush1.msra.mxu0 0.0
  %8476 = vmatprep.subr.mxu0 0.0
  %8477 = vmatpush1.msra.mxu0 0.0
  %8478 = vmatprep.subr.mxu0 0.0
  %8479 = vmatpush1.msra.mxu0 0.0
  %8480 = vmatprep.subr.mxu0 0.0
  %8481 = vmatpush1.msra.mxu0 0.0
  %8482 = vmatprep.subr.mxu0 0.0
  %8483 = vmatpush1.msra.mxu0 0.0
  %8484 = vmatprep.subr.mxu0 0.0
  %8485 = vmatpush1.msra.mxu0 0.0
  %8486 = vmatprep.subr.mxu0 0.0
  %8487 = vmatpush1.msra.mxu0 0.0
  %8488 = vmatprep.mubr.f32.mxu0 0.0
  %8489 = vmatmul.mubr.f32.gmra.mrb[0].mxu0 %v8422
  %v8490 = vpop.f32.mrb[0].mxu0
  %v8491 = vadd.f32 0.0, %v8490
  %v8492 = vpop.f32.mrb[0].mxu0
  %8493 = vdwg.mxu0
  %v8495 = vsel %vm1363, %v8491, 0
  %8497 = vmatprep.subr.mxu0 0.0
  %8498 = vmatpush1.msra.mxu0 %v7550
  %8499 = vmatprep.subr.mxu0 0.0
  %8500 = vmatpush1.msra.mxu0 %v7551
  %8501 = vmatprep.subr.mxu0 0.0
  %8502 = vmatpush1.msra.mxu0 0.0
  %8503 = vmatprep.subr.mxu0 0.0
  %8504 = vmatpush1.msra.mxu0 0.0
  %8505 = vmatprep.subr.mxu0 0.0
  %8506 = vmatpush1.msra.mxu0 0.0
  %8507 = vmatprep.subr.mxu0 0.0
  %8508 = vmatpush1.msra.mxu0 0.0
  %8509 = vmatprep.subr.mxu0 0.0
  %8510 = vmatpush1.msra.mxu0 0.0
  %8511 = vmatprep.subr.mxu0 0.0
  %8512 = vmatpush1.msra.mxu0 0.0
  %8513 = vmatprep.subr.mxu0 0.0
  %8514 = vmatpush1.msra.mxu0 0.0
  %8515 = vmatprep.subr.mxu0 0.0
  %8516 = vmatpush1.msra.mxu0 0.0
  %8517 = vmatprep.subr.mxu0 0.0
  %8518 = vmatpush1.msra.mxu0 0.0
  %8519 = vmatprep.subr.mxu0 0.0
  %8520 = vmatpush1.msra.mxu0 0.0
  %8521 = vmatprep.subr.mxu0 0.0
  %8522 = vmatpush1.msra.mxu0 0.0
  %8523 = vmatprep.subr.mxu0 0.0
  %8524 = vmatpush1.msra.mxu0 0.0
  %8525 = vmatprep.subr.mxu0 0.0
  %8526 = vmatpush1.msra.mxu0 0.0
  %8527 = vmatprep.subr.mxu0 0.0
  %8528 = vmatpush1.msra.mxu0 0.0
  %8529 = vmatprep.subr.mxu0 0.0
  %8530 = vmatpush1.msra.mxu0 0.0
  %8531 = vmatprep.subr.mxu0 0.0
  %8532 = vmatpush1.msra.mxu0 0.0
  %8533 = vmatprep.subr.mxu0 0.0
  %8534 = vmatpush1.msra.mxu0 0.0
  %8535 = vmatprep.subr.mxu0 0.0
  %8536 = vmatpush1.msra.mxu0 0.0
  %8537 = vmatprep.subr.mxu0 0.0
  %8538 = vmatpush1.msra.mxu0 0.0
  %8539 = vmatprep.subr.mxu0 0.0
  %8540 = vmatpush1.msra.mxu0 0.0
  %8541 = vmatprep.subr.mxu0 0.0
  %8542 = vmatpush1.msra.mxu0 0.0
  %8543 = vmatprep.subr.mxu0 0.0
  %8544 = vmatpush1.msra.mxu0 0.0
  %8545 = vmatprep.subr.mxu0 0.0
  %8546 = vmatpush1.msra.mxu0 0.0
  %8547 = vmatprep.subr.mxu0 0.0
  %8548 = vmatpush1.msra.mxu0 0.0
  %8549 = vmatprep.subr.mxu0 0.0
  %8550 = vmatpush1.msra.mxu0 0.0
  %8551 = vmatprep.subr.mxu0 0.0
  %8552 = vmatpush1.msra.mxu0 0.0
  %8553 = vmatprep.subr.mxu0 0.0
  %8554 = vmatpush1.msra.mxu0 0.0
  %8555 = vmatprep.subr.mxu0 0.0
  %8556 = vmatpush1.msra.mxu0 0.0
  %8557 = vmatprep.subr.mxu0 0.0
  %8558 = vmatpush1.msra.mxu0 0.0
  %8559 = vmatprep.subr.mxu0 0.0
  %8560 = vmatpush1.msra.mxu0 0.0
  %8561 = vmatprep.mubr.f32.mxu0 0.0
  %8562 = vmatmul.mubr.f32.gmra.mrb[0].mxu0 %v8495
  %v8563 = vpop.f32.mrb[0].mxu0
  %v8564 = vadd.f32 0.0, %v8563
  %v8565 = vpop.f32.mrb[0].mxu0
  %8566 = vdwg.mxu0
  %v8567 = vadd.f32 %v8333, %v8564
  %v8568 = vadd.f32 %v8567, %v7631
  %v8569 = vld [vmem:[%s67] sm:$0x1]
  %v8570 = vld [vmem:[%s69] sm:$0x1]
  %v8571 = vadd.f32 %v5567, %v7633
  %v8572 = vadd.f32 %v5568, %v8568
  %v8573 = vsel %vm265, %v8571, 0.0
  %8574 = vadd.xlane.f32.xlu0 %v8573
  %v8575 = vpop.xlane.xlu0 %8574
  %v8576 = vsel %vm265, %v8572, 0.0
  %8577 = vadd.xlane.f32.xlu0 %v8576
  %v8578 = vpop.xlane.xlu0 %8577
  %v8579 = vmul.f32 %v8575, %v3263
  %v8580 = vmul.f32 %v8578, %v3263
  %v8581 = vsub.f32 %v8571, %v8579
  %v8582 = vsub.f32 %v8572, %v8580
  %v8583 = vmul.f32 %v8581, %v8581
  %v8584 = vmul.f32 %v8582, %v8582
  %v8585 = vsel %vm265, %v8583, 0.0
  %8586 = vadd.xlane.f32.xlu0 %v8585
  %v8587 = vpop.xlane.xlu0 %8586
  %v8588 = vsel %vm265, %v8584, 0.0
  %8589 = vadd.xlane.f32.xlu0 %v8588
  %v8590 = vpop.xlane.xlu0 %8589
  %v8591 = vmul.f32 %v8587, %v3263
  %v8592 = vmul.f32 %v8590, %v3263
  %v8593 = vadd.f32 %v8591, 1e-05
  %v8594 = vadd.f32 %v8592, 1e-05
  %v8595 = vrsqrt.pop %v8593
  %v8596 = vrsqrt.pop %v8594
  %v8597 = vmul.f32 %v8581, %v8595
  %v8598 = vmul.f32 %v8582, %v8596
  %v8600 = vlaneseq
  %v8601 = vshrl.u32 %v8600, 7
  %v8602 = vsub.s32 0, %v8601
  %v8603 = vrot.slane %v8569, %v8602
  %v8605 = vmul.f32 %v8597, %v8603
  %v8606 = vmul.f32 %v8598, %v8603
  %v8608 = vlaneseq
  %v8609 = vshrl.u32 %v8608, 7
  %v8610 = vsub.s32 0, %v8609
  %v8611 = vrot.slane %v8570, %v8610
  %v8613 = vadd.f32 %v8605, %v8611
  %v8614 = vadd.f32 %v8606, %v8611
  %v8615 = vpack.c.bf16 %v8614, %v8613
  %v8616 = vld [vmem:[%s59] sm:$0xff]
  %v8617 = vld [vmem:[%s59 + $0x8] sm:$0xff]
  %v8618 = vld [vmem:[%s59 + $0x10] sm:$0xff]
  %v8619 = vld [vmem:[%s59 + $0x18] sm:$0xff]
  %v8620 = vld [vmem:[%s59 + $0x20] sm:$0xff]
  %v8621 = vld [vmem:[%s59 + $0x28] sm:$0xff]
  %v8622 = vld [vmem:[%s59 + $0x30] sm:$0xff]
  %v8623 = vld [vmem:[%s59 + $0x38] sm:$0xff]
  %v8624 = vld [vmem:[%s59 + $0x40] sm:$0xff]
  %v8625 = vld [vmem:[%s59 + $0x48] sm:$0xff]
  %v8626 = vld [vmem:[%s59 + $0x50] sm:$0xff]
  %v8627 = vld [vmem:[%s59 + $0x58] sm:$0xff]
  %v8628 = vld [vmem:[%s59 + $0x60] sm:$0xff]
  %v8629 = vld [vmem:[%s59 + $0x68] sm:$0xff]
  %v8630 = vld [vmem:[%s59 + $0x70] sm:$0xff]
  %v8631 = vld [vmem:[%s59 + $0x78] sm:$0xff]
  %v8632 = vld [vmem:[%s59 + $0x80] sm:$0xff]
  %v8633 = vld [vmem:[%s59 + $0x88] sm:$0xff]
  %v8634 = vld [vmem:[%s59 + $0x90] sm:$0xff]
  %v8635 = vld [vmem:[%s59 + $0x98] sm:$0xff]
  %v8636 = vld [vmem:[%s59 + $0xa0] sm:$0xff]
  %v8637 = vld [vmem:[%s59 + $0xa8] sm:$0xff]
  %v8638 = vld [vmem:[%s59 + $0xb0] sm:$0xff]
  %v8639 = vld [vmem:[%s59 + $0xb8] sm:$0xff]
  %v8640 = vld [vmem:[%s59 + $0xc0] sm:$0xff]
  %v8641 = vld [vmem:[%s59 + $0xc8] sm:$0xff]
  %v8642 = vld [vmem:[%s59 + $0xd0] sm:$0xff]
  %v8643 = vld [vmem:[%s59 + $0xd8] sm:$0xff]
  %v8644 = vld [vmem:[%s59 + $0xe0] sm:$0xff]
  %v8645 = vld [vmem:[%s59 + $0xe8] sm:$0xff]
  %v8646 = vld [vmem:[%s59 + $0xf0] sm:$0xff]
  %v8647 = vld [vmem:[%s59 + $0xf8] sm:$0xff]
  %v8648 = vld [vmem:[%s59 + $0x100] sm:$0xff]
  %v8649 = vld [vmem:[%s59 + $0x108] sm:$0xff]
  %v8650 = vld [vmem:[%s59 + $0x110] sm:$0xff]
  %v8651 = vld [vmem:[%s59 + $0x118] sm:$0xff]
  %v8652 = vld [vmem:[%s59 + $0x120] sm:$0xff]
  %v8653 = vld [vmem:[%s59 + $0x128] sm:$0xff]
  %v8654 = vld [vmem:[%s59 + $0x130] sm:$0xff]
  %v8655 = vld [vmem:[%s59 + $0x138] sm:$0xff]
  %v8656 = vld [vmem:[%s59 + $0x140] sm:$0xff]
  %v8657 = vld [vmem:[%s59 + $0x148] sm:$0xff]
  %v8658 = vld [vmem:[%s59 + $0x150] sm:$0xff]
  %v8659 = vld [vmem:[%s59 + $0x158] sm:$0xff]
  %v8660 = vld [vmem:[%s59 + $0x160] sm:$0xff]
  %v8661 = vld [vmem:[%s59 + $0x168] sm:$0xff]
  %v8662 = vld [vmem:[%s59 + $0x170] sm:$0xff]
  %v8663 = vld [vmem:[%s59 + $0x178] sm:$0xff]
  %v8664 = vld [vmem:[%s59 + $0x180] sm:$0xff]
  %v8665 = vld [vmem:[%s59 + $0x188] sm:$0xff]
  %v8666 = vld [vmem:[%s59 + $0x190] sm:$0xff]
  %v8667 = vld [vmem:[%s59 + $0x198] sm:$0xff]
  %v8668 = vld [vmem:[%s59 + $0x1a0] sm:$0xff]
  %v8669 = vld [vmem:[%s59 + $0x1a8] sm:$0xff]
  %v8670 = vld [vmem:[%s59 + $0x1b0] sm:$0xff]
  %v8671 = vld [vmem:[%s59 + $0x1b8] sm:$0xff]
  %v8672 = vld [vmem:[%s59 + $0x1c0] sm:$0xff]
  %v8673 = vld [vmem:[%s59 + $0x1c8] sm:$0xff]
  %v8674 = vld [vmem:[%s59 + $0x1d0] sm:$0xff]
  %v8675 = vld [vmem:[%s59 + $0x1d8] sm:$0xff]
  %v8676 = vld [vmem:[%s59 + $0x1e0] sm:$0xff]
  %v8677 = vld [vmem:[%s59 + $0x1e8] sm:$0xff]
  %v8678 = vld [vmem:[%s59 + $0x1f0] sm:$0xff]
  %v8679 = vld [vmem:[%s59 + $0x1f8] sm:$0xff]
  %v8680 = vld [vmem:[%s61] sm:$0xff]
  %v8681 = vld [vmem:[%s61 + $0x8] sm:$0xff]
  %v8684 = vlaneseq
  %v8685 = vshrl.u32 %v8684, 7
  %v8686 = vsub.s32 0, %v8685
  %v8687 = vrot.slane %v8680, %v8686
  %v8688 = vlaneseq
  %v8689 = vshrl.u32 %v8688, 7
  %v8690 = vsub.s32 1, %v8689
  %v8691 = vrot.slane %v8680, %v8690
  %v8692 = vlaneseq
  %v8693 = vshrl.u32 %v8692, 7
  %v8694 = vsub.s32 2, %v8693
  %v8695 = vrot.slane %v8680, %v8694
  %v8696 = vlaneseq
  %v8697 = vshrl.u32 %v8696, 7
  %v8698 = vsub.s32 3, %v8697
  %v8699 = vrot.slane %v8680, %v8698
  %v8700 = vlaneseq
  %v8701 = vshrl.u32 %v8700, 7
  %v8702 = vsub.s32 4, %v8701
  %v8703 = vrot.slane %v8680, %v8702
  %v8704 = vlaneseq
  %v8705 = vshrl.u32 %v8704, 7
  %v8706 = vsub.s32 5, %v8705
  %v8707 = vrot.slane %v8680, %v8706
  %v8708 = vlaneseq
  %v8709 = vshrl.u32 %v8708, 7
  %v8710 = vsub.s32 6, %v8709
  %v8711 = vrot.slane %v8680, %v8710
  %v8712 = vlaneseq
  %v8713 = vshrl.u32 %v8712, 7
  %v8714 = vsub.s32 7, %v8713
  %v8715 = vrot.slane %v8680, %v8714
  %v8716 = vlaneseq
  %v8717 = vshrl.u32 %v8716, 7
  %v8718 = vsub.s32 0, %v8717
  %v8719 = vrot.slane %v8681, %v8718
  %v8720 = vlaneseq
  %v8721 = vshrl.u32 %v8720, 7
  %v8722 = vsub.s32 1, %v8721
  %v8723 = vrot.slane %v8681, %v8722
  %v8724 = vlaneseq
  %v8725 = vshrl.u32 %v8724, 7
  %v8726 = vsub.s32 2, %v8725
  %v8727 = vrot.slane %v8681, %v8726
  %v8728 = vlaneseq
  %v8729 = vshrl.u32 %v8728, 7
  %v8730 = vsub.s32 3, %v8729
  %v8731 = vrot.slane %v8681, %v8730
  %v8732 = vlaneseq
  %v8733 = vshrl.u32 %v8732, 7
  %v8734 = vsub.s32 4, %v8733
  %v8735 = vrot.slane %v8681, %v8734
  %v8736 = vlaneseq
  %v8737 = vshrl.u32 %v8736, 7
  %v8738 = vsub.s32 5, %v8737
  %v8739 = vrot.slane %v8681, %v8738
  %v8740 = vlaneseq
  %v8741 = vshrl.u32 %v8740, 7
  %v8742 = vsub.s32 6, %v8741
  %v8743 = vrot.slane %v8681, %v8742
  %v8744 = vlaneseq
  %v8745 = vshrl.u32 %v8744, 7
  %v8746 = vsub.s32 7, %v8745
  %v8747 = vrot.slane %v8681, %v8746
  %v8828 = vunpack.c.l.b16 %v8616
  %v8829 = vunpack.c.h.b16 %v8616
  %v8830 = vunpack.c.l.b16 %v8617
  %v8831 = vunpack.c.h.b16 %v8617
  %v8832 = vunpack.c.l.b16 %v8618
  %v8833 = vunpack.c.h.b16 %v8618
  %v8834 = vunpack.c.l.b16 %v8619
  %v8835 = vunpack.c.h.b16 %v8619
  %v8836 = vunpack.c.l.b16 %v8620
  %v8837 = vunpack.c.h.b16 %v8620
  %v8838 = vunpack.c.l.b16 %v8621
  %v8839 = vunpack.c.h.b16 %v8621
  %v8840 = vunpack.c.l.b16 %v8622
  %v8841 = vunpack.c.h.b16 %v8622
  %v8842 = vunpack.c.l.b16 %v8623
  %v8843 = vunpack.c.h.b16 %v8623
  %v8844 = vunpack.c.l.b16 %v8624
  %v8845 = vunpack.c.h.b16 %v8624
  %v8846 = vunpack.c.l.b16 %v8625
  %v8847 = vunpack.c.h.b16 %v8625
  %v8848 = vunpack.c.l.b16 %v8626
  %v8849 = vunpack.c.h.b16 %v8626
  %v8850 = vunpack.c.l.b16 %v8627
  %v8851 = vunpack.c.h.b16 %v8627
  %v8852 = vunpack.c.l.b16 %v8628
  %v8853 = vunpack.c.h.b16 %v8628
  %v8854 = vunpack.c.l.b16 %v8629
  %v8855 = vunpack.c.h.b16 %v8629
  %v8856 = vunpack.c.l.b16 %v8630
  %v8857 = vunpack.c.h.b16 %v8630
  %v8858 = vunpack.c.l.b16 %v8631
  %v8859 = vunpack.c.h.b16 %v8631
  %v8860 = vunpack.c.l.b16 %v8632
  %v8861 = vunpack.c.h.b16 %v8632
  %v8862 = vunpack.c.l.b16 %v8633
  %v8863 = vunpack.c.h.b16 %v8633
  %v8864 = vunpack.c.l.b16 %v8634
  %v8865 = vunpack.c.h.b16 %v8634
  %v8866 = vunpack.c.l.b16 %v8635
  %v8867 = vunpack.c.h.b16 %v8635
  %v8868 = vunpack.c.l.b16 %v8636
  %v8869 = vunpack.c.h.b16 %v8636
  %v8870 = vunpack.c.l.b16 %v8637
  %v8871 = vunpack.c.h.b16 %v8637
  %v8872 = vunpack.c.l.b16 %v8638
  %v8873 = vunpack.c.h.b16 %v8638
  %v8874 = vunpack.c.l.b16 %v8639
  %v8875 = vunpack.c.h.b16 %v8639
  %v8876 = vunpack.c.l.b16 %v8640
  %v8877 = vunpack.c.h.b16 %v8640
  %v8878 = vunpack.c.l.b16 %v8641
  %v8879 = vunpack.c.h.b16 %v8641
  %v8880 = vunpack.c.l.b16 %v8642
  %v8881 = vunpack.c.h.b16 %v8642
  %v8882 = vunpack.c.l.b16 %v8643
  %v8883 = vunpack.c.h.b16 %v8643
  %v8884 = vunpack.c.l.b16 %v8644
  %v8885 = vunpack.c.h.b16 %v8644
  %v8886 = vunpack.c.l.b16 %v8645
  %v8887 = vunpack.c.h.b16 %v8645
  %v8888 = vunpack.c.l.b16 %v8646
  %v8889 = vunpack.c.h.b16 %v8646
  %v8890 = vunpack.c.l.b16 %v8647
  %v8891 = vunpack.c.h.b16 %v8647
  %v8892 = vunpack.c.l.b16 %v8648
  %v8893 = vunpack.c.h.b16 %v8648
  %v8894 = vunpack.c.l.b16 %v8649
  %v8895 = vunpack.c.h.b16 %v8649
  %v8896 = vunpack.c.l.b16 %v8650
  %v8897 = vunpack.c.h.b16 %v8650
  %v8898 = vunpack.c.l.b16 %v8651
  %v8899 = vunpack.c.h.b16 %v8651
  %v8900 = vunpack.c.l.b16 %v8652
  %v8901 = vunpack.c.h.b16 %v8652
  %v8902 = vunpack.c.l.b16 %v8653
  %v8903 = vunpack.c.h.b16 %v8653
  %v8904 = vunpack.c.l.b16 %v8654
  %v8905 = vunpack.c.h.b16 %v8654
  %v8906 = vunpack.c.l.b16 %v8655
  %v8907 = vunpack.c.h.b16 %v8655
  %v8908 = vunpack.c.l.b16 %v8656
  %v8909 = vunpack.c.h.b16 %v8656
  %v8910 = vunpack.c.l.b16 %v8657
  %v8911 = vunpack.c.h.b16 %v8657
  %v8912 = vunpack.c.l.b16 %v8658
  %v8913 = vunpack.c.h.b16 %v8658
  %v8914 = vunpack.c.l.b16 %v8659
  %v8915 = vunpack.c.h.b16 %v8659
  %v8916 = vunpack.c.l.b16 %v8660
  %v8917 = vunpack.c.h.b16 %v8660
  %v8918 = vunpack.c.l.b16 %v8661
  %v8919 = vunpack.c.h.b16 %v8661
  %v8920 = vunpack.c.l.b16 %v8662
  %v8921 = vunpack.c.h.b16 %v8662
  %v8922 = vunpack.c.l.b16 %v8663
  %v8923 = vunpack.c.h.b16 %v8663
  %v8924 = vunpack.c.l.b16 %v8664
  %v8925 = vunpack.c.h.b16 %v8664
  %v8926 = vunpack.c.l.b16 %v8665
  %v8927 = vunpack.c.h.b16 %v8665
  %v8928 = vunpack.c.l.b16 %v8666
  %v8929 = vunpack.c.h.b16 %v8666
  %v8930 = vunpack.c.l.b16 %v8667
  %v8931 = vunpack.c.h.b16 %v8667
  %v8932 = vunpack.c.l.b16 %v8668
  %v8933 = vunpack.c.h.b16 %v8668
  %v8934 = vunpack.c.l.b16 %v8669
  %v8935 = vunpack.c.h.b16 %v8669
  %v8936 = vunpack.c.l.b16 %v8670
  %v8937 = vunpack.c.h.b16 %v8670
  %v8938 = vunpack.c.l.b16 %v8671
  %v8939 = vunpack.c.h.b16 %v8671
  %v8940 = vunpack.c.l.b16 %v8672
  %v8941 = vunpack.c.h.b16 %v8672
  %v8942 = vunpack.c.l.b16 %v8673
  %v8943 = vunpack.c.h.b16 %v8673
  %v8944 = vunpack.c.l.b16 %v8674
  %v8945 = vunpack.c.h.b16 %v8674
  %v8946 = vunpack.c.l.b16 %v8675
  %v8947 = vunpack.c.h.b16 %v8675
  %v8948 = vunpack.c.l.b16 %v8676
  %v8949 = vunpack.c.h.b16 %v8676
  %v8950 = vunpack.c.l.b16 %v8677
  %v8951 = vunpack.c.h.b16 %v8677
  %v8952 = vunpack.c.l.b16 %v8678
  %v8953 = vunpack.c.h.b16 %v8678
  %v8954 = vunpack.c.l.b16 %v8679
  %v8955 = vunpack.c.h.b16 %v8679
  %v8956 = vpack.c.b16 %v8844, %v8828
  %v8957 = vpack.c.b16 %v8845, %v8829
  %v8958 = vpack.c.b16 %v8846, %v8830
  %v8959 = vpack.c.b16 %v8847, %v8831
  %v8960 = vpack.c.b16 %v8848, %v8832
  %v8961 = vpack.c.b16 %v8849, %v8833
  %v8962 = vpack.c.b16 %v8850, %v8834
  %v8963 = vpack.c.b16 %v8851, %v8835
  %v8964 = vpack.c.b16 %v8852, %v8836
  %v8965 = vpack.c.b16 %v8853, %v8837
  %v8966 = vpack.c.b16 %v8854, %v8838
  %v8967 = vpack.c.b16 %v8855, %v8839
  %v8968 = vpack.c.b16 %v8856, %v8840
  %v8969 = vpack.c.b16 %v8857, %v8841
  %v8970 = vpack.c.b16 %v8858, %v8842
  %v8971 = vpack.c.b16 %v8859, %v8843
  %v8972 = vpack.c.b16 %v8876, %v8860
  %v8973 = vpack.c.b16 %v8877, %v8861
  %v8974 = vpack.c.b16 %v8878, %v8862
  %v8975 = vpack.c.b16 %v8879, %v8863
  %v8976 = vpack.c.b16 %v8880, %v8864
  %v8977 = vpack.c.b16 %v8881, %v8865
  %v8978 = vpack.c.b16 %v8882, %v8866
  %v8979 = vpack.c.b16 %v8883, %v8867
  %v8980 = vpack.c.b16 %v8884, %v8868
  %v8981 = vpack.c.b16 %v8885, %v8869
  %v8982 = vpack.c.b16 %v8886, %v8870
  %v8983 = vpack.c.b16 %v8887, %v8871
  %v8984 = vpack.c.b16 %v8888, %v8872
  %v8985 = vpack.c.b16 %v8889, %v8873
  %v8986 = vpack.c.b16 %v8890, %v8874
  %v8987 = vpack.c.b16 %v8891, %v8875
  %v8988 = vpack.c.b16 %v8908, %v8892
  %v8989 = vpack.c.b16 %v8909, %v8893
  %v8990 = vpack.c.b16 %v8910, %v8894
  %v8991 = vpack.c.b16 %v8911, %v8895
  %v8992 = vpack.c.b16 %v8912, %v8896
  %v8993 = vpack.c.b16 %v8913, %v8897
  %v8994 = vpack.c.b16 %v8914, %v8898
  %v8995 = vpack.c.b16 %v8915, %v8899
  %v8996 = vpack.c.b16 %v8916, %v8900
  %v8997 = vpack.c.b16 %v8917, %v8901
  %v8998 = vpack.c.b16 %v8918, %v8902
  %v8999 = vpack.c.b16 %v8919, %v8903
  %v9000 = vpack.c.b16 %v8920, %v8904
  %v9001 = vpack.c.b16 %v8921, %v8905
  %v9002 = vpack.c.b16 %v8922, %v8906
  %v9003 = vpack.c.b16 %v8923, %v8907
  %v9004 = vpack.c.b16 %v8940, %v8924
  %v9005 = vpack.c.b16 %v8941, %v8925
  %v9006 = vpack.c.b16 %v8942, %v8926
  %v9007 = vpack.c.b16 %v8943, %v8927
  %v9008 = vpack.c.b16 %v8944, %v8928
  %v9009 = vpack.c.b16 %v8945, %v8929
  %v9010 = vpack.c.b16 %v8946, %v8930
  %v9011 = vpack.c.b16 %v8947, %v8931
  %v9012 = vpack.c.b16 %v8948, %v8932
  %v9013 = vpack.c.b16 %v8949, %v8933
  %v9014 = vpack.c.b16 %v8950, %v8934
  %v9015 = vpack.c.b16 %v8951, %v8935
  %v9016 = vpack.c.b16 %v8952, %v8936
  %v9017 = vpack.c.b16 %v8953, %v8937
  %v9018 = vpack.c.b16 %v8954, %v8938
  %v9019 = vpack.c.b16 %v8955, %v8939
  %v9085 = vsel %vm265, %v8615, 0
  %9087 = vmatprep.subr.bf16.mxu0 %v8957
  %9088 = vmatpush1.bf16.msra.mxu0 %v8956
  %9089 = vmatprep.subr.bf16.mxu0 %v8973
  %9090 = vmatpush1.bf16.msra.mxu0 %v8972
  %9091 = vmatprep.subr.bf16.mxu0 %v8989
  %9092 = vmatpush1.bf16.msra.mxu0 %v8988
  %9093 = vmatprep.subr.bf16.mxu0 %v9005
  %9094 = vmatpush1.bf16.msra.mxu0 %v9004
  %9095 = vmatprep.subr.bf16.mxu0 0
  %9096 = vmatpush1.bf16.msra.mxu0 0
  %9097 = vmatprep.subr.bf16.mxu0 0
  %9098 = vmatpush1.bf16.msra.mxu0 0
  %9099 = vmatprep.subr.bf16.mxu0 0
  %9100 = vmatpush1.bf16.msra.mxu0 0
  %9101 = vmatprep.subr.bf16.mxu0 0
  %9102 = vmatpush1.bf16.msra.mxu0 0
  %9103 = vmatprep.subr.bf16.mxu0 0
  %9104 = vmatpush1.bf16.msra.mxu0 0
  %9105 = vmatprep.subr.bf16.mxu0 0
  %9106 = vmatpush1.bf16.msra.mxu0 0
  %9107 = vmatprep.subr.bf16.mxu0 0
  %9108 = vmatpush1.bf16.msra.mxu0 0
  %9109 = vmatprep.subr.bf16.mxu0 0
  %9110 = vmatpush1.bf16.msra.mxu0 0
  %9111 = vmatprep.subr.bf16.mxu0 0
  %9112 = vmatpush1.bf16.msra.mxu0 0
  %9113 = vmatprep.subr.bf16.mxu0 0
  %9114 = vmatpush1.bf16.msra.mxu0 0
  %9115 = vmatprep.subr.bf16.mxu0 0
  %9116 = vmatpush1.bf16.msra.mxu0 0
  %9117 = vmatprep.subr.bf16.mxu0 0
  %9118 = vmatpush1.bf16.msra.mxu0 0
  %9119 = vmatprep.mubr.bf16.mxu0 0
  %9120 = vmatmul.mubr.bf16.gmra.mrb[0].mxu0 %v9085
  %v9121 = vpop.f32.mrb[0].mxu0
  %v9122 = vadd.f32 %v8687, %v9121
  %v9123 = vpop.f32.mrb[0].mxu0
  %v9124 = vadd.f32 %v8691, %v9123
  %v9125 = vpop.f32.mrb[0].mxu0
  %v9126 = vadd.f32 %v8687, %v9125
  %v9127 = vpop.f32.mrb[0].mxu0
  %v9128 = vadd.f32 %v8691, %v9127
  %9129 = vdwg.mxu0
  %9130 = vmatprep.subr.bf16.mxu0 %v8959
  %9131 = vmatpush1.bf16.msra.mxu0 %v8958
  %9132 = vmatprep.subr.bf16.mxu0 %v8975
  %9133 = vmatpush1.bf16.msra.mxu0 %v8974
  %9134 = vmatprep.subr.bf16.mxu0 %v8991
  %9135 = vmatpush1.bf16.msra.mxu0 %v8990
  %9136 = vmatprep.subr.bf16.mxu0 %v9007
  %9137 = vmatpush1.bf16.msra.mxu0 %v9006
  %9138 = vmatprep.subr.bf16.mxu0 0
  %9139 = vmatpush1.bf16.msra.mxu0 0
  %9140 = vmatprep.subr.bf16.mxu0 0
  %9141 = vmatpush1.bf16.msra.mxu0 0
  %9142 = vmatprep.subr.bf16.mxu0 0
  %9143 = vmatpush1.bf16.msra.mxu0 0
  %9144 = vmatprep.subr.bf16.mxu0 0
  %9145 = vmatpush1.bf16.msra.mxu0 0
  %9146 = vmatprep.subr.bf16.mxu0 0
  %9147 = vmatpush1.bf16.msra.mxu0 0
  %9148 = vmatprep.subr.bf16.mxu0 0
  %9149 = vmatpush1.bf16.msra.mxu0 0
  %9150 = vmatprep.subr.bf16.mxu0 0
  %9151 = vmatpush1.bf16.msra.mxu0 0
  %9152 = vmatprep.subr.bf16.mxu0 0
  %9153 = vmatpush1.bf16.msra.mxu0 0
  %9154 = vmatprep.subr.bf16.mxu0 0
  %9155 = vmatpush1.bf16.msra.mxu0 0
  %9156 = vmatprep.subr.bf16.mxu0 0
  %9157 = vmatpush1.bf16.msra.mxu0 0
  %9158 = vmatprep.subr.bf16.mxu0 0
  %9159 = vmatpush1.bf16.msra.mxu0 0
  %9160 = vmatprep.subr.bf16.mxu0 0
  %9161 = vmatpush1.bf16.msra.mxu0 0
  %9162 = vmatprep.mubr.bf16.mxu0 0
  %9163 = vmatmul.mubr.bf16.gmra.mrb[0].mxu0 %v9085
  %v9164 = vpop.f32.mrb[0].mxu0
  %v9165 = vadd.f32 %v8695, %v9164
  %v9166 = vpop.f32.mrb[0].mxu0
  %v9167 = vadd.f32 %v8699, %v9166
  %v9168 = vpop.f32.mrb[0].mxu0
  %v9169 = vadd.f32 %v8695, %v9168
  %v9170 = vpop.f32.mrb[0].mxu0
  %v9171 = vadd.f32 %v8699, %v9170
  %9172 = vdwg.mxu0
  %9173 = vmatprep.subr.bf16.mxu0 %v8961
  %9174 = vmatpush1.bf16.msra.mxu0 %v8960
  %9175 = vmatprep.subr.bf16.mxu0 %v8977
  %9176 = vmatpush1.bf16.msra.mxu0 %v8976
  %9177 = vmatprep.subr.bf16.mxu0 %v8993
  %9178 = vmatpush1.bf16.msra.mxu0 %v8992
  %9179 = vmatprep.subr.bf16.mxu0 %v9009
  %9180 = vmatpush1.bf16.msra.mxu0 %v9008
  %9181 = vmatprep.subr.bf16.mxu0 0
  %9182 = vmatpush1.bf16.msra.mxu0 0
  %9183 = vmatprep.subr.bf16.mxu0 0
  %9184 = vmatpush1.bf16.msra.mxu0 0
  %9185 = vmatprep.subr.bf16.mxu0 0
  %9186 = vmatpush1.bf16.msra.mxu0 0
  %9187 = vmatprep.subr.bf16.mxu0 0
  %9188 = vmatpush1.bf16.msra.mxu0 0
  %9189 = vmatprep.subr.bf16.mxu0 0
  %9190 = vmatpush1.bf16.msra.mxu0 0
  %9191 = vmatprep.subr.bf16.mxu0 0
  %9192 = vmatpush1.bf16.msra.mxu0 0
  %9193 = vmatprep.subr.bf16.mxu0 0
  %9194 = vmatpush1.bf16.msra.mxu0 0
  %9195 = vmatprep.subr.bf16.mxu0 0
  %9196 = vmatpush1.bf16.msra.mxu0 0
  %9197 = vmatprep.subr.bf16.mxu0 0
  %9198 = vmatpush1.bf16.msra.mxu0 0
  %9199 = vmatprep.subr.bf16.mxu0 0
  %9200 = vmatpush1.bf16.msra.mxu0 0
  %9201 = vmatprep.subr.bf16.mxu0 0
  %9202 = vmatpush1.bf16.msra.mxu0 0
  %9203 = vmatprep.subr.bf16.mxu0 0
  %9204 = vmatpush1.bf16.msra.mxu0 0
  %9205 = vmatprep.mubr.bf16.mxu0 0
  %9206 = vmatmul.mubr.bf16.gmra.mrb[0].mxu0 %v9085
  %v9207 = vpop.f32.mrb[0].mxu0
  %v9208 = vadd.f32 %v8703, %v9207
  %v9209 = vpop.f32.mrb[0].mxu0
  %v9210 = vadd.f32 %v8707, %v9209
  %v9211 = vpop.f32.mrb[0].mxu0
  %v9212 = vadd.f32 %v8703, %v9211
  %v9213 = vpop.f32.mrb[0].mxu0
  %v9214 = vadd.f32 %v8707, %v9213
  %9215 = vdwg.mxu0
  %9216 = vmatprep.subr.bf16.mxu0 %v8963
  %9217 = vmatpush1.bf16.msra.mxu0 %v8962
  %9218 = vmatprep.subr.bf16.mxu0 %v8979
  %9219 = vmatpush1.bf16.msra.mxu0 %v8978
  %9220 = vmatprep.subr.bf16.mxu0 %v8995
  %9221 = vmatpush1.bf16.msra.mxu0 %v8994
  %9222 = vmatprep.subr.bf16.mxu0 %v9011
  %9223 = vmatpush1.bf16.msra.mxu0 %v9010
  %9224 = vmatprep.subr.bf16.mxu0 0
  %9225 = vmatpush1.bf16.msra.mxu0 0
  %9226 = vmatprep.subr.bf16.mxu0 0
  %9227 = vmatpush1.bf16.msra.mxu0 0
  %9228 = vmatprep.subr.bf16.mxu0 0
  %9229 = vmatpush1.bf16.msra.mxu0 0
  %9230 = vmatprep.subr.bf16.mxu0 0
  %9231 = vmatpush1.bf16.msra.mxu0 0
  %9232 = vmatprep.subr.bf16.mxu0 0
  %9233 = vmatpush1.bf16.msra.mxu0 0
  %9234 = vmatprep.subr.bf16.mxu0 0
  %9235 = vmatpush1.bf16.msra.mxu0 0
  %9236 = vmatprep.subr.bf16.mxu0 0
  %9237 = vmatpush1.bf16.msra.mxu0 0
  %9238 = vmatprep.subr.bf16.mxu0 0
  %9239 = vmatpush1.bf16.msra.mxu0 0
  %9240 = vmatprep.subr.bf16.mxu0 0
  %9241 = vmatpush1.bf16.msra.mxu0 0
  %9242 = vmatprep.subr.bf16.mxu0 0
  %9243 = vmatpush1.bf16.msra.mxu0 0
  %9244 = vmatprep.subr.bf16.mxu0 0
  %9245 = vmatpush1.bf16.msra.mxu0 0
  %9246 = vmatprep.subr.bf16.mxu0 0
  %9247 = vmatpush1.bf16.msra.mxu0 0
  %9248 = vmatprep.mubr.bf16.mxu0 0
  %9249 = vmatmul.mubr.bf16.gmra.mrb[0].mxu0 %v9085
  %v9250 = vpop.f32.mrb[0].mxu0
  %v9251 = vadd.f32 %v8711, %v9250
  %v9252 = vpop.f32.mrb[0].mxu0
  %v9253 = vadd.f32 %v8715, %v9252
  %v9254 = vpop.f32.mrb[0].mxu0
  %v9255 = vadd.f32 %v8711, %v9254
  %v9256 = vpop.f32.mrb[0].mxu0
  %v9257 = vadd.f32 %v8715, %v9256
  %9258 = vdwg.mxu0
  %9259 = vmatprep.subr.bf16.mxu0 %v8965
  %9260 = vmatpush1.bf16.msra.mxu0 %v8964
  %9261 = vmatprep.subr.bf16.mxu0 %v8981
  %9262 = vmatpush1.bf16.msra.mxu0 %v8980
  %9263 = vmatprep.subr.bf16.mxu0 %v8997
  %9264 = vmatpush1.bf16.msra.mxu0 %v8996
  %9265 = vmatprep.subr.bf16.mxu0 %v9013
  %9266 = vmatpush1.bf16.msra.mxu0 %v9012
  %9267 = vmatprep.subr.bf16.mxu0 0
  %9268 = vmatpush1.bf16.msra.mxu0 0
  %9269 = vmatprep.subr.bf16.mxu0 0
  %9270 = vmatpush1.bf16.msra.mxu0 0
  %9271 = vmatprep.subr.bf16.mxu0 0
  %9272 = vmatpush1.bf16.msra.mxu0 0
  %9273 = vmatprep.subr.bf16.mxu0 0
  %9274 = vmatpush1.bf16.msra.mxu0 0
  %9275 = vmatprep.subr.bf16.mxu0 0
  %9276 = vmatpush1.bf16.msra.mxu0 0
  %9277 = vmatprep.subr.bf16.mxu0 0
  %9278 = vmatpush1.bf16.msra.mxu0 0
  %9279 = vmatprep.subr.bf16.mxu0 0
  %9280 = vmatpush1.bf16.msra.mxu0 0
  %9281 = vmatprep.subr.bf16.mxu0 0
  %9282 = vmatpush1.bf16.msra.mxu0 0
  %9283 = vmatprep.subr.bf16.mxu0 0
  %9284 = vmatpush1.bf16.msra.mxu0 0
  %9285 = vmatprep.subr.bf16.mxu0 0
  %9286 = vmatpush1.bf16.msra.mxu0 0
  %9287 = vmatprep.subr.bf16.mxu0 0
  %9288 = vmatpush1.bf16.msra.mxu0 0
  %9289 = vmatprep.subr.bf16.mxu0 0
  %9290 = vmatpush1.bf16.msra.mxu0 0
  %9291 = vmatprep.mubr.bf16.mxu0 0
  %9292 = vmatmul.mubr.bf16.gmra.mrb[0].mxu0 %v9085
  %v9293 = vpop.f32.mrb[0].mxu0
  %v9294 = vadd.f32 %v8719, %v9293
  %v9295 = vpop.f32.mrb[0].mxu0
  %v9296 = vadd.f32 %v8723, %v9295
  %v9297 = vpop.f32.mrb[0].mxu0
  %v9298 = vadd.f32 %v8719, %v9297
  %v9299 = vpop.f32.mrb[0].mxu0
  %v9300 = vadd.f32 %v8723, %v9299
  %9301 = vdwg.mxu0
  %9302 = vmatprep.subr.bf16.mxu0 %v8967
  %9303 = vmatpush1.bf16.msra.mxu0 %v8966
  %9304 = vmatprep.subr.bf16.mxu0 %v8983
  %9305 = vmatpush1.bf16.msra.mxu0 %v8982
  %9306 = vmatprep.subr.bf16.mxu0 %v8999
  %9307 = vmatpush1.bf16.msra.mxu0 %v8998
  %9308 = vmatprep.subr.bf16.mxu0 %v9015
  %9309 = vmatpush1.bf16.msra.mxu0 %v9014
  %9310 = vmatprep.subr.bf16.mxu0 0
  %9311 = vmatpush1.bf16.msra.mxu0 0
  %9312 = vmatprep.subr.bf16.mxu0 0
  %9313 = vmatpush1.bf16.msra.mxu0 0
  %9314 = vmatprep.subr.bf16.mxu0 0
  %9315 = vmatpush1.bf16.msra.mxu0 0
  %9316 = vmatprep.subr.bf16.mxu0 0
  %9317 = vmatpush1.bf16.msra.mxu0 0
  %9318 = vmatprep.subr.bf16.mxu0 0
  %9319 = vmatpush1.bf16.msra.mxu0 0
  %9320 = vmatprep.subr.bf16.mxu0 0
  %9321 = vmatpush1.bf16.msra.mxu0 0
  %9322 = vmatprep.subr.bf16.mxu0 0
  %9323 = vmatpush1.bf16.msra.mxu0 0
  %9324 = vmatprep.subr.bf16.mxu0 0
  %9325 = vmatpush1.bf16.msra.mxu0 0
  %9326 = vmatprep.subr.bf16.mxu0 0
  %9327 = vmatpush1.bf16.msra.mxu0 0
  %9328 = vmatprep.subr.bf16.mxu0 0
  %9329 = vmatpush1.bf16.msra.mxu0 0
  %9330 = vmatprep.subr.bf16.mxu0 0
  %9331 = vmatpush1.bf16.msra.mxu0 0
  %9332 = vmatprep.subr.bf16.mxu0 0
  %9333 = vmatpush1.bf16.msra.mxu0 0
  %9334 = vmatprep.mubr.bf16.mxu0 0
  %9335 = vmatmul.mubr.bf16.gmra.mrb[0].mxu0 %v9085
  %v9336 = vpop.f32.mrb[0].mxu0
  %v9337 = vadd.f32 %v8727, %v9336
  %v9338 = vpop.f32.mrb[0].mxu0
  %v9339 = vadd.f32 %v8731, %v9338
  %v9340 = vpop.f32.mrb[0].mxu0
  %v9341 = vadd.f32 %v8727, %v9340
  %v9342 = vpop.f32.mrb[0].mxu0
  %v9343 = vadd.f32 %v8731, %v9342
  %9344 = vdwg.mxu0
  %9345 = vmatprep.subr.bf16.mxu0 %v8969
  %9346 = vmatpush1.bf16.msra.mxu0 %v8968
  %9347 = vmatprep.subr.bf16.mxu0 %v8985
  %9348 = vmatpush1.bf16.msra.mxu0 %v8984
  %9349 = vmatprep.subr.bf16.mxu0 %v9001
  %9350 = vmatpush1.bf16.msra.mxu0 %v9000
  %9351 = vmatprep.subr.bf16.mxu0 %v9017
  %9352 = vmatpush1.bf16.msra.mxu0 %v9016
  %9353 = vmatprep.subr.bf16.mxu0 0
  %9354 = vmatpush1.bf16.msra.mxu0 0
  %9355 = vmatprep.subr.bf16.mxu0 0
  %9356 = vmatpush1.bf16.msra.mxu0 0
  %9357 = vmatprep.subr.bf16.mxu0 0
  %9358 = vmatpush1.bf16.msra.mxu0 0
  %9359 = vmatprep.subr.bf16.mxu0 0
  %9360 = vmatpush1.bf16.msra.mxu0 0
  %9361 = vmatprep.subr.bf16.mxu0 0
  %9362 = vmatpush1.bf16.msra.mxu0 0
  %9363 = vmatprep.subr.bf16.mxu0 0
  %9364 = vmatpush1.bf16.msra.mxu0 0
  %9365 = vmatprep.subr.bf16.mxu0 0
  %9366 = vmatpush1.bf16.msra.mxu0 0
  %9367 = vmatprep.subr.bf16.mxu0 0
  %9368 = vmatpush1.bf16.msra.mxu0 0
  %9369 = vmatprep.subr.bf16.mxu0 0
  %9370 = vmatpush1.bf16.msra.mxu0 0
  %9371 = vmatprep.subr.bf16.mxu0 0
  %9372 = vmatpush1.bf16.msra.mxu0 0
  %9373 = vmatprep.subr.bf16.mxu0 0
  %9374 = vmatpush1.bf16.msra.mxu0 0
  %9375 = vmatprep.subr.bf16.mxu0 0
  %9376 = vmatpush1.bf16.msra.mxu0 0
  %9377 = vmatprep.mubr.bf16.mxu0 0
  %9378 = vmatmul.mubr.bf16.gmra.mrb[0].mxu0 %v9085
  %v9379 = vpop.f32.mrb[0].mxu0
  %v9380 = vadd.f32 %v8735, %v9379
  %v9381 = vpop.f32.mrb[0].mxu0
  %v9382 = vadd.f32 %v8739, %v9381
  %v9383 = vpop.f32.mrb[0].mxu0
  %v9384 = vadd.f32 %v8735, %v9383
  %v9385 = vpop.f32.mrb[0].mxu0
  %v9386 = vadd.f32 %v8739, %v9385
  %9387 = vdwg.mxu0
  %9388 = vmatprep.subr.bf16.mxu0 %v8971
  %9389 = vmatpush1.bf16.msra.mxu0 %v8970
  %9390 = vmatprep.subr.bf16.mxu0 %v8987
  %9391 = vmatpush1.bf16.msra.mxu0 %v8986
  %9392 = vmatprep.subr.bf16.mxu0 %v9003
  %9393 = vmatpush1.bf16.msra.mxu0 %v9002
  %9394 = vmatprep.subr.bf16.mxu0 %v9019
  %9395 = vmatpush1.bf16.msra.mxu0 %v9018
  %9396 = vmatprep.subr.bf16.mxu0 0
  %9397 = vmatpush1.bf16.msra.mxu0 0
  %9398 = vmatprep.subr.bf16.mxu0 0
  %9399 = vmatpush1.bf16.msra.mxu0 0
  %9400 = vmatprep.subr.bf16.mxu0 0
  %9401 = vmatpush1.bf16.msra.mxu0 0
  %9402 = vmatprep.subr.bf16.mxu0 0
  %9403 = vmatpush1.bf16.msra.mxu0 0
  %9404 = vmatprep.subr.bf16.mxu0 0
  %9405 = vmatpush1.bf16.msra.mxu0 0
  %9406 = vmatprep.subr.bf16.mxu0 0
  %9407 = vmatpush1.bf16.msra.mxu0 0
  %9408 = vmatprep.subr.bf16.mxu0 0
  %9409 = vmatpush1.bf16.msra.mxu0 0
  %9410 = vmatprep.subr.bf16.mxu0 0
  %9411 = vmatpush1.bf16.msra.mxu0 0
  %9412 = vmatprep.subr.bf16.mxu0 0
  %9413 = vmatpush1.bf16.msra.mxu0 0
  %9414 = vmatprep.subr.bf16.mxu0 0
  %9415 = vmatpush1.bf16.msra.mxu0 0
  %9416 = vmatprep.subr.bf16.mxu0 0
  %9417 = vmatpush1.bf16.msra.mxu0 0
  %9418 = vmatprep.subr.bf16.mxu0 0
  %9419 = vmatpush1.bf16.msra.mxu0 0
  %9420 = vmatprep.mubr.bf16.mxu0 0
  %9421 = vmatmul.mubr.bf16.gmra.mrb[0].mxu0 %v9085
  %v9422 = vpop.f32.mrb[0].mxu0
  %v9423 = vadd.f32 %v8743, %v9422
  %v9424 = vpop.f32.mrb[0].mxu0
  %v9425 = vadd.f32 %v8747, %v9424
  %v9426 = vpop.f32.mrb[0].mxu0
  %v9427 = vadd.f32 %v8743, %v9426
  %v9428 = vpop.f32.mrb[0].mxu0
  %v9429 = vadd.f32 %v8747, %v9428
  %9430 = vdwg.mxu0
  %v9431 = vmax.f32 %v9122, 0.0
  %v9432 = vmax.f32 %v9124, 0.0
  %v9433 = vmax.f32 %v9165, 0.0
  %v9434 = vmax.f32 %v9167, 0.0
  %v9435 = vmax.f32 %v9208, 0.0
  %v9436 = vmax.f32 %v9210, 0.0
  %v9437 = vmax.f32 %v9251, 0.0
  %v9438 = vmax.f32 %v9253, 0.0
  %v9439 = vmax.f32 %v9294, 0.0
  %v9440 = vmax.f32 %v9296, 0.0
  %v9441 = vmax.f32 %v9337, 0.0
  %v9442 = vmax.f32 %v9339, 0.0
  %v9443 = vmax.f32 %v9380, 0.0
  %v9444 = vmax.f32 %v9382, 0.0
  %v9445 = vmax.f32 %v9423, 0.0
  %v9446 = vmax.f32 %v9425, 0.0
  %v9447 = vmax.f32 %v9126, 0.0
  %v9448 = vmax.f32 %v9128, 0.0
  %v9449 = vmax.f32 %v9169, 0.0
  %v9450 = vmax.f32 %v9171, 0.0
  %v9451 = vmax.f32 %v9212, 0.0
  %v9452 = vmax.f32 %v9214, 0.0
  %v9453 = vmax.f32 %v9255, 0.0
  %v9454 = vmax.f32 %v9257, 0.0
  %v9455 = vmax.f32 %v9298, 0.0
  %v9456 = vmax.f32 %v9300, 0.0
  %v9457 = vmax.f32 %v9341, 0.0
  %v9458 = vmax.f32 %v9343, 0.0
  %v9459 = vmax.f32 %v9384, 0.0
  %v9460 = vmax.f32 %v9386, 0.0
  %v9461 = vmax.f32 %v9427, 0.0
  %v9462 = vmax.f32 %v9429, 0.0
  %v9463 = vpack.c.bf16 %v9447, %v9431
  %v9464 = vpack.c.bf16 %v9448, %v9432
  %v9465 = vpack.c.bf16 %v9449, %v9433
  %v9466 = vpack.c.bf16 %v9450, %v9434
  %v9467 = vpack.c.bf16 %v9451, %v9435
  %v9468 = vpack.c.bf16 %v9452, %v9436
  %v9469 = vpack.c.bf16 %v9453, %v9437
  %v9470 = vpack.c.bf16 %v9454, %v9438
  %v9471 = vpack.c.bf16 %v9455, %v9439
  %v9472 = vpack.c.bf16 %v9456, %v9440
  %v9473 = vpack.c.bf16 %v9457, %v9441
  %v9474 = vpack.c.bf16 %v9458, %v9442
  %v9475 = vpack.c.bf16 %v9459, %v9443
  %v9476 = vpack.c.bf16 %v9460, %v9444
  %v9477 = vpack.c.bf16 %v9461, %v9445
  %v9478 = vpack.c.bf16 %v9462, %v9446
  %v9479 = vld [vmem:[%s63] sm:$0xf]
  %v9480 = vld [vmem:[%s63 + $0x4] sm:$0xf]
  %v9481 = vld [vmem:[%s63 + $0x8] sm:$0xf]
  %v9482 = vld [vmem:[%s63 + $0xc] sm:$0xf]
  %v9483 = vld [vmem:[%s63 + $0x10] sm:$0xf]
  %v9484 = vld [vmem:[%s63 + $0x14] sm:$0xf]
  %v9485 = vld [vmem:[%s63 + $0x18] sm:$0xf]
  %v9486 = vld [vmem:[%s63 + $0x1c] sm:$0xf]
  %v9487 = vld [vmem:[%s63 + $0x20] sm:$0xf]
  %v9488 = vld [vmem:[%s63 + $0x24] sm:$0xf]
  %v9489 = vld [vmem:[%s63 + $0x28] sm:$0xf]
  %v9490 = vld [vmem:[%s63 + $0x2c] sm:$0xf]
  %v9491 = vld [vmem:[%s63 + $0x30] sm:$0xf]
  %v9492 = vld [vmem:[%s63 + $0x34] sm:$0xf]
  %v9493 = vld [vmem:[%s63 + $0x38] sm:$0xf]
  %v9494 = vld [vmem:[%s63 + $0x3c] sm:$0xf]
  %v9495 = vld [vmem:[%s63 + $0x40] sm:$0xf]
  %v9496 = vld [vmem:[%s63 + $0x44] sm:$0xf]
  %v9497 = vld [vmem:[%s63 + $0x48] sm:$0xf]
  %v9498 = vld [vmem:[%s63 + $0x4c] sm:$0xf]
  %v9499 = vld [vmem:[%s63 + $0x50] sm:$0xf]
  %v9500 = vld [vmem:[%s63 + $0x54] sm:$0xf]
  %v9501 = vld [vmem:[%s63 + $0x58] sm:$0xf]
  %v9502 = vld [vmem:[%s63 + $0x5c] sm:$0xf]
  %v9503 = vld [vmem:[%s63 + $0x60] sm:$0xf]
  %v9504 = vld [vmem:[%s63 + $0x64] sm:$0xf]
  %v9505 = vld [vmem:[%s63 + $0x68] sm:$0xf]
  %v9506 = vld [vmem:[%s63 + $0x6c] sm:$0xf]
  %v9507 = vld [vmem:[%s63 + $0x70] sm:$0xf]
  %v9508 = vld [vmem:[%s63 + $0x74] sm:$0xf]
  %v9509 = vld [vmem:[%s63 + $0x78] sm:$0xf]
  %v9510 = vld [vmem:[%s63 + $0x7c] sm:$0xf]
  %v9511 = vld [vmem:[%s63 + $0x80] sm:$0xf]
  %v9512 = vld [vmem:[%s63 + $0x84] sm:$0xf]
  %v9513 = vld [vmem:[%s63 + $0x88] sm:$0xf]
  %v9514 = vld [vmem:[%s63 + $0x8c] sm:$0xf]
  %v9515 = vld [vmem:[%s63 + $0x90] sm:$0xf]
  %v9516 = vld [vmem:[%s63 + $0x94] sm:$0xf]
  %v9517 = vld [vmem:[%s63 + $0x98] sm:$0xf]
  %v9518 = vld [vmem:[%s63 + $0x9c] sm:$0xf]
  %v9519 = vld [vmem:[%s63 + $0xa0] sm:$0xf]
  %v9520 = vld [vmem:[%s63 + $0xa4] sm:$0xf]
  %v9521 = vld [vmem:[%s63 + $0xa8] sm:$0xf]
  %v9522 = vld [vmem:[%s63 + $0xac] sm:$0xf]
  %v9523 = vld [vmem:[%s63 + $0xb0] sm:$0xf]
  %v9524 = vld [vmem:[%s63 + $0xb4] sm:$0xf]
  %v9525 = vld [vmem:[%s63 + $0xb8] sm:$0xf]
  %v9526 = vld [vmem:[%s63 + $0xbc] sm:$0xf]
  %v9527 = vld [vmem:[%s63 + $0xc0] sm:$0xf]
  %v9528 = vld [vmem:[%s63 + $0xc4] sm:$0xf]
  %v9529 = vld [vmem:[%s63 + $0xc8] sm:$0xf]
  %v9530 = vld [vmem:[%s63 + $0xcc] sm:$0xf]
  %v9531 = vld [vmem:[%s63 + $0xd0] sm:$0xf]
  %v9532 = vld [vmem:[%s63 + $0xd4] sm:$0xf]
  %v9533 = vld [vmem:[%s63 + $0xd8] sm:$0xf]
  %v9534 = vld [vmem:[%s63 + $0xdc] sm:$0xf]
  %v9535 = vld [vmem:[%s63 + $0xe0] sm:$0xf]
  %v9536 = vld [vmem:[%s63 + $0xe4] sm:$0xf]
  %v9537 = vld [vmem:[%s63 + $0xe8] sm:$0xf]
  %v9538 = vld [vmem:[%s63 + $0xec] sm:$0xf]
  %v9539 = vld [vmem:[%s63 + $0xf0] sm:$0xf]
  %v9540 = vld [vmem:[%s63 + $0xf4] sm:$0xf]
  %v9541 = vld [vmem:[%s63 + $0xf8] sm:$0xf]
  %v9542 = vld [vmem:[%s63 + $0xfc] sm:$0xf]
  %v9543 = vld [vmem:[%s63 + $0x100] sm:$0xf]
  %v9544 = vld [vmem:[%s63 + $0x104] sm:$0xf]
  %v9545 = vld [vmem:[%s63 + $0x108] sm:$0xf]
  %v9546 = vld [vmem:[%s63 + $0x10c] sm:$0xf]
  %v9547 = vld [vmem:[%s63 + $0x110] sm:$0xf]
  %v9548 = vld [vmem:[%s63 + $0x114] sm:$0xf]
  %v9549 = vld [vmem:[%s63 + $0x118] sm:$0xf]
  %v9550 = vld [vmem:[%s63 + $0x11c] sm:$0xf]
  %v9551 = vld [vmem:[%s63 + $0x120] sm:$0xf]
  %v9552 = vld [vmem:[%s63 + $0x124] sm:$0xf]
  %v9553 = vld [vmem:[%s63 + $0x128] sm:$0xf]
  %v9554 = vld [vmem:[%s63 + $0x12c] sm:$0xf]
  %v9555 = vld [vmem:[%s63 + $0x130] sm:$0xf]
  %v9556 = vld [vmem:[%s63 + $0x134] sm:$0xf]
  %v9557 = vld [vmem:[%s63 + $0x138] sm:$0xf]
  %v9558 = vld [vmem:[%s63 + $0x13c] sm:$0xf]
  %v9559 = vld [vmem:[%s63 + $0x140] sm:$0xf]
  %v9560 = vld [vmem:[%s63 + $0x144] sm:$0xf]
  %v9561 = vld [vmem:[%s63 + $0x148] sm:$0xf]
  %v9562 = vld [vmem:[%s63 + $0x14c] sm:$0xf]
  %v9563 = vld [vmem:[%s63 + $0x150] sm:$0xf]
  %v9564 = vld [vmem:[%s63 + $0x154] sm:$0xf]
  %v9565 = vld [vmem:[%s63 + $0x158] sm:$0xf]
  %v9566 = vld [vmem:[%s63 + $0x15c] sm:$0xf]
  %v9567 = vld [vmem:[%s63 + $0x160] sm:$0xf]
  %v9568 = vld [vmem:[%s63 + $0x164] sm:$0xf]
  %v9569 = vld [vmem:[%s63 + $0x168] sm:$0xf]
  %v9570 = vld [vmem:[%s63 + $0x16c] sm:$0xf]
  %v9571 = vld [vmem:[%s63 + $0x170] sm:$0xf]
  %v9572 = vld [vmem:[%s63 + $0x174] sm:$0xf]
  %v9573 = vld [vmem:[%s63 + $0x178] sm:$0xf]
  %v9574 = vld [vmem:[%s63 + $0x17c] sm:$0xf]
  %v9575 = vld [vmem:[%s63 + $0x180] sm:$0xf]
  %v9576 = vld [vmem:[%s63 + $0x184] sm:$0xf]
  %v9577 = vld [vmem:[%s63 + $0x188] sm:$0xf]
  %v9578 = vld [vmem:[%s63 + $0x18c] sm:$0xf]
  %v9579 = vld [vmem:[%s63 + $0x190] sm:$0xf]
  %v9580 = vld [vmem:[%s63 + $0x194] sm:$0xf]
  %v9581 = vld [vmem:[%s63 + $0x198] sm:$0xf]
  %v9582 = vld [vmem:[%s63 + $0x19c] sm:$0xf]
  %v9583 = vld [vmem:[%s63 + $0x1a0] sm:$0xf]
  %v9584 = vld [vmem:[%s63 + $0x1a4] sm:$0xf]
  %v9585 = vld [vmem:[%s63 + $0x1a8] sm:$0xf]
  %v9586 = vld [vmem:[%s63 + $0x1ac] sm:$0xf]
  %v9587 = vld [vmem:[%s63 + $0x1b0] sm:$0xf]
  %v9588 = vld [vmem:[%s63 + $0x1b4] sm:$0xf]
  %v9589 = vld [vmem:[%s63 + $0x1b8] sm:$0xf]
  %v9590 = vld [vmem:[%s63 + $0x1bc] sm:$0xf]
  %v9591 = vld [vmem:[%s63 + $0x1c0] sm:$0xf]
  %v9592 = vld [vmem:[%s63 + $0x1c4] sm:$0xf]
  %v9593 = vld [vmem:[%s63 + $0x1c8] sm:$0xf]
  %v9594 = vld [vmem:[%s63 + $0x1cc] sm:$0xf]
  %v9595 = vld [vmem:[%s63 + $0x1d0] sm:$0xf]
  %v9596 = vld [vmem:[%s63 + $0x1d4] sm:$0xf]
  %v9597 = vld [vmem:[%s63 + $0x1d8] sm:$0xf]
  %v9598 = vld [vmem:[%s63 + $0x1dc] sm:$0xf]
  %v9599 = vld [vmem:[%s63 + $0x1e0] sm:$0xf]
  %v9600 = vld [vmem:[%s63 + $0x1e4] sm:$0xf]
  %v9601 = vld [vmem:[%s63 + $0x1e8] sm:$0xf]
  %v9602 = vld [vmem:[%s63 + $0x1ec] sm:$0xf]
  %v9603 = vld [vmem:[%s63 + $0x1f0] sm:$0xf]
  %v9604 = vld [vmem:[%s63 + $0x1f4] sm:$0xf]
  %v9605 = vld [vmem:[%s63 + $0x1f8] sm:$0xf]
  %v9606 = vld [vmem:[%s63 + $0x1fc] sm:$0xf]
  %v9607 = vld [vmem:[%s63 + $0x200] sm:$0xf]
  %v9608 = vld [vmem:[%s63 + $0x204] sm:$0xf]
  %v9609 = vld [vmem:[%s63 + $0x208] sm:$0xf]
  %v9610 = vld [vmem:[%s63 + $0x20c] sm:$0xf]
  %v9611 = vld [vmem:[%s63 + $0x210] sm:$0xf]
  %v9612 = vld [vmem:[%s63 + $0x214] sm:$0xf]
  %v9613 = vld [vmem:[%s63 + $0x218] sm:$0xf]
  %v9614 = vld [vmem:[%s63 + $0x21c] sm:$0xf]
  %v9615 = vld [vmem:[%s63 + $0x220] sm:$0xf]
  %v9616 = vld [vmem:[%s63 + $0x224] sm:$0xf]
  %v9617 = vld [vmem:[%s63 + $0x228] sm:$0xf]
  %v9618 = vld [vmem:[%s63 + $0x22c] sm:$0xf]
  %v9619 = vld [vmem:[%s63 + $0x230] sm:$0xf]
  %v9620 = vld [vmem:[%s63 + $0x234] sm:$0xf]
  %v9621 = vld [vmem:[%s63 + $0x238] sm:$0xf]
  %v9622 = vld [vmem:[%s63 + $0x23c] sm:$0xf]
  %v9623 = vld [vmem:[%s63 + $0x240] sm:$0xf]
  %v9624 = vld [vmem:[%s63 + $0x244] sm:$0xf]
  %v9625 = vld [vmem:[%s63 + $0x248] sm:$0xf]
  %v9626 = vld [vmem:[%s63 + $0x24c] sm:$0xf]
  %v9627 = vld [vmem:[%s63 + $0x250] sm:$0xf]
  %v9628 = vld [vmem:[%s63 + $0x254] sm:$0xf]
  %v9629 = vld [vmem:[%s63 + $0x258] sm:$0xf]
  %v9630 = vld [vmem:[%s63 + $0x25c] sm:$0xf]
  %v9631 = vld [vmem:[%s63 + $0x260] sm:$0xf]
  %v9632 = vld [vmem:[%s63 + $0x264] sm:$0xf]
  %v9633 = vld [vmem:[%s63 + $0x268] sm:$0xf]
  %v9634 = vld [vmem:[%s63 + $0x26c] sm:$0xf]
  %v9635 = vld [vmem:[%s63 + $0x270] sm:$0xf]
  %v9636 = vld [vmem:[%s63 + $0x274] sm:$0xf]
  %v9637 = vld [vmem:[%s63 + $0x278] sm:$0xf]
  %v9638 = vld [vmem:[%s63 + $0x27c] sm:$0xf]
  %v9639 = vld [vmem:[%s63 + $0x280] sm:$0xf]
  %v9640 = vld [vmem:[%s63 + $0x284] sm:$0xf]
  %v9641 = vld [vmem:[%s63 + $0x288] sm:$0xf]
  %v9642 = vld [vmem:[%s63 + $0x28c] sm:$0xf]
  %v9643 = vld [vmem:[%s63 + $0x290] sm:$0xf]
  %v9644 = vld [vmem:[%s63 + $0x294] sm:$0xf]
  %v9645 = vld [vmem:[%s63 + $0x298] sm:$0xf]
  %v9646 = vld [vmem:[%s63 + $0x29c] sm:$0xf]
  %v9647 = vld [vmem:[%s63 + $0x2a0] sm:$0xf]
  %v9648 = vld [vmem:[%s63 + $0x2a4] sm:$0xf]
  %v9649 = vld [vmem:[%s63 + $0x2a8] sm:$0xf]
  %v9650 = vld [vmem:[%s63 + $0x2ac] sm:$0xf]
  %v9651 = vld [vmem:[%s63 + $0x2b0] sm:$0xf]
  %v9652 = vld [vmem:[%s63 + $0x2b4] sm:$0xf]
  %v9653 = vld [vmem:[%s63 + $0x2b8] sm:$0xf]
  %v9654 = vld [vmem:[%s63 + $0x2bc] sm:$0xf]
  %v9655 = vld [vmem:[%s63 + $0x2c0] sm:$0xf]
  %v9656 = vld [vmem:[%s63 + $0x2c4] sm:$0xf]
  %v9657 = vld [vmem:[%s63 + $0x2c8] sm:$0xf]
  %v9658 = vld [vmem:[%s63 + $0x2cc] sm:$0xf]
  %v9659 = vld [vmem:[%s63 + $0x2d0] sm:$0xf]
  %v9660 = vld [vmem:[%s63 + $0x2d4] sm:$0xf]
  %v9661 = vld [vmem:[%s63 + $0x2d8] sm:$0xf]
  %v9662 = vld [vmem:[%s63 + $0x2dc] sm:$0xf]
  %v9663 = vld [vmem:[%s63 + $0x2e0] sm:$0xf]
  %v9664 = vld [vmem:[%s63 + $0x2e4] sm:$0xf]
  %v9665 = vld [vmem:[%s63 + $0x2e8] sm:$0xf]
  %v9666 = vld [vmem:[%s63 + $0x2ec] sm:$0xf]
  %v9667 = vld [vmem:[%s63 + $0x2f0] sm:$0xf]
  %v9668 = vld [vmem:[%s63 + $0x2f4] sm:$0xf]
  %v9669 = vld [vmem:[%s63 + $0x2f8] sm:$0xf]
  %v9670 = vld [vmem:[%s63 + $0x2fc] sm:$0xf]
  %v9671 = vld [vmem:[%s63 + $0x300] sm:$0xf]
  %v9672 = vld [vmem:[%s63 + $0x304] sm:$0xf]
  %v9673 = vld [vmem:[%s63 + $0x308] sm:$0xf]
  %v9674 = vld [vmem:[%s63 + $0x30c] sm:$0xf]
  %v9675 = vld [vmem:[%s63 + $0x310] sm:$0xf]
  %v9676 = vld [vmem:[%s63 + $0x314] sm:$0xf]
  %v9677 = vld [vmem:[%s63 + $0x318] sm:$0xf]
  %v9678 = vld [vmem:[%s63 + $0x31c] sm:$0xf]
  %v9679 = vld [vmem:[%s63 + $0x320] sm:$0xf]
  %v9680 = vld [vmem:[%s63 + $0x324] sm:$0xf]
  %v9681 = vld [vmem:[%s63 + $0x328] sm:$0xf]
  %v9682 = vld [vmem:[%s63 + $0x32c] sm:$0xf]
  %v9683 = vld [vmem:[%s63 + $0x330] sm:$0xf]
  %v9684 = vld [vmem:[%s63 + $0x334] sm:$0xf]
  %v9685 = vld [vmem:[%s63 + $0x338] sm:$0xf]
  %v9686 = vld [vmem:[%s63 + $0x33c] sm:$0xf]
  %v9687 = vld [vmem:[%s63 + $0x340] sm:$0xf]
  %v9688 = vld [vmem:[%s63 + $0x344] sm:$0xf]
  %v9689 = vld [vmem:[%s63 + $0x348] sm:$0xf]
  %v9690 = vld [vmem:[%s63 + $0x34c] sm:$0xf]
  %v9691 = vld [vmem:[%s63 + $0x350] sm:$0xf]
  %v9692 = vld [vmem:[%s63 + $0x354] sm:$0xf]
  %v9693 = vld [vmem:[%s63 + $0x358] sm:$0xf]
  %v9694 = vld [vmem:[%s63 + $0x35c] sm:$0xf]
  %v9695 = vld [vmem:[%s63 + $0x360] sm:$0xf]
  %v9696 = vld [vmem:[%s63 + $0x364] sm:$0xf]
  %v9697 = vld [vmem:[%s63 + $0x368] sm:$0xf]
  %v9698 = vld [vmem:[%s63 + $0x36c] sm:$0xf]
  %v9699 = vld [vmem:[%s63 + $0x370] sm:$0xf]
  %v9700 = vld [vmem:[%s63 + $0x374] sm:$0xf]
  %v9701 = vld [vmem:[%s63 + $0x378] sm:$0xf]
  %v9702 = vld [vmem:[%s63 + $0x37c] sm:$0xf]
  %v9703 = vld [vmem:[%s63 + $0x380] sm:$0xf]
  %v9704 = vld [vmem:[%s63 + $0x384] sm:$0xf]
  %v9705 = vld [vmem:[%s63 + $0x388] sm:$0xf]
  %v9706 = vld [vmem:[%s63 + $0x38c] sm:$0xf]
  %v9707 = vld [vmem:[%s63 + $0x390] sm:$0xf]
  %v9708 = vld [vmem:[%s63 + $0x394] sm:$0xf]
  %v9709 = vld [vmem:[%s63 + $0x398] sm:$0xf]
  %v9710 = vld [vmem:[%s63 + $0x39c] sm:$0xf]
  %v9711 = vld [vmem:[%s63 + $0x3a0] sm:$0xf]
  %v9712 = vld [vmem:[%s63 + $0x3a4] sm:$0xf]
  %v9713 = vld [vmem:[%s63 + $0x3a8] sm:$0xf]
  %v9714 = vld [vmem:[%s63 + $0x3ac] sm:$0xf]
  %v9715 = vld [vmem:[%s63 + $0x3b0] sm:$0xf]
  %v9716 = vld [vmem:[%s63 + $0x3b4] sm:$0xf]
  %v9717 = vld [vmem:[%s63 + $0x3b8] sm:$0xf]
  %v9718 = vld [vmem:[%s63 + $0x3bc] sm:$0xf]
  %v9719 = vld [vmem:[%s63 + $0x3c0] sm:$0xf]
  %v9720 = vld [vmem:[%s63 + $0x3c4] sm:$0xf]
  %v9721 = vld [vmem:[%s63 + $0x3c8] sm:$0xf]
  %v9722 = vld [vmem:[%s63 + $0x3cc] sm:$0xf]
  %v9723 = vld [vmem:[%s63 + $0x3d0] sm:$0xf]
  %v9724 = vld [vmem:[%s63 + $0x3d4] sm:$0xf]
  %v9725 = vld [vmem:[%s63 + $0x3d8] sm:$0xf]
  %v9726 = vld [vmem:[%s63 + $0x3dc] sm:$0xf]
  %v9727 = vld [vmem:[%s63 + $0x3e0] sm:$0xf]
  %v9728 = vld [vmem:[%s63 + $0x3e4] sm:$0xf]
  %v9729 = vld [vmem:[%s63 + $0x3e8] sm:$0xf]
  %v9730 = vld [vmem:[%s63 + $0x3ec] sm:$0xf]
  %v9731 = vld [vmem:[%s63 + $0x3f0] sm:$0xf]
  %v9732 = vld [vmem:[%s63 + $0x3f4] sm:$0xf]
  %v9733 = vld [vmem:[%s63 + $0x3f8] sm:$0xf]
  %v9734 = vld [vmem:[%s63 + $0x3fc] sm:$0xf]
  %v9735 = vld [vmem:[%s65] sm:$0x1]
  %v9737 = vlaneseq
  %v9738 = vshrl.u32 %v9737, 7
  %v9739 = vsub.s32 0, %v9738
  %v9740 = vrot.slane %v9735, %v9739
  %v9998 = vunpack.c.l.b16 %v9479
  %v9999 = vunpack.c.l.b16 %v9480
  %v10000 = vunpack.c.l.b16 %v9481
  %v10001 = vunpack.c.l.b16 %v9482
  %v10002 = vunpack.c.l.b16 %v9483
  %v10003 = vunpack.c.l.b16 %v9484
  %v10004 = vunpack.c.l.b16 %v9485
  %v10005 = vunpack.c.l.b16 %v9486
  %v10006 = vunpack.c.l.b16 %v9487
  %v10007 = vunpack.c.l.b16 %v9488
  %v10008 = vunpack.c.l.b16 %v9489
  %v10009 = vunpack.c.l.b16 %v9490
  %v10010 = vunpack.c.l.b16 %v9491
  %v10011 = vunpack.c.l.b16 %v9492
  %v10012 = vunpack.c.l.b16 %v9493
  %v10013 = vunpack.c.l.b16 %v9494
  %v10014 = vunpack.c.l.b16 %v9495
  %v10015 = vunpack.c.l.b16 %v9496
  %v10016 = vunpack.c.l.b16 %v9497
  %v10017 = vunpack.c.l.b16 %v9498
  %v10018 = vunpack.c.l.b16 %v9499
  %v10019 = vunpack.c.l.b16 %v9500
  %v10020 = vunpack.c.l.b16 %v9501
  %v10021 = vunpack.c.l.b16 %v9502
  %v10022 = vunpack.c.l.b16 %v9503
  %v10023 = vunpack.c.l.b16 %v9504
  %v10024 = vunpack.c.l.b16 %v9505
  %v10025 = vunpack.c.l.b16 %v9506
  %v10026 = vunpack.c.l.b16 %v9507
  %v10027 = vunpack.c.l.b16 %v9508
  %v10028 = vunpack.c.l.b16 %v9509
  %v10029 = vunpack.c.l.b16 %v9510
  %v10030 = vunpack.c.l.b16 %v9511
  %v10031 = vunpack.c.l.b16 %v9512
  %v10032 = vunpack.c.l.b16 %v9513
  %v10033 = vunpack.c.l.b16 %v9514
  %v10034 = vunpack.c.l.b16 %v9515
  %v10035 = vunpack.c.l.b16 %v9516
  %v10036 = vunpack.c.l.b16 %v9517
  %v10037 = vunpack.c.l.b16 %v9518
  %v10038 = vunpack.c.l.b16 %v9519
  %v10039 = vunpack.c.l.b16 %v9520
  %v10040 = vunpack.c.l.b16 %v9521
  %v10041 = vunpack.c.l.b16 %v9522
  %v10042 = vunpack.c.l.b16 %v9523
  %v10043 = vunpack.c.l.b16 %v9524
  %v10044 = vunpack.c.l.b16 %v9525
  %v10045 = vunpack.c.l.b16 %v9526
  %v10046 = vunpack.c.l.b16 %v9527
  %v10047 = vunpack.c.l.b16 %v9528
  %v10048 = vunpack.c.l.b16 %v9529
  %v10049 = vunpack.c.l.b16 %v9530
  %v10050 = vunpack.c.l.b16 %v9531
  %v10051 = vunpack.c.l.b16 %v9532
  %v10052 = vunpack.c.l.b16 %v9533
  %v10053 = vunpack.c.l.b16 %v9534
  %v10054 = vunpack.c.l.b16 %v9535
  %v10055 = vunpack.c.l.b16 %v9536
  %v10056 = vunpack.c.l.b16 %v9537
  %v10057 = vunpack.c.l.b16 %v9538
  %v10058 = vunpack.c.l.b16 %v9539
  %v10059 = vunpack.c.l.b16 %v9540
  %v10060 = vunpack.c.l.b16 %v9541
  %v10061 = vunpack.c.l.b16 %v9542
  %v10062 = vunpack.c.l.b16 %v9543
  %v10063 = vunpack.c.l.b16 %v9544
  %v10064 = vunpack.c.l.b16 %v9545
  %v10065 = vunpack.c.l.b16 %v9546
  %v10066 = vunpack.c.l.b16 %v9547
  %v10067 = vunpack.c.l.b16 %v9548
  %v10068 = vunpack.c.l.b16 %v9549
  %v10069 = vunpack.c.l.b16 %v9550
  %v10070 = vunpack.c.l.b16 %v9551
  %v10071 = vunpack.c.l.b16 %v9552
  %v10072 = vunpack.c.l.b16 %v9553
  %v10073 = vunpack.c.l.b16 %v9554
  %v10074 = vunpack.c.l.b16 %v9555
  %v10075 = vunpack.c.l.b16 %v9556
  %v10076 = vunpack.c.l.b16 %v9557
  %v10077 = vunpack.c.l.b16 %v9558
  %v10078 = vunpack.c.l.b16 %v9559
  %v10079 = vunpack.c.l.b16 %v9560
  %v10080 = vunpack.c.l.b16 %v9561
  %v10081 = vunpack.c.l.b16 %v9562
  %v10082 = vunpack.c.l.b16 %v9563
  %v10083 = vunpack.c.l.b16 %v9564
  %v10084 = vunpack.c.l.b16 %v9565
  %v10085 = vunpack.c.l.b16 %v9566
  %v10086 = vunpack.c.l.b16 %v9567
  %v10087 = vunpack.c.l.b16 %v9568
  %v10088 = vunpack.c.l.b16 %v9569
  %v10089 = vunpack.c.l.b16 %v9570
  %v10090 = vunpack.c.l.b16 %v9571
  %v10091 = vunpack.c.l.b16 %v9572
  %v10092 = vunpack.c.l.b16 %v9573
  %v10093 = vunpack.c.l.b16 %v9574
  %v10094 = vunpack.c.l.b16 %v9575
  %v10095 = vunpack.c.l.b16 %v9576
  %v10096 = vunpack.c.l.b16 %v9577
  %v10097 = vunpack.c.l.b16 %v9578
  %v10098 = vunpack.c.l.b16 %v9579
  %v10099 = vunpack.c.l.b16 %v9580
  %v10100 = vunpack.c.l.b16 %v9581
  %v10101 = vunpack.c.l.b16 %v9582
  %v10102 = vunpack.c.l.b16 %v9583
  %v10103 = vunpack.c.l.b16 %v9584
  %v10104 = vunpack.c.l.b16 %v9585
  %v10105 = vunpack.c.l.b16 %v9586
  %v10106 = vunpack.c.l.b16 %v9587
  %v10107 = vunpack.c.l.b16 %v9588
  %v10108 = vunpack.c.l.b16 %v9589
  %v10109 = vunpack.c.l.b16 %v9590
  %v10110 = vunpack.c.l.b16 %v9591
  %v10111 = vunpack.c.l.b16 %v9592
  %v10112 = vunpack.c.l.b16 %v9593
  %v10113 = vunpack.c.l.b16 %v9594
  %v10114 = vunpack.c.l.b16 %v9595
  %v10115 = vunpack.c.l.b16 %v9596
  %v10116 = vunpack.c.l.b16 %v9597
  %v10117 = vunpack.c.l.b16 %v9598
  %v10118 = vunpack.c.l.b16 %v9599
  %v10119 = vunpack.c.l.b16 %v9600
  %v10120 = vunpack.c.l.b16 %v9601
  %v10121 = vunpack.c.l.b16 %v9602
  %v10122 = vunpack.c.l.b16 %v9603
  %v10123 = vunpack.c.l.b16 %v9604
  %v10124 = vunpack.c.l.b16 %v9605
  %v10125 = vunpack.c.l.b16 %v9606
  %v10126 = vunpack.c.l.b16 %v9607
  %v10127 = vunpack.c.l.b16 %v9608
  %v10128 = vunpack.c.l.b16 %v9609
  %v10129 = vunpack.c.l.b16 %v9610
  %v10130 = vunpack.c.l.b16 %v9611
  %v10131 = vunpack.c.l.b16 %v9612
  %v10132 = vunpack.c.l.b16 %v9613
  %v10133 = vunpack.c.l.b16 %v9614
  %v10134 = vunpack.c.l.b16 %v9615
  %v10135 = vunpack.c.l.b16 %v9616
  %v10136 = vunpack.c.l.b16 %v9617
  %v10137 = vunpack.c.l.b16 %v9618
  %v10138 = vunpack.c.l.b16 %v9619
  %v10139 = vunpack.c.l.b16 %v9620
  %v10140 = vunpack.c.l.b16 %v9621
  %v10141 = vunpack.c.l.b16 %v9622
  %v10142 = vunpack.c.l.b16 %v9623
  %v10143 = vunpack.c.l.b16 %v9624
  %v10144 = vunpack.c.l.b16 %v9625
  %v10145 = vunpack.c.l.b16 %v9626
  %v10146 = vunpack.c.l.b16 %v9627
  %v10147 = vunpack.c.l.b16 %v9628
  %v10148 = vunpack.c.l.b16 %v9629
  %v10149 = vunpack.c.l.b16 %v9630
  %v10150 = vunpack.c.l.b16 %v9631
  %v10151 = vunpack.c.l.b16 %v9632
  %v10152 = vunpack.c.l.b16 %v9633
  %v10153 = vunpack.c.l.b16 %v9634
  %v10154 = vunpack.c.l.b16 %v9635
  %v10155 = vunpack.c.l.b16 %v9636
  %v10156 = vunpack.c.l.b16 %v9637
  %v10157 = vunpack.c.l.b16 %v9638
  %v10158 = vunpack.c.l.b16 %v9639
  %v10159 = vunpack.c.l.b16 %v9640
  %v10160 = vunpack.c.l.b16 %v9641
  %v10161 = vunpack.c.l.b16 %v9642
  %v10162 = vunpack.c.l.b16 %v9643
  %v10163 = vunpack.c.l.b16 %v9644
  %v10164 = vunpack.c.l.b16 %v9645
  %v10165 = vunpack.c.l.b16 %v9646
  %v10166 = vunpack.c.l.b16 %v9647
  %v10167 = vunpack.c.l.b16 %v9648
  %v10168 = vunpack.c.l.b16 %v9649
  %v10169 = vunpack.c.l.b16 %v9650
  %v10170 = vunpack.c.l.b16 %v9651
  %v10171 = vunpack.c.l.b16 %v9652
  %v10172 = vunpack.c.l.b16 %v9653
  %v10173 = vunpack.c.l.b16 %v9654
  %v10174 = vunpack.c.l.b16 %v9655
  %v10175 = vunpack.c.l.b16 %v9656
  %v10176 = vunpack.c.l.b16 %v9657
  %v10177 = vunpack.c.l.b16 %v9658
  %v10178 = vunpack.c.l.b16 %v9659
  %v10179 = vunpack.c.l.b16 %v9660
  %v10180 = vunpack.c.l.b16 %v9661
  %v10181 = vunpack.c.l.b16 %v9662
  %v10182 = vunpack.c.l.b16 %v9663
  %v10183 = vunpack.c.l.b16 %v9664
  %v10184 = vunpack.c.l.b16 %v9665
  %v10185 = vunpack.c.l.b16 %v9666
  %v10186 = vunpack.c.l.b16 %v9667
  %v10187 = vunpack.c.l.b16 %v9668
  %v10188 = vunpack.c.l.b16 %v9669
  %v10189 = vunpack.c.l.b16 %v9670
  %v10190 = vunpack.c.l.b16 %v9671
  %v10191 = vunpack.c.l.b16 %v9672
  %v10192 = vunpack.c.l.b16 %v9673
  %v10193 = vunpack.c.l.b16 %v9674
  %v10194 = vunpack.c.l.b16 %v9675
  %v10195 = vunpack.c.l.b16 %v9676
  %v10196 = vunpack.c.l.b16 %v9677
  %v10197 = vunpack.c.l.b16 %v9678
  %v10198 = vunpack.c.l.b16 %v9679
  %v10199 = vunpack.c.l.b16 %v9680
  %v10200 = vunpack.c.l.b16 %v9681
  %v10201 = vunpack.c.l.b16 %v9682
  %v10202 = vunpack.c.l.b16 %v9683
  %v10203 = vunpack.c.l.b16 %v9684
  %v10204 = vunpack.c.l.b16 %v9685
  %v10205 = vunpack.c.l.b16 %v9686
  %v10206 = vunpack.c.l.b16 %v9687
  %v10207 = vunpack.c.l.b16 %v9688
  %v10208 = vunpack.c.l.b16 %v9689
  %v10209 = vunpack.c.l.b16 %v9690
  %v10210 = vunpack.c.l.b16 %v9691
  %v10211 = vunpack.c.l.b16 %v9692
  %v10212 = vunpack.c.l.b16 %v9693
  %v10213 = vunpack.c.l.b16 %v9694
  %v10214 = vunpack.c.l.b16 %v9695
  %v10215 = vunpack.c.l.b16 %v9696
  %v10216 = vunpack.c.l.b16 %v9697
  %v10217 = vunpack.c.l.b16 %v9698
  %v10218 = vunpack.c.l.b16 %v9699
  %v10219 = vunpack.c.l.b16 %v9700
  %v10220 = vunpack.c.l.b16 %v9701
  %v10221 = vunpack.c.l.b16 %v9702
  %v10222 = vunpack.c.l.b16 %v9703
  %v10223 = vunpack.c.l.b16 %v9704
  %v10224 = vunpack.c.l.b16 %v9705
  %v10225 = vunpack.c.l.b16 %v9706
  %v10226 = vunpack.c.l.b16 %v9707
  %v10227 = vunpack.c.l.b16 %v9708
  %v10228 = vunpack.c.l.b16 %v9709
  %v10229 = vunpack.c.l.b16 %v9710
  %v10230 = vunpack.c.l.b16 %v9711
  %v10231 = vunpack.c.l.b16 %v9712
  %v10232 = vunpack.c.l.b16 %v9713
  %v10233 = vunpack.c.l.b16 %v9714
  %v10234 = vunpack.c.l.b16 %v9715
  %v10235 = vunpack.c.l.b16 %v9716
  %v10236 = vunpack.c.l.b16 %v9717
  %v10237 = vunpack.c.l.b16 %v9718
  %v10238 = vunpack.c.l.b16 %v9719
  %v10239 = vunpack.c.l.b16 %v9720
  %v10240 = vunpack.c.l.b16 %v9721
  %v10241 = vunpack.c.l.b16 %v9722
  %v10242 = vunpack.c.l.b16 %v9723
  %v10243 = vunpack.c.l.b16 %v9724
  %v10244 = vunpack.c.l.b16 %v9725
  %v10245 = vunpack.c.l.b16 %v9726
  %v10246 = vunpack.c.l.b16 %v9727
  %v10247 = vunpack.c.l.b16 %v9728
  %v10248 = vunpack.c.l.b16 %v9729
  %v10249 = vunpack.c.l.b16 %v9730
  %v10250 = vunpack.c.l.b16 %v9731
  %v10251 = vunpack.c.l.b16 %v9732
  %v10252 = vunpack.c.l.b16 %v9733
  %v10253 = vunpack.c.l.b16 %v9734
  %v10254 = vpack.c.b16 %v9999, %v9998
  %v10255 = vpack.c.b16 %v10001, %v10000
  %v10256 = vpack.c.b16 %v10003, %v10002
  %v10257 = vpack.c.b16 %v10005, %v10004
  %v10258 = vpack.c.b16 %v10007, %v10006
  %v10259 = vpack.c.b16 %v10009, %v10008
  %v10260 = vpack.c.b16 %v10011, %v10010
  %v10261 = vpack.c.b16 %v10013, %v10012
  %v10262 = vpack.c.b16 %v10015, %v10014
  %v10263 = vpack.c.b16 %v10017, %v10016
  %v10264 = vpack.c.b16 %v10019, %v10018
  %v10265 = vpack.c.b16 %v10021, %v10020
  %v10266 = vpack.c.b16 %v10023, %v10022
  %v10267 = vpack.c.b16 %v10025, %v10024
  %v10268 = vpack.c.b16 %v10027, %v10026
  %v10269 = vpack.c.b16 %v10029, %v10028
  %v10270 = vpack.c.b16 %v10031, %v10030
  %v10271 = vpack.c.b16 %v10033, %v10032
  %v10272 = vpack.c.b16 %v10035, %v10034
  %v10273 = vpack.c.b16 %v10037, %v10036
  %v10274 = vpack.c.b16 %v10039, %v10038
  %v10275 = vpack.c.b16 %v10041, %v10040
  %v10276 = vpack.c.b16 %v10043, %v10042
  %v10277 = vpack.c.b16 %v10045, %v10044
  %v10278 = vpack.c.b16 %v10047, %v10046
  %v10279 = vpack.c.b16 %v10049, %v10048
  %v10280 = vpack.c.b16 %v10051, %v10050
  %v10281 = vpack.c.b16 %v10053, %v10052
  %v10282 = vpack.c.b16 %v10055, %v10054
  %v10283 = vpack.c.b16 %v10057, %v10056
  %v10284 = vpack.c.b16 %v10059, %v10058
  %v10285 = vpack.c.b16 %v10061, %v10060
  %v10286 = vpack.c.b16 %v10063, %v10062
  %v10287 = vpack.c.b16 %v10065, %v10064
  %v10288 = vpack.c.b16 %v10067, %v10066
  %v10289 = vpack.c.b16 %v10069, %v10068
  %v10290 = vpack.c.b16 %v10071, %v10070
  %v10291 = vpack.c.b16 %v10073, %v10072
  %v10292 = vpack.c.b16 %v10075, %v10074
  %v10293 = vpack.c.b16 %v10077, %v10076
  %v10294 = vpack.c.b16 %v10079, %v10078
  %v10295 = vpack.c.b16 %v10081, %v10080
  %v10296 = vpack.c.b16 %v10083, %v10082
  %v10297 = vpack.c.b16 %v10085, %v10084
  %v10298 = vpack.c.b16 %v10087, %v10086
  %v10299 = vpack.c.b16 %v10089, %v10088
  %v10300 = vpack.c.b16 %v10091, %v10090
  %v10301 = vpack.c.b16 %v10093, %v10092
  %v10302 = vpack.c.b16 %v10095, %v10094
  %v10303 = vpack.c.b16 %v10097, %v10096
  %v10304 = vpack.c.b16 %v10099, %v10098
  %v10305 = vpack.c.b16 %v10101, %v10100
  %v10306 = vpack.c.b16 %v10103, %v10102
  %v10307 = vpack.c.b16 %v10105, %v10104
  %v10308 = vpack.c.b16 %v10107, %v10106
  %v10309 = vpack.c.b16 %v10109, %v10108
  %v10310 = vpack.c.b16 %v10111, %v10110
  %v10311 = vpack.c.b16 %v10113, %v10112
  %v10312 = vpack.c.b16 %v10115, %v10114
  %v10313 = vpack.c.b16 %v10117, %v10116
  %v10314 = vpack.c.b16 %v10119, %v10118
  %v10315 = vpack.c.b16 %v10121, %v10120
  %v10316 = vpack.c.b16 %v10123, %v10122
  %v10317 = vpack.c.b16 %v10125, %v10124
  %v10318 = vpack.c.b16 %v10127, %v10126
  %v10319 = vpack.c.b16 %v10129, %v10128
  %v10320 = vpack.c.b16 %v10131, %v10130
  %v10321 = vpack.c.b16 %v10133, %v10132
  %v10322 = vpack.c.b16 %v10135, %v10134
  %v10323 = vpack.c.b16 %v10137, %v10136
  %v10324 = vpack.c.b16 %v10139, %v10138
  %v10325 = vpack.c.b16 %v10141, %v10140
  %v10326 = vpack.c.b16 %v10143, %v10142
  %v10327 = vpack.c.b16 %v10145, %v10144
  %v10328 = vpack.c.b16 %v10147, %v10146
  %v10329 = vpack.c.b16 %v10149, %v10148
  %v10330 = vpack.c.b16 %v10151, %v10150
  %v10331 = vpack.c.b16 %v10153, %v10152
  %v10332 = vpack.c.b16 %v10155, %v10154
  %v10333 = vpack.c.b16 %v10157, %v10156
  %v10334 = vpack.c.b16 %v10159, %v10158
  %v10335 = vpack.c.b16 %v10161, %v10160
  %v10336 = vpack.c.b16 %v10163, %v10162
  %v10337 = vpack.c.b16 %v10165, %v10164
  %v10338 = vpack.c.b16 %v10167, %v10166
  %v10339 = vpack.c.b16 %v10169, %v10168
  %v10340 = vpack.c.b16 %v10171, %v10170
  %v10341 = vpack.c.b16 %v10173, %v10172
  %v10342 = vpack.c.b16 %v10175, %v10174
  %v10343 = vpack.c.b16 %v10177, %v10176
  %v10344 = vpack.c.b16 %v10179, %v10178
  %v10345 = vpack.c.b16 %v10181, %v10180
  %v10346 = vpack.c.b16 %v10183, %v10182
  %v10347 = vpack.c.b16 %v10185, %v10184
  %v10348 = vpack.c.b16 %v10187, %v10186
  %v10349 = vpack.c.b16 %v10189, %v10188
  %v10350 = vpack.c.b16 %v10191, %v10190
  %v10351 = vpack.c.b16 %v10193, %v10192
  %v10352 = vpack.c.b16 %v10195, %v10194
  %v10353 = vpack.c.b16 %v10197, %v10196
  %v10354 = vpack.c.b16 %v10199, %v10198
  %v10355 = vpack.c.b16 %v10201, %v10200
  %v10356 = vpack.c.b16 %v10203, %v10202
  %v10357 = vpack.c.b16 %v10205, %v10204
  %v10358 = vpack.c.b16 %v10207, %v10206
  %v10359 = vpack.c.b16 %v10209, %v10208
  %v10360 = vpack.c.b16 %v10211, %v10210
  %v10361 = vpack.c.b16 %v10213, %v10212
  %v10362 = vpack.c.b16 %v10215, %v10214
  %v10363 = vpack.c.b16 %v10217, %v10216
  %v10364 = vpack.c.b16 %v10219, %v10218
  %v10365 = vpack.c.b16 %v10221, %v10220
  %v10366 = vpack.c.b16 %v10223, %v10222
  %v10367 = vpack.c.b16 %v10225, %v10224
  %v10368 = vpack.c.b16 %v10227, %v10226
  %v10369 = vpack.c.b16 %v10229, %v10228
  %v10370 = vpack.c.b16 %v10231, %v10230
  %v10371 = vpack.c.b16 %v10233, %v10232
  %v10372 = vpack.c.b16 %v10235, %v10234
  %v10373 = vpack.c.b16 %v10237, %v10236
  %v10374 = vpack.c.b16 %v10239, %v10238
  %v10375 = vpack.c.b16 %v10241, %v10240
  %v10376 = vpack.c.b16 %v10243, %v10242
  %v10377 = vpack.c.b16 %v10245, %v10244
  %v10378 = vpack.c.b16 %v10247, %v10246
  %v10379 = vpack.c.b16 %v10249, %v10248
  %v10380 = vpack.c.b16 %v10251, %v10250
  %v10381 = vpack.c.b16 %v10253, %v10252
  %10510 = vmatprep.subr.bf16.mxu0 0
  %10511 = vmatpush1.bf16.msra.mxu0 %v10254
  %10512 = vmatprep.subr.bf16.mxu0 0
  %10513 = vmatpush1.bf16.msra.mxu0 %v10255
  %10514 = vmatprep.subr.bf16.mxu0 0
  %10515 = vmatpush1.bf16.msra.mxu0 %v10256
  %10516 = vmatprep.subr.bf16.mxu0 0
  %10517 = vmatpush1.bf16.msra.mxu0 %v10257
  %10518 = vmatprep.subr.bf16.mxu0 0
  %10519 = vmatpush1.bf16.msra.mxu0 %v10258
  %10520 = vmatprep.subr.bf16.mxu0 0
  %10521 = vmatpush1.bf16.msra.mxu0 %v10259
  %10522 = vmatprep.subr.bf16.mxu0 0
  %10523 = vmatpush1.bf16.msra.mxu0 %v10260
  %10524 = vmatprep.subr.bf16.mxu0 0
  %10525 = vmatpush1.bf16.msra.mxu0 %v10261
  %10526 = vmatprep.subr.bf16.mxu0 0
  %10527 = vmatpush1.bf16.msra.mxu0 %v10262
  %10528 = vmatprep.subr.bf16.mxu0 0
  %10529 = vmatpush1.bf16.msra.mxu0 %v10263
  %10530 = vmatprep.subr.bf16.mxu0 0
  %10531 = vmatpush1.bf16.msra.mxu0 %v10264
  %10532 = vmatprep.subr.bf16.mxu0 0
  %10533 = vmatpush1.bf16.msra.mxu0 %v10265
  %10534 = vmatprep.subr.bf16.mxu0 0
  %10535 = vmatpush1.bf16.msra.mxu0 %v10266
  %10536 = vmatprep.subr.bf16.mxu0 0
  %10537 = vmatpush1.bf16.msra.mxu0 %v10267
  %10538 = vmatprep.subr.bf16.mxu0 0
  %10539 = vmatpush1.bf16.msra.mxu0 %v10268
  %10540 = vmatprep.subr.bf16.mxu0 0
  %10541 = vmatpush1.bf16.msra.mxu0 %v10269
  %10542 = vmatprep.mubr.bf16.mxu0 %v9464
  %10543 = vmatmul.mubr.bf16.gmra.mrb[0].mxu0 %v9463
  %v10544 = vpop.f32.mrb[0].mxu0
  %v10545 = vadd.f32 %v9740, %v10544
  %v10546 = vpop.f32.mrb[0].mxu0
  %v10547 = vpop.f32.mrb[0].mxu0
  %v10548 = vadd.f32 %v9740, %v10547
  %v10549 = vpop.f32.mrb[0].mxu0
  %10550 = vdwg.mxu0
  %10551 = vmatprep.subr.bf16.mxu0 0
  %10552 = vmatpush1.bf16.msra.mxu0 %v10270
  %10553 = vmatprep.subr.bf16.mxu0 0
  %10554 = vmatpush1.bf16.msra.mxu0 %v10271
  %10555 = vmatprep.subr.bf16.mxu0 0
  %10556 = vmatpush1.bf16.msra.mxu0 %v10272
  %10557 = vmatprep.subr.bf16.mxu0 0
  %10558 = vmatpush1.bf16.msra.mxu0 %v10273
  %10559 = vmatprep.subr.bf16.mxu0 0
  %10560 = vmatpush1.bf16.msra.mxu0 %v10274
  %10561 = vmatprep.subr.bf16.mxu0 0
  %10562 = vmatpush1.bf16.msra.mxu0 %v10275
  %10563 = vmatprep.subr.bf16.mxu0 0
  %10564 = vmatpush1.bf16.msra.mxu0 %v10276
  %10565 = vmatprep.subr.bf16.mxu0 0
  %10566 = vmatpush1.bf16.msra.mxu0 %v10277
  %10567 = vmatprep.subr.bf16.mxu0 0
  %10568 = vmatpush1.bf16.msra.mxu0 %v10278
  %10569 = vmatprep.subr.bf16.mxu0 0
  %10570 = vmatpush1.bf16.msra.mxu0 %v10279
  %10571 = vmatprep.subr.bf16.mxu0 0
  %10572 = vmatpush1.bf16.msra.mxu0 %v10280
  %10573 = vmatprep.subr.bf16.mxu0 0
  %10574 = vmatpush1.bf16.msra.mxu0 %v10281
  %10575 = vmatprep.subr.bf16.mxu0 0
  %10576 = vmatpush1.bf16.msra.mxu0 %v10282
  %10577 = vmatprep.subr.bf16.mxu0 0
  %10578 = vmatpush1.bf16.msra.mxu0 %v10283
  %10579 = vmatprep.subr.bf16.mxu0 0
  %10580 = vmatpush1.bf16.msra.mxu0 %v10284
  %10581 = vmatprep.subr.bf16.mxu0 0
  %10582 = vmatpush1.bf16.msra.mxu0 %v10285
  %10583 = vmatprep.mubr.bf16.mxu0 %v9466
  %10584 = vmatmul.mubr.bf16.gmra.mrb[0].mxu0 %v9465
  %v10585 = vpop.f32.mrb[0].mxu0
  %v10586 = vadd.f32 %v10545, %v10585
  %v10587 = vpop.f32.mrb[0].mxu0
  %v10588 = vpop.f32.mrb[0].mxu0
  %v10589 = vadd.f32 %v10548, %v10588
  %v10590 = vpop.f32.mrb[0].mxu0
  %10591 = vdwg.mxu0
  %10592 = vmatprep.subr.bf16.mxu0 0
  %10593 = vmatpush1.bf16.msra.mxu0 %v10286
  %10594 = vmatprep.subr.bf16.mxu0 0
  %10595 = vmatpush1.bf16.msra.mxu0 %v10287
  %10596 = vmatprep.subr.bf16.mxu0 0
  %10597 = vmatpush1.bf16.msra.mxu0 %v10288
  %10598 = vmatprep.subr.bf16.mxu0 0
  %10599 = vmatpush1.bf16.msra.mxu0 %v10289
  %10600 = vmatprep.subr.bf16.mxu0 0
  %10601 = vmatpush1.bf16.msra.mxu0 %v10290
  %10602 = vmatprep.subr.bf16.mxu0 0
  %10603 = vmatpush1.bf16.msra.mxu0 %v10291
  %10604 = vmatprep.subr.bf16.mxu0 0
  %10605 = vmatpush1.bf16.msra.mxu0 %v10292
  %10606 = vmatprep.subr.bf16.mxu0 0
  %10607 = vmatpush1.bf16.msra.mxu0 %v10293
  %10608 = vmatprep.subr.bf16.mxu0 0
  %10609 = vmatpush1.bf16.msra.mxu0 %v10294
  %10610 = vmatprep.subr.bf16.mxu0 0
  %10611 = vmatpush1.bf16.msra.mxu0 %v10295
  %10612 = vmatprep.subr.bf16.mxu0 0
  %10613 = vmatpush1.bf16.msra.mxu0 %v10296
  %10614 = vmatprep.subr.bf16.mxu0 0
  %10615 = vmatpush1.bf16.msra.mxu0 %v10297
  %10616 = vmatprep.subr.bf16.mxu0 0
  %10617 = vmatpush1.bf16.msra.mxu0 %v10298
  %10618 = vmatprep.subr.bf16.mxu0 0
  %10619 = vmatpush1.bf16.msra.mxu0 %v10299
  %10620 = vmatprep.subr.bf16.mxu0 0
  %10621 = vmatpush1.bf16.msra.mxu0 %v10300
  %10622 = vmatprep.subr.bf16.mxu0 0
  %10623 = vmatpush1.bf16.msra.mxu0 %v10301
  %10624 = vmatprep.mubr.bf16.mxu0 %v9468
  %10625 = vmatmul.mubr.bf16.gmra.mrb[0].mxu0 %v9467
  %v10626 = vpop.f32.mrb[0].mxu0
  %v10627 = vadd.f32 %v10586, %v10626
  %v10628 = vpop.f32.mrb[0].mxu0
  %v10629 = vpop.f32.mrb[0].mxu0
  %v10630 = vadd.f32 %v10589, %v10629
  %v10631 = vpop.f32.mrb[0].mxu0
  %10632 = vdwg.mxu0
  %10633 = vmatprep.subr.bf16.mxu0 0
  %10634 = vmatpush1.bf16.msra.mxu0 %v10302
  %10635 = vmatprep.subr.bf16.mxu0 0
  %10636 = vmatpush1.bf16.msra.mxu0 %v10303
  %10637 = vmatprep.subr.bf16.mxu0 0
  %10638 = vmatpush1.bf16.msra.mxu0 %v10304
  %10639 = vmatprep.subr.bf16.mxu0 0
  %10640 = vmatpush1.bf16.msra.mxu0 %v10305
  %10641 = vmatprep.subr.bf16.mxu0 0
  %10642 = vmatpush1.bf16.msra.mxu0 %v10306
  %10643 = vmatprep.subr.bf16.mxu0 0
  %10644 = vmatpush1.bf16.msra.mxu0 %v10307
  %10645 = vmatprep.subr.bf16.mxu0 0
  %10646 = vmatpush1.bf16.msra.mxu0 %v10308
  %10647 = vmatprep.subr.bf16.mxu0 0
  %10648 = vmatpush1.bf16.msra.mxu0 %v10309
  %10649 = vmatprep.subr.bf16.mxu0 0
  %10650 = vmatpush1.bf16.msra.mxu0 %v10310
  %10651 = vmatprep.subr.bf16.mxu0 0
  %10652 = vmatpush1.bf16.msra.mxu0 %v10311
  %10653 = vmatprep.subr.bf16.mxu0 0
  %10654 = vmatpush1.bf16.msra.mxu0 %v10312
  %10655 = vmatprep.subr.bf16.mxu0 0
  %10656 = vmatpush1.bf16.msra.mxu0 %v10313
  %10657 = vmatprep.subr.bf16.mxu0 0
  %10658 = vmatpush1.bf16.msra.mxu0 %v10314
  %10659 = vmatprep.subr.bf16.mxu0 0
  %10660 = vmatpush1.bf16.msra.mxu0 %v10315
  %10661 = vmatprep.subr.bf16.mxu0 0
  %10662 = vmatpush1.bf16.msra.mxu0 %v10316
  %10663 = vmatprep.subr.bf16.mxu0 0
  %10664 = vmatpush1.bf16.msra.mxu0 %v10317
  %10665 = vmatprep.mubr.bf16.mxu0 %v9470
  %10666 = vmatmul.mubr.bf16.gmra.mrb[0].mxu0 %v9469
  %v10667 = vpop.f32.mrb[0].mxu0
  %v10668 = vadd.f32 %v10627, %v10667
  %v10669 = vpop.f32.mrb[0].mxu0
  %v10670 = vpop.f32.mrb[0].mxu0
  %v10671 = vadd.f32 %v10630, %v10670
  %v10672 = vpop.f32.mrb[0].mxu0
  %10673 = vdwg.mxu0
  %10674 = vmatprep.subr.bf16.mxu0 0
  %10675 = vmatpush1.bf16.msra.mxu0 %v10318
  %10676 = vmatprep.subr.bf16.mxu0 0
  %10677 = vmatpush1.bf16.msra.mxu0 %v10319
  %10678 = vmatprep.subr.bf16.mxu0 0
  %10679 = vmatpush1.bf16.msra.mxu0 %v10320
  %10680 = vmatprep.subr.bf16.mxu0 0
  %10681 = vmatpush1.bf16.msra.mxu0 %v10321
  %10682 = vmatprep.subr.bf16.mxu0 0
  %10683 = vmatpush1.bf16.msra.mxu0 %v10322
  %10684 = vmatprep.subr.bf16.mxu0 0
  %10685 = vmatpush1.bf16.msra.mxu0 %v10323
  %10686 = vmatprep.subr.bf16.mxu0 0
  %10687 = vmatpush1.bf16.msra.mxu0 %v10324
  %10688 = vmatprep.subr.bf16.mxu0 0
  %10689 = vmatpush1.bf16.msra.mxu0 %v10325
  %10690 = vmatprep.subr.bf16.mxu0 0
  %10691 = vmatpush1.bf16.msra.mxu0 %v10326
  %10692 = vmatprep.subr.bf16.mxu0 0
  %10693 = vmatpush1.bf16.msra.mxu0 %v10327
  %10694 = vmatprep.subr.bf16.mxu0 0
  %10695 = vmatpush1.bf16.msra.mxu0 %v10328
  %10696 = vmatprep.subr.bf16.mxu0 0
  %10697 = vmatpush1.bf16.msra.mxu0 %v10329
  %10698 = vmatprep.subr.bf16.mxu0 0
  %10699 = vmatpush1.bf16.msra.mxu0 %v10330
  %10700 = vmatprep.subr.bf16.mxu0 0
  %10701 = vmatpush1.bf16.msra.mxu0 %v10331
  %10702 = vmatprep.subr.bf16.mxu0 0
  %10703 = vmatpush1.bf16.msra.mxu0 %v10332
  %10704 = vmatprep.subr.bf16.mxu0 0
  %10705 = vmatpush1.bf16.msra.mxu0 %v10333
  %10706 = vmatprep.mubr.bf16.mxu0 %v9472
  %10707 = vmatmul.mubr.bf16.gmra.mrb[0].mxu0 %v9471
  %v10708 = vpop.f32.mrb[0].mxu0
  %v10709 = vadd.f32 %v10668, %v10708
  %v10710 = vpop.f32.mrb[0].mxu0
  %v10711 = vpop.f32.mrb[0].mxu0
  %v10712 = vadd.f32 %v10671, %v10711
  %v10713 = vpop.f32.mrb[0].mxu0
  %10714 = vdwg.mxu0
  %10715 = vmatprep.subr.bf16.mxu0 0
  %10716 = vmatpush1.bf16.msra.mxu0 %v10334
  %10717 = vmatprep.subr.bf16.mxu0 0
  %10718 = vmatpush1.bf16.msra.mxu0 %v10335
  %10719 = vmatprep.subr.bf16.mxu0 0
  %10720 = vmatpush1.bf16.msra.mxu0 %v10336
  %10721 = vmatprep.subr.bf16.mxu0 0
  %10722 = vmatpush1.bf16.msra.mxu0 %v10337
  %10723 = vmatprep.subr.bf16.mxu0 0
  %10724 = vmatpush1.bf16.msra.mxu0 %v10338
  %10725 = vmatprep.subr.bf16.mxu0 0
  %10726 = vmatpush1.bf16.msra.mxu0 %v10339
  %10727 = vmatprep.subr.bf16.mxu0 0
  %10728 = vmatpush1.bf16.msra.mxu0 %v10340
  %10729 = vmatprep.subr.bf16.mxu0 0
  %10730 = vmatpush1.bf16.msra.mxu0 %v10341
  %10731 = vmatprep.subr.bf16.mxu0 0
  %10732 = vmatpush1.bf16.msra.mxu0 %v10342
  %10733 = vmatprep.subr.bf16.mxu0 0
  %10734 = vmatpush1.bf16.msra.mxu0 %v10343
  %10735 = vmatprep.subr.bf16.mxu0 0
  %10736 = vmatpush1.bf16.msra.mxu0 %v10344
  %10737 = vmatprep.subr.bf16.mxu0 0
  %10738 = vmatpush1.bf16.msra.mxu0 %v10345
  %10739 = vmatprep.subr.bf16.mxu0 0
  %10740 = vmatpush1.bf16.msra.mxu0 %v10346
  %10741 = vmatprep.subr.bf16.mxu0 0
  %10742 = vmatpush1.bf16.msra.mxu0 %v10347
  %10743 = vmatprep.subr.bf16.mxu0 0
  %10744 = vmatpush1.bf16.msra.mxu0 %v10348
  %10745 = vmatprep.subr.bf16.mxu0 0
  %10746 = vmatpush1.bf16.msra.mxu0 %v10349
  %10747 = vmatprep.mubr.bf16.mxu0 %v9474
  %10748 = vmatmul.mubr.bf16.gmra.mrb[0].mxu0 %v9473
  %v10749 = vpop.f32.mrb[0].mxu0
  %v10750 = vadd.f32 %v10709, %v10749
  %v10751 = vpop.f32.mrb[0].mxu0
  %v10752 = vpop.f32.mrb[0].mxu0
  %v10753 = vadd.f32 %v10712, %v10752
  %v10754 = vpop.f32.mrb[0].mxu0
  %10755 = vdwg.mxu0
  %10756 = vmatprep.subr.bf16.mxu0 0
  %10757 = vmatpush1.bf16.msra.mxu0 %v10350
  %10758 = vmatprep.subr.bf16.mxu0 0
  %10759 = vmatpush1.bf16.msra.mxu0 %v10351
  %10760 = vmatprep.subr.bf16.mxu0 0
  %10761 = vmatpush1.bf16.msra.mxu0 %v10352
  %10762 = vmatprep.subr.bf16.mxu0 0
  %10763 = vmatpush1.bf16.msra.mxu0 %v10353
  %10764 = vmatprep.subr.bf16.mxu0 0
  %10765 = vmatpush1.bf16.msra.mxu0 %v10354
  %10766 = vmatprep.subr.bf16.mxu0 0
  %10767 = vmatpush1.bf16.msra.mxu0 %v10355
  %10768 = vmatprep.subr.bf16.mxu0 0
  %10769 = vmatpush1.bf16.msra.mxu0 %v10356
  %10770 = vmatprep.subr.bf16.mxu0 0
  %10771 = vmatpush1.bf16.msra.mxu0 %v10357
  %10772 = vmatprep.subr.bf16.mxu0 0
  %10773 = vmatpush1.bf16.msra.mxu0 %v10358
  %10774 = vmatprep.subr.bf16.mxu0 0
  %10775 = vmatpush1.bf16.msra.mxu0 %v10359
  %10776 = vmatprep.subr.bf16.mxu0 0
  %10777 = vmatpush1.bf16.msra.mxu0 %v10360
  %10778 = vmatprep.subr.bf16.mxu0 0
  %10779 = vmatpush1.bf16.msra.mxu0 %v10361
  %10780 = vmatprep.subr.bf16.mxu0 0
  %10781 = vmatpush1.bf16.msra.mxu0 %v10362
  %10782 = vmatprep.subr.bf16.mxu0 0
  %10783 = vmatpush1.bf16.msra.mxu0 %v10363
  %10784 = vmatprep.subr.bf16.mxu0 0
  %10785 = vmatpush1.bf16.msra.mxu0 %v10364
  %10786 = vmatprep.subr.bf16.mxu0 0
  %10787 = vmatpush1.bf16.msra.mxu0 %v10365
  %10788 = vmatprep.mubr.bf16.mxu0 %v9476
  %10789 = vmatmul.mubr.bf16.gmra.mrb[0].mxu0 %v9475
  %v10790 = vpop.f32.mrb[0].mxu0
  %v10791 = vadd.f32 %v10750, %v10790
  %v10792 = vpop.f32.mrb[0].mxu0
  %v10793 = vpop.f32.mrb[0].mxu0
  %v10794 = vadd.f32 %v10753, %v10793
  %v10795 = vpop.f32.mrb[0].mxu0
  %10796 = vdwg.mxu0
  %10797 = vmatprep.subr.bf16.mxu0 0
  %10798 = vmatpush1.bf16.msra.mxu0 %v10366
  %10799 = vmatprep.subr.bf16.mxu0 0
  %10800 = vmatpush1.bf16.msra.mxu0 %v10367
  %10801 = vmatprep.subr.bf16.mxu0 0
  %10802 = vmatpush1.bf16.msra.mxu0 %v10368
  %10803 = vmatprep.subr.bf16.mxu0 0
  %10804 = vmatpush1.bf16.msra.mxu0 %v10369
  %10805 = vmatprep.subr.bf16.mxu0 0
  %10806 = vmatpush1.bf16.msra.mxu0 %v10370
  %10807 = vmatprep.subr.bf16.mxu0 0
  %10808 = vmatpush1.bf16.msra.mxu0 %v10371
  %10809 = vmatprep.subr.bf16.mxu0 0
  %10810 = vmatpush1.bf16.msra.mxu0 %v10372
  %10811 = vmatprep.subr.bf16.mxu0 0
  %10812 = vmatpush1.bf16.msra.mxu0 %v10373
  %10813 = vmatprep.subr.bf16.mxu0 0
  %10814 = vmatpush1.bf16.msra.mxu0 %v10374
  %10815 = vmatprep.subr.bf16.mxu0 0
  %10816 = vmatpush1.bf16.msra.mxu0 %v10375
  %10817 = vmatprep.subr.bf16.mxu0 0
  %10818 = vmatpush1.bf16.msra.mxu0 %v10376
  %10819 = vmatprep.subr.bf16.mxu0 0
  %10820 = vmatpush1.bf16.msra.mxu0 %v10377
  %10821 = vmatprep.subr.bf16.mxu0 0
  %10822 = vmatpush1.bf16.msra.mxu0 %v10378
  %10823 = vmatprep.subr.bf16.mxu0 0
  %10824 = vmatpush1.bf16.msra.mxu0 %v10379
  %10825 = vmatprep.subr.bf16.mxu0 0
  %10826 = vmatpush1.bf16.msra.mxu0 %v10380
  %10827 = vmatprep.subr.bf16.mxu0 0
  %10828 = vmatpush1.bf16.msra.mxu0 %v10381
  %10829 = vmatprep.mubr.bf16.mxu0 %v9478
  %10830 = vmatmul.mubr.bf16.gmra.mrb[0].mxu0 %v9477
  %v10831 = vpop.f32.mrb[0].mxu0
  %v10832 = vadd.f32 %v10791, %v10831
  %v10833 = vpop.f32.mrb[0].mxu0
  %v10834 = vpop.f32.mrb[0].mxu0
  %v10835 = vadd.f32 %v10794, %v10834
  %v10836 = vpop.f32.mrb[0].mxu0
  %10837 = vdwg.mxu0
  %v10838 = vld [vmem:[%s71] sm:$0x1]
  %v10839 = vld [vmem:[%s73] sm:$0x1]
  %v10840 = vadd.f32 %v8613, %v10832
  %v10841 = vadd.f32 %v8614, %v10835
  %v10842 = vsel %vm265, %v10840, 0.0
  %10843 = vadd.xlane.f32.xlu0 %v10842
  %v10844 = vpop.xlane.xlu0 %10843
  %v10845 = vsel %vm265, %v10841, 0.0
  %10846 = vadd.xlane.f32.xlu0 %v10845
  %v10847 = vpop.xlane.xlu0 %10846
  %v10848 = vmul.f32 %v10844, %v3263
  %v10849 = vmul.f32 %v10847, %v3263
  %v10850 = vsub.f32 %v10840, %v10848
  %v10851 = vsub.f32 %v10841, %v10849
  %v10852 = vmul.f32 %v10850, %v10850
  %v10853 = vmul.f32 %v10851, %v10851
  %v10854 = vsel %vm265, %v10852, 0.0
  %10855 = vadd.xlane.f32.xlu0 %v10854
  %v10856 = vpop.xlane.xlu0 %10855
  %v10857 = vsel %vm265, %v10853, 0.0
  %10858 = vadd.xlane.f32.xlu0 %v10857
  %v10859 = vpop.xlane.xlu0 %10858
  %v10860 = vmul.f32 %v10856, %v3263
  %v10861 = vmul.f32 %v10859, %v3263
  %v10862 = vadd.f32 %v10860, 1e-05
  %v10863 = vadd.f32 %v10861, 1e-05
  %v10864 = vrsqrt.pop %v10862
  %v10865 = vrsqrt.pop %v10863
  %v10866 = vmul.f32 %v10850, %v10864
  %v10867 = vmul.f32 %v10851, %v10865
  %v10869 = vlaneseq
  %v10870 = vshrl.u32 %v10869, 7
  %v10871 = vsub.s32 0, %v10870
  %v10872 = vrot.slane %v10838, %v10871
  %v10874 = vmul.f32 %v10866, %v10872
  %v10875 = vmul.f32 %v10867, %v10872
  %v10877 = vlaneseq
  %v10878 = vshrl.u32 %v10877, 7
  %v10879 = vsub.s32 0, %v10878
  %v10880 = vrot.slane %v10839, %v10879
  %v10882 = vadd.f32 %v10874, %v10880
  %v10883 = vadd.f32 %v10875, %v10880
  %v10884 = vadd.f32 %v10882, %v10883
  %v10885 = vmul.f32 %v10884, 0.5
  %v10886 = vld [vmem:[%s7] sm:$0xff]
  %v10887 = vld [vmem:[%s7 + $0x8] sm:$0xff]
  %v10888 = vld [vmem:[%s7 + $0x10] sm:$0xff]
  %v10889 = vld [vmem:[%s7 + $0x18] sm:$0xff]
  %v10890 = vld [vmem:[%s7 + $0x20] sm:$0xff]
  %v10891 = vld [vmem:[%s7 + $0x28] sm:$0xff]
  %v10892 = vld [vmem:[%s7 + $0x30] sm:$0xff]
  %v10893 = vld [vmem:[%s7 + $0x38] sm:$0xff]
  %v10894 = vld [vmem:[%s9] sm:$0x1]
  %v10896 = vlaneseq
  %v10897 = vshrl.u32 %v10896, 7
  %v10898 = vsub.s32 0, %v10897
  %v10899 = vrot.slane %v10894, %v10898
  %v10902 = vsel %vm265, %v10885, 0
  %10904 = vmatprep.subr.mxu0 0.0
  %10905 = vmatpush1.msra.mxu0 %v10886
  %10906 = vmatprep.subr.mxu0 0.0
  %10907 = vmatpush1.msra.mxu0 %v10887
  %10908 = vmatprep.subr.mxu0 0.0
  %10909 = vmatpush1.msra.mxu0 %v10888
  %10910 = vmatprep.subr.mxu0 0.0
  %10911 = vmatpush1.msra.mxu0 %v10889
  %10912 = vmatprep.subr.mxu0 0.0
  %10913 = vmatpush1.msra.mxu0 %v10890
  %10914 = vmatprep.subr.mxu0 0.0
  %10915 = vmatpush1.msra.mxu0 %v10891
  %10916 = vmatprep.subr.mxu0 0.0
  %10917 = vmatpush1.msra.mxu0 %v10892
  %10918 = vmatprep.subr.mxu0 0.0
  %10919 = vmatpush1.msra.mxu0 %v10893
  %10920 = vmatprep.subr.mxu0 0.0
  %10921 = vmatpush1.msra.mxu0 0.0
  %10922 = vmatprep.subr.mxu0 0.0
  %10923 = vmatpush1.msra.mxu0 0.0
  %10924 = vmatprep.subr.mxu0 0.0
  %10925 = vmatpush1.msra.mxu0 0.0
  %10926 = vmatprep.subr.mxu0 0.0
  %10927 = vmatpush1.msra.mxu0 0.0
  %10928 = vmatprep.subr.mxu0 0.0
  %10929 = vmatpush1.msra.mxu0 0.0
  %10930 = vmatprep.subr.mxu0 0.0
  %10931 = vmatpush1.msra.mxu0 0.0
  %10932 = vmatprep.subr.mxu0 0.0
  %10933 = vmatpush1.msra.mxu0 0.0
  %10934 = vmatprep.subr.mxu0 0.0
  %10935 = vmatpush1.msra.mxu0 0.0
  %10936 = vmatprep.subr.mxu0 0.0
  %10937 = vmatpush1.msra.mxu0 0.0
  %10938 = vmatprep.subr.mxu0 0.0
  %10939 = vmatpush1.msra.mxu0 0.0
  %10940 = vmatprep.subr.mxu0 0.0
  %10941 = vmatpush1.msra.mxu0 0.0
  %10942 = vmatprep.subr.mxu0 0.0
  %10943 = vmatpush1.msra.mxu0 0.0
  %10944 = vmatprep.subr.mxu0 0.0
  %10945 = vmatpush1.msra.mxu0 0.0
  %10946 = vmatprep.subr.mxu0 0.0
  %10947 = vmatpush1.msra.mxu0 0.0
  %10948 = vmatprep.subr.mxu0 0.0
  %10949 = vmatpush1.msra.mxu0 0.0
  %10950 = vmatprep.subr.mxu0 0.0
  %10951 = vmatpush1.msra.mxu0 0.0
  %10952 = vmatprep.subr.mxu0 0.0
  %10953 = vmatpush1.msra.mxu0 0.0
  %10954 = vmatprep.subr.mxu0 0.0
  %10955 = vmatpush1.msra.mxu0 0.0
  %10956 = vmatprep.subr.mxu0 0.0
  %10957 = vmatpush1.msra.mxu0 0.0
  %10958 = vmatprep.subr.mxu0 0.0
  %10959 = vmatpush1.msra.mxu0 0.0
  %10960 = vmatprep.subr.mxu0 0.0
  %10961 = vmatpush1.msra.mxu0 0.0
  %10962 = vmatprep.subr.mxu0 0.0
  %10963 = vmatpush1.msra.mxu0 0.0
  %10964 = vmatprep.subr.mxu0 0.0
  %10965 = vmatpush1.msra.mxu0 0.0
  %10966 = vmatprep.subr.mxu0 0.0
  %10967 = vmatpush1.msra.mxu0 0.0
  %10968 = vmatprep.mubr.f32.mxu0 0.0
  %10969 = vmatmul.mubr.f32.gmra.mrb[0].mxu0 %v10902
  %v10970 = vpop.f32.mrb[0].mxu0
  %v10971 = vadd.f32 %v10899, %v10970
  %v10972 = vpop.f32.mrb[0].mxu0
  %10973 = vdwg.mxu0
  %vm10974 = vcmask 31744
  %10975 = vst.msk [vmem:[%s75] sm:$0xff] %vm10974, %v10971
  // Predicated region
  $region150: #{transformer_regressor_forward.1} parent=0 // pred_check
    _
  $region151: #{transformer_regressor_forward.1} parent=0 // pred_check_branch
    %10977 = sbr.rel (0) target = $region153
  $region152: #{transformer_regressor_forward.1} parent=0 // pred_region
    _
  $region153: #{transformer_regressor_forward.1} parent=0 // pred_fallthru
    _
  // Predicated region
  $region154: #{transformer_regressor_forward.1} parent=0 // pred_check
    _
  $region155: #{transformer_regressor_forward.1} parent=0 // pred_check_branch
    %10979 = sbr.rel (0) target = $region157
  $region156: #{transformer_regressor_forward.1} parent=0 // pred_region
    _
  $region157: #{transformer_regressor_forward.1} parent=0 // pred_fallthru
    _

</llo_original>
